<compile_context>
chip_gen: v6e
topology: v6e:2x2x1
jax: 0.10.0
libtpu: 0.0.40
codegen_flags: <defaults>
</compile_context>

<pallas_src>
import jax
import jax.numpy as jnp
from jax.experimental import pallas as pl
from jax.experimental.pallas import tpu as pltpu


# ----------------------------------------------------------------------------
# In-kernel helper: 7-tap conv (pad=3) along W or H, K-fused into one matmul
# ----------------------------------------------------------------------------
def _conv7(t, w_ref, b_ref, along_width, out_dtype):
    """t: (B, H, W, Cin) bf16;  w_ref: (7*Cin, Cout) bf16;  b_ref: (1, Cout) f32."""
    B, H, W, Cin = t.shape
    Cout = w_ref.shape[-1]
    if along_width:
        z = jnp.zeros((B, H, 3, Cin), t.dtype)
        tp = jnp.concatenate([z, t, z], axis=2)                 # (B, H, W+6, Cin)
        taps = [tp[:, :, k:k + W, :].reshape(B * H * W, Cin) for k in range(7)]
    else:
        z = jnp.zeros((B, 3, W, Cin), t.dtype)
        tp = jnp.concatenate([z, t, z], axis=1)                 # (B, H+6, W, Cin)
        taps = [tp[:, k:k + H, :, :].reshape(B * H * W, Cin) for k in range(7)]
    xk = jnp.concatenate(taps, axis=-1)                         # (M, 7*Cin) bf16
    y = jnp.dot(xk, w_ref[...], preferred_element_type=jnp.float32)
    y = jnp.maximum(y + b_ref[...], 0.0)
    return y.astype(out_dtype).reshape(B, H, W, Cout)


# ----------------------------------------------------------------------------
# Fused InceptionC kernel (batch_tile images per grid step)
# ----------------------------------------------------------------------------
def _inception_c_kernel(x_ref,
                        w_stem_ref, b_act_ref, b_pool_ref,
                        w72_ref, b72_ref, w73_ref, b73_ref,
                        wd2_ref, bd2_ref, wd3_ref, bd3_ref,
                        wd4_ref, bd4_ref, wd5_ref, bd5_ref,
                        o_ref):
    B, H, W, Cin = x_ref.shape
    C_act = b_act_ref.shape[-1]           # 192 + 2*c7
    c7 = wd2_ref.shape[-1]
    C1 = C_act - 2 * c7                   # 192
    M = B * H * W

    x = x_ref[...]                                              # bf16

    # ---- fused 1x1 "stem": [branch1x1 | branch7x7_1 | branch7x7dbl_1 | pool 1x1]
    raw = jnp.dot(x.reshape(M, Cin), w_stem_ref[...],
                  preferred_element_type=jnp.float32)           # (M, C_stem) f32

    act = jnp.maximum(raw[:, :C_act] + b_act_ref[...], 0.0)
    branch1x1 = act[:, :C1].reshape(B, H, W, C1)                # f32
    t7 = act[:, C1:C1 + c7].astype(jnp.bfloat16).reshape(B, H, W, c7)
    td = act[:, C1 + c7:].astype(jnp.bfloat16).reshape(B, H, W, c7)

    # ---- branch7x7: (1,7) then (7,1); intermediates stay bf16 in VMEM --------
    b7 = _conv7(t7, w72_ref, b72_ref, along_width=True,  out_dtype=jnp.bfloat16)
    b7 = _conv7(b7, w73_ref, b73_ref, along_width=False, out_dtype=jnp.float32)

    # ---- branch7x7dbl: (7,1), (1,7), (7,1), (1,7) ----------------------------
    bd = _conv7(td, wd2_ref, bd2_ref, along_width=False, out_dtype=jnp.bfloat16)
    bd = _conv7(bd, wd3_ref, bd3_ref, along_width=True,  out_dtype=jnp.bfloat16)
    bd = _conv7(bd, wd4_ref, bd4_ref, along_width=False, out_dtype=jnp.bfloat16)
    bd = _conv7(bd, wd5_ref, bd5_ref, along_width=True,  out_dtype=jnp.float32)

    # ---- branch_pool (commuted): 1x1 conv came out of the stem WITHOUT bias;
    # 3x3 avg pool (zero pad, /9, count_include_pad) over 192 channels, then
    # bias + ReLU.  Exactly equal to relu(conv(avgpool(x)) + bias).
    s = raw[:, C_act:].reshape(B, H, W, C1)                     # f32, no bias yet
    zr = jnp.zeros((B, 1, W, C1), jnp.float32)
    zc = jnp.zeros((B, H + 2, 1, C1), jnp.float32)
    sp = jnp.concatenate([zr, s, zr], axis=1)
    sp = jnp.concatenate([zc, sp, zc], axis=2)                  # (B, H+2, W+2, C1)
    pool = jnp.zeros((B, H, W, C1), jnp.float32)
    for dh in range(3):
        for dw in range(3):
            pool = pool + sp[:, dh:dh + H, dw:dw + W, :]
    bp = jnp.maximum(pool * (1.0 / 9.0) + b_pool_ref[...], 0.0)

    # ---- channel concat of the four branches in VMEM; one lane-dense store ---
    out = jnp.concatenate([branch1x1, b7, bd, bp], axis=-1)     # (B, H, W, 768)
    o_ref[...] = out.astype(o_ref.dtype)


# ----------------------------------------------------------------------------
# Parameter construction (deterministic, synthetic) with BN folding
# ----------------------------------------------------------------------------
def _make_conv_params(key, k, cin, cout, eps=1e-3):
    """BN(eps)-folded f32 conv weight (K, Cin, Cout) and bias (Cout,)."""
    kw, kg, kb, km, kv = jax.random.split(key, 5)
    w = jax.random.normal(kw, (k, cin, cout), jnp.float32) * 0.1
    gamma = jax.random.uniform(kg, (cout,), jnp.float32, 0.5, 1.5)
    beta = jax.random.normal(kb, (cout,), jnp.float32) * 0.1
    r_mean = jax.random.normal(km, (cout,), jnp.float32) * 0.1
    r_var = jax.random.uniform(kv, (cout,), jnp.float32, 0.5, 1.5)
    scale = gamma / jnp.sqrt(r_var + eps)
    return w * scale, beta - r_mean * scale


def init_inception_c(key, in_channels, channels_7x7):
    c7 = channels_7x7
    keys = jax.random.split(key, 10)
    ref = {
        "b1x1":  _make_conv_params(keys[0], 1, in_channels, 192),   # 1x1
        "b7_1":  _make_conv_params(keys[1], 1, in_channels, c7),    # 1x1
        "b7_2":  _make_conv_params(keys[2], 7, c7, c7),             # (1,7)
        "b7_3":  _make_conv_params(keys[3], 7, c7, 192),            # (7,1)
        "b7d_1": _make_conv_params(keys[4], 1, in_channels, c7),    # 1x1
        "b7d_2": _make_conv_params(keys[5], 7, c7, c7),             # (7,1)
        "b7d_3": _make_conv_params(keys[6], 7, c7, c7),             # (1,7)
        "b7d_4": _make_conv_params(keys[7], 7, c7, c7),             # (7,1)
        "b7d_5": _make_conv_params(keys[8], 7, c7, 192),            # (1,7)
        "bpool": _make_conv_params(keys[9], 1, in_channels, 192),   # 1x1
    }

    def w1(name):                       # (Cin, Cout) bf16, 1x1 convs
        return ref[name][0][0].astype(jnp.bfloat16)

    def w7(name):                       # (7*Cin, Cout) bf16, K-fused tap layout
        w = ref[name][0]
        return w.reshape(w.shape[0] * w.shape[1], w.shape[2]).astype(jnp.bfloat16)

    def b(name):                        # (1, Cout) f32 folded BN bias
        return ref[name][1].reshape(1, -1).astype(jnp.float32)

    params = {
        # stem = [branch1x1 | branch7x7_1 | branch7x7dbl_1 | branch_pool 1x1]
        "w_stem": jnp.concatenate([w1("b1x1"), w1("b7_1"), w1("b7d_1"), w1("bpool")],
                                  axis=-1),
        "b_act":  jnp.concatenate([b("b1x1"), b("b7_1"), b("b7d_1")], axis=-1),
        "b_pool": b("bpool"),            # applied AFTER the pooled conv output
        "w7_2": w7("b7_2"), "b7_2": b("b7_2"),
        "w7_3": w7("b7_3"), "b7_3": b("b7_3"),
        "w7d_2": w7("b7d_2"), "b7d_2": b("b7d_2"),
        "w7d_3": w7("b7d_3"), "b7d_3": b("b7d_3"),
        "w7d_4": w7("b7d_4"), "b7d_4": b("b7d_4"),
        "w7d_5": w7("b7d_5"), "b7d_5": b("b7d_5"),
    }
    return params, ref


# ----------------------------------------------------------------------------
# Forward pass (single pallas_call; NCHW in / NCHW out)
# ----------------------------------------------------------------------------
def inception_c_forward(params, x_nchw, *, batch_tile=1):
    x = jnp.transpose(x_nchw, (0, 2, 3, 1)).astype(jnp.bfloat16)  # NCHW -> NHWC bf16
    N, H, W, Cin = x.shape
    c7 = params["w7_2"].shape[-1]
    C_stem = params["w_stem"].shape[-1]
    C_out = 4 * 192
    bt = batch_tile
    assert N % bt == 0, (N, bt)

    weight_order = ("w_stem", "b_act", "b_pool",
                    "w7_2", "b7_2", "w7_3", "b7_3",
                    "w7d_2", "b7d_2", "w7d_3", "b7d_3",
                    "w7d_4", "b7d_4", "w7d_5", "b7d_5")
    weights = [params[k] for k in weight_order]

    def _full_spec(a):
        # Constant (grid-invariant) full-array block; index_map is constant.
        nd = a.ndim
        return pl.BlockSpec(a.shape, lambda n: (0,) * nd)

    # Advisory cost estimate for the single fused custom call.
    M = N * H * W
    flops = int(2 * M * (Cin * C_stem + 7 * c7 * (4 * c7 + 2 * 192)) + 9 * M * 192)
    bytes_accessed = int(x.size * x.dtype.itemsize
                         + M * C_out * 4
                         + sum(int(a.size) * a.dtype.itemsize for a in weights))

    out = pl.pallas_call(
        _inception_c_kernel,
        out_shape=jax.ShapeDtypeStruct((N, H, W, C_out), jnp.float32),
        grid_spec=pltpu.PrefetchScalarGridSpec(
            num_scalar_prefetch=0,
            grid=(N // bt,),                                    # batch tiles
            in_specs=[pl.BlockSpec((bt, H, W, Cin), lambda n: (n, 0, 0, 0))]
                     + [_full_spec(a) for a in weights],
            out_specs=pl.BlockSpec((bt, H, W, C_out), lambda n: (n, 0, 0, 0)),
        ),
        compiler_params=pltpu.CompilerParams(
            dimension_semantics=("parallel",),                  # split across TCs
            vmem_limit_bytes=48 * 1024 * 1024),                 # headroom under v7x 64 MiB
        cost_estimate=pl.CostEstimate(flops=flops, transcendentals=0,
                                      bytes_accessed=bytes_accessed),
    )(x, *weights)

    return jnp.transpose(out, (0, 3, 1, 2))                     # NHWC -> NCHW (f32)


# ----------------------------------------------------------------------------
# Pure-JAX f32 reference following the PyTorch module's op order (for checking)
# ----------------------------------------------------------------------------
def _conv_ref(t, w, b, along_width=False):
    K = w.shape[0]
    if K == 1:
        y = jnp.einsum("nhwc,cd->nhwd", t, w[0])
    else:
        pad = K // 2
        if along_width:
            tp = jnp.pad(t, ((0, 0), (0, 0), (pad, pad), (0, 0)))
            y = sum(jnp.einsum("nhwc,cd->nhwd", tp[:, :, k:k + t.shape[2], :], w[k])
                    for k in range(K))
        else:
            tp = jnp.pad(t, ((0, 0), (pad, pad), (0, 0), (0, 0)))
            y = sum(jnp.einsum("nhwc,cd->nhwd", tp[:, k:k + t.shape[1], :, :], w[k])
                    for k in range(K))
    return jnp.maximum(y + b, 0.0)


def inception_c_reference(ref, x_nchw):
    x = jnp.transpose(x_nchw, (0, 2, 3, 1)).astype(jnp.float32)
    H, W = x.shape[1], x.shape[2]

    b1 = _conv_ref(x, *ref["b1x1"])

    b7 = _conv_ref(x, *ref["b7_1"])
    b7 = _conv_ref(b7, *ref["b7_2"], along_width=True)
    b7 = _conv_ref(b7, *ref["b7_3"], along_width=False)

    bd = _conv_ref(x, *ref["b7d_1"])
    bd = _conv_ref(bd, *ref["b7d_2"], along_width=False)
    bd = _conv_ref(bd, *ref["b7d_3"], along_width=True)
    bd = _conv_ref(bd, *ref["b7d_4"], along_width=False)
    bd = _conv_ref(bd, *ref["b7d_5"], along_width=True)

    xp = jnp.pad(x, ((0, 0), (1, 1), (1, 1), (0, 0)))
    pool = sum(xp[:, dh:dh + H, dw:dw + W, :]
               for dh in range(3) for dw in range(3)) / 9.0
    bp = _conv_ref(pool, *ref["bpool"])

    out = jnp.concatenate([b1, b7, bd, bp], axis=-1)
    return jnp.transpose(out, (0, 3, 1, 2))


if __name__ == "__main__":
    key = jax.random.PRNGKey(0)
    kx, kp = jax.random.split(key)

    N, Cin, H, W = 4, 16, 8, 8        # small shapes consistent with the module
    channels_7x7 = 8

    x = jax.random.normal(kx, (N, Cin, H, W), jnp.float32)
    params, ref_params = init_inception_c(kp, Cin, channels_7x7)

    fwd = jax.jit(inception_c_forward, static_argnames=("batch_tile",))
    out = jax.block_until_ready(fwd(params, x, batch_tile=2))

    assert out.shape == (N, 192 * 4, H, W), out.shape
    assert out.dtype == jnp.float32
    assert bool(jnp.all(jnp.isfinite(out)))

    # Loose tolerance: bf16 activations/weights on the MXU vs f32 reference.
    ref_out = inception_c_reference(ref_params, x)
    max_err = float(jnp.max(jnp.abs(out - ref_out)))
    assert max_err < 1e-1, f"max abs error vs f32 reference: {max_err}"

    print("KERNEL_OK")
</pallas_src>

<mosaic_0001>
module attributes {stable_mosaic.version = 11 : i64} {
  func.func @_inception_c_kernel(%arg0: i32, %arg1: memref<2x8x8x16xbf16, #tpu.memory_space<vmem>>, %arg2: memref<16x400xbf16, #tpu.memory_space<vmem>>, %arg3: memref<1x208xf32, #tpu.memory_space<vmem>>, %arg4: memref<1x192xf32, #tpu.memory_space<vmem>>, %arg5: memref<56x8xbf16, #tpu.memory_space<vmem>>, %arg6: memref<1x8xf32, #tpu.memory_space<vmem>>, %arg7: memref<56x192xbf16, #tpu.memory_space<vmem>>, %arg8: memref<1x192xf32, #tpu.memory_space<vmem>>, %arg9: memref<56x8xbf16, #tpu.memory_space<vmem>>, %arg10: memref<1x8xf32, #tpu.memory_space<vmem>>, %arg11: memref<56x8xbf16, #tpu.memory_space<vmem>>, %arg12: memref<1x8xf32, #tpu.memory_space<vmem>>, %arg13: memref<56x8xbf16, #tpu.memory_space<vmem>>, %arg14: memref<1x8xf32, #tpu.memory_space<vmem>>, %arg15: memref<56x192xbf16, #tpu.memory_space<vmem>>, %arg16: memref<1x192xf32, #tpu.memory_space<vmem>>, %arg17: memref<2x8x8x768xf32, #tpu.memory_space<vmem>>) attributes {dimension_semantics = [#tpu.dimension_semantics<parallel>], iteration_bounds = array<i64: 2>, scalar_prefetch = 0 : i64, scratch_operands = 0 : i64, tpu.core_type = #tpu.core_type<tc>, window_params = [{transform_indices = @transform_0, window_bounds = array<i64: 2, 8, 8, 16>}, {pipeline_mode = #tpu.pipeline_mode<synchronous>, transform_indices = @transform_1, window_bounds = array<i64: 16, 400>}, {pipeline_mode = #tpu.pipeline_mode<synchronous>, transform_indices = @transform_2, window_bounds = array<i64: 1, 208>}, {pipeline_mode = #tpu.pipeline_mode<synchronous>, transform_indices = @transform_3, window_bounds = array<i64: 1, 192>}, {pipeline_mode = #tpu.pipeline_mode<synchronous>, transform_indices = @transform_4, window_bounds = array<i64: 56, 8>}, {pipeline_mode = #tpu.pipeline_mode<synchronous>, transform_indices = @transform_5, window_bounds = array<i64: 1, 8>}, {pipeline_mode = #tpu.pipeline_mode<synchronous>, transform_indices = @transform_6, window_bounds = array<i64: 56, 192>}, {pipeline_mode = #tpu.pipeline_mode<synchronous>, transform_indices = @transform_7, window_bounds = array<i64: 1, 192>}, {pipeline_mode = #tpu.pipeline_mode<synchronous>, transform_indices = @transform_8, window_bounds = array<i64: 56, 8>}, {pipeline_mode = #tpu.pipeline_mode<synchronous>, transform_indices = @transform_9, window_bounds = array<i64: 1, 8>}, {pipeline_mode = #tpu.pipeline_mode<synchronous>, transform_indices = @transform_10, window_bounds = array<i64: 56, 8>}, {pipeline_mode = #tpu.pipeline_mode<synchronous>, transform_indices = @transform_11, window_bounds = array<i64: 1, 8>}, {pipeline_mode = #tpu.pipeline_mode<synchronous>, transform_indices = @transform_12, window_bounds = array<i64: 56, 8>}, {pipeline_mode = #tpu.pipeline_mode<synchronous>, transform_indices = @transform_13, window_bounds = array<i64: 1, 8>}, {pipeline_mode = #tpu.pipeline_mode<synchronous>, transform_indices = @transform_14, window_bounds = array<i64: 56, 192>}, {pipeline_mode = #tpu.pipeline_mode<synchronous>, transform_indices = @transform_15, window_bounds = array<i64: 1, 192>}, {transform_indices = @transform_16, window_bounds = array<i64: 2, 8, 8, 768>}]} {
    %c0 = arith.constant 0 : index
    %c0_0 = arith.constant 0 : index
    %c0_1 = arith.constant 0 : index
    %c0_2 = arith.constant 0 : index
    %0 = vector.load %arg1[%c0, %c0_0, %c0_1, %c0_2] : memref<2x8x8x16xbf16, #tpu.memory_space<vmem>>, vector<2x8x8x16xbf16>
    %1 = vector.shape_cast %0 : vector<2x8x8x16xbf16> to vector<128x16xbf16>
    %c0_3 = arith.constant 0 : index
    %c0_4 = arith.constant 0 : index
    %2 = vector.load %arg2[%c0_3, %c0_4] : memref<16x400xbf16, #tpu.memory_space<vmem>>, vector<16x400xbf16>
    %cst = arith.constant dense<0.000000e+00> : vector<128x400xf32>
    %3 = tpu.matmul %1, %2, %cst {dimension_numbers = #tpu.dot_dimension_numbers<[1], [0], [0], [1], [0, 0, 1, 1], [], []>} : vector<128x16xbf16>, vector<16x400xbf16>, vector<128x400xf32> -> vector<128x400xf32>
    %4 = vector.extract_strided_slice %3 {offsets = [0, 0], sizes = [128, 208], strides = [1, 1]} : vector<128x400xf32> to vector<128x208xf32>
    %c0_5 = arith.constant 0 : index
    %c0_6 = arith.constant 0 : index
    %5 = vector.load %arg3[%c0_5, %c0_6] : memref<1x208xf32, #tpu.memory_space<vmem>>, vector<1x208xf32>
    %6 = vector.broadcast %5 : vector<1x208xf32> to vector<128x208xf32>
    %7 = arith.addf %4, %6 : vector<128x208xf32>
    %cst_7 = arith.constant 0.000000e+00 : f32
    %8 = vector.broadcast %cst_7 : f32 to vector<128x208xf32>
    %9 = arith.maximumf %7, %8 : vector<128x208xf32>
    %10 = vector.extract_strided_slice %9 {offsets = [0, 0], sizes = [128, 192], strides = [1, 1]} : vector<128x208xf32> to vector<128x192xf32>
    %11 = vector.shape_cast %10 : vector<128x192xf32> to vector<2x8x8x192xf32>
    %12 = vector.extract_strided_slice %9 {offsets = [0, 192], sizes = [128, 8], strides = [1, 1]} : vector<128x208xf32> to vector<128x8xf32>
    %13 = arith.truncf %12 : vector<128x8xf32> to vector<128x8xbf16>
    %14 = vector.shape_cast %13 : vector<128x8xbf16> to vector<2x8x8x8xbf16>
    %15 = vector.extract_strided_slice %9 {offsets = [0, 200], sizes = [128, 8], strides = [1, 1]} : vector<128x208xf32> to vector<128x8xf32>
    %16 = arith.truncf %15 : vector<128x8xf32> to vector<128x8xbf16>
    %17 = vector.shape_cast %16 : vector<128x8xbf16> to vector<2x8x8x8xbf16>
    %cst_8 = arith.constant 0.000000e+00 : bf16
    %18 = vector.broadcast %cst_8 : bf16 to vector<2x8x3x8xbf16>
    %19 = tpu.concatenate %18, %14, %18 in 2 : vector<2x8x3x8xbf16>, vector<2x8x8x8xbf16>, vector<2x8x3x8xbf16> -> vector<2x8x14x8xbf16>
    %20 = vector.extract_strided_slice %19 {offsets = [0, 0, 0, 0], sizes = [2, 8, 8, 8], strides = [1, 1, 1, 1]} : vector<2x8x14x8xbf16> to vector<2x8x8x8xbf16>
    %21 = vector.shape_cast %20 : vector<2x8x8x8xbf16> to vector<128x8xbf16>
    %22 = vector.extract_strided_slice %19 {offsets = [0, 0, 1, 0], sizes = [2, 8, 8, 8], strides = [1, 1, 1, 1]} : vector<2x8x14x8xbf16> to vector<2x8x8x8xbf16>
    %23 = vector.shape_cast %22 : vector<2x8x8x8xbf16> to vector<128x8xbf16>
    %24 = vector.extract_strided_slice %19 {offsets = [0, 0, 2, 0], sizes = [2, 8, 8, 8], strides = [1, 1, 1, 1]} : vector<2x8x14x8xbf16> to vector<2x8x8x8xbf16>
    %25 = vector.shape_cast %24 : vector<2x8x8x8xbf16> to vector<128x8xbf16>
    %26 = vector.extract_strided_slice %19 {offsets = [0, 0, 3, 0], sizes = [2, 8, 8, 8], strides = [1, 1, 1, 1]} : vector<2x8x14x8xbf16> to vector<2x8x8x8xbf16>
    %27 = vector.shape_cast %26 : vector<2x8x8x8xbf16> to vector<128x8xbf16>
    %28 = vector.extract_strided_slice %19 {offsets = [0, 0, 4, 0], sizes = [2, 8, 8, 8], strides = [1, 1, 1, 1]} : vector<2x8x14x8xbf16> to vector<2x8x8x8xbf16>
    %29 = vector.shape_cast %28 : vector<2x8x8x8xbf16> to vector<128x8xbf16>
    %30 = vector.extract_strided_slice %19 {offsets = [0, 0, 5, 0], sizes = [2, 8, 8, 8], strides = [1, 1, 1, 1]} : vector<2x8x14x8xbf16> to vector<2x8x8x8xbf16>
    %31 = vector.shape_cast %30 : vector<2x8x8x8xbf16> to vector<128x8xbf16>
    %32 = vector.extract_strided_slice %19 {offsets = [0, 0, 6, 0], sizes = [2, 8, 8, 8], strides = [1, 1, 1, 1]} : vector<2x8x14x8xbf16> to vector<2x8x8x8xbf16>
    %33 = vector.shape_cast %32 : vector<2x8x8x8xbf16> to vector<128x8xbf16>
    %34 = tpu.concatenate %21, %23, %25, %27, %29, %31, %33 in 1 : vector<128x8xbf16>, vector<128x8xbf16>, vector<128x8xbf16>, vector<128x8xbf16>, vector<128x8xbf16>, vector<128x8xbf16>, vector<128x8xbf16> -> vector<128x56xbf16>
    %c0_9 = arith.constant 0 : index
    %c0_10 = arith.constant 0 : index
    %35 = vector.load %arg5[%c0_9, %c0_10] : memref<56x8xbf16, #tpu.memory_space<vmem>>, vector<56x8xbf16>
    %cst_11 = arith.constant dense<0.000000e+00> : vector<128x8xf32>
    %36 = tpu.matmul %34, %35, %cst_11 {dimension_numbers = #tpu.dot_dimension_numbers<[1], [0], [0], [1], [0, 0, 1, 1], [], []>} : vector<128x56xbf16>, vector<56x8xbf16>, vector<128x8xf32> -> vector<128x8xf32>
    %c0_12 = arith.constant 0 : index
    %c0_13 = arith.constant 0 : index
    %37 = vector.load %arg6[%c0_12, %c0_13] : memref<1x8xf32, #tpu.memory_space<vmem>>, vector<1x8xf32>
    %38 = vector.broadcast %37 : vector<1x8xf32> to vector<128x8xf32>
    %39 = arith.addf %36, %38 : vector<128x8xf32>
    %cst_14 = arith.constant 0.000000e+00 : f32
    %40 = vector.broadcast %cst_14 : f32 to vector<128x8xf32>
    %41 = arith.maximumf %39, %40 : vector<128x8xf32>
    %42 = arith.truncf %41 : vector<128x8xf32> to vector<128x8xbf16>
    %43 = vector.shape_cast %42 : vector<128x8xbf16> to vector<2x8x8x8xbf16>
    %cst_15 = arith.constant 0.000000e+00 : bf16
    %44 = vector.broadcast %cst_15 : bf16 to vector<2x3x8x8xbf16>
    %45 = tpu.concatenate %44, %43, %44 in 1 : vector<2x3x8x8xbf16>, vector<2x8x8x8xbf16>, vector<2x3x8x8xbf16> -> vector<2x14x8x8xbf16>
    %46 = vector.extract_strided_slice %45 {offsets = [0, 0, 0, 0], sizes = [2, 8, 8, 8], strides = [1, 1, 1, 1]} : vector<2x14x8x8xbf16> to vector<2x8x8x8xbf16>
    %47 = vector.shape_cast %46 : vector<2x8x8x8xbf16> to vector<128x8xbf16>
    %48 = vector.extract_strided_slice %45 {offsets = [0, 1, 0, 0], sizes = [2, 8, 8, 8], strides = [1, 1, 1, 1]} : vector<2x14x8x8xbf16> to vector<2x8x8x8xbf16>
    %49 = vector.shape_cast %48 : vector<2x8x8x8xbf16> to vector<128x8xbf16>
    %50 = vector.extract_strided_slice %45 {offsets = [0, 2, 0, 0], sizes = [2, 8, 8, 8], strides = [1, 1, 1, 1]} : vector<2x14x8x8xbf16> to vector<2x8x8x8xbf16>
    %51 = vector.shape_cast %50 : vector<2x8x8x8xbf16> to vector<128x8xbf16>
    %52 = vector.extract_strided_slice %45 {offsets = [0, 3, 0, 0], sizes = [2, 8, 8, 8], strides = [1, 1, 1, 1]} : vector<2x14x8x8xbf16> to vector<2x8x8x8xbf16>
    %53 = vector.shape_cast %52 : vector<2x8x8x8xbf16> to vector<128x8xbf16>
    %54 = vector.extract_strided_slice %45 {offsets = [0, 4, 0, 0], sizes = [2, 8, 8, 8], strides = [1, 1, 1, 1]} : vector<2x14x8x8xbf16> to vector<2x8x8x8xbf16>
    %55 = vector.shape_cast %54 : vector<2x8x8x8xbf16> to vector<128x8xbf16>
    %56 = vector.extract_strided_slice %45 {offsets = [0, 5, 0, 0], sizes = [2, 8, 8, 8], strides = [1, 1, 1, 1]} : vector<2x14x8x8xbf16> to vector<2x8x8x8xbf16>
    %57 = vector.shape_cast %56 : vector<2x8x8x8xbf16> to vector<128x8xbf16>
    %58 = vector.extract_strided_slice %45 {offsets = [0, 6, 0, 0], sizes = [2, 8, 8, 8], strides = [1, 1, 1, 1]} : vector<2x14x8x8xbf16> to vector<2x8x8x8xbf16>
    %59 = vector.shape_cast %58 : vector<2x8x8x8xbf16> to vector<128x8xbf16>
    %60 = tpu.concatenate %47, %49, %51, %53, %55, %57, %59 in 1 : vector<128x8xbf16>, vector<128x8xbf16>, vector<128x8xbf16>, vector<128x8xbf16>, vector<128x8xbf16>, vector<128x8xbf16>, vector<128x8xbf16> -> vector<128x56xbf16>
    %c0_16 = arith.constant 0 : index
    %c0_17 = arith.constant 0 : index
    %61 = vector.load %arg7[%c0_16, %c0_17] : memref<56x192xbf16, #tpu.memory_space<vmem>>, vector<56x192xbf16>
    %cst_18 = arith.constant dense<0.000000e+00> : vector<128x192xf32>
    %62 = tpu.matmul %60, %61, %cst_18 {dimension_numbers = #tpu.dot_dimension_numbers<[1], [0], [0], [1], [0, 0, 1, 1], [], []>} : vector<128x56xbf16>, vector<56x192xbf16>, vector<128x192xf32> -> vector<128x192xf32>
    %c0_19 = arith.constant 0 : index
    %c0_20 = arith.constant 0 : index
    %63 = vector.load %arg8[%c0_19, %c0_20] : memref<1x192xf32, #tpu.memory_space<vmem>>, vector<1x192xf32>
    %64 = vector.broadcast %63 : vector<1x192xf32> to vector<128x192xf32>
    %65 = arith.addf %62, %64 : vector<128x192xf32>
    %cst_21 = arith.constant 0.000000e+00 : f32
    %66 = vector.broadcast %cst_21 : f32 to vector<128x192xf32>
    %67 = arith.maximumf %65, %66 : vector<128x192xf32>
    %68 = vector.shape_cast %67 : vector<128x192xf32> to vector<2x8x8x192xf32>
    %cst_22 = arith.constant 0.000000e+00 : bf16
    %69 = vector.broadcast %cst_22 : bf16 to vector<2x3x8x8xbf16>
    %70 = tpu.concatenate %69, %17, %69 in 1 : vector<2x3x8x8xbf16>, vector<2x8x8x8xbf16>, vector<2x3x8x8xbf16> -> vector<2x14x8x8xbf16>
    %71 = vector.extract_strided_slice %70 {offsets = [0, 0, 0, 0], sizes = [2, 8, 8, 8], strides = [1, 1, 1, 1]} : vector<2x14x8x8xbf16> to vector<2x8x8x8xbf16>
    %72 = vector.shape_cast %71 : vector<2x8x8x8xbf16> to vector<128x8xbf16>
    %73 = vector.extract_strided_slice %70 {offsets = [0, 1, 0, 0], sizes = [2, 8, 8, 8], strides = [1, 1, 1, 1]} : vector<2x14x8x8xbf16> to vector<2x8x8x8xbf16>
    %74 = vector.shape_cast %73 : vector<2x8x8x8xbf16> to vector<128x8xbf16>
    %75 = vector.extract_strided_slice %70 {offsets = [0, 2, 0, 0], sizes = [2, 8, 8, 8], strides = [1, 1, 1, 1]} : vector<2x14x8x8xbf16> to vector<2x8x8x8xbf16>
    %76 = vector.shape_cast %75 : vector<2x8x8x8xbf16> to vector<128x8xbf16>
    %77 = vector.extract_strided_slice %70 {offsets = [0, 3, 0, 0], sizes = [2, 8, 8, 8], strides = [1, 1, 1, 1]} : vector<2x14x8x8xbf16> to vector<2x8x8x8xbf16>
    %78 = vector.shape_cast %77 : vector<2x8x8x8xbf16> to vector<128x8xbf16>
    %79 = vector.extract_strided_slice %70 {offsets = [0, 4, 0, 0], sizes = [2, 8, 8, 8], strides = [1, 1, 1, 1]} : vector<2x14x8x8xbf16> to vector<2x8x8x8xbf16>
    %80 = vector.shape_cast %79 : vector<2x8x8x8xbf16> to vector<128x8xbf16>
    %81 = vector.extract_strided_slice %70 {offsets = [0, 5, 0, 0], sizes = [2, 8, 8, 8], strides = [1, 1, 1, 1]} : vector<2x14x8x8xbf16> to vector<2x8x8x8xbf16>
    %82 = vector.shape_cast %81 : vector<2x8x8x8xbf16> to vector<128x8xbf16>
    %83 = vector.extract_strided_slice %70 {offsets = [0, 6, 0, 0], sizes = [2, 8, 8, 8], strides = [1, 1, 1, 1]} : vector<2x14x8x8xbf16> to vector<2x8x8x8xbf16>
    %84 = vector.shape_cast %83 : vector<2x8x8x8xbf16> to vector<128x8xbf16>
    %85 = tpu.concatenate %72, %74, %76, %78, %80, %82, %84 in 1 : vector<128x8xbf16>, vector<128x8xbf16>, vector<128x8xbf16>, vector<128x8xbf16>, vector<128x8xbf16>, vector<128x8xbf16>, vector<128x8xbf16> -> vector<128x56xbf16>
    %c0_23 = arith.constant 0 : index
    %c0_24 = arith.constant 0 : index
    %86 = vector.load %arg9[%c0_23, %c0_24] : memref<56x8xbf16, #tpu.memory_space<vmem>>, vector<56x8xbf16>
    %cst_25 = arith.constant dense<0.000000e+00> : vector<128x8xf32>
    %87 = tpu.matmul %85, %86, %cst_25 {dimension_numbers = #tpu.dot_dimension_numbers<[1], [0], [0], [1], [0, 0, 1, 1], [], []>} : vector<128x56xbf16>, vector<56x8xbf16>, vector<128x8xf32> -> vector<128x8xf32>
    %c0_26 = arith.constant 0 : index
    %c0_27 = arith.constant 0 : index
    %88 = vector.load %arg10[%c0_26, %c0_27] : memref<1x8xf32, #tpu.memory_space<vmem>>, vector<1x8xf32>
    %89 = vector.broadcast %88 : vector<1x8xf32> to vector<128x8xf32>
    %90 = arith.addf %87, %89 : vector<128x8xf32>
    %cst_28 = arith.constant 0.000000e+00 : f32
    %91 = vector.broadcast %cst_28 : f32 to vector<128x8xf32>
    %92 = arith.maximumf %90, %91 : vector<128x8xf32>
    %93 = arith.truncf %92 : vector<128x8xf32> to vector<128x8xbf16>
    %94 = vector.shape_cast %93 : vector<128x8xbf16> to vector<2x8x8x8xbf16>
    %cst_29 = arith.constant 0.000000e+00 : bf16
    %95 = vector.broadcast %cst_29 : bf16 to vector<2x8x3x8xbf16>
    %96 = tpu.concatenate %95, %94, %95 in 2 : vector<2x8x3x8xbf16>, vector<2x8x8x8xbf16>, vector<2x8x3x8xbf16> -> vector<2x8x14x8xbf16>
    %97 = vector.extract_strided_slice %96 {offsets = [0, 0, 0, 0], sizes = [2, 8, 8, 8], strides = [1, 1, 1, 1]} : vector<2x8x14x8xbf16> to vector<2x8x8x8xbf16>
    %98 = vector.shape_cast %97 : vector<2x8x8x8xbf16> to vector<128x8xbf16>
    %99 = vector.extract_strided_slice %96 {offsets = [0, 0, 1, 0], sizes = [2, 8, 8, 8], strides = [1, 1, 1, 1]} : vector<2x8x14x8xbf16> to vector<2x8x8x8xbf16>
    %100 = vector.shape_cast %99 : vector<2x8x8x8xbf16> to vector<128x8xbf16>
    %101 = vector.extract_strided_slice %96 {offsets = [0, 0, 2, 0], sizes = [2, 8, 8, 8], strides = [1, 1, 1, 1]} : vector<2x8x14x8xbf16> to vector<2x8x8x8xbf16>
    %102 = vector.shape_cast %101 : vector<2x8x8x8xbf16> to vector<128x8xbf16>
    %103 = vector.extract_strided_slice %96 {offsets = [0, 0, 3, 0], sizes = [2, 8, 8, 8], strides = [1, 1, 1, 1]} : vector<2x8x14x8xbf16> to vector<2x8x8x8xbf16>
    %104 = vector.shape_cast %103 : vector<2x8x8x8xbf16> to vector<128x8xbf16>
    %105 = vector.extract_strided_slice %96 {offsets = [0, 0, 4, 0], sizes = [2, 8, 8, 8], strides = [1, 1, 1, 1]} : vector<2x8x14x8xbf16> to vector<2x8x8x8xbf16>
    %106 = vector.shape_cast %105 : vector<2x8x8x8xbf16> to vector<128x8xbf16>
    %107 = vector.extract_strided_slice %96 {offsets = [0, 0, 5, 0], sizes = [2, 8, 8, 8], strides = [1, 1, 1, 1]} : vector<2x8x14x8xbf16> to vector<2x8x8x8xbf16>
    %108 = vector.shape_cast %107 : vector<2x8x8x8xbf16> to vector<128x8xbf16>
    %109 = vector.extract_strided_slice %96 {offsets = [0, 0, 6, 0], sizes = [2, 8, 8, 8], strides = [1, 1, 1, 1]} : vector<2x8x14x8xbf16> to vector<2x8x8x8xbf16>
    %110 = vector.shape_cast %109 : vector<2x8x8x8xbf16> to vector<128x8xbf16>
    %111 = tpu.concatenate %98, %100, %102, %104, %106, %108, %110 in 1 : vector<128x8xbf16>, vector<128x8xbf16>, vector<128x8xbf16>, vector<128x8xbf16>, vector<128x8xbf16>, vector<128x8xbf16>, vector<128x8xbf16> -> vector<128x56xbf16>
    %c0_30 = arith.constant 0 : index
    %c0_31 = arith.constant 0 : index
    %112 = vector.load %arg11[%c0_30, %c0_31] : memref<56x8xbf16, #tpu.memory_space<vmem>>, vector<56x8xbf16>
    %cst_32 = arith.constant dense<0.000000e+00> : vector<128x8xf32>
    %113 = tpu.matmul %111, %112, %cst_32 {dimension_numbers = #tpu.dot_dimension_numbers<[1], [0], [0], [1], [0, 0, 1, 1], [], []>} : vector<128x56xbf16>, vector<56x8xbf16>, vector<128x8xf32> -> vector<128x8xf32>
    %c0_33 = arith.constant 0 : index
    %c0_34 = arith.constant 0 : index
    %114 = vector.load %arg12[%c0_33, %c0_34] : memref<1x8xf32, #tpu.memory_space<vmem>>, vector<1x8xf32>
    %115 = vector.broadcast %114 : vector<1x8xf32> to vector<128x8xf32>
    %116 = arith.addf %113, %115 : vector<128x8xf32>
    %cst_35 = arith.constant 0.000000e+00 : f32
    %117 = vector.broadcast %cst_35 : f32 to vector<128x8xf32>
    %118 = arith.maximumf %116, %117 : vector<128x8xf32>
    %119 = arith.truncf %118 : vector<128x8xf32> to vector<128x8xbf16>
    %120 = vector.shape_cast %119 : vector<128x8xbf16> to vector<2x8x8x8xbf16>
    %cst_36 = arith.constant 0.000000e+00 : bf16
    %121 = vector.broadcast %cst_36 : bf16 to vector<2x3x8x8xbf16>
    %122 = tpu.concatenate %121, %120, %121 in 1 : vector<2x3x8x8xbf16>, vector<2x8x8x8xbf16>, vector<2x3x8x8xbf16> -> vector<2x14x8x8xbf16>
    %123 = vector.extract_strided_slice %122 {offsets = [0, 0, 0, 0], sizes = [2, 8, 8, 8], strides = [1, 1, 1, 1]} : vector<2x14x8x8xbf16> to vector<2x8x8x8xbf16>
    %124 = vector.shape_cast %123 : vector<2x8x8x8xbf16> to vector<128x8xbf16>
    %125 = vector.extract_strided_slice %122 {offsets = [0, 1, 0, 0], sizes = [2, 8, 8, 8], strides = [1, 1, 1, 1]} : vector<2x14x8x8xbf16> to vector<2x8x8x8xbf16>
    %126 = vector.shape_cast %125 : vector<2x8x8x8xbf16> to vector<128x8xbf16>
    %127 = vector.extract_strided_slice %122 {offsets = [0, 2, 0, 0], sizes = [2, 8, 8, 8], strides = [1, 1, 1, 1]} : vector<2x14x8x8xbf16> to vector<2x8x8x8xbf16>
    %128 = vector.shape_cast %127 : vector<2x8x8x8xbf16> to vector<128x8xbf16>
    %129 = vector.extract_strided_slice %122 {offsets = [0, 3, 0, 0], sizes = [2, 8, 8, 8], strides = [1, 1, 1, 1]} : vector<2x14x8x8xbf16> to vector<2x8x8x8xbf16>
    %130 = vector.shape_cast %129 : vector<2x8x8x8xbf16> to vector<128x8xbf16>
    %131 = vector.extract_strided_slice %122 {offsets = [0, 4, 0, 0], sizes = [2, 8, 8, 8], strides = [1, 1, 1, 1]} : vector<2x14x8x8xbf16> to vector<2x8x8x8xbf16>
    %132 = vector.shape_cast %131 : vector<2x8x8x8xbf16> to vector<128x8xbf16>
    %133 = vector.extract_strided_slice %122 {offsets = [0, 5, 0, 0], sizes = [2, 8, 8, 8], strides = [1, 1, 1, 1]} : vector<2x14x8x8xbf16> to vector<2x8x8x8xbf16>
    %134 = vector.shape_cast %133 : vector<2x8x8x8xbf16> to vector<128x8xbf16>
    %135 = vector.extract_strided_slice %122 {offsets = [0, 6, 0, 0], sizes = [2, 8, 8, 8], strides = [1, 1, 1, 1]} : vector<2x14x8x8xbf16> to vector<2x8x8x8xbf16>
    %136 = vector.shape_cast %135 : vector<2x8x8x8xbf16> to vector<128x8xbf16>
    %137 = tpu.concatenate %124, %126, %128, %130, %132, %134, %136 in 1 : vector<128x8xbf16>, vector<128x8xbf16>, vector<128x8xbf16>, vector<128x8xbf16>, vector<128x8xbf16>, vector<128x8xbf16>, vector<128x8xbf16> -> vector<128x56xbf16>
    %c0_37 = arith.constant 0 : index
    %c0_38 = arith.constant 0 : index
    %138 = vector.load %arg13[%c0_37, %c0_38] : memref<56x8xbf16, #tpu.memory_space<vmem>>, vector<56x8xbf16>
    %cst_39 = arith.constant dense<0.000000e+00> : vector<128x8xf32>
    %139 = tpu.matmul %137, %138, %cst_39 {dimension_numbers = #tpu.dot_dimension_numbers<[1], [0], [0], [1], [0, 0, 1, 1], [], []>} : vector<128x56xbf16>, vector<56x8xbf16>, vector<128x8xf32> -> vector<128x8xf32>
    %c0_40 = arith.constant 0 : index
    %c0_41 = arith.constant 0 : index
    %140 = vector.load %arg14[%c0_40, %c0_41] : memref<1x8xf32, #tpu.memory_space<vmem>>, vector<1x8xf32>
    %141 = vector.broadcast %140 : vector<1x8xf32> to vector<128x8xf32>
    %142 = arith.addf %139, %141 : vector<128x8xf32>
    %cst_42 = arith.constant 0.000000e+00 : f32
    %143 = vector.broadcast %cst_42 : f32 to vector<128x8xf32>
    %144 = arith.maximumf %142, %143 : vector<128x8xf32>
    %145 = arith.truncf %144 : vector<128x8xf32> to vector<128x8xbf16>
    %146 = vector.shape_cast %145 : vector<128x8xbf16> to vector<2x8x8x8xbf16>
    %cst_43 = arith.constant 0.000000e+00 : bf16
    %147 = vector.broadcast %cst_43 : bf16 to vector<2x8x3x8xbf16>
    %148 = tpu.concatenate %147, %146, %147 in 2 : vector<2x8x3x8xbf16>, vector<2x8x8x8xbf16>, vector<2x8x3x8xbf16> -> vector<2x8x14x8xbf16>
    %149 = vector.extract_strided_slice %148 {offsets = [0, 0, 0, 0], sizes = [2, 8, 8, 8], strides = [1, 1, 1, 1]} : vector<2x8x14x8xbf16> to vector<2x8x8x8xbf16>
    %150 = vector.shape_cast %149 : vector<2x8x8x8xbf16> to vector<128x8xbf16>
    %151 = vector.extract_strided_slice %148 {offsets = [0, 0, 1, 0], sizes = [2, 8, 8, 8], strides = [1, 1, 1, 1]} : vector<2x8x14x8xbf16> to vector<2x8x8x8xbf16>
    %152 = vector.shape_cast %151 : vector<2x8x8x8xbf16> to vector<128x8xbf16>
    %153 = vector.extract_strided_slice %148 {offsets = [0, 0, 2, 0], sizes = [2, 8, 8, 8], strides = [1, 1, 1, 1]} : vector<2x8x14x8xbf16> to vector<2x8x8x8xbf16>
    %154 = vector.shape_cast %153 : vector<2x8x8x8xbf16> to vector<128x8xbf16>
    %155 = vector.extract_strided_slice %148 {offsets = [0, 0, 3, 0], sizes = [2, 8, 8, 8], strides = [1, 1, 1, 1]} : vector<2x8x14x8xbf16> to vector<2x8x8x8xbf16>
    %156 = vector.shape_cast %155 : vector<2x8x8x8xbf16> to vector<128x8xbf16>
    %157 = vector.extract_strided_slice %148 {offsets = [0, 0, 4, 0], sizes = [2, 8, 8, 8], strides = [1, 1, 1, 1]} : vector<2x8x14x8xbf16> to vector<2x8x8x8xbf16>
    %158 = vector.shape_cast %157 : vector<2x8x8x8xbf16> to vector<128x8xbf16>
    %159 = vector.extract_strided_slice %148 {offsets = [0, 0, 5, 0], sizes = [2, 8, 8, 8], strides = [1, 1, 1, 1]} : vector<2x8x14x8xbf16> to vector<2x8x8x8xbf16>
    %160 = vector.shape_cast %159 : vector<2x8x8x8xbf16> to vector<128x8xbf16>
    %161 = vector.extract_strided_slice %148 {offsets = [0, 0, 6, 0], sizes = [2, 8, 8, 8], strides = [1, 1, 1, 1]} : vector<2x8x14x8xbf16> to vector<2x8x8x8xbf16>
    %162 = vector.shape_cast %161 : vector<2x8x8x8xbf16> to vector<128x8xbf16>
    %163 = tpu.concatenate %150, %152, %154, %156, %158, %160, %162 in 1 : vector<128x8xbf16>, vector<128x8xbf16>, vector<128x8xbf16>, vector<128x8xbf16>, vector<128x8xbf16>, vector<128x8xbf16>, vector<128x8xbf16> -> vector<128x56xbf16>
    %c0_44 = arith.constant 0 : index
    %c0_45 = arith.constant 0 : index
    %164 = vector.load %arg15[%c0_44, %c0_45] : memref<56x192xbf16, #tpu.memory_space<vmem>>, vector<56x192xbf16>
    %cst_46 = arith.constant dense<0.000000e+00> : vector<128x192xf32>
    %165 = tpu.matmul %163, %164, %cst_46 {dimension_numbers = #tpu.dot_dimension_numbers<[1], [0], [0], [1], [0, 0, 1, 1], [], []>} : vector<128x56xbf16>, vector<56x192xbf16>, vector<128x192xf32> -> vector<128x192xf32>
    %c0_47 = arith.constant 0 : index
    %c0_48 = arith.constant 0 : index
    %166 = vector.load %arg16[%c0_47, %c0_48] : memref<1x192xf32, #tpu.memory_space<vmem>>, vector<1x192xf32>
    %167 = vector.broadcast %166 : vector<1x192xf32> to vector<128x192xf32>
    %168 = arith.addf %165, %167 : vector<128x192xf32>
    %cst_49 = arith.constant 0.000000e+00 : f32
    %169 = vector.broadcast %cst_49 : f32 to vector<128x192xf32>
    %170 = arith.maximumf %168, %169 : vector<128x192xf32>
    %171 = vector.shape_cast %170 : vector<128x192xf32> to vector<2x8x8x192xf32>
    %172 = vector.extract_strided_slice %3 {offsets = [0, 208], sizes = [128, 192], strides = [1, 1]} : vector<128x400xf32> to vector<128x192xf32>
    %173 = vector.shape_cast %172 : vector<128x192xf32> to vector<2x8x8x192xf32>
    %cst_50 = arith.constant 0.000000e+00 : f32
    %174 = vector.broadcast %cst_50 : f32 to vector<2x1x8x192xf32>
    %cst_51 = arith.constant 0.000000e+00 : f32
    %175 = vector.broadcast %cst_51 : f32 to vector<2x10x1x192xf32>
    %176 = tpu.concatenate %174, %173, %174 in 1 : vector<2x1x8x192xf32>, vector<2x8x8x192xf32>, vector<2x1x8x192xf32> -> vector<2x10x8x192xf32>
    %177 = tpu.concatenate %175, %176, %175 in 2 : vector<2x10x1x192xf32>, vector<2x10x8x192xf32>, vector<2x10x1x192xf32> -> vector<2x10x10x192xf32>
    %cst_52 = arith.constant 0.000000e+00 : f32
    %178 = vector.broadcast %cst_52 : f32 to vector<2x8x8x192xf32>
    %179 = vector.extract_strided_slice %177 {offsets = [0, 0, 0, 0], sizes = [2, 8, 8, 192], strides = [1, 1, 1, 1]} : vector<2x10x10x192xf32> to vector<2x8x8x192xf32>
    %180 = arith.addf %178, %179 : vector<2x8x8x192xf32>
    %181 = vector.extract_strided_slice %177 {offsets = [0, 0, 1, 0], sizes = [2, 8, 8, 192], strides = [1, 1, 1, 1]} : vector<2x10x10x192xf32> to vector<2x8x8x192xf32>
    %182 = arith.addf %180, %181 : vector<2x8x8x192xf32>
    %183 = vector.extract_strided_slice %177 {offsets = [0, 0, 2, 0], sizes = [2, 8, 8, 192], strides = [1, 1, 1, 1]} : vector<2x10x10x192xf32> to vector<2x8x8x192xf32>
    %184 = arith.addf %182, %183 : vector<2x8x8x192xf32>
    %185 = vector.extract_strided_slice %177 {offsets = [0, 1, 0, 0], sizes = [2, 8, 8, 192], strides = [1, 1, 1, 1]} : vector<2x10x10x192xf32> to vector<2x8x8x192xf32>
    %186 = arith.addf %184, %185 : vector<2x8x8x192xf32>
    %187 = vector.extract_strided_slice %177 {offsets = [0, 1, 1, 0], sizes = [2, 8, 8, 192], strides = [1, 1, 1, 1]} : vector<2x10x10x192xf32> to vector<2x8x8x192xf32>
    %188 = arith.addf %186, %187 : vector<2x8x8x192xf32>
    %189 = vector.extract_strided_slice %177 {offsets = [0, 1, 2, 0], sizes = [2, 8, 8, 192], strides = [1, 1, 1, 1]} : vector<2x10x10x192xf32> to vector<2x8x8x192xf32>
    %190 = arith.addf %188, %189 : vector<2x8x8x192xf32>
    %191 = vector.extract_strided_slice %177 {offsets = [0, 2, 0, 0], sizes = [2, 8, 8, 192], strides = [1, 1, 1, 1]} : vector<2x10x10x192xf32> to vector<2x8x8x192xf32>
    %192 = arith.addf %190, %191 : vector<2x8x8x192xf32>
    %193 = vector.extract_strided_slice %177 {offsets = [0, 2, 1, 0], sizes = [2, 8, 8, 192], strides = [1, 1, 1, 1]} : vector<2x10x10x192xf32> to vector<2x8x8x192xf32>
    %194 = arith.addf %192, %193 : vector<2x8x8x192xf32>
    %195 = vector.extract_strided_slice %177 {offsets = [0, 2, 2, 0], sizes = [2, 8, 8, 192], strides = [1, 1, 1, 1]} : vector<2x10x10x192xf32> to vector<2x8x8x192xf32>
    %196 = arith.addf %194, %195 : vector<2x8x8x192xf32>
    %cst_53 = arith.constant 0.111111112 : f32
    %197 = vector.broadcast %cst_53 : f32 to vector<2x8x8x192xf32>
    %198 = arith.mulf %196, %197 : vector<2x8x8x192xf32>
    %c0_54 = arith.constant 0 : index
    %c0_55 = arith.constant 0 : index
    %199 = vector.load %arg4[%c0_54, %c0_55] : memref<1x192xf32, #tpu.memory_space<vmem>>, vector<1x192xf32>
    %200 = vector.shape_cast %199 : vector<1x192xf32> to vector<1x1x1x192xf32>
    %201 = vector.broadcast %200 : vector<1x1x1x192xf32> to vector<2x8x8x192xf32>
    %202 = arith.addf %198, %201 : vector<2x8x8x192xf32>
    %cst_56 = arith.constant 0.000000e+00 : f32
    %203 = vector.broadcast %cst_56 : f32 to vector<2x8x8x192xf32>
    %204 = arith.maximumf %202, %203 : vector<2x8x8x192xf32>
    %205 = tpu.concatenate %11, %68, %171, %204 in 3 : vector<2x8x8x192xf32>, vector<2x8x8x192xf32>, vector<2x8x8x192xf32>, vector<2x8x8x192xf32> -> vector<2x8x8x768xf32>
    %c0_57 = arith.constant 0 : index
    %c0_58 = arith.constant 0 : index
    %c0_59 = arith.constant 0 : index
    %c0_60 = arith.constant 0 : index
    %206 = vector.load %arg17[%c0_57, %c0_58, %c0_59, %c0_60] : memref<2x8x8x768xf32, #tpu.memory_space<vmem>>, vector<2x8x8x768xf32>
    tpu.vector_store %arg17[%c0_57, %c0_58, %c0_59, %c0_60], %205 {strides = array<i32>} : memref<2x8x8x768xf32, #tpu.memory_space<vmem>>, vector<2x8x8x768xf32>,
    return
  }
  func.func @transform_0(%arg0: i32) -> (i32, i32, i32, i32) {
    %c0_i32 = arith.constant 0 : i32
    %c0_i32_0 = arith.constant 0 : i32
    %c0_i32_1 = arith.constant 0 : i32
    %c0_i32_2 = arith.constant 0 : i32
    return %arg0, %c0_i32, %c0_i32_0, %c0_i32_1 : i32, i32, i32, i32
  }
  func.func @transform_1(%arg0: i32) -> (i32, i32) {
    %c0_i32 = arith.constant 0 : i32
    %c0_i32_0 = arith.constant 0 : i32
    %c0_i32_1 = arith.constant 0 : i32
    return %c0_i32, %c0_i32_0 : i32, i32
  }
  func.func @transform_2(%arg0: i32) -> (i32, i32) {
    %c0_i32 = arith.constant 0 : i32
    %c0_i32_0 = arith.constant 0 : i32
    %c0_i32_1 = arith.constant 0 : i32
    return %c0_i32, %c0_i32_0 : i32, i32
  }
  func.func @transform_3(%arg0: i32) -> (i32, i32) {
    %c0_i32 = arith.constant 0 : i32
    %c0_i32_0 = arith.constant 0 : i32
    %c0_i32_1 = arith.constant 0 : i32
    return %c0_i32, %c0_i32_0 : i32, i32
  }
  func.func @transform_4(%arg0: i32) -> (i32, i32) {
    %c0_i32 = arith.constant 0 : i32
    %c0_i32_0 = arith.constant 0 : i32
    %c0_i32_1 = arith.constant 0 : i32
    return %c0_i32, %c0_i32_0 : i32, i32
  }
  func.func @transform_5(%arg0: i32) -> (i32, i32) {
    %c0_i32 = arith.constant 0 : i32
    %c0_i32_0 = arith.constant 0 : i32
    %c0_i32_1 = arith.constant 0 : i32
    return %c0_i32, %c0_i32_0 : i32, i32
  }
  func.func @transform_6(%arg0: i32) -> (i32, i32) {
    %c0_i32 = arith.constant 0 : i32
    %c0_i32_0 = arith.constant 0 : i32
    %c0_i32_1 = arith.constant 0 : i32
    return %c0_i32, %c0_i32_0 : i32, i32
  }
  func.func @transform_7(%arg0: i32) -> (i32, i32) {
    %c0_i32 = arith.constant 0 : i32
    %c0_i32_0 = arith.constant 0 : i32
    %c0_i32_1 = arith.constant 0 : i32
    return %c0_i32, %c0_i32_0 : i32, i32
  }
  func.func @transform_8(%arg0: i32) -> (i32, i32) {
    %c0_i32 = arith.constant 0 : i32
    %c0_i32_0 = arith.constant 0 : i32
    %c0_i32_1 = arith.constant 0 : i32
    return %c0_i32, %c0_i32_0 : i32, i32
  }
  func.func @transform_9(%arg0: i32) -> (i32, i32) {
    %c0_i32 = arith.constant 0 : i32
    %c0_i32_0 = arith.constant 0 : i32
    %c0_i32_1 = arith.constant 0 : i32
    return %c0_i32, %c0_i32_0 : i32, i32
  }
  func.func @transform_10(%arg0: i32) -> (i32, i32) {
    %c0_i32 = arith.constant 0 : i32
    %c0_i32_0 = arith.constant 0 : i32
    %c0_i32_1 = arith.constant 0 : i32
    return %c0_i32, %c0_i32_0 : i32, i32
  }
  func.func @transform_11(%arg0: i32) -> (i32, i32) {
    %c0_i32 = arith.constant 0 : i32
    %c0_i32_0 = arith.constant 0 : i32
    %c0_i32_1 = arith.constant 0 : i32
    return %c0_i32, %c0_i32_0 : i32, i32
  }
  func.func @transform_12(%arg0: i32) -> (i32, i32) {
    %c0_i32 = arith.constant 0 : i32
    %c0_i32_0 = arith.constant 0 : i32
    %c0_i32_1 = arith.constant 0 : i32
    return %c0_i32, %c0_i32_0 : i32, i32
  }
  func.func @transform_13(%arg0: i32) -> (i32, i32) {
    %c0_i32 = arith.constant 0 : i32
    %c0_i32_0 = arith.constant 0 : i32
    %c0_i32_1 = arith.constant 0 : i32
    return %c0_i32, %c0_i32_0 : i32, i32
  }
  func.func @transform_14(%arg0: i32) -> (i32, i32) {
    %c0_i32 = arith.constant 0 : i32
    %c0_i32_0 = arith.constant 0 : i32
    %c0_i32_1 = arith.constant 0 : i32
    return %c0_i32, %c0_i32_0 : i32, i32
  }
  func.func @transform_15(%arg0: i32) -> (i32, i32) {
    %c0_i32 = arith.constant 0 : i32
    %c0_i32_0 = arith.constant 0 : i32
    %c0_i32_1 = arith.constant 0 : i32
    return %c0_i32, %c0_i32_0 : i32, i32
  }
  func.func @transform_16(%arg0: i32) -> (i32, i32, i32, i32) {
    %c0_i32 = arith.constant 0 : i32
    %c0_i32_0 = arith.constant 0 : i32
    %c0_i32_1 = arith.constant 0 : i32
    %c0_i32_2 = arith.constant 0 : i32
    return %arg0, %c0_i32, %c0_i32_0, %c0_i32_1 : i32, i32, i32, i32
  }
}

</mosaic_0001>

<llo_original>
// kernel: inception_c_forward.1
$region0: #{inception_c_forward.1}
  #allocation0 [shape = 'u32[]', space=smem, size = 0x4, offset = 0x4, fixed_abs, tag = 'smem constant byte address 0x4 - core index']
  #allocation1 [shape = 'u32[144,128]{1,0:T(1,128)}', space=vmem, size = 0x12000, scoped, tag = 'internal scratch']
  %s0 = inlined_call_operand.vmem [shape: bf16[4,8,8,16], index: 0, kind: input, shape index: {}]
  %s1 = inlined_call_operand.vmem [shape: bf16[16,400], index: 1, kind: input, shape index: {}]
  %s2 = inlined_call_operand.vmem [shape: f32[1,208], index: 2, kind: input, shape index: {}]
  %s3 = inlined_call_operand.vmem [shape: f32[1,192], index: 3, kind: input, shape index: {}]
  %s4 = inlined_call_operand.vmem [shape: bf16[56,8], index: 4, kind: input, shape index: {}]
  %s5 = inlined_call_operand.vmem [shape: f32[1,8], index: 5, kind: input, shape index: {}]
  %s6 = inlined_call_operand.vmem [shape: bf16[56,192], index: 6, kind: input, shape index: {}]
  %s7 = inlined_call_operand.vmem [shape: f32[1,192], index: 7, kind: input, shape index: {}]
  %s8 = inlined_call_operand.vmem [shape: bf16[56,8], index: 8, kind: input, shape index: {}]
  %s9 = inlined_call_operand.vmem [shape: f32[1,8], index: 9, kind: input, shape index: {}]
  %s10 = inlined_call_operand.vmem [shape: bf16[56,8], index: 10, kind: input, shape index: {}]
  %s11 = inlined_call_operand.vmem [shape: f32[1,8], index: 11, kind: input, shape index: {}]
  %s12 = inlined_call_operand.vmem [shape: bf16[56,8], index: 12, kind: input, shape index: {}]
  %s13 = inlined_call_operand.vmem [shape: f32[1,8], index: 13, kind: input, shape index: {}]
  %s14 = inlined_call_operand.vmem [shape: bf16[56,192], index: 14, kind: input, shape index: {}]
  %s15 = inlined_call_operand.vmem [shape: f32[1,192], index: 15, kind: input, shape index: {}]
  %s16 = inlined_call_operand.hbm [shape: f32[4,8,8,768], index: 16, kind: output, shape index: {}]
  %s17 = sld [smem:[#allocation0]]
  $region97: #{inception_c_forward.1} parent=0
    _
  %s19 = ssub.s32 1, %s17
  %s20 = scalar_select 0, %s19, %s17
  $region1: #{inception_c_forward.1} parent=0
    #allocation2 [shape = 'u8[786432]{0}', space=vmem, size = 0xc0000, scoped, tag = 'output window, operand 0']
    #allocation3 [shape = 's32[2]{0}', space=sflag, size = 0x8, scoped, tag = 'scoped memory for inception_c_forward.1']
    %21 = vsyncpa [#allocation3], 0
    %s22 = scalar_lea.sflag [#allocation3], 1
    %23 = vsyncpa %s22, 0
    loop: start=0, step=1, limit=4
    $region2: #{inception_c_forward.1} parent=1 // loop_pre_header
      _
    $region3: #{inception_c_forward.1} parent=1 // loop_header
      %s25 = sphi 0, %s29
      %p26 = scmp.ge.s32.totalorder %s25, 4
      %s35 = sphi 0, %s37
      %s38 = sphi 0, %s35
      %s39 = sphi 0, %s38
      %s55 = sphi 0, %s39
      %s59 = sphi 0, %s59
      %s61 = sphi 0, %s59
      %s62 = sphi 0, %s61
      %s76 = sphi 0, %s62
      %s80 = sphi 0, %s80
      %s82 = sphi 0, %s80
      %s83 = sphi 0, %s82
      %s97 = sphi 0, %s83
      %s101 = sphi 0, %s101
      %s103 = sphi 0, %s101
      %s104 = sphi 0, %s103
      %s118 = sphi 0, %s104
      %s122 = sphi 0, %s122
      %s124 = sphi 0, %s122
      %s125 = sphi 0, %s124
      %s139 = sphi 0, %s125
      %s143 = sphi 0, %s143
      %s145 = sphi 0, %s143
      %s146 = sphi 0, %s145
      %s160 = sphi 0, %s146
      %s164 = sphi 0, %s164
      %s166 = sphi 0, %s164
      %s167 = sphi 0, %s166
      %s181 = sphi 0, %s167
      %s185 = sphi 0, %s185
      %s187 = sphi 0, %s185
      %s188 = sphi 0, %s187
      %s202 = sphi 0, %s188
      %s206 = sphi 0, %s206
      %s208 = sphi 0, %s206
      %s209 = sphi 0, %s208
      %s223 = sphi 0, %s209
      %s227 = sphi 0, %s227
      %s229 = sphi 0, %s227
      %s230 = sphi 0, %s229
      %s244 = sphi 0, %s230
      %s248 = sphi 0, %s248
      %s250 = sphi 0, %s248
      %s251 = sphi 0, %s250
      %s265 = sphi 0, %s251
      %s269 = sphi 0, %s269
      %s271 = sphi 0, %s269
      %s272 = sphi 0, %s271
      %s286 = sphi 0, %s272
      %s290 = sphi 0, %s290
      %s292 = sphi 0, %s290
      %s293 = sphi 0, %s292
      %s307 = sphi 0, %s293
      %s311 = sphi 0, %s311
      %s313 = sphi 0, %s311
      %s314 = sphi 0, %s313
      %s328 = sphi 0, %s314
      %s332 = sphi 0, %s332
      %s334 = sphi 0, %s332
      %s335 = sphi 0, %s334
      %s349 = sphi 0, %s335
      %s353 = sphi 0, %s353
      %s355 = sphi 0, %s353
      %s356 = sphi 0, %s355
      %s370 = sphi 0, %s356
      %s376 = sphi 0, %s378
      %s379 = sphi 0, %s376
      %s380 = sphi 0, %s379
      %s396 = sphi 0, %s380
    $region4: #{inception_c_forward.1} parent=1 // loop_header_branch
      %28 = sbr.rel (%p26) target = $region8
    $region5: #{inception_c_forward.1} parent=1 // loop_body
      %s30 = ssub.s32 %s25, 1
      %s31 = ssub.s32 %s25, 2
      %s32 = sadd.s32 %s25, 1
      %s33 = ssub.s32 %s25, %s32
      %p34 = scmp.eq.s32.totalorder %s33, 0
      %s36 = sadd.s32 %s35, 1
      %s37 = scalar_select %p34, %s35, %s36
      %p40 = pneg %p34
      %p41 = scmp.eq.s32.totalorder %s25, 1
      %p42 = por %p40, %p41
      %p43 = scmp.ne.s32.totalorder %s35, %s38
      %p44 = scmp.eq.s32.totalorder %s25, 0
      %p45 = por %p43, %p44
      %p46 = scmp.ne.s32.totalorder %s35, %s38
      %p47 = scmp.eq.s32.totalorder %s30, 1
      %p48 = por %p46, %p47
      %p49 = scmp.ne.s32.totalorder %s38, %s39
      %p50 = scmp.eq.s32.totalorder %s30, 0
      %p51 = por %p49, %p50
      %p52 = scmp.ne.s32.totalorder %s38, %s39
      %p53 = scmp.eq.s32.totalorder %s31, 1
      %p54 = por %p52, %p53
      %p56 = scmp.ne.s32.totalorder %s39, %s55
      %p57 = scmp.eq.s32.totalorder %s31, 0
      %p58 = por %p56, %p57
      %s60 = sadd.s32 %s59, 1
      %p63 = scmp.eq.s32.totalorder %s25, 1
      %p64 = scmp.ne.s32.totalorder %s59, %s61
      %p65 = scmp.eq.s32.totalorder %s25, 0
      %p66 = por %p64, %p65
      %p67 = scmp.ne.s32.totalorder %s59, %s61
      %p68 = scmp.eq.s32.totalorder %s30, 1
      %p69 = por %p67, %p68
      %p70 = scmp.ne.s32.totalorder %s61, %s62
      %p71 = scmp.eq.s32.totalorder %s30, 0
      %p72 = por %p70, %p71
      %p73 = scmp.ne.s32.totalorder %s61, %s62
      %p74 = scmp.eq.s32.totalorder %s31, 1
      %p75 = por %p73, %p74
      %p77 = scmp.ne.s32.totalorder %s62, %s76
      %p78 = scmp.eq.s32.totalorder %s31, 0
      %p79 = por %p77, %p78
      %s81 = sadd.s32 %s80, 1
      %p84 = scmp.eq.s32.totalorder %s25, 1
      %p85 = scmp.ne.s32.totalorder %s80, %s82
      %p86 = scmp.eq.s32.totalorder %s25, 0
      %p87 = por %p85, %p86
      %p88 = scmp.ne.s32.totalorder %s80, %s82
      %p89 = scmp.eq.s32.totalorder %s30, 1
      %p90 = por %p88, %p89
      %p91 = scmp.ne.s32.totalorder %s82, %s83
      %p92 = scmp.eq.s32.totalorder %s30, 0
      %p93 = por %p91, %p92
      %p94 = scmp.ne.s32.totalorder %s82, %s83
      %p95 = scmp.eq.s32.totalorder %s31, 1
      %p96 = por %p94, %p95
      %p98 = scmp.ne.s32.totalorder %s83, %s97
      %p99 = scmp.eq.s32.totalorder %s31, 0
      %p100 = por %p98, %p99
      %s102 = sadd.s32 %s101, 1
      %p105 = scmp.eq.s32.totalorder %s25, 1
      %p106 = scmp.ne.s32.totalorder %s101, %s103
      %p107 = scmp.eq.s32.totalorder %s25, 0
      %p108 = por %p106, %p107
      %p109 = scmp.ne.s32.totalorder %s101, %s103
      %p110 = scmp.eq.s32.totalorder %s30, 1
      %p111 = por %p109, %p110
      %p112 = scmp.ne.s32.totalorder %s103, %s104
      %p113 = scmp.eq.s32.totalorder %s30, 0
      %p114 = por %p112, %p113
      %p115 = scmp.ne.s32.totalorder %s103, %s104
      %p116 = scmp.eq.s32.totalorder %s31, 1
      %p117 = por %p115, %p116
      %p119 = scmp.ne.s32.totalorder %s104, %s118
      %p120 = scmp.eq.s32.totalorder %s31, 0
      %p121 = por %p119, %p120
      %s123 = sadd.s32 %s122, 1
      %p126 = scmp.eq.s32.totalorder %s25, 1
      %p127 = scmp.ne.s32.totalorder %s122, %s124
      %p128 = scmp.eq.s32.totalorder %s25, 0
      %p129 = por %p127, %p128
      %p130 = scmp.ne.s32.totalorder %s122, %s124
      %p131 = scmp.eq.s32.totalorder %s30, 1
      %p132 = por %p130, %p131
      %p133 = scmp.ne.s32.totalorder %s124, %s125
      %p134 = scmp.eq.s32.totalorder %s30, 0
      %p135 = por %p133, %p134
      %p136 = scmp.ne.s32.totalorder %s124, %s125
      %p137 = scmp.eq.s32.totalorder %s31, 1
      %p138 = por %p136, %p137
      %p140 = scmp.ne.s32.totalorder %s125, %s139
      %p141 = scmp.eq.s32.totalorder %s31, 0
      %p142 = por %p140, %p141
      %s144 = sadd.s32 %s143, 1
      %p147 = scmp.eq.s32.totalorder %s25, 1
      %p148 = scmp.ne.s32.totalorder %s143, %s145
      %p149 = scmp.eq.s32.totalorder %s25, 0
      %p150 = por %p148, %p149
      %p151 = scmp.ne.s32.totalorder %s143, %s145
      %p152 = scmp.eq.s32.totalorder %s30, 1
      %p153 = por %p151, %p152
      %p154 = scmp.ne.s32.totalorder %s145, %s146
      %p155 = scmp.eq.s32.totalorder %s30, 0
      %p156 = por %p154, %p155
      %p157 = scmp.ne.s32.totalorder %s145, %s146
      %p158 = scmp.eq.s32.totalorder %s31, 1
      %p159 = por %p157, %p158
      %p161 = scmp.ne.s32.totalorder %s146, %s160
      %p162 = scmp.eq.s32.totalorder %s31, 0
      %p163 = por %p161, %p162
      %s165 = sadd.s32 %s164, 1
      %p168 = scmp.eq.s32.totalorder %s25, 1
      %p169 = scmp.ne.s32.totalorder %s164, %s166
      %p170 = scmp.eq.s32.totalorder %s25, 0
      %p171 = por %p169, %p170
      %p172 = scmp.ne.s32.totalorder %s164, %s166
      %p173 = scmp.eq.s32.totalorder %s30, 1
      %p174 = por %p172, %p173
      %p175 = scmp.ne.s32.totalorder %s166, %s167
      %p176 = scmp.eq.s32.totalorder %s30, 0
      %p177 = por %p175, %p176
      %p178 = scmp.ne.s32.totalorder %s166, %s167
      %p179 = scmp.eq.s32.totalorder %s31, 1
      %p180 = por %p178, %p179
      %p182 = scmp.ne.s32.totalorder %s167, %s181
      %p183 = scmp.eq.s32.totalorder %s31, 0
      %p184 = por %p182, %p183
      %s186 = sadd.s32 %s185, 1
      %p189 = scmp.eq.s32.totalorder %s25, 1
      %p190 = scmp.ne.s32.totalorder %s185, %s187
      %p191 = scmp.eq.s32.totalorder %s25, 0
      %p192 = por %p190, %p191
      %p193 = scmp.ne.s32.totalorder %s185, %s187
      %p194 = scmp.eq.s32.totalorder %s30, 1
      %p195 = por %p193, %p194
      %p196 = scmp.ne.s32.totalorder %s187, %s188
      %p197 = scmp.eq.s32.totalorder %s30, 0
      %p198 = por %p196, %p197
      %p199 = scmp.ne.s32.totalorder %s187, %s188
      %p200 = scmp.eq.s32.totalorder %s31, 1
      %p201 = por %p199, %p200
      %p203 = scmp.ne.s32.totalorder %s188, %s202
      %p204 = scmp.eq.s32.totalorder %s31, 0
      %p205 = por %p203, %p204
      %s207 = sadd.s32 %s206, 1
      %p210 = scmp.eq.s32.totalorder %s25, 1
      %p211 = scmp.ne.s32.totalorder %s206, %s208
      %p212 = scmp.eq.s32.totalorder %s25, 0
      %p213 = por %p211, %p212
      %p214 = scmp.ne.s32.totalorder %s206, %s208
      %p215 = scmp.eq.s32.totalorder %s30, 1
      %p216 = por %p214, %p215
      %p217 = scmp.ne.s32.totalorder %s208, %s209
      %p218 = scmp.eq.s32.totalorder %s30, 0
      %p219 = por %p217, %p218
      %p220 = scmp.ne.s32.totalorder %s208, %s209
      %p221 = scmp.eq.s32.totalorder %s31, 1
      %p222 = por %p220, %p221
      %p224 = scmp.ne.s32.totalorder %s209, %s223
      %p225 = scmp.eq.s32.totalorder %s31, 0
      %p226 = por %p224, %p225
      %s228 = sadd.s32 %s227, 1
      %p231 = scmp.eq.s32.totalorder %s25, 1
      %p232 = scmp.ne.s32.totalorder %s227, %s229
      %p233 = scmp.eq.s32.totalorder %s25, 0
      %p234 = por %p232, %p233
      %p235 = scmp.ne.s32.totalorder %s227, %s229
      %p236 = scmp.eq.s32.totalorder %s30, 1
      %p237 = por %p235, %p236
      %p238 = scmp.ne.s32.totalorder %s229, %s230
      %p239 = scmp.eq.s32.totalorder %s30, 0
      %p240 = por %p238, %p239
      %p241 = scmp.ne.s32.totalorder %s229, %s230
      %p242 = scmp.eq.s32.totalorder %s31, 1
      %p243 = por %p241, %p242
      %p245 = scmp.ne.s32.totalorder %s230, %s244
      %p246 = scmp.eq.s32.totalorder %s31, 0
      %p247 = por %p245, %p246
      %s249 = sadd.s32 %s248, 1
      %p252 = scmp.eq.s32.totalorder %s25, 1
      %p253 = scmp.ne.s32.totalorder %s248, %s250
      %p254 = scmp.eq.s32.totalorder %s25, 0
      %p255 = por %p253, %p254
      %p256 = scmp.ne.s32.totalorder %s248, %s250
      %p257 = scmp.eq.s32.totalorder %s30, 1
      %p258 = por %p256, %p257
      %p259 = scmp.ne.s32.totalorder %s250, %s251
      %p260 = scmp.eq.s32.totalorder %s30, 0
      %p261 = por %p259, %p260
      %p262 = scmp.ne.s32.totalorder %s250, %s251
      %p263 = scmp.eq.s32.totalorder %s31, 1
      %p264 = por %p262, %p263
      %p266 = scmp.ne.s32.totalorder %s251, %s265
      %p267 = scmp.eq.s32.totalorder %s31, 0
      %p268 = por %p266, %p267
      %s270 = sadd.s32 %s269, 1
      %p273 = scmp.eq.s32.totalorder %s25, 1
      %p274 = scmp.ne.s32.totalorder %s269, %s271
      %p275 = scmp.eq.s32.totalorder %s25, 0
      %p276 = por %p274, %p275
      %p277 = scmp.ne.s32.totalorder %s269, %s271
      %p278 = scmp.eq.s32.totalorder %s30, 1
      %p279 = por %p277, %p278
      %p280 = scmp.ne.s32.totalorder %s271, %s272
      %p281 = scmp.eq.s32.totalorder %s30, 0
      %p282 = por %p280, %p281
      %p283 = scmp.ne.s32.totalorder %s271, %s272
      %p284 = scmp.eq.s32.totalorder %s31, 1
      %p285 = por %p283, %p284
      %p287 = scmp.ne.s32.totalorder %s272, %s286
      %p288 = scmp.eq.s32.totalorder %s31, 0
      %p289 = por %p287, %p288
      %s291 = sadd.s32 %s290, 1
      %p294 = scmp.eq.s32.totalorder %s25, 1
      %p295 = scmp.ne.s32.totalorder %s290, %s292
      %p296 = scmp.eq.s32.totalorder %s25, 0
      %p297 = por %p295, %p296
      %p298 = scmp.ne.s32.totalorder %s290, %s292
      %p299 = scmp.eq.s32.totalorder %s30, 1
      %p300 = por %p298, %p299
      %p301 = scmp.ne.s32.totalorder %s292, %s293
      %p302 = scmp.eq.s32.totalorder %s30, 0
      %p303 = por %p301, %p302
      %p304 = scmp.ne.s32.totalorder %s292, %s293
      %p305 = scmp.eq.s32.totalorder %s31, 1
      %p306 = por %p304, %p305
      %p308 = scmp.ne.s32.totalorder %s293, %s307
      %p309 = scmp.eq.s32.totalorder %s31, 0
      %p310 = por %p308, %p309
      %s312 = sadd.s32 %s311, 1
      %p315 = scmp.eq.s32.totalorder %s25, 1
      %p316 = scmp.ne.s32.totalorder %s311, %s313
      %p317 = scmp.eq.s32.totalorder %s25, 0
      %p318 = por %p316, %p317
      %p319 = scmp.ne.s32.totalorder %s311, %s313
      %p320 = scmp.eq.s32.totalorder %s30, 1
      %p321 = por %p319, %p320
      %p322 = scmp.ne.s32.totalorder %s313, %s314
      %p323 = scmp.eq.s32.totalorder %s30, 0
      %p324 = por %p322, %p323
      %p325 = scmp.ne.s32.totalorder %s313, %s314
      %p326 = scmp.eq.s32.totalorder %s31, 1
      %p327 = por %p325, %p326
      %p329 = scmp.ne.s32.totalorder %s314, %s328
      %p330 = scmp.eq.s32.totalorder %s31, 0
      %p331 = por %p329, %p330
      %s333 = sadd.s32 %s332, 1
      %p336 = scmp.eq.s32.totalorder %s25, 1
      %p337 = scmp.ne.s32.totalorder %s332, %s334
      %p338 = scmp.eq.s32.totalorder %s25, 0
      %p339 = por %p337, %p338
      %p340 = scmp.ne.s32.totalorder %s332, %s334
      %p341 = scmp.eq.s32.totalorder %s30, 1
      %p342 = por %p340, %p341
      %p343 = scmp.ne.s32.totalorder %s334, %s335
      %p344 = scmp.eq.s32.totalorder %s30, 0
      %p345 = por %p343, %p344
      %p346 = scmp.ne.s32.totalorder %s334, %s335
      %p347 = scmp.eq.s32.totalorder %s31, 1
      %p348 = por %p346, %p347
      %p350 = scmp.ne.s32.totalorder %s335, %s349
      %p351 = scmp.eq.s32.totalorder %s31, 0
      %p352 = por %p350, %p351
      %s354 = sadd.s32 %s353, 1
      %p357 = scmp.eq.s32.totalorder %s25, 1
      %p358 = scmp.ne.s32.totalorder %s353, %s355
      %p359 = scmp.eq.s32.totalorder %s25, 0
      %p360 = por %p358, %p359
      %p361 = scmp.ne.s32.totalorder %s353, %s355
      %p362 = scmp.eq.s32.totalorder %s30, 1
      %p363 = por %p361, %p362
      %p364 = scmp.ne.s32.totalorder %s355, %s356
      %p365 = scmp.eq.s32.totalorder %s30, 0
      %p366 = por %p364, %p365
      %p367 = scmp.ne.s32.totalorder %s355, %s356
      %p368 = scmp.eq.s32.totalorder %s31, 1
      %p369 = por %p367, %p368
      %p371 = scmp.ne.s32.totalorder %s356, %s370
      %p372 = scmp.eq.s32.totalorder %s31, 0
      %p373 = por %p371, %p372
      %s374 = ssub.s32 %s25, %s32
      %p375 = scmp.eq.s32.totalorder %s374, 0
      %s377 = sadd.s32 %s376, 1
      %s378 = scalar_select %p375, %s376, %s377
      %p381 = pneg %p375
      %p382 = scmp.eq.s32.totalorder %s25, 1
      %p383 = por %p381, %p382
      %p384 = scmp.ne.s32.totalorder %s376, %s379
      %p385 = scmp.eq.s32.totalorder %s25, 0
      %p386 = por %p384, %p385
      %p387 = scmp.ne.s32.totalorder %s376, %s379
      %p388 = scmp.eq.s32.totalorder %s30, 1
      %p389 = por %p387, %p388
      %p390 = scmp.ne.s32.totalorder %s379, %s380
      %p391 = scmp.eq.s32.totalorder %s30, 0
      %p392 = por %p390, %p391
      %p393 = scmp.ne.s32.totalorder %s379, %s380
      %p394 = scmp.eq.s32.totalorder %s31, 1
      %p395 = por %p393, %p394
      %p397 = scmp.ne.s32.totalorder %s380, %s396
      %p398 = scmp.eq.s32.totalorder %s31, 0
      %p399 = por %p397, %p398
      %p400 = scmp.le.s32.totalorder 1, %s25
      %p401 = scmp.lt.s32.totalorder %s25, 3
      %p402 = pnand %p400, %p401
      %p403 = pneg %p402
      // Predicated region
      $region9: #{inception_c_forward.1} parent=5 // pred_check
        _
      $region10: #{inception_c_forward.1} parent=5 // pred_check_branch
        %405 = sbr.rel (%p402) target = $region12
      $region11: #{inception_c_forward.1} parent=5 // pred_region
        %s406 = ssub.s32 %s25, 1
        // Predicated region
        $region13: #{inception_c_forward.1} parent=11 // pred_check
          %p407 = pneg %p72
        $region14: #{inception_c_forward.1} parent=11 // pred_check_branch
          %409 = sbr.rel (%p407) target = $region16
        $region15: #{inception_c_forward.1} parent=11 // pred_region
          _
        $region16: #{inception_c_forward.1} parent=11 // pred_fallthru
          _
        // Predicated region
        $region17: #{inception_c_forward.1} parent=11 // pred_check
          %p410 = pneg %p93
        $region18: #{inception_c_forward.1} parent=11 // pred_check_branch
          %412 = sbr.rel (%p410) target = $region20
        $region19: #{inception_c_forward.1} parent=11 // pred_region
          _
        $region20: #{inception_c_forward.1} parent=11 // pred_fallthru
          _
        // Predicated region
        $region21: #{inception_c_forward.1} parent=11 // pred_check
          %p413 = pneg %p114
        $region22: #{inception_c_forward.1} parent=11 // pred_check_branch
          %415 = sbr.rel (%p413) target = $region24
        $region23: #{inception_c_forward.1} parent=11 // pred_region
          _
        $region24: #{inception_c_forward.1} parent=11 // pred_fallthru
          _
        // Predicated region
        $region25: #{inception_c_forward.1} parent=11 // pred_check
          %p416 = pneg %p135
        $region26: #{inception_c_forward.1} parent=11 // pred_check_branch
          %418 = sbr.rel (%p416) target = $region28
        $region27: #{inception_c_forward.1} parent=11 // pred_region
          _
        $region28: #{inception_c_forward.1} parent=11 // pred_fallthru
          _
        // Predicated region
        $region29: #{inception_c_forward.1} parent=11 // pred_check
          %p419 = pneg %p156
        $region30: #{inception_c_forward.1} parent=11 // pred_check_branch
          %421 = sbr.rel (%p419) target = $region32
        $region31: #{inception_c_forward.1} parent=11 // pred_region
          _
        $region32: #{inception_c_forward.1} parent=11 // pred_fallthru
          _
        // Predicated region
        $region33: #{inception_c_forward.1} parent=11 // pred_check
          %p422 = pneg %p177
        $region34: #{inception_c_forward.1} parent=11 // pred_check_branch
          %424 = sbr.rel (%p422) target = $region36
        $region35: #{inception_c_forward.1} parent=11 // pred_region
          _
        $region36: #{inception_c_forward.1} parent=11 // pred_fallthru
          _
        // Predicated region
        $region37: #{inception_c_forward.1} parent=11 // pred_check
          %p425 = pneg %p198
        $region38: #{inception_c_forward.1} parent=11 // pred_check_branch
          %427 = sbr.rel (%p425) target = $region40
        $region39: #{inception_c_forward.1} parent=11 // pred_region
          _
        $region40: #{inception_c_forward.1} parent=11 // pred_fallthru
          _
        // Predicated region
        $region41: #{inception_c_forward.1} parent=11 // pred_check
          %p428 = pneg %p219
        $region42: #{inception_c_forward.1} parent=11 // pred_check_branch
          %430 = sbr.rel (%p428) target = $region44
        $region43: #{inception_c_forward.1} parent=11 // pred_region
          _
        $region44: #{inception_c_forward.1} parent=11 // pred_fallthru
          _
        // Predicated region
        $region45: #{inception_c_forward.1} parent=11 // pred_check
          %p431 = pneg %p240
        $region46: #{inception_c_forward.1} parent=11 // pred_check_branch
          %433 = sbr.rel (%p431) target = $region48
        $region47: #{inception_c_forward.1} parent=11 // pred_region
          _
        $region48: #{inception_c_forward.1} parent=11 // pred_fallthru
          _
        // Predicated region
        $region49: #{inception_c_forward.1} parent=11 // pred_check
          %p434 = pneg %p261
        $region50: #{inception_c_forward.1} parent=11 // pred_check_branch
          %436 = sbr.rel (%p434) target = $region52
        $region51: #{inception_c_forward.1} parent=11 // pred_region
          _
        $region52: #{inception_c_forward.1} parent=11 // pred_fallthru
          _
        // Predicated region
        $region53: #{inception_c_forward.1} parent=11 // pred_check
          %p437 = pneg %p282
        $region54: #{inception_c_forward.1} parent=11 // pred_check_branch
          %439 = sbr.rel (%p437) target = $region56
        $region55: #{inception_c_forward.1} parent=11 // pred_region
          _
        $region56: #{inception_c_forward.1} parent=11 // pred_fallthru
          _
        // Predicated region
        $region57: #{inception_c_forward.1} parent=11 // pred_check
          %p440 = pneg %p303
        $region58: #{inception_c_forward.1} parent=11 // pred_check_branch
          %442 = sbr.rel (%p440) target = $region60
        $region59: #{inception_c_forward.1} parent=11 // pred_region
          _
        $region60: #{inception_c_forward.1} parent=11 // pred_fallthru
          _
        // Predicated region
        $region61: #{inception_c_forward.1} parent=11 // pred_check
          %p443 = pneg %p324
        $region62: #{inception_c_forward.1} parent=11 // pred_check_branch
          %445 = sbr.rel (%p443) target = $region64
        $region63: #{inception_c_forward.1} parent=11 // pred_region
          _
        $region64: #{inception_c_forward.1} parent=11 // pred_fallthru
          _
        // Predicated region
        $region65: #{inception_c_forward.1} parent=11 // pred_check
          %p446 = pneg %p345
        $region66: #{inception_c_forward.1} parent=11 // pred_check_branch
          %448 = sbr.rel (%p446) target = $region68
        $region67: #{inception_c_forward.1} parent=11 // pred_region
          _
        $region68: #{inception_c_forward.1} parent=11 // pred_fallthru
          _
        // Predicated region
        $region69: #{inception_c_forward.1} parent=11 // pred_check
          %p449 = pneg %p366
        $region70: #{inception_c_forward.1} parent=11 // pred_check_branch
          %451 = sbr.rel (%p449) target = $region72
        $region71: #{inception_c_forward.1} parent=11 // pred_region
          _
        $region72: #{inception_c_forward.1} parent=11 // pred_fallthru
          _
      $region12: #{inception_c_forward.1} parent=5 // pred_fallthru
        _
      %p452 = scmp.lt.s32.totalorder %s25, 2
      // Predicated region
      $region73: #{inception_c_forward.1} parent=5 // pred_check
        %p453 = pneg %p452
      $region74: #{inception_c_forward.1} parent=5 // pred_check_branch
        %455 = sbr.rel (%p453) target = $region76
      $region75: #{inception_c_forward.1} parent=5 // pred_region
        // Predicated region
        $region77: #{inception_c_forward.1} parent=75 // pred_check
          %p456 = pneg %p45
        $region78: #{inception_c_forward.1} parent=75 // pred_check_branch
          %458 = sbr.rel (%p456) target = $region80
        $region79: #{inception_c_forward.1} parent=75 // pred_region
          %s459 = smul.u32 2, %s25
          %p460 = scmp.lt.s32.totalorder %s459, 3
          %s461 = scalar_select %p460, %s459, 3
          %s462 = smul.addr %s461, 8
          %s463 = smul.addr %s462, 4
          %s464 = scalar_lea.vmem %s0, %s463
          %s465 = smul.u32 2, %s25
        $region80: #{inception_c_forward.1} parent=75 // pred_fallthru
          _
      $region76: #{inception_c_forward.1} parent=5 // pred_fallthru
        _
      %p466 = scmp.le.s32.totalorder 1, %s25
      %p467 = scmp.lt.s32.totalorder %s25, 3
      %p468 = pnand %p466, %p467
      %p469 = pneg %p468
      // Predicated region
      $region81: #{inception_c_forward.1} parent=5 // pred_check
        _
      $region82: #{inception_c_forward.1} parent=5 // pred_check_branch
        %471 = sbr.rel (%p468) target = $region84
      $region83: #{inception_c_forward.1} parent=5 // pred_region
        %s472 = ssub.s32 %s25, 1
        %s473 = smul.u32 2, %s30
        %p474 = scmp.lt.s32.totalorder %s473, 3
        %s475 = scalar_select %p474, %s473, 3
        %s476 = smul.addr %s475, 8
        %s477 = smul.addr %s476, 4
        %s478 = scalar_lea.vmem %s0, %s477
        %p479 = pneg %p51
        %p480 = pneg %p48
        %p481 = pneg %p72
        %p482 = pneg %p69
        %p483 = pneg %p93
        %p484 = pneg %p90
        %p485 = pneg %p114
        %p486 = pneg %p111
        %p487 = pneg %p135
        %p488 = pneg %p132
        %p489 = pneg %p156
        %p490 = pneg %p153
        %p491 = pneg %p177
        %p492 = pneg %p174
        %p493 = pneg %p198
        %p494 = pneg %p195
        %p495 = pneg %p219
        %p496 = pneg %p216
        %p497 = pneg %p240
        %p498 = pneg %p237
        %p499 = pneg %p261
        %p500 = pneg %p258
        %p501 = pneg %p282
        %p502 = pneg %p279
        %p503 = pneg %p303
        %p504 = pneg %p300
        %p505 = pneg %p324
        %p506 = pneg %p321
        %p507 = pneg %p345
        %p508 = pneg %p342
        %p509 = pneg %p366
        %p510 = pneg %p363
        %p511 = pneg %p392
        %p512 = pneg %p389
        %s513 = sand.u32 %s379, 1
        %s514 = scalar_lea.sflag [#allocation3], %s513
        %s515 = sand.u32 %s379, 1
        %s516 = smul.addr %s515, 768
        %s517 = scalar_lea.vmem [#allocation2], %s516
        %s518 = smul.u32 2, %s30
        %p519 = scmp.lt.s32.totalorder %s518, 3
        %s520 = scalar_select %p519, %s518, 3
        %s521 = smul.addr %s520, 8
        %s522 = smul.addr %s521, 4
        %s523 = scalar_lea.vmem %s0, %s522
        %s524 = smul.u32 2, %s30
        %s525 = smul.u32 2, %s30
        %v527 = vld [vmem:[%s523] sm:$0xf]
        %v528 = vld [vmem:[%s523 + $0x4] sm:$0xf]
        %v529 = vld [vmem:[%s523 + $0x8] sm:$0xf]
        %v530 = vld [vmem:[%s523 + $0xc] sm:$0xf]
        %v531 = vld [vmem:[%s523 + $0x10] sm:$0xf]
        %v532 = vld [vmem:[%s523 + $0x14] sm:$0xf]
        %v533 = vld [vmem:[%s523 + $0x18] sm:$0xf]
        %v534 = vld [vmem:[%s523 + $0x1c] sm:$0xf]
        %v535 = vld [vmem:[%s523 + $0x20] sm:$0xf]
        %v536 = vld [vmem:[%s523 + $0x24] sm:$0xf]
        %v537 = vld [vmem:[%s523 + $0x28] sm:$0xf]
        %v538 = vld [vmem:[%s523 + $0x2c] sm:$0xf]
        %v539 = vld [vmem:[%s523 + $0x30] sm:$0xf]
        %v540 = vld [vmem:[%s523 + $0x34] sm:$0xf]
        %v541 = vld [vmem:[%s523 + $0x38] sm:$0xf]
        %v542 = vld [vmem:[%s523 + $0x3c] sm:$0xf]
        %v543 = vld [vmem:[%s1] sm:$0xff]
        %v544 = vld [vmem:[%s1 + $0x8] sm:$0xff]
        %v545 = vld [vmem:[%s1 + $0x10] sm:$0xff]
        %v546 = vld [vmem:[%s1 + $0x18] sm:$0xff]
        %v563 = vunpack.c.l.b16 %v527
        %v564 = vunpack.c.l.b16 %v528
        %v565 = vunpack.c.l.b16 %v529
        %v566 = vunpack.c.l.b16 %v530
        %v567 = vunpack.c.l.b16 %v531
        %v568 = vunpack.c.l.b16 %v532
        %v569 = vunpack.c.l.b16 %v533
        %v570 = vunpack.c.l.b16 %v534
        %v571 = vunpack.c.l.b16 %v535
        %v572 = vunpack.c.l.b16 %v536
        %v573 = vunpack.c.l.b16 %v537
        %v574 = vunpack.c.l.b16 %v538
        %v575 = vunpack.c.l.b16 %v539
        %v576 = vunpack.c.l.b16 %v540
        %v577 = vunpack.c.l.b16 %v541
        %v578 = vunpack.c.l.b16 %v542
        %v579 = vpack.c.b16 %v564, %v563
        %v580 = vpack.c.b16 %v566, %v565
        %v581 = vpack.c.b16 %v568, %v567
        %v582 = vpack.c.b16 %v570, %v569
        %v583 = vpack.c.b16 %v572, %v571
        %v584 = vpack.c.b16 %v574, %v573
        %v585 = vpack.c.b16 %v576, %v575
        %v586 = vpack.c.b16 %v578, %v577
        %v591 = vunpack.c.l.b16 %v543
        %v592 = vunpack.c.h.b16 %v543
        %v593 = vunpack.c.l.b16 %v544
        %v594 = vunpack.c.h.b16 %v544
        %v595 = vunpack.c.l.b16 %v545
        %v596 = vunpack.c.h.b16 %v545
        %v597 = vunpack.c.l.b16 %v546
        %v598 = vunpack.c.h.b16 %v546
        %v599 = vpack.c.b16 %v595, %v591
        %v600 = vpack.c.b16 %v596, %v592
        %v601 = vpack.c.b16 %v597, %v593
        %v602 = vpack.c.b16 %v598, %v594
        %vm607 = vcmask 130048
        %v609 = vsel %vm607, %v579, 0
        %v612 = vsel %vm607, %v580, 0
        %v615 = vsel %vm607, %v581, 0
        %v618 = vsel %vm607, %v582, 0
        %v621 = vsel %vm607, %v583, 0
        %v624 = vsel %vm607, %v584, 0
        %v627 = vsel %vm607, %v585, 0
        %v630 = vsel %vm607, %v586, 0
        %632 = vmatprep.subr.bf16.mxu0 0
        %633 = vmatpush1.bf16.msra.mxu0 0
        %634 = vmatprep.subr.bf16.mxu0 0
        %635 = vmatpush1.bf16.msra.mxu0 0
        %636 = vmatprep.subr.bf16.mxu0 0
        %637 = vmatpush1.bf16.msra.mxu0 0
        %638 = vmatprep.subr.bf16.mxu0 0
        %639 = vmatpush1.bf16.msra.mxu0 0
        %640 = vmatprep.subr.bf16.mxu0 0
        %641 = vmatpush1.bf16.msra.mxu0 0
        %642 = vmatprep.subr.bf16.mxu0 0
        %643 = vmatpush1.bf16.msra.mxu0 0
        %644 = vmatprep.subr.bf16.mxu0 0
        %645 = vmatpush1.bf16.msra.mxu0 0
        %646 = vmatprep.subr.bf16.mxu0 %v600
        %647 = vmatpush1.bf16.msra.mxu0 %v599
        %648 = vmatprep.subr.bf16.mxu0 0
        %649 = vmatpush2.bf16.msra.mxu0 0
        %650 = vmatprep.subr.bf16.mxu0 0
        %651 = vmatpush2.bf16.msra.mxu0 0
        %652 = vmatprep.subr.bf16.mxu0 0
        %653 = vmatpush2.bf16.msra.mxu0 0
        %654 = vmatprep.subr.bf16.mxu0 0
        %655 = vmatpush2.bf16.msra.mxu0 0
        %656 = vmatprep.subr.bf16.mxu0 0
        %657 = vmatpush2.bf16.msra.mxu0 0
        %658 = vmatprep.subr.bf16.mxu0 0
        %659 = vmatpush2.bf16.msra.mxu0 0
        %660 = vmatprep.subr.bf16.mxu0 0
        %661 = vmatpush2.bf16.msra.mxu0 0
        %662 = vmatprep.subr.bf16.mxu0 0
        %663 = vmatpush2.bf16.msra.mxu0 0
        %664 = vmatprep.mubr.bf16.mxu0 0
        %665 = vmatmul.mubr.bf16.gmra.mxu0 %v609
        %v666 = vpop.f32.mrf.mxu0
        %v667 = vadd.f32 0.0, %v666
        %v668 = vpop.f32.mrf.mxu0
        %v669 = vadd.f32 0.0, %v668
        %v670 = vpop.f32.mrf.mxu0
        %v671 = vadd.f32 0.0, %v670
        %v672 = vpop.f32.mrf.mxu0
        %v673 = vadd.f32 0.0, %v672
        %674 = vmatprep.mubr.bf16.mxu0 0
        %675 = vmatmul.mubr.bf16.gmra.mxu0 %v612
        %v676 = vpop.f32.mrf.mxu0
        %v677 = vadd.f32 0.0, %v676
        %v678 = vpop.f32.mrf.mxu0
        %v679 = vadd.f32 0.0, %v678
        %v680 = vpop.f32.mrf.mxu0
        %v681 = vadd.f32 0.0, %v680
        %v682 = vpop.f32.mrf.mxu0
        %v683 = vadd.f32 0.0, %v682
        %684 = vmatprep.mubr.bf16.mxu0 0
        %685 = vmatmul.mubr.bf16.gmra.mxu0 %v615
        %v686 = vpop.f32.mrf.mxu0
        %v687 = vadd.f32 0.0, %v686
        %v688 = vpop.f32.mrf.mxu0
        %v689 = vadd.f32 0.0, %v688
        %v690 = vpop.f32.mrf.mxu0
        %v691 = vadd.f32 0.0, %v690
        %v692 = vpop.f32.mrf.mxu0
        %v693 = vadd.f32 0.0, %v692
        %694 = vmatprep.mubr.bf16.mxu0 0
        %695 = vmatmul.mubr.bf16.gmra.mxu0 %v618
        %v696 = vpop.f32.mrf.mxu0
        %v697 = vadd.f32 0.0, %v696
        %v698 = vpop.f32.mrf.mxu0
        %v699 = vadd.f32 0.0, %v698
        %v700 = vpop.f32.mrf.mxu0
        %v701 = vadd.f32 0.0, %v700
        %v702 = vpop.f32.mrf.mxu0
        %v703 = vadd.f32 0.0, %v702
        %704 = vmatprep.mubr.bf16.mxu0 0
        %705 = vmatmul.mubr.bf16.gmra.mxu0 %v621
        %v706 = vpop.f32.mrf.mxu0
        %v707 = vadd.f32 0.0, %v706
        %v708 = vpop.f32.mrf.mxu0
        %v709 = vadd.f32 0.0, %v708
        %v710 = vpop.f32.mrf.mxu0
        %v711 = vadd.f32 0.0, %v710
        %v712 = vpop.f32.mrf.mxu0
        %v713 = vadd.f32 0.0, %v712
        %714 = vmatprep.mubr.bf16.mxu0 0
        %715 = vmatmul.mubr.bf16.gmra.mxu0 %v624
        %v716 = vpop.f32.mrf.mxu0
        %v717 = vadd.f32 0.0, %v716
        %v718 = vpop.f32.mrf.mxu0
        %v719 = vadd.f32 0.0, %v718
        %v720 = vpop.f32.mrf.mxu0
        %v721 = vadd.f32 0.0, %v720
        %v722 = vpop.f32.mrf.mxu0
        %v723 = vadd.f32 0.0, %v722
        %724 = vmatprep.mubr.bf16.mxu0 0
        %725 = vmatmul.mubr.bf16.gmra.mxu0 %v627
        %v726 = vpop.f32.mrf.mxu0
        %v727 = vadd.f32 0.0, %v726
        %v728 = vpop.f32.mrf.mxu0
        %v729 = vadd.f32 0.0, %v728
        %v730 = vpop.f32.mrf.mxu0
        %v731 = vadd.f32 0.0, %v730
        %v732 = vpop.f32.mrf.mxu0
        %v733 = vadd.f32 0.0, %v732
        %734 = vmatprep.mubr.bf16.mxu0 0
        %735 = vmatmul.mubr.bf16.gmra.mxu0 %v630
        %v736 = vpop.f32.mrf.mxu0
        %v737 = vadd.f32 0.0, %v736
        %v738 = vpop.f32.mrf.mxu0
        %v739 = vadd.f32 0.0, %v738
        %v740 = vpop.f32.mrf.mxu0
        %v741 = vadd.f32 0.0, %v740
        %v742 = vpop.f32.mrf.mxu0
        %v743 = vadd.f32 0.0, %v742
        %744 = vdwg.mxu0
        %745 = vmatprep.subr.bf16.mxu0 0
        %746 = vmatpush1.bf16.msra.mxu0 0
        %747 = vmatprep.subr.bf16.mxu0 0
        %748 = vmatpush1.bf16.msra.mxu0 0
        %749 = vmatprep.subr.bf16.mxu0 0
        %750 = vmatpush1.bf16.msra.mxu0 0
        %751 = vmatprep.subr.bf16.mxu0 0
        %752 = vmatpush1.bf16.msra.mxu0 0
        %753 = vmatprep.subr.bf16.mxu0 0
        %754 = vmatpush1.bf16.msra.mxu0 0
        %755 = vmatprep.subr.bf16.mxu0 0
        %756 = vmatpush1.bf16.msra.mxu0 0
        %757 = vmatprep.subr.bf16.mxu0 0
        %758 = vmatpush1.bf16.msra.mxu0 0
        %759 = vmatprep.subr.bf16.mxu0 %v602
        %760 = vmatpush1.bf16.msra.mxu0 %v601
        %761 = vmatprep.subr.bf16.mxu0 0
        %762 = vmatpush2.bf16.msra.mxu0 0
        %763 = vmatprep.subr.bf16.mxu0 0
        %764 = vmatpush2.bf16.msra.mxu0 0
        %765 = vmatprep.subr.bf16.mxu0 0
        %766 = vmatpush2.bf16.msra.mxu0 0
        %767 = vmatprep.subr.bf16.mxu0 0
        %768 = vmatpush2.bf16.msra.mxu0 0
        %769 = vmatprep.subr.bf16.mxu0 0
        %770 = vmatpush2.bf16.msra.mxu0 0
        %771 = vmatprep.subr.bf16.mxu0 0
        %772 = vmatpush2.bf16.msra.mxu0 0
        %773 = vmatprep.subr.bf16.mxu0 0
        %774 = vmatpush2.bf16.msra.mxu0 0
        %775 = vmatprep.subr.bf16.mxu0 0
        %776 = vmatpush2.bf16.msra.mxu0 0
        %777 = vmatprep.mubr.bf16.mxu0 0
        %778 = vmatmul.mubr.bf16.gmra.mxu0 %v609
        %v779 = vpop.f32.mrf.mxu0
        %v780 = vadd.f32 0.0, %v779
        %v781 = vpop.f32.mrf.mxu0
        %v782 = vadd.f32 0.0, %v781
        %v783 = vpop.f32.mrf.mxu0
        %v784 = vadd.f32 0.0, %v783
        %v785 = vpop.f32.mrf.mxu0
        %v786 = vadd.f32 0.0, %v785
        %787 = vmatprep.mubr.bf16.mxu0 0
        %788 = vmatmul.mubr.bf16.gmra.mxu0 %v612
        %v789 = vpop.f32.mrf.mxu0
        %v790 = vadd.f32 0.0, %v789
        %v791 = vpop.f32.mrf.mxu0
        %v792 = vadd.f32 0.0, %v791
        %v793 = vpop.f32.mrf.mxu0
        %v794 = vadd.f32 0.0, %v793
        %v795 = vpop.f32.mrf.mxu0
        %v796 = vadd.f32 0.0, %v795
        %797 = vmatprep.mubr.bf16.mxu0 0
        %798 = vmatmul.mubr.bf16.gmra.mxu0 %v615
        %v799 = vpop.f32.mrf.mxu0
        %v800 = vadd.f32 0.0, %v799
        %v801 = vpop.f32.mrf.mxu0
        %v802 = vadd.f32 0.0, %v801
        %v803 = vpop.f32.mrf.mxu0
        %v804 = vadd.f32 0.0, %v803
        %v805 = vpop.f32.mrf.mxu0
        %v806 = vadd.f32 0.0, %v805
        %807 = vmatprep.mubr.bf16.mxu0 0
        %808 = vmatmul.mubr.bf16.gmra.mxu0 %v618
        %v809 = vpop.f32.mrf.mxu0
        %v810 = vadd.f32 0.0, %v809
        %v811 = vpop.f32.mrf.mxu0
        %v812 = vadd.f32 0.0, %v811
        %v813 = vpop.f32.mrf.mxu0
        %v814 = vadd.f32 0.0, %v813
        %v815 = vpop.f32.mrf.mxu0
        %v816 = vadd.f32 0.0, %v815
        %817 = vmatprep.mubr.bf16.mxu0 0
        %818 = vmatmul.mubr.bf16.gmra.mxu0 %v621
        %v819 = vpop.f32.mrf.mxu0
        %v820 = vadd.f32 0.0, %v819
        %v821 = vpop.f32.mrf.mxu0
        %v822 = vadd.f32 0.0, %v821
        %v823 = vpop.f32.mrf.mxu0
        %v824 = vadd.f32 0.0, %v823
        %v825 = vpop.f32.mrf.mxu0
        %v826 = vadd.f32 0.0, %v825
        %827 = vmatprep.mubr.bf16.mxu0 0
        %828 = vmatmul.mubr.bf16.gmra.mxu0 %v624
        %v829 = vpop.f32.mrf.mxu0
        %v830 = vadd.f32 0.0, %v829
        %v831 = vpop.f32.mrf.mxu0
        %v832 = vadd.f32 0.0, %v831
        %v833 = vpop.f32.mrf.mxu0
        %v834 = vadd.f32 0.0, %v833
        %v835 = vpop.f32.mrf.mxu0
        %v836 = vadd.f32 0.0, %v835
        %837 = vmatprep.mubr.bf16.mxu0 0
        %838 = vmatmul.mubr.bf16.gmra.mxu0 %v627
        %v839 = vpop.f32.mrf.mxu0
        %v840 = vadd.f32 0.0, %v839
        %v841 = vpop.f32.mrf.mxu0
        %v842 = vadd.f32 0.0, %v841
        %v843 = vpop.f32.mrf.mxu0
        %v844 = vadd.f32 0.0, %v843
        %v845 = vpop.f32.mrf.mxu0
        %v846 = vadd.f32 0.0, %v845
        %847 = vmatprep.mubr.bf16.mxu0 0
        %848 = vmatmul.mubr.bf16.gmra.mxu0 %v630
        %v849 = vpop.f32.mrf.mxu0
        %v850 = vadd.f32 0.0, %v849
        %v851 = vpop.f32.mrf.mxu0
        %v852 = vadd.f32 0.0, %v851
        %v853 = vpop.f32.mrf.mxu0
        %v854 = vadd.f32 0.0, %v853
        %v855 = vpop.f32.mrf.mxu0
        %v856 = vadd.f32 0.0, %v855
        %857 = vdwg.mxu0
        %v858 = vld [vmem:[%s2] sm:$0x3]
        %v860 = vlaneseq
        %v861 = vshrl.u32 %v860, 7
        %v862 = vsub.s32 0, %v861
        %v863 = vrot.slane %v858, %v862
        %v864 = vlaneseq
        %v865 = vshrl.u32 %v864, 7
        %v866 = vsub.s32 1, %v865
        %v867 = vrot.slane %v858, %v866
        %v870 = vadd.f32 %v667, %v863
        %v871 = vadd.f32 %v669, %v867
        %v872 = vadd.f32 %v671, %v863
        %v873 = vadd.f32 %v673, %v867
        %v874 = vadd.f32 %v677, %v863
        %v875 = vadd.f32 %v679, %v867
        %v876 = vadd.f32 %v681, %v863
        %v877 = vadd.f32 %v683, %v867
        %v878 = vadd.f32 %v687, %v863
        %v879 = vadd.f32 %v689, %v867
        %v880 = vadd.f32 %v691, %v863
        %v881 = vadd.f32 %v693, %v867
        %v882 = vadd.f32 %v697, %v863
        %v883 = vadd.f32 %v699, %v867
        %v884 = vadd.f32 %v701, %v863
        %v885 = vadd.f32 %v703, %v867
        %v886 = vadd.f32 %v707, %v863
        %v887 = vadd.f32 %v709, %v867
        %v888 = vadd.f32 %v711, %v863
        %v889 = vadd.f32 %v713, %v867
        %v890 = vadd.f32 %v717, %v863
        %v891 = vadd.f32 %v719, %v867
        %v892 = vadd.f32 %v721, %v863
        %v893 = vadd.f32 %v723, %v867
        %v894 = vadd.f32 %v727, %v863
        %v895 = vadd.f32 %v729, %v867
        %v896 = vadd.f32 %v731, %v863
        %v897 = vadd.f32 %v733, %v867
        %v898 = vadd.f32 %v737, %v863
        %v899 = vadd.f32 %v739, %v867
        %v900 = vadd.f32 %v741, %v863
        %v901 = vadd.f32 %v743, %v867
        %v902 = vmax.f32 %v870, 0.0
        %v903 = vmax.f32 %v871, 0.0
        %v904 = vmax.f32 %v872, 0.0
        %v905 = vmax.f32 %v873, 0.0
        %v906 = vmax.f32 %v874, 0.0
        %v907 = vmax.f32 %v875, 0.0
        %v908 = vmax.f32 %v876, 0.0
        %v909 = vmax.f32 %v877, 0.0
        %v910 = vmax.f32 %v878, 0.0
        %v911 = vmax.f32 %v879, 0.0
        %v912 = vmax.f32 %v880, 0.0
        %v913 = vmax.f32 %v881, 0.0
        %v914 = vmax.f32 %v882, 0.0
        %v915 = vmax.f32 %v883, 0.0
        %v916 = vmax.f32 %v884, 0.0
        %v917 = vmax.f32 %v885, 0.0
        %v918 = vmax.f32 %v886, 0.0
        %v919 = vmax.f32 %v887, 0.0
        %v920 = vmax.f32 %v888, 0.0
        %v921 = vmax.f32 %v889, 0.0
        %v922 = vmax.f32 %v890, 0.0
        %v923 = vmax.f32 %v891, 0.0
        %v924 = vmax.f32 %v892, 0.0
        %v925 = vmax.f32 %v893, 0.0
        %v926 = vmax.f32 %v894, 0.0
        %v927 = vmax.f32 %v895, 0.0
        %v928 = vmax.f32 %v896, 0.0
        %v929 = vmax.f32 %v897, 0.0
        %v930 = vmax.f32 %v898, 0.0
        %v931 = vmax.f32 %v899, 0.0
        %v932 = vmax.f32 %v900, 0.0
        %v933 = vmax.f32 %v901, 0.0
        %v934 = vpack.c.bf16 %v905, %v903
        %v935 = vpack.c.bf16 %v909, %v907
        %v936 = vpack.c.bf16 %v913, %v911
        %v937 = vpack.c.bf16 %v917, %v915
        %v938 = vpack.c.bf16 %v921, %v919
        %v939 = vpack.c.bf16 %v925, %v923
        %v940 = vpack.c.bf16 %v929, %v927
        %v941 = vpack.c.bf16 %v933, %v931
        %v950 = vunpack.c.l.b16 %v934
        %v951 = vunpack.c.h.b16 %v934
        %v952 = vunpack.c.l.b16 %v935
        %v953 = vunpack.c.h.b16 %v935
        %v954 = vunpack.c.l.b16 %v936
        %v955 = vunpack.c.h.b16 %v936
        %v956 = vunpack.c.l.b16 %v937
        %v957 = vunpack.c.h.b16 %v937
        %v958 = vunpack.c.l.b16 %v938
        %v959 = vunpack.c.h.b16 %v938
        %v960 = vunpack.c.l.b16 %v939
        %v961 = vunpack.c.h.b16 %v939
        %v962 = vunpack.c.l.b16 %v940
        %v963 = vunpack.c.h.b16 %v940
        %v964 = vunpack.c.l.b16 %v941
        %v965 = vunpack.c.h.b16 %v941
        %v966 = vpack.c.b16 %v950, %v950
        %v967 = vpack.c.b16 %v951, %v951
        %v968 = vpack.c.b16 %v952, %v952
        %v969 = vpack.c.b16 %v953, %v953
        %v970 = vpack.c.b16 %v954, %v954
        %v971 = vpack.c.b16 %v955, %v955
        %v972 = vpack.c.b16 %v956, %v956
        %v973 = vpack.c.b16 %v957, %v957
        %v974 = vpack.c.b16 %v958, %v958
        %v975 = vpack.c.b16 %v959, %v959
        %v976 = vpack.c.b16 %v960, %v960
        %v977 = vpack.c.b16 %v961, %v961
        %v978 = vpack.c.b16 %v962, %v962
        %v979 = vpack.c.b16 %v963, %v963
        %v980 = vpack.c.b16 %v964, %v964
        %v981 = vpack.c.b16 %v965, %v965
        %v983 = vshrl.u32 %v966, 16
        %v985 = vrot.slane %v983, 6
        %v986 = vshll.u32 %v966, 16
        %v988 = vrot.slane %v986, 7
        %v989 = vor.u32 %v985, %v988
        %v991 = vshrl.u32 %v967, 16
        %v993 = vrot.slane %v991, 6
        %v994 = vshll.u32 %v967, 16
        %v996 = vrot.slane %v994, 7
        %v997 = vor.u32 %v993, %v996
        %v999 = vshrl.u32 %v968, 16
        %v1001 = vrot.slane %v999, 6
        %v1002 = vshll.u32 %v968, 16
        %v1004 = vrot.slane %v1002, 7
        %v1005 = vor.u32 %v1001, %v1004
        %v1007 = vshrl.u32 %v969, 16
        %v1009 = vrot.slane %v1007, 6
        %v1010 = vshll.u32 %v969, 16
        %v1012 = vrot.slane %v1010, 7
        %v1013 = vor.u32 %v1009, %v1012
        %v1015 = vshrl.u32 %v970, 16
        %v1017 = vrot.slane %v1015, 6
        %v1018 = vshll.u32 %v970, 16
        %v1020 = vrot.slane %v1018, 7
        %v1021 = vor.u32 %v1017, %v1020
        %v1023 = vshrl.u32 %v971, 16
        %v1025 = vrot.slane %v1023, 6
        %v1026 = vshll.u32 %v971, 16
        %v1028 = vrot.slane %v1026, 7
        %v1029 = vor.u32 %v1025, %v1028
        %v1031 = vshrl.u32 %v972, 16
        %v1033 = vrot.slane %v1031, 6
        %v1034 = vshll.u32 %v972, 16
        %v1036 = vrot.slane %v1034, 7
        %v1037 = vor.u32 %v1033, %v1036
        %v1039 = vshrl.u32 %v973, 16
        %v1041 = vrot.slane %v1039, 6
        %v1042 = vshll.u32 %v973, 16
        %v1044 = vrot.slane %v1042, 7
        %v1045 = vor.u32 %v1041, %v1044
        %v1047 = vshrl.u32 %v974, 16
        %v1049 = vrot.slane %v1047, 6
        %v1050 = vshll.u32 %v974, 16
        %v1052 = vrot.slane %v1050, 7
        %v1053 = vor.u32 %v1049, %v1052
        %v1055 = vshrl.u32 %v975, 16
        %v1057 = vrot.slane %v1055, 6
        %v1058 = vshll.u32 %v975, 16
        %v1060 = vrot.slane %v1058, 7
        %v1061 = vor.u32 %v1057, %v1060
        %v1063 = vshrl.u32 %v976, 16
        %v1065 = vrot.slane %v1063, 6
        %v1066 = vshll.u32 %v976, 16
        %v1068 = vrot.slane %v1066, 7
        %v1069 = vor.u32 %v1065, %v1068
        %v1071 = vshrl.u32 %v977, 16
        %v1073 = vrot.slane %v1071, 6
        %v1074 = vshll.u32 %v977, 16
        %v1076 = vrot.slane %v1074, 7
        %v1077 = vor.u32 %v1073, %v1076
        %v1079 = vshrl.u32 %v978, 16
        %v1081 = vrot.slane %v1079, 6
        %v1082 = vshll.u32 %v978, 16
        %v1084 = vrot.slane %v1082, 7
        %v1085 = vor.u32 %v1081, %v1084
        %v1087 = vshrl.u32 %v979, 16
        %v1089 = vrot.slane %v1087, 6
        %v1090 = vshll.u32 %v979, 16
        %v1092 = vrot.slane %v1090, 7
        %v1093 = vor.u32 %v1089, %v1092
        %v1095 = vshrl.u32 %v980, 16
        %v1097 = vrot.slane %v1095, 6
        %v1098 = vshll.u32 %v980, 16
        %v1100 = vrot.slane %v1098, 7
        %v1101 = vor.u32 %v1097, %v1100
        %v1103 = vshrl.u32 %v981, 16
        %v1105 = vrot.slane %v1103, 6
        %v1106 = vshll.u32 %v981, 16
        %v1108 = vrot.slane %v1106, 7
        %v1109 = vor.u32 %v1105, %v1108
        %1110 = vrot.lane.b32.xlu0 %v989, 64
        %v1111 = vpop.permute.xlu0 %1110
        %1112 = vrot.lane.b32.xlu0 %v997, 64
        %v1113 = vpop.permute.xlu0 %1112
        %1114 = vrot.lane.b32.xlu0 %v1005, 64
        %v1115 = vpop.permute.xlu0 %1114
        %1116 = vrot.lane.b32.xlu0 %v1013, 64
        %v1117 = vpop.permute.xlu0 %1116
        %1118 = vrot.lane.b32.xlu0 %v1021, 64
        %v1119 = vpop.permute.xlu0 %1118
        %1120 = vrot.lane.b32.xlu0 %v1029, 64
        %v1121 = vpop.permute.xlu0 %1120
        %1122 = vrot.lane.b32.xlu0 %v1037, 64
        %v1123 = vpop.permute.xlu0 %1122
        %1124 = vrot.lane.b32.xlu0 %v1045, 64
        %v1125 = vpop.permute.xlu0 %1124
        %1126 = vrot.lane.b32.xlu0 %v1053, 64
        %v1127 = vpop.permute.xlu0 %1126
        %1128 = vrot.lane.b32.xlu0 %v1061, 64
        %v1129 = vpop.permute.xlu0 %1128
        %1130 = vrot.lane.b32.xlu0 %v1069, 64
        %v1131 = vpop.permute.xlu0 %1130
        %1132 = vrot.lane.b32.xlu0 %v1077, 64
        %v1133 = vpop.permute.xlu0 %1132
        %1134 = vrot.lane.b32.xlu0 %v1085, 64
        %v1135 = vpop.permute.xlu0 %1134
        %1136 = vrot.lane.b32.xlu0 %v1093, 64
        %v1137 = vpop.permute.xlu0 %1136
        %1138 = vrot.lane.b32.xlu0 %v1101, 64
        %v1139 = vpop.permute.xlu0 %1138
        %1140 = vrot.lane.b32.xlu0 %v1109, 64
        %v1141 = vpop.permute.xlu0 %1140
        %vm1158 = vcmask 1041408
        %vm1159 = vsmask.f32 1280
        %vm1160 = vmand %vm1158, %vm1159
        %v1161 = vsel %vm1160, 0, %v1111
        %v1162 = vsel %vm1160, 0, %v1113
        %v1163 = vsel %vm1160, 0, %v1115
        %v1164 = vsel %vm1160, 0, %v1117
        %v1165 = vsel %vm1160, 0, %v1119
        %v1166 = vsel %vm1160, 0, %v1121
        %v1167 = vsel %vm1160, 0, %v1123
        %v1168 = vsel %vm1160, 0, %v1125
        %v1169 = vsel %vm1160, 0, %v1127
        %v1170 = vsel %vm1160, 0, %v1129
        %v1171 = vsel %vm1160, 0, %v1131
        %v1172 = vsel %vm1160, 0, %v1133
        %v1173 = vsel %vm1160, 0, %v1135
        %v1174 = vsel %vm1160, 0, %v1137
        %v1175 = vsel %vm1160, 0, %v1139
        %v1176 = vsel %vm1160, 0, %v1141
        %vm1177 = vcmask 1045504
        %vm1178 = vsmask.f32 5376
        %vm1179 = vmand %vm1177, %vm1178
        %v1180 = vsel %vm1179, %v1161, 0
        %v1181 = vsel %vm1179, %v1162, 0
        %v1182 = vsel %vm1179, %v1163, 0
        %v1183 = vsel %vm1179, %v1164, 0
        %v1184 = vsel %vm1179, %v1165, 0
        %v1185 = vsel %vm1179, %v1166, 0
        %v1186 = vsel %vm1179, %v1167, 0
        %v1187 = vsel %vm1179, %v1168, 0
        %v1188 = vsel %vm1179, %v1169, 0
        %v1189 = vsel %vm1179, %v1170, 0
        %v1190 = vsel %vm1179, %v1171, 0
        %v1191 = vsel %vm1179, %v1172, 0
        %v1192 = vsel %vm1179, %v1173, 0
        %v1193 = vsel %vm1179, %v1174, 0
        %v1194 = vsel %vm1179, %v1175, 0
        %v1195 = vsel %vm1179, %v1176, 0
        %v1212 = vunpack.c.l.b16 %v1180
        %v1213 = vunpack.c.h.b16 %v1180
        %v1214 = vunpack.c.l.b16 %v1181
        %v1215 = vunpack.c.h.b16 %v1181
        %v1216 = vunpack.c.l.b16 %v1182
        %v1217 = vunpack.c.h.b16 %v1182
        %v1218 = vunpack.c.l.b16 %v1183
        %v1219 = vunpack.c.h.b16 %v1183
        %v1220 = vunpack.c.l.b16 %v1184
        %v1221 = vunpack.c.h.b16 %v1184
        %v1222 = vunpack.c.l.b16 %v1185
        %v1223 = vunpack.c.h.b16 %v1185
        %v1224 = vunpack.c.l.b16 %v1186
        %v1225 = vunpack.c.h.b16 %v1186
        %v1226 = vunpack.c.l.b16 %v1187
        %v1227 = vunpack.c.h.b16 %v1187
        %v1228 = vunpack.c.l.b16 %v1188
        %v1229 = vunpack.c.h.b16 %v1188
        %v1230 = vunpack.c.l.b16 %v1189
        %v1231 = vunpack.c.h.b16 %v1189
        %v1232 = vunpack.c.l.b16 %v1190
        %v1233 = vunpack.c.h.b16 %v1190
        %v1234 = vunpack.c.l.b16 %v1191
        %v1235 = vunpack.c.h.b16 %v1191
        %v1236 = vunpack.c.l.b16 %v1192
        %v1237 = vunpack.c.h.b16 %v1192
        %v1238 = vunpack.c.l.b16 %v1193
        %v1239 = vunpack.c.h.b16 %v1193
        %v1240 = vunpack.c.l.b16 %v1194
        %v1241 = vunpack.c.h.b16 %v1194
        %v1242 = vunpack.c.l.b16 %v1195
        %v1243 = vunpack.c.h.b16 %v1195
        %v1244 = vpack.c.b16 %v1212, %v1212
        %v1245 = vpack.c.b16 %v1213, %v1213
        %v1246 = vpack.c.b16 %v1214, %v1214
        %v1247 = vpack.c.b16 %v1215, %v1215
        %v1248 = vpack.c.b16 %v1216, %v1216
        %v1249 = vpack.c.b16 %v1217, %v1217
        %v1250 = vpack.c.b16 %v1218, %v1218
        %v1251 = vpack.c.b16 %v1219, %v1219
        %v1252 = vpack.c.b16 %v1220, %v1220
        %v1253 = vpack.c.b16 %v1221, %v1221
        %v1254 = vpack.c.b16 %v1222, %v1222
        %v1255 = vpack.c.b16 %v1223, %v1223
        %v1256 = vpack.c.b16 %v1224, %v1224
        %v1257 = vpack.c.b16 %v1225, %v1225
        %v1258 = vpack.c.b16 %v1226, %v1226
        %v1259 = vpack.c.b16 %v1227, %v1227
        %v1260 = vpack.c.b16 %v1228, %v1228
        %v1261 = vpack.c.b16 %v1229, %v1229
        %v1262 = vpack.c.b16 %v1230, %v1230
        %v1263 = vpack.c.b16 %v1231, %v1231
        %v1264 = vpack.c.b16 %v1232, %v1232
        %v1265 = vpack.c.b16 %v1233, %v1233
        %v1266 = vpack.c.b16 %v1234, %v1234
        %v1267 = vpack.c.b16 %v1235, %v1235
        %v1268 = vpack.c.b16 %v1236, %v1236
        %v1269 = vpack.c.b16 %v1237, %v1237
        %v1270 = vpack.c.b16 %v1238, %v1238
        %v1271 = vpack.c.b16 %v1239, %v1239
        %v1272 = vpack.c.b16 %v1240, %v1240
        %v1273 = vpack.c.b16 %v1241, %v1241
        %v1274 = vpack.c.b16 %v1242, %v1242
        %v1275 = vpack.c.b16 %v1243, %v1243
        %vm1276 = vsmask.f32 3328
        %vm1277 = vsmask.f32 7440
        %vm1278 = vmor %vm1276, %vm1277
        %v1280 = vshrl.u32 %v1244, 16
        %v1282 = vrot.slane %v1280, 4
        %v1283 = vshll.u32 %v1244, 16
        %v1285 = vrot.slane %v1283, 5
        %v1286 = vor.u32 %v1282, %v1285
        %v1287 = vrot.slane %v1286, 4
        %v1289 = vshll.u32 %v1245, 16
        %v1291 = vrot.slane %v1289, 5
        %v1292 = vsel %vm1278, %v1287, %v1291
        %v1294 = vshrl.u32 %v1246, 16
        %v1296 = vrot.slane %v1294, 4
        %v1297 = vshll.u32 %v1246, 16
        %v1299 = vrot.slane %v1297, 5
        %v1300 = vor.u32 %v1296, %v1299
        %v1301 = vrot.slane %v1300, 4
        %v1303 = vshll.u32 %v1247, 16
        %v1305 = vrot.slane %v1303, 5
        %v1306 = vsel %vm1278, %v1301, %v1305
        %v1308 = vshrl.u32 %v1248, 16
        %v1310 = vrot.slane %v1308, 4
        %v1311 = vshll.u32 %v1248, 16
        %v1313 = vrot.slane %v1311, 5
        %v1314 = vor.u32 %v1310, %v1313
        %v1315 = vrot.slane %v1314, 4
        %v1317 = vshll.u32 %v1249, 16
        %v1319 = vrot.slane %v1317, 5
        %v1320 = vsel %vm1278, %v1315, %v1319
        %v1322 = vshrl.u32 %v1250, 16
        %v1324 = vrot.slane %v1322, 4
        %v1325 = vshll.u32 %v1250, 16
        %v1327 = vrot.slane %v1325, 5
        %v1328 = vor.u32 %v1324, %v1327
        %v1329 = vrot.slane %v1328, 4
        %v1331 = vshll.u32 %v1251, 16
        %v1333 = vrot.slane %v1331, 5
        %v1334 = vsel %vm1278, %v1329, %v1333
        %v1336 = vshrl.u32 %v1252, 16
        %v1338 = vrot.slane %v1336, 4
        %v1339 = vshll.u32 %v1252, 16
        %v1341 = vrot.slane %v1339, 5
        %v1342 = vor.u32 %v1338, %v1341
        %v1343 = vrot.slane %v1342, 4
        %v1345 = vshll.u32 %v1253, 16
        %v1347 = vrot.slane %v1345, 5
        %v1348 = vsel %vm1278, %v1343, %v1347
        %v1350 = vshrl.u32 %v1254, 16
        %v1352 = vrot.slane %v1350, 4
        %v1353 = vshll.u32 %v1254, 16
        %v1355 = vrot.slane %v1353, 5
        %v1356 = vor.u32 %v1352, %v1355
        %v1357 = vrot.slane %v1356, 4
        %v1359 = vshll.u32 %v1255, 16
        %v1361 = vrot.slane %v1359, 5
        %v1362 = vsel %vm1278, %v1357, %v1361
        %v1364 = vshrl.u32 %v1256, 16
        %v1366 = vrot.slane %v1364, 4
        %v1367 = vshll.u32 %v1256, 16
        %v1369 = vrot.slane %v1367, 5
        %v1370 = vor.u32 %v1366, %v1369
        %v1371 = vrot.slane %v1370, 4
        %v1373 = vshll.u32 %v1257, 16
        %v1375 = vrot.slane %v1373, 5
        %v1376 = vsel %vm1278, %v1371, %v1375
        %v1378 = vshrl.u32 %v1258, 16
        %v1380 = vrot.slane %v1378, 4
        %v1381 = vshll.u32 %v1258, 16
        %v1383 = vrot.slane %v1381, 5
        %v1384 = vor.u32 %v1380, %v1383
        %v1385 = vrot.slane %v1384, 4
        %v1387 = vshll.u32 %v1259, 16
        %v1389 = vrot.slane %v1387, 5
        %v1390 = vsel %vm1278, %v1385, %v1389
        %v1392 = vshrl.u32 %v1260, 16
        %v1394 = vrot.slane %v1392, 4
        %v1395 = vshll.u32 %v1260, 16
        %v1397 = vrot.slane %v1395, 5
        %v1398 = vor.u32 %v1394, %v1397
        %v1399 = vrot.slane %v1398, 4
        %v1401 = vshll.u32 %v1261, 16
        %v1403 = vrot.slane %v1401, 5
        %v1404 = vsel %vm1278, %v1399, %v1403
        %v1406 = vshrl.u32 %v1262, 16
        %v1408 = vrot.slane %v1406, 4
        %v1409 = vshll.u32 %v1262, 16
        %v1411 = vrot.slane %v1409, 5
        %v1412 = vor.u32 %v1408, %v1411
        %v1413 = vrot.slane %v1412, 4
        %v1415 = vshll.u32 %v1263, 16
        %v1417 = vrot.slane %v1415, 5
        %v1418 = vsel %vm1278, %v1413, %v1417
        %v1420 = vshrl.u32 %v1264, 16
        %v1422 = vrot.slane %v1420, 4
        %v1423 = vshll.u32 %v1264, 16
        %v1425 = vrot.slane %v1423, 5
        %v1426 = vor.u32 %v1422, %v1425
        %v1427 = vrot.slane %v1426, 4
        %v1429 = vshll.u32 %v1265, 16
        %v1431 = vrot.slane %v1429, 5
        %v1432 = vsel %vm1278, %v1427, %v1431
        %v1434 = vshrl.u32 %v1266, 16
        %v1436 = vrot.slane %v1434, 4
        %v1437 = vshll.u32 %v1266, 16
        %v1439 = vrot.slane %v1437, 5
        %v1440 = vor.u32 %v1436, %v1439
        %v1441 = vrot.slane %v1440, 4
        %v1443 = vshll.u32 %v1267, 16
        %v1445 = vrot.slane %v1443, 5
        %v1446 = vsel %vm1278, %v1441, %v1445
        %v1448 = vshrl.u32 %v1268, 16
        %v1450 = vrot.slane %v1448, 4
        %v1451 = vshll.u32 %v1268, 16
        %v1453 = vrot.slane %v1451, 5
        %v1454 = vor.u32 %v1450, %v1453
        %v1455 = vrot.slane %v1454, 4
        %v1457 = vshll.u32 %v1269, 16
        %v1459 = vrot.slane %v1457, 5
        %v1460 = vsel %vm1278, %v1455, %v1459
        %v1462 = vshrl.u32 %v1270, 16
        %v1464 = vrot.slane %v1462, 4
        %v1465 = vshll.u32 %v1270, 16
        %v1467 = vrot.slane %v1465, 5
        %v1468 = vor.u32 %v1464, %v1467
        %v1469 = vrot.slane %v1468, 4
        %v1471 = vshll.u32 %v1271, 16
        %v1473 = vrot.slane %v1471, 5
        %v1474 = vsel %vm1278, %v1469, %v1473
        %v1476 = vshrl.u32 %v1272, 16
        %v1478 = vrot.slane %v1476, 4
        %v1479 = vshll.u32 %v1272, 16
        %v1481 = vrot.slane %v1479, 5
        %v1482 = vor.u32 %v1478, %v1481
        %v1483 = vrot.slane %v1482, 4
        %v1485 = vshll.u32 %v1273, 16
        %v1487 = vrot.slane %v1485, 5
        %v1488 = vsel %vm1278, %v1483, %v1487
        %v1490 = vshrl.u32 %v1274, 16
        %v1492 = vrot.slane %v1490, 4
        %v1493 = vshll.u32 %v1274, 16
        %v1495 = vrot.slane %v1493, 5
        %v1496 = vor.u32 %v1492, %v1495
        %v1497 = vrot.slane %v1496, 4
        %v1499 = vshll.u32 %v1275, 16
        %v1501 = vrot.slane %v1499, 5
        %v1502 = vsel %vm1278, %v1497, %v1501
        %vm1503 = vcmask 1042432
        %vm1504 = vcmask 1046532
        %vm1505 = vmor %vm1503, %vm1504
        %v1506 = vrot.slane %v1244, 5
        %v1507 = vrot.slane %v1506, 4
        %v1508 = vrot.slane %v1245, 5
        %v1509 = vsel %vm1505, %v1507, %v1508
        %v1510 = vrot.slane %v1246, 5
        %v1511 = vrot.slane %v1510, 4
        %v1512 = vrot.slane %v1247, 5
        %v1513 = vsel %vm1505, %v1511, %v1512
        %v1514 = vrot.slane %v1248, 5
        %v1515 = vrot.slane %v1514, 4
        %v1516 = vrot.slane %v1249, 5
        %v1517 = vsel %vm1505, %v1515, %v1516
        %v1518 = vrot.slane %v1250, 5
        %v1519 = vrot.slane %v1518, 4
        %v1520 = vrot.slane %v1251, 5
        %v1521 = vsel %vm1505, %v1519, %v1520
        %v1522 = vrot.slane %v1252, 5
        %v1523 = vrot.slane %v1522, 4
        %v1524 = vrot.slane %v1253, 5
        %v1525 = vsel %vm1505, %v1523, %v1524
        %v1526 = vrot.slane %v1254, 5
        %v1527 = vrot.slane %v1526, 4
        %v1528 = vrot.slane %v1255, 5
        %v1529 = vsel %vm1505, %v1527, %v1528
        %v1530 = vrot.slane %v1256, 5
        %v1531 = vrot.slane %v1530, 4
        %v1532 = vrot.slane %v1257, 5
        %v1533 = vsel %vm1505, %v1531, %v1532
        %v1534 = vrot.slane %v1258, 5
        %v1535 = vrot.slane %v1534, 4
        %v1536 = vrot.slane %v1259, 5
        %v1537 = vsel %vm1505, %v1535, %v1536
        %v1538 = vrot.slane %v1260, 5
        %v1539 = vrot.slane %v1538, 4
        %v1540 = vrot.slane %v1261, 5
        %v1541 = vsel %vm1505, %v1539, %v1540
        %v1542 = vrot.slane %v1262, 5
        %v1543 = vrot.slane %v1542, 4
        %v1544 = vrot.slane %v1263, 5
        %v1545 = vsel %vm1505, %v1543, %v1544
        %v1546 = vrot.slane %v1264, 5
        %v1547 = vrot.slane %v1546, 4
        %v1548 = vrot.slane %v1265, 5
        %v1549 = vsel %vm1505, %v1547, %v1548
        %v1550 = vrot.slane %v1266, 5
        %v1551 = vrot.slane %v1550, 4
        %v1552 = vrot.slane %v1267, 5
        %v1553 = vsel %vm1505, %v1551, %v1552
        %v1554 = vrot.slane %v1268, 5
        %v1555 = vrot.slane %v1554, 4
        %v1556 = vrot.slane %v1269, 5
        %v1557 = vsel %vm1505, %v1555, %v1556
        %v1558 = vrot.slane %v1270, 5
        %v1559 = vrot.slane %v1558, 4
        %v1560 = vrot.slane %v1271, 5
        %v1561 = vsel %vm1505, %v1559, %v1560
        %v1562 = vrot.slane %v1272, 5
        %v1563 = vrot.slane %v1562, 4
        %v1564 = vrot.slane %v1273, 5
        %v1565 = vsel %vm1505, %v1563, %v1564
        %v1566 = vrot.slane %v1274, 5
        %v1567 = vrot.slane %v1566, 4
        %v1568 = vrot.slane %v1275, 5
        %v1569 = vsel %vm1505, %v1567, %v1568
        %vm1570 = vsmask.f32 2304
        %vm1571 = vsmask.f32 6416
        %vm1572 = vmor %vm1570, %vm1571
        %v1573 = vrot.slane %v1280, 5
        %v1574 = vrot.slane %v1283, 6
        %v1575 = vor.u32 %v1573, %v1574
        %v1576 = vrot.slane %v1575, 4
        %v1577 = vshrl.u32 %v1245, 16
        %v1579 = vrot.slane %v1577, 5
        %v1580 = vrot.slane %v1289, 6
        %v1581 = vor.u32 %v1579, %v1580
        %v1582 = vsel %vm1572, %v1576, %v1581
        %v1583 = vrot.slane %v1294, 5
        %v1584 = vrot.slane %v1297, 6
        %v1585 = vor.u32 %v1583, %v1584
        %v1586 = vrot.slane %v1585, 4
        %v1587 = vshrl.u32 %v1247, 16
        %v1589 = vrot.slane %v1587, 5
        %v1590 = vrot.slane %v1303, 6
        %v1591 = vor.u32 %v1589, %v1590
        %v1592 = vsel %vm1572, %v1586, %v1591
        %v1593 = vrot.slane %v1308, 5
        %v1594 = vrot.slane %v1311, 6
        %v1595 = vor.u32 %v1593, %v1594
        %v1596 = vrot.slane %v1595, 4
        %v1597 = vshrl.u32 %v1249, 16
        %v1599 = vrot.slane %v1597, 5
        %v1600 = vrot.slane %v1317, 6
        %v1601 = vor.u32 %v1599, %v1600
        %v1602 = vsel %vm1572, %v1596, %v1601
        %v1603 = vrot.slane %v1322, 5
        %v1604 = vrot.slane %v1325, 6
        %v1605 = vor.u32 %v1603, %v1604
        %v1606 = vrot.slane %v1605, 4
        %v1607 = vshrl.u32 %v1251, 16
        %v1609 = vrot.slane %v1607, 5
        %v1610 = vrot.slane %v1331, 6
        %v1611 = vor.u32 %v1609, %v1610
        %v1612 = vsel %vm1572, %v1606, %v1611
        %v1613 = vrot.slane %v1336, 5
        %v1614 = vrot.slane %v1339, 6
        %v1615 = vor.u32 %v1613, %v1614
        %v1616 = vrot.slane %v1615, 4
        %v1617 = vshrl.u32 %v1253, 16
        %v1619 = vrot.slane %v1617, 5
        %v1620 = vrot.slane %v1345, 6
        %v1621 = vor.u32 %v1619, %v1620
        %v1622 = vsel %vm1572, %v1616, %v1621
        %v1623 = vrot.slane %v1350, 5
        %v1624 = vrot.slane %v1353, 6
        %v1625 = vor.u32 %v1623, %v1624
        %v1626 = vrot.slane %v1625, 4
        %v1627 = vshrl.u32 %v1255, 16
        %v1629 = vrot.slane %v1627, 5
        %v1630 = vrot.slane %v1359, 6
        %v1631 = vor.u32 %v1629, %v1630
        %v1632 = vsel %vm1572, %v1626, %v1631
        %v1633 = vrot.slane %v1364, 5
        %v1634 = vrot.slane %v1367, 6
        %v1635 = vor.u32 %v1633, %v1634
        %v1636 = vrot.slane %v1635, 4
        %v1637 = vshrl.u32 %v1257, 16
        %v1639 = vrot.slane %v1637, 5
        %v1640 = vrot.slane %v1373, 6
        %v1641 = vor.u32 %v1639, %v1640
        %v1642 = vsel %vm1572, %v1636, %v1641
        %v1643 = vrot.slane %v1378, 5
        %v1644 = vrot.slane %v1381, 6
        %v1645 = vor.u32 %v1643, %v1644
        %v1646 = vrot.slane %v1645, 4
        %v1647 = vshrl.u32 %v1259, 16
        %v1649 = vrot.slane %v1647, 5
        %v1650 = vrot.slane %v1387, 6
        %v1651 = vor.u32 %v1649, %v1650
        %v1652 = vsel %vm1572, %v1646, %v1651
        %v1653 = vrot.slane %v1392, 5
        %v1654 = vrot.slane %v1395, 6
        %v1655 = vor.u32 %v1653, %v1654
        %v1656 = vrot.slane %v1655, 4
        %v1657 = vshrl.u32 %v1261, 16
        %v1659 = vrot.slane %v1657, 5
        %v1660 = vrot.slane %v1401, 6
        %v1661 = vor.u32 %v1659, %v1660
        %v1662 = vsel %vm1572, %v1656, %v1661
        %v1663 = vrot.slane %v1406, 5
        %v1664 = vrot.slane %v1409, 6
        %v1665 = vor.u32 %v1663, %v1664
        %v1666 = vrot.slane %v1665, 4
        %v1667 = vshrl.u32 %v1263, 16
        %v1669 = vrot.slane %v1667, 5
        %v1670 = vrot.slane %v1415, 6
        %v1671 = vor.u32 %v1669, %v1670
        %v1672 = vsel %vm1572, %v1666, %v1671
        %v1673 = vrot.slane %v1420, 5
        %v1674 = vrot.slane %v1423, 6
        %v1675 = vor.u32 %v1673, %v1674
        %v1676 = vrot.slane %v1675, 4
        %v1677 = vshrl.u32 %v1265, 16
        %v1679 = vrot.slane %v1677, 5
        %v1680 = vrot.slane %v1429, 6
        %v1681 = vor.u32 %v1679, %v1680
        %v1682 = vsel %vm1572, %v1676, %v1681
        %v1683 = vrot.slane %v1434, 5
        %v1684 = vrot.slane %v1437, 6
        %v1685 = vor.u32 %v1683, %v1684
        %v1686 = vrot.slane %v1685, 4
        %v1687 = vshrl.u32 %v1267, 16
        %v1689 = vrot.slane %v1687, 5
        %v1690 = vrot.slane %v1443, 6
        %v1691 = vor.u32 %v1689, %v1690
        %v1692 = vsel %vm1572, %v1686, %v1691
        %v1693 = vrot.slane %v1448, 5
        %v1694 = vrot.slane %v1451, 6
        %v1695 = vor.u32 %v1693, %v1694
        %v1696 = vrot.slane %v1695, 4
        %v1697 = vshrl.u32 %v1269, 16
        %v1699 = vrot.slane %v1697, 5
        %v1700 = vrot.slane %v1457, 6
        %v1701 = vor.u32 %v1699, %v1700
        %v1702 = vsel %vm1572, %v1696, %v1701
        %v1703 = vrot.slane %v1462, 5
        %v1704 = vrot.slane %v1465, 6
        %v1705 = vor.u32 %v1703, %v1704
        %v1706 = vrot.slane %v1705, 4
        %v1707 = vshrl.u32 %v1271, 16
        %v1709 = vrot.slane %v1707, 5
        %v1710 = vrot.slane %v1471, 6
        %v1711 = vor.u32 %v1709, %v1710
        %v1712 = vsel %vm1572, %v1706, %v1711
        %v1713 = vrot.slane %v1476, 5
        %v1714 = vrot.slane %v1479, 6
        %v1715 = vor.u32 %v1713, %v1714
        %v1716 = vrot.slane %v1715, 4
        %v1717 = vshrl.u32 %v1273, 16
        %v1719 = vrot.slane %v1717, 5
        %v1720 = vrot.slane %v1485, 6
        %v1721 = vor.u32 %v1719, %v1720
        %v1722 = vsel %vm1572, %v1716, %v1721
        %v1723 = vrot.slane %v1490, 5
        %v1724 = vrot.slane %v1493, 6
        %v1725 = vor.u32 %v1723, %v1724
        %v1726 = vrot.slane %v1725, 4
        %v1727 = vshrl.u32 %v1275, 16
        %v1729 = vrot.slane %v1727, 5
        %v1730 = vrot.slane %v1499, 6
        %v1731 = vor.u32 %v1729, %v1730
        %v1732 = vsel %vm1572, %v1726, %v1731
        %vm1733 = vcmask 1045508
        %vm1734 = vmor %vm1158, %vm1733
        %v1735 = vrot.slane %v1244, 6
        %v1736 = vrot.slane %v1735, 4
        %v1737 = vrot.slane %v1245, 6
        %v1738 = vsel %vm1734, %v1736, %v1737
        %v1739 = vrot.slane %v1246, 6
        %v1740 = vrot.slane %v1739, 4
        %v1741 = vrot.slane %v1247, 6
        %v1742 = vsel %vm1734, %v1740, %v1741
        %v1743 = vrot.slane %v1248, 6
        %v1744 = vrot.slane %v1743, 4
        %v1745 = vrot.slane %v1249, 6
        %v1746 = vsel %vm1734, %v1744, %v1745
        %v1747 = vrot.slane %v1250, 6
        %v1748 = vrot.slane %v1747, 4
        %v1749 = vrot.slane %v1251, 6
        %v1750 = vsel %vm1734, %v1748, %v1749
        %v1751 = vrot.slane %v1252, 6
        %v1752 = vrot.slane %v1751, 4
        %v1753 = vrot.slane %v1253, 6
        %v1754 = vsel %vm1734, %v1752, %v1753
        %v1755 = vrot.slane %v1254, 6
        %v1756 = vrot.slane %v1755, 4
        %v1757 = vrot.slane %v1255, 6
        %v1758 = vsel %vm1734, %v1756, %v1757
        %v1759 = vrot.slane %v1256, 6
        %v1760 = vrot.slane %v1759, 4
        %v1761 = vrot.slane %v1257, 6
        %v1762 = vsel %vm1734, %v1760, %v1761
        %v1763 = vrot.slane %v1258, 6
        %v1764 = vrot.slane %v1763, 4
        %v1765 = vrot.slane %v1259, 6
        %v1766 = vsel %vm1734, %v1764, %v1765
        %v1767 = vrot.slane %v1260, 6
        %v1768 = vrot.slane %v1767, 4
        %v1769 = vrot.slane %v1261, 6
        %v1770 = vsel %vm1734, %v1768, %v1769
        %v1771 = vrot.slane %v1262, 6
        %v1772 = vrot.slane %v1771, 4
        %v1773 = vrot.slane %v1263, 6
        %v1774 = vsel %vm1734, %v1772, %v1773
        %v1775 = vrot.slane %v1264, 6
        %v1776 = vrot.slane %v1775, 4
        %v1777 = vrot.slane %v1265, 6
        %v1778 = vsel %vm1734, %v1776, %v1777
        %v1779 = vrot.slane %v1266, 6
        %v1780 = vrot.slane %v1779, 4
        %v1781 = vrot.slane %v1267, 6
        %v1782 = vsel %vm1734, %v1780, %v1781
        %v1783 = vrot.slane %v1268, 6
        %v1784 = vrot.slane %v1783, 4
        %v1785 = vrot.slane %v1269, 6
        %v1786 = vsel %vm1734, %v1784, %v1785
        %v1787 = vrot.slane %v1270, 6
        %v1788 = vrot.slane %v1787, 4
        %v1789 = vrot.slane %v1271, 6
        %v1790 = vsel %vm1734, %v1788, %v1789
        %v1791 = vrot.slane %v1272, 6
        %v1792 = vrot.slane %v1791, 4
        %v1793 = vrot.slane %v1273, 6
        %v1794 = vsel %vm1734, %v1792, %v1793
        %v1795 = vrot.slane %v1274, 6
        %v1796 = vrot.slane %v1795, 4
        %v1797 = vrot.slane %v1275, 6
        %v1798 = vsel %vm1734, %v1796, %v1797
        %vm1799 = vsmask.f32 5392
        %vm1800 = vmor %vm1159, %vm1799
        %v1801 = vrot.slane %v1280, 6
        %v1802 = vrot.slane %v1283, 7
        %v1803 = vor.u32 %v1801, %v1802
        %v1804 = vrot.slane %v1803, 4
        %v1805 = vrot.slane %v1577, 6
        %v1806 = vrot.slane %v1289, 7
        %v1807 = vor.u32 %v1805, %v1806
        %v1808 = vsel %vm1800, %v1804, %v1807
        %v1809 = vrot.slane %v1294, 6
        %v1810 = vrot.slane %v1297, 7
        %v1811 = vor.u32 %v1809, %v1810
        %v1812 = vrot.slane %v1811, 4
        %v1813 = vrot.slane %v1587, 6
        %v1814 = vrot.slane %v1303, 7
        %v1815 = vor.u32 %v1813, %v1814
        %v1816 = vsel %vm1800, %v1812, %v1815
        %v1817 = vrot.slane %v1308, 6
        %v1818 = vrot.slane %v1311, 7
        %v1819 = vor.u32 %v1817, %v1818
        %v1820 = vrot.slane %v1819, 4
        %v1821 = vrot.slane %v1597, 6
        %v1822 = vrot.slane %v1317, 7
        %v1823 = vor.u32 %v1821, %v1822
        %v1824 = vsel %vm1800, %v1820, %v1823
        %v1825 = vrot.slane %v1322, 6
        %v1826 = vrot.slane %v1325, 7
        %v1827 = vor.u32 %v1825, %v1826
        %v1828 = vrot.slane %v1827, 4
        %v1829 = vrot.slane %v1607, 6
        %v1830 = vrot.slane %v1331, 7
        %v1831 = vor.u32 %v1829, %v1830
        %v1832 = vsel %vm1800, %v1828, %v1831
        %v1833 = vrot.slane %v1336, 6
        %v1834 = vrot.slane %v1339, 7
        %v1835 = vor.u32 %v1833, %v1834
        %v1836 = vrot.slane %v1835, 4
        %v1837 = vrot.slane %v1617, 6
        %v1838 = vrot.slane %v1345, 7
        %v1839 = vor.u32 %v1837, %v1838
        %v1840 = vsel %vm1800, %v1836, %v1839
        %v1841 = vrot.slane %v1350, 6
        %v1842 = vrot.slane %v1353, 7
        %v1843 = vor.u32 %v1841, %v1842
        %v1844 = vrot.slane %v1843, 4
        %v1845 = vrot.slane %v1627, 6
        %v1846 = vrot.slane %v1359, 7
        %v1847 = vor.u32 %v1845, %v1846
        %v1848 = vsel %vm1800, %v1844, %v1847
        %v1849 = vrot.slane %v1364, 6
        %v1850 = vrot.slane %v1367, 7
        %v1851 = vor.u32 %v1849, %v1850
        %v1852 = vrot.slane %v1851, 4
        %v1853 = vrot.slane %v1637, 6
        %v1854 = vrot.slane %v1373, 7
        %v1855 = vor.u32 %v1853, %v1854
        %v1856 = vsel %vm1800, %v1852, %v1855
        %v1857 = vrot.slane %v1378, 6
        %v1858 = vrot.slane %v1381, 7
        %v1859 = vor.u32 %v1857, %v1858
        %v1860 = vrot.slane %v1859, 4
        %v1861 = vrot.slane %v1647, 6
        %v1862 = vrot.slane %v1387, 7
        %v1863 = vor.u32 %v1861, %v1862
        %v1864 = vsel %vm1800, %v1860, %v1863
        %v1865 = vrot.slane %v1392, 6
        %v1866 = vrot.slane %v1395, 7
        %v1867 = vor.u32 %v1865, %v1866
        %v1868 = vrot.slane %v1867, 4
        %v1869 = vrot.slane %v1657, 6
        %v1870 = vrot.slane %v1401, 7
        %v1871 = vor.u32 %v1869, %v1870
        %v1872 = vsel %vm1800, %v1868, %v1871
        %v1873 = vrot.slane %v1406, 6
        %v1874 = vrot.slane %v1409, 7
        %v1875 = vor.u32 %v1873, %v1874
        %v1876 = vrot.slane %v1875, 4
        %v1877 = vrot.slane %v1667, 6
        %v1878 = vrot.slane %v1415, 7
        %v1879 = vor.u32 %v1877, %v1878
        %v1880 = vsel %vm1800, %v1876, %v1879
        %v1881 = vrot.slane %v1420, 6
        %v1882 = vrot.slane %v1423, 7
        %v1883 = vor.u32 %v1881, %v1882
        %v1884 = vrot.slane %v1883, 4
        %v1885 = vrot.slane %v1677, 6
        %v1886 = vrot.slane %v1429, 7
        %v1887 = vor.u32 %v1885, %v1886
        %v1888 = vsel %vm1800, %v1884, %v1887
        %v1889 = vrot.slane %v1434, 6
        %v1890 = vrot.slane %v1437, 7
        %v1891 = vor.u32 %v1889, %v1890
        %v1892 = vrot.slane %v1891, 4
        %v1893 = vrot.slane %v1687, 6
        %v1894 = vrot.slane %v1443, 7
        %v1895 = vor.u32 %v1893, %v1894
        %v1896 = vsel %vm1800, %v1892, %v1895
        %v1897 = vrot.slane %v1448, 6
        %v1898 = vrot.slane %v1451, 7
        %v1899 = vor.u32 %v1897, %v1898
        %v1900 = vrot.slane %v1899, 4
        %v1901 = vrot.slane %v1697, 6
        %v1902 = vrot.slane %v1457, 7
        %v1903 = vor.u32 %v1901, %v1902
        %v1904 = vsel %vm1800, %v1900, %v1903
        %v1905 = vrot.slane %v1462, 6
        %v1906 = vrot.slane %v1465, 7
        %v1907 = vor.u32 %v1905, %v1906
        %v1908 = vrot.slane %v1907, 4
        %v1909 = vrot.slane %v1707, 6
        %v1910 = vrot.slane %v1471, 7
        %v1911 = vor.u32 %v1909, %v1910
        %v1912 = vsel %vm1800, %v1908, %v1911
        %v1913 = vrot.slane %v1476, 6
        %v1914 = vrot.slane %v1479, 7
        %v1915 = vor.u32 %v1913, %v1914
        %v1916 = vrot.slane %v1915, 4
        %v1917 = vrot.slane %v1717, 6
        %v1918 = vrot.slane %v1485, 7
        %v1919 = vor.u32 %v1917, %v1918
        %v1920 = vsel %vm1800, %v1916, %v1919
        %v1921 = vrot.slane %v1490, 6
        %v1922 = vrot.slane %v1493, 7
        %v1923 = vor.u32 %v1921, %v1922
        %v1924 = vrot.slane %v1923, 4
        %v1925 = vrot.slane %v1727, 6
        %v1926 = vrot.slane %v1499, 7
        %v1927 = vor.u32 %v1925, %v1926
        %v1928 = vsel %vm1800, %v1924, %v1927
        %vm1929 = vcmask 1040384
        %vm1930 = vcmask 1044484
        %vm1931 = vmor %vm1929, %vm1930
        %v1932 = vrot.slane %v1244, 7
        %v1933 = vrot.slane %v1932, 4
        %v1934 = vrot.slane %v1245, 7
        %v1935 = vsel %vm1931, %v1933, %v1934
        %v1936 = vrot.slane %v1246, 7
        %v1937 = vrot.slane %v1936, 4
        %v1938 = vrot.slane %v1247, 7
        %v1939 = vsel %vm1931, %v1937, %v1938
        %v1940 = vrot.slane %v1248, 7
        %v1941 = vrot.slane %v1940, 4
        %v1942 = vrot.slane %v1249, 7
        %v1943 = vsel %vm1931, %v1941, %v1942
        %v1944 = vrot.slane %v1250, 7
        %v1945 = vrot.slane %v1944, 4
        %v1946 = vrot.slane %v1251, 7
        %v1947 = vsel %vm1931, %v1945, %v1946
        %v1948 = vrot.slane %v1252, 7
        %v1949 = vrot.slane %v1948, 4
        %v1950 = vrot.slane %v1253, 7
        %v1951 = vsel %vm1931, %v1949, %v1950
        %v1952 = vrot.slane %v1254, 7
        %v1953 = vrot.slane %v1952, 4
        %v1954 = vrot.slane %v1255, 7
        %v1955 = vsel %vm1931, %v1953, %v1954
        %v1956 = vrot.slane %v1256, 7
        %v1957 = vrot.slane %v1956, 4
        %v1958 = vrot.slane %v1257, 7
        %v1959 = vsel %vm1931, %v1957, %v1958
        %v1960 = vrot.slane %v1258, 7
        %v1961 = vrot.slane %v1960, 4
        %v1962 = vrot.slane %v1259, 7
        %v1963 = vsel %vm1931, %v1961, %v1962
        %v1964 = vrot.slane %v1260, 7
        %v1965 = vrot.slane %v1964, 4
        %v1966 = vrot.slane %v1261, 7
        %v1967 = vsel %vm1931, %v1965, %v1966
        %v1968 = vrot.slane %v1262, 7
        %v1969 = vrot.slane %v1968, 4
        %v1970 = vrot.slane %v1263, 7
        %v1971 = vsel %vm1931, %v1969, %v1970
        %v1972 = vrot.slane %v1264, 7
        %v1973 = vrot.slane %v1972, 4
        %v1974 = vrot.slane %v1265, 7
        %v1975 = vsel %vm1931, %v1973, %v1974
        %v1976 = vrot.slane %v1266, 7
        %v1977 = vrot.slane %v1976, 4
        %v1978 = vrot.slane %v1267, 7
        %v1979 = vsel %vm1931, %v1977, %v1978
        %v1980 = vrot.slane %v1268, 7
        %v1981 = vrot.slane %v1980, 4
        %v1982 = vrot.slane %v1269, 7
        %v1983 = vsel %vm1931, %v1981, %v1982
        %v1984 = vrot.slane %v1270, 7
        %v1985 = vrot.slane %v1984, 4
        %v1986 = vrot.slane %v1271, 7
        %v1987 = vsel %vm1931, %v1985, %v1986
        %v1988 = vrot.slane %v1272, 7
        %v1989 = vrot.slane %v1988, 4
        %v1990 = vrot.slane %v1273, 7
        %v1991 = vsel %vm1931, %v1989, %v1990
        %v1992 = vrot.slane %v1274, 7
        %v1993 = vrot.slane %v1992, 4
        %v1994 = vrot.slane %v1275, 7
        %v1995 = vsel %vm1931, %v1993, %v1994
        %v1996 = vpack.c.b16 %v1214, %v1212
        %v1997 = vpack.c.b16 %v1218, %v1216
        %v1998 = vpack.c.b16 %v1222, %v1220
        %v1999 = vpack.c.b16 %v1226, %v1224
        %v2000 = vpack.c.b16 %v1230, %v1228
        %v2001 = vpack.c.b16 %v1234, %v1232
        %v2002 = vpack.c.b16 %v1238, %v1236
        %v2003 = vpack.c.b16 %v1242, %v1240
        %v2004 = vunpack.c.l.b16 %v1292
        %v2005 = vunpack.c.l.b16 %v1306
        %v2006 = vunpack.c.l.b16 %v1320
        %v2007 = vunpack.c.l.b16 %v1334
        %v2008 = vunpack.c.l.b16 %v1348
        %v2009 = vunpack.c.l.b16 %v1362
        %v2010 = vunpack.c.l.b16 %v1376
        %v2011 = vunpack.c.l.b16 %v1390
        %v2012 = vunpack.c.l.b16 %v1404
        %v2013 = vunpack.c.l.b16 %v1418
        %v2014 = vunpack.c.l.b16 %v1432
        %v2015 = vunpack.c.l.b16 %v1446
        %v2016 = vunpack.c.l.b16 %v1460
        %v2017 = vunpack.c.l.b16 %v1474
        %v2018 = vunpack.c.l.b16 %v1488
        %v2019 = vunpack.c.l.b16 %v1502
        %v2020 = vpack.c.b16 %v2005, %v2004
        %v2021 = vpack.c.b16 %v2007, %v2006
        %v2022 = vpack.c.b16 %v2009, %v2008
        %v2023 = vpack.c.b16 %v2011, %v2010
        %v2024 = vpack.c.b16 %v2013, %v2012
        %v2025 = vpack.c.b16 %v2015, %v2014
        %v2026 = vpack.c.b16 %v2017, %v2016
        %v2027 = vpack.c.b16 %v2019, %v2018
        %2028 = vrot.lane.b32.xlu0 %v2020, 8
        %v2029 = vpop.permute.xlu0 %2028
        %2030 = vrot.lane.b32.xlu0 %v2021, 8
        %v2031 = vpop.permute.xlu0 %2030
        %2032 = vrot.lane.b32.xlu0 %v2022, 8
        %v2033 = vpop.permute.xlu0 %2032
        %2034 = vrot.lane.b32.xlu0 %v2023, 8
        %v2035 = vpop.permute.xlu0 %2034
        %2036 = vrot.lane.b32.xlu0 %v2024, 8
        %v2037 = vpop.permute.xlu0 %2036
        %2038 = vrot.lane.b32.xlu0 %v2025, 8
        %v2039 = vpop.permute.xlu0 %2038
        %2040 = vrot.lane.b32.xlu0 %v2026, 8
        %v2041 = vpop.permute.xlu0 %2040
        %2042 = vrot.lane.b32.xlu0 %v2027, 8
        %v2043 = vpop.permute.xlu0 %2042
        %v2044 = vunpack.c.l.b16 %v1509
        %v2045 = vunpack.c.l.b16 %v1513
        %v2046 = vunpack.c.l.b16 %v1517
        %v2047 = vunpack.c.l.b16 %v1521
        %v2048 = vunpack.c.l.b16 %v1525
        %v2049 = vunpack.c.l.b16 %v1529
        %v2050 = vunpack.c.l.b16 %v1533
        %v2051 = vunpack.c.l.b16 %v1537
        %v2052 = vunpack.c.l.b16 %v1541
        %v2053 = vunpack.c.l.b16 %v1545
        %v2054 = vunpack.c.l.b16 %v1549
        %v2055 = vunpack.c.l.b16 %v1553
        %v2056 = vunpack.c.l.b16 %v1557
        %v2057 = vunpack.c.l.b16 %v1561
        %v2058 = vunpack.c.l.b16 %v1565
        %v2059 = vunpack.c.l.b16 %v1569
        %v2060 = vpack.c.b16 %v2045, %v2044
        %v2061 = vpack.c.b16 %v2047, %v2046
        %v2062 = vpack.c.b16 %v2049, %v2048
        %v2063 = vpack.c.b16 %v2051, %v2050
        %v2064 = vpack.c.b16 %v2053, %v2052
        %v2065 = vpack.c.b16 %v2055, %v2054
        %v2066 = vpack.c.b16 %v2057, %v2056
        %v2067 = vpack.c.b16 %v2059, %v2058
        %2068 = vrot.lane.b32.xlu0 %v2060, 16
        %v2069 = vpop.permute.xlu0 %2068
        %2070 = vrot.lane.b32.xlu0 %v2061, 16
        %v2071 = vpop.permute.xlu0 %2070
        %2072 = vrot.lane.b32.xlu0 %v2062, 16
        %v2073 = vpop.permute.xlu0 %2072
        %2074 = vrot.lane.b32.xlu0 %v2063, 16
        %v2075 = vpop.permute.xlu0 %2074
        %2076 = vrot.lane.b32.xlu0 %v2064, 16
        %v2077 = vpop.permute.xlu0 %2076
        %2078 = vrot.lane.b32.xlu0 %v2065, 16
        %v2079 = vpop.permute.xlu0 %2078
        %2080 = vrot.lane.b32.xlu0 %v2066, 16
        %v2081 = vpop.permute.xlu0 %2080
        %2082 = vrot.lane.b32.xlu0 %v2067, 16
        %v2083 = vpop.permute.xlu0 %2082
        %v2084 = vunpack.c.l.b16 %v1582
        %v2085 = vunpack.c.l.b16 %v1592
        %v2086 = vunpack.c.l.b16 %v1602
        %v2087 = vunpack.c.l.b16 %v1612
        %v2088 = vunpack.c.l.b16 %v1622
        %v2089 = vunpack.c.l.b16 %v1632
        %v2090 = vunpack.c.l.b16 %v1642
        %v2091 = vunpack.c.l.b16 %v1652
        %v2092 = vunpack.c.l.b16 %v1662
        %v2093 = vunpack.c.l.b16 %v1672
        %v2094 = vunpack.c.l.b16 %v1682
        %v2095 = vunpack.c.l.b16 %v1692
        %v2096 = vunpack.c.l.b16 %v1702
        %v2097 = vunpack.c.l.b16 %v1712
        %v2098 = vunpack.c.l.b16 %v1722
        %v2099 = vunpack.c.l.b16 %v1732
        %v2100 = vpack.c.b16 %v2085, %v2084
        %v2101 = vpack.c.b16 %v2087, %v2086
        %v2102 = vpack.c.b16 %v2089, %v2088
        %v2103 = vpack.c.b16 %v2091, %v2090
        %v2104 = vpack.c.b16 %v2093, %v2092
        %v2105 = vpack.c.b16 %v2095, %v2094
        %v2106 = vpack.c.b16 %v2097, %v2096
        %v2107 = vpack.c.b16 %v2099, %v2098
        %2108 = vrot.lane.b32.xlu0 %v2100, 24
        %v2109 = vpop.permute.xlu0 %2108
        %2110 = vrot.lane.b32.xlu0 %v2101, 24
        %v2111 = vpop.permute.xlu0 %2110
        %2112 = vrot.lane.b32.xlu0 %v2102, 24
        %v2113 = vpop.permute.xlu0 %2112
        %2114 = vrot.lane.b32.xlu0 %v2103, 24
        %v2115 = vpop.permute.xlu0 %2114
        %2116 = vrot.lane.b32.xlu0 %v2104, 24
        %v2117 = vpop.permute.xlu0 %2116
        %2118 = vrot.lane.b32.xlu0 %v2105, 24
        %v2119 = vpop.permute.xlu0 %2118
        %2120 = vrot.lane.b32.xlu0 %v2106, 24
        %v2121 = vpop.permute.xlu0 %2120
        %2122 = vrot.lane.b32.xlu0 %v2107, 24
        %v2123 = vpop.permute.xlu0 %2122
        %v2124 = vunpack.c.l.b16 %v1738
        %v2125 = vunpack.c.l.b16 %v1742
        %v2126 = vunpack.c.l.b16 %v1746
        %v2127 = vunpack.c.l.b16 %v1750
        %v2128 = vunpack.c.l.b16 %v1754
        %v2129 = vunpack.c.l.b16 %v1758
        %v2130 = vunpack.c.l.b16 %v1762
        %v2131 = vunpack.c.l.b16 %v1766
        %v2132 = vunpack.c.l.b16 %v1770
        %v2133 = vunpack.c.l.b16 %v1774
        %v2134 = vunpack.c.l.b16 %v1778
        %v2135 = vunpack.c.l.b16 %v1782
        %v2136 = vunpack.c.l.b16 %v1786
        %v2137 = vunpack.c.l.b16 %v1790
        %v2138 = vunpack.c.l.b16 %v1794
        %v2139 = vunpack.c.l.b16 %v1798
        %v2140 = vpack.c.b16 %v2125, %v2124
        %v2141 = vpack.c.b16 %v2127, %v2126
        %v2142 = vpack.c.b16 %v2129, %v2128
        %v2143 = vpack.c.b16 %v2131, %v2130
        %v2144 = vpack.c.b16 %v2133, %v2132
        %v2145 = vpack.c.b16 %v2135, %v2134
        %v2146 = vpack.c.b16 %v2137, %v2136
        %v2147 = vpack.c.b16 %v2139, %v2138
        %2148 = vrot.lane.b32.xlu0 %v2140, 32
        %v2149 = vpop.permute.xlu0 %2148
        %2150 = vrot.lane.b32.xlu0 %v2141, 32
        %v2151 = vpop.permute.xlu0 %2150
        %2152 = vrot.lane.b32.xlu0 %v2142, 32
        %v2153 = vpop.permute.xlu0 %2152
        %2154 = vrot.lane.b32.xlu0 %v2143, 32
        %v2155 = vpop.permute.xlu0 %2154
        %2156 = vrot.lane.b32.xlu0 %v2144, 32
        %v2157 = vpop.permute.xlu0 %2156
        %2158 = vrot.lane.b32.xlu0 %v2145, 32
        %v2159 = vpop.permute.xlu0 %2158
        %2160 = vrot.lane.b32.xlu0 %v2146, 32
        %v2161 = vpop.permute.xlu0 %2160
        %2162 = vrot.lane.b32.xlu0 %v2147, 32
        %v2163 = vpop.permute.xlu0 %2162
        %v2164 = vunpack.c.l.b16 %v1808
        %v2165 = vunpack.c.l.b16 %v1816
        %v2166 = vunpack.c.l.b16 %v1824
        %v2167 = vunpack.c.l.b16 %v1832
        %v2168 = vunpack.c.l.b16 %v1840
        %v2169 = vunpack.c.l.b16 %v1848
        %v2170 = vunpack.c.l.b16 %v1856
        %v2171 = vunpack.c.l.b16 %v1864
        %v2172 = vunpack.c.l.b16 %v1872
        %v2173 = vunpack.c.l.b16 %v1880
        %v2174 = vunpack.c.l.b16 %v1888
        %v2175 = vunpack.c.l.b16 %v1896
        %v2176 = vunpack.c.l.b16 %v1904
        %v2177 = vunpack.c.l.b16 %v1912
        %v2178 = vunpack.c.l.b16 %v1920
        %v2179 = vunpack.c.l.b16 %v1928
        %v2180 = vpack.c.b16 %v2165, %v2164
        %v2181 = vpack.c.b16 %v2167, %v2166
        %v2182 = vpack.c.b16 %v2169, %v2168
        %v2183 = vpack.c.b16 %v2171, %v2170
        %v2184 = vpack.c.b16 %v2173, %v2172
        %v2185 = vpack.c.b16 %v2175, %v2174
        %v2186 = vpack.c.b16 %v2177, %v2176
        %v2187 = vpack.c.b16 %v2179, %v2178
        %2188 = vrot.lane.b32.xlu0 %v2180, 40
        %v2189 = vpop.permute.xlu0 %2188
        %2190 = vrot.lane.b32.xlu0 %v2181, 40
        %v2191 = vpop.permute.xlu0 %2190
        %2192 = vrot.lane.b32.xlu0 %v2182, 40
        %v2193 = vpop.permute.xlu0 %2192
        %2194 = vrot.lane.b32.xlu0 %v2183, 40
        %v2195 = vpop.permute.xlu0 %2194
        %2196 = vrot.lane.b32.xlu0 %v2184, 40
        %v2197 = vpop.permute.xlu0 %2196
        %2198 = vrot.lane.b32.xlu0 %v2185, 40
        %v2199 = vpop.permute.xlu0 %2198
        %2200 = vrot.lane.b32.xlu0 %v2186, 40
        %v2201 = vpop.permute.xlu0 %2200
        %2202 = vrot.lane.b32.xlu0 %v2187, 40
        %v2203 = vpop.permute.xlu0 %2202
        %v2204 = vunpack.c.l.b16 %v1935
        %v2205 = vunpack.c.l.b16 %v1939
        %v2206 = vunpack.c.l.b16 %v1943
        %v2207 = vunpack.c.l.b16 %v1947
        %v2208 = vunpack.c.l.b16 %v1951
        %v2209 = vunpack.c.l.b16 %v1955
        %v2210 = vunpack.c.l.b16 %v1959
        %v2211 = vunpack.c.l.b16 %v1963
        %v2212 = vunpack.c.l.b16 %v1967
        %v2213 = vunpack.c.l.b16 %v1971
        %v2214 = vunpack.c.l.b16 %v1975
        %v2215 = vunpack.c.l.b16 %v1979
        %v2216 = vunpack.c.l.b16 %v1983
        %v2217 = vunpack.c.l.b16 %v1987
        %v2218 = vunpack.c.l.b16 %v1991
        %v2219 = vunpack.c.l.b16 %v1995
        %v2220 = vpack.c.b16 %v2205, %v2204
        %v2221 = vpack.c.b16 %v2207, %v2206
        %v2222 = vpack.c.b16 %v2209, %v2208
        %v2223 = vpack.c.b16 %v2211, %v2210
        %v2224 = vpack.c.b16 %v2213, %v2212
        %v2225 = vpack.c.b16 %v2215, %v2214
        %v2226 = vpack.c.b16 %v2217, %v2216
        %v2227 = vpack.c.b16 %v2219, %v2218
        %2228 = vrot.lane.b32.xlu0 %v2220, 48
        %v2229 = vpop.permute.xlu0 %2228
        %2230 = vrot.lane.b32.xlu0 %v2221, 48
        %v2231 = vpop.permute.xlu0 %2230
        %2232 = vrot.lane.b32.xlu0 %v2222, 48
        %v2233 = vpop.permute.xlu0 %2232
        %2234 = vrot.lane.b32.xlu0 %v2223, 48
        %v2235 = vpop.permute.xlu0 %2234
        %2236 = vrot.lane.b32.xlu0 %v2224, 48
        %v2237 = vpop.permute.xlu0 %2236
        %2238 = vrot.lane.b32.xlu0 %v2225, 48
        %v2239 = vpop.permute.xlu0 %2238
        %2240 = vrot.lane.b32.xlu0 %v2226, 48
        %v2241 = vpop.permute.xlu0 %2240
        %2242 = vrot.lane.b32.xlu0 %v2227, 48
        %v2243 = vpop.permute.xlu0 %2242
        %vm2244 = vcmask 64512
        %v2247 = vsel %vm2244, %v1996, %v2029
        %v2250 = vsel %vm2244, %v1997, %v2031
        %v2253 = vsel %vm2244, %v1998, %v2033
        %v2256 = vsel %vm2244, %v1999, %v2035
        %v2259 = vsel %vm2244, %v2000, %v2037
        %v2262 = vsel %vm2244, %v2001, %v2039
        %v2265 = vsel %vm2244, %v2002, %v2041
        %v2268 = vsel %vm2244, %v2003, %v2043
        %v2270 = vsel %vm607, %v2247, %v2069
        %v2272 = vsel %vm607, %v2250, %v2071
        %v2274 = vsel %vm607, %v2253, %v2073
        %v2276 = vsel %vm607, %v2256, %v2075
        %v2278 = vsel %vm607, %v2259, %v2077
        %v2280 = vsel %vm607, %v2262, %v2079
        %v2282 = vsel %vm607, %v2265, %v2081
        %v2284 = vsel %vm607, %v2268, %v2083
        %vm2285 = vcmask 195584
        %v2287 = vsel %vm2285, %v2270, %v2109
        %v2289 = vsel %vm2285, %v2272, %v2111
        %v2291 = vsel %vm2285, %v2274, %v2113
        %v2293 = vsel %vm2285, %v2276, %v2115
        %v2295 = vsel %vm2285, %v2278, %v2117
        %v2297 = vsel %vm2285, %v2280, %v2119
        %v2299 = vsel %vm2285, %v2282, %v2121
        %v2301 = vsel %vm2285, %v2284, %v2123
        %vm2302 = vcmask 261120
        %v2304 = vsel %vm2302, %v2287, %v2149
        %v2306 = vsel %vm2302, %v2289, %v2151
        %v2308 = vsel %vm2302, %v2291, %v2153
        %v2310 = vsel %vm2302, %v2293, %v2155
        %v2312 = vsel %vm2302, %v2295, %v2157
        %v2314 = vsel %vm2302, %v2297, %v2159
        %v2316 = vsel %vm2302, %v2299, %v2161
        %v2318 = vsel %vm2302, %v2301, %v2163
        %vm2319 = vcmask 326656
        %v2321 = vsel %vm2319, %v2304, %v2189
        %v2323 = vsel %vm2319, %v2306, %v2191
        %v2325 = vsel %vm2319, %v2308, %v2193
        %v2327 = vsel %vm2319, %v2310, %v2195
        %v2329 = vsel %vm2319, %v2312, %v2197
        %v2331 = vsel %vm2319, %v2314, %v2199
        %v2333 = vsel %vm2319, %v2316, %v2201
        %v2335 = vsel %vm2319, %v2318, %v2203
        %vm2336 = vcmask 392192
        %v2338 = vsel %vm2336, %v2321, %v2229
        %v2340 = vsel %vm2336, %v2323, %v2231
        %v2342 = vsel %vm2336, %v2325, %v2233
        %v2344 = vsel %vm2336, %v2327, %v2235
        %v2346 = vsel %vm2336, %v2329, %v2237
        %v2348 = vsel %vm2336, %v2331, %v2239
        %v2350 = vsel %vm2336, %v2333, %v2241
        %v2352 = vsel %vm2336, %v2335, %v2243
        %v2353 = vld [vmem:[%s4] sm:$0xf]
        %v2354 = vld [vmem:[%s4 + $0x4] sm:$0xf]
        %v2355 = vld [vmem:[%s4 + $0x8] sm:$0xf]
        %v2356 = vld [vmem:[%s4 + $0xc] sm:$0xf]
        %v2357 = vld [vmem:[%s4 + $0x10] sm:$0xf]
        %v2358 = vld [vmem:[%s4 + $0x14] sm:$0xf]
        %v2359 = vld [vmem:[%s4 + $0x18] sm:$0xf]
        %v2360 = vld [vmem:[%s5] sm:$0x1]
        %v2362 = vlaneseq
        %v2363 = vshrl.u32 %v2362, 7
        %v2364 = vsub.s32 0, %v2363
        %v2365 = vrot.slane %v2360, %v2364
        %v2374 = vunpack.c.l.b16 %v2353
        %v2375 = vunpack.c.l.b16 %v2354
        %v2376 = vunpack.c.l.b16 %v2355
        %v2377 = vunpack.c.l.b16 %v2356
        %v2378 = vunpack.c.l.b16 %v2357
        %v2379 = vunpack.c.l.b16 %v2358
        %v2380 = vunpack.c.l.b16 %v2359
        %v2381 = vpack.c.b16 %v2375, %v2374
        %v2382 = vpack.c.b16 %v2377, %v2376
        %v2383 = vpack.c.b16 %v2379, %v2378
        %v2384 = vpack.c.b16 %v2380, %v2380
        %vm2388 = vcmask 457728
        %v2389 = vsel %vm2388, %v2338, 0
        %v2391 = vsel %vm2388, %v2340, 0
        %v2393 = vsel %vm2388, %v2342, 0
        %v2395 = vsel %vm2388, %v2344, 0
        %v2397 = vsel %vm2388, %v2346, 0
        %v2399 = vsel %vm2388, %v2348, 0
        %v2401 = vsel %vm2388, %v2350, 0
        %v2403 = vsel %vm2388, %v2352, 0
        %vm2405 = vcmask 1043456
        %v2407 = vsel %vm2405, %v2384, 0
        %2409 = vmatprep.subr.bf16.mxu0 0
        %2410 = vmatpush1.bf16.msra.mxu0 0
        %2411 = vmatprep.subr.bf16.mxu0 0
        %2412 = vmatpush1.bf16.msra.mxu0 0
        %2413 = vmatprep.subr.bf16.mxu0 0
        %2414 = vmatpush1.bf16.msra.mxu0 0
        %2415 = vmatprep.subr.bf16.mxu0 0
        %2416 = vmatpush1.bf16.msra.mxu0 0
        %2417 = vmatprep.subr.bf16.mxu0 0
        %2418 = vmatpush1.bf16.msra.mxu0 %v2407
        %2419 = vmatprep.subr.bf16.mxu0 0
        %2420 = vmatpush1.bf16.msra.mxu0 %v2383
        %2421 = vmatprep.subr.bf16.mxu0 0
        %2422 = vmatpush1.bf16.msra.mxu0 %v2382
        %2423 = vmatprep.subr.bf16.mxu0 0
        %2424 = vmatpush1.bf16.msra.mxu0 %v2381
        %2425 = vmatprep.subr.bf16.mxu0 0
        %2426 = vmatpush2.bf16.msra.mxu0 0
        %2427 = vmatprep.subr.bf16.mxu0 0
        %2428 = vmatpush2.bf16.msra.mxu0 0
        %2429 = vmatprep.subr.bf16.mxu0 0
        %2430 = vmatpush2.bf16.msra.mxu0 0
        %2431 = vmatprep.subr.bf16.mxu0 0
        %2432 = vmatpush2.bf16.msra.mxu0 0
        %2433 = vmatprep.subr.bf16.mxu0 0
        %2434 = vmatpush2.bf16.msra.mxu0 0
        %2435 = vmatprep.subr.bf16.mxu0 0
        %2436 = vmatpush2.bf16.msra.mxu0 0
        %2437 = vmatprep.subr.bf16.mxu0 0
        %2438 = vmatpush2.bf16.msra.mxu0 0
        %2439 = vmatprep.subr.bf16.mxu0 0
        %2440 = vmatpush2.bf16.msra.mxu0 0
        %2441 = vmatprep.mubr.bf16.mxu0 0
        %2442 = vmatmul.mubr.bf16.gmra.mxu0 %v2389
        %v2443 = vpop.f32.mrf.mxu0
        %v2444 = vadd.f32 %v2365, %v2443
        %v2445 = vpop.f32.mrf.mxu0
        %v2446 = vpop.f32.mrf.mxu0
        %v2447 = vadd.f32 %v2365, %v2446
        %v2448 = vpop.f32.mrf.mxu0
        %2449 = vmatprep.mubr.bf16.mxu0 0
        %2450 = vmatmul.mubr.bf16.gmra.mxu0 %v2391
        %v2451 = vpop.f32.mrf.mxu0
        %v2452 = vadd.f32 %v2365, %v2451
        %v2453 = vpop.f32.mrf.mxu0
        %v2454 = vpop.f32.mrf.mxu0
        %v2455 = vadd.f32 %v2365, %v2454
        %v2456 = vpop.f32.mrf.mxu0
        %2457 = vmatprep.mubr.bf16.mxu0 0
        %2458 = vmatmul.mubr.bf16.gmra.mxu0 %v2393
        %v2459 = vpop.f32.mrf.mxu0
        %v2460 = vadd.f32 %v2365, %v2459
        %v2461 = vpop.f32.mrf.mxu0
        %v2462 = vpop.f32.mrf.mxu0
        %v2463 = vadd.f32 %v2365, %v2462
        %v2464 = vpop.f32.mrf.mxu0
        %2465 = vmatprep.mubr.bf16.mxu0 0
        %2466 = vmatmul.mubr.bf16.gmra.mxu0 %v2395
        %v2467 = vpop.f32.mrf.mxu0
        %v2468 = vadd.f32 %v2365, %v2467
        %v2469 = vpop.f32.mrf.mxu0
        %v2470 = vpop.f32.mrf.mxu0
        %v2471 = vadd.f32 %v2365, %v2470
        %v2472 = vpop.f32.mrf.mxu0
        %2473 = vmatprep.mubr.bf16.mxu0 0
        %2474 = vmatmul.mubr.bf16.gmra.mxu0 %v2397
        %v2475 = vpop.f32.mrf.mxu0
        %v2476 = vadd.f32 %v2365, %v2475
        %v2477 = vpop.f32.mrf.mxu0
        %v2478 = vpop.f32.mrf.mxu0
        %v2479 = vadd.f32 %v2365, %v2478
        %v2480 = vpop.f32.mrf.mxu0
        %2481 = vmatprep.mubr.bf16.mxu0 0
        %2482 = vmatmul.mubr.bf16.gmra.mxu0 %v2399
        %v2483 = vpop.f32.mrf.mxu0
        %v2484 = vadd.f32 %v2365, %v2483
        %v2485 = vpop.f32.mrf.mxu0
        %v2486 = vpop.f32.mrf.mxu0
        %v2487 = vadd.f32 %v2365, %v2486
        %v2488 = vpop.f32.mrf.mxu0
        %2489 = vmatprep.mubr.bf16.mxu0 0
        %2490 = vmatmul.mubr.bf16.gmra.mxu0 %v2401
        %v2491 = vpop.f32.mrf.mxu0
        %v2492 = vadd.f32 %v2365, %v2491
        %v2493 = vpop.f32.mrf.mxu0
        %v2494 = vpop.f32.mrf.mxu0
        %v2495 = vadd.f32 %v2365, %v2494
        %v2496 = vpop.f32.mrf.mxu0
        %2497 = vmatprep.mubr.bf16.mxu0 0
        %2498 = vmatmul.mubr.bf16.gmra.mxu0 %v2403
        %v2499 = vpop.f32.mrf.mxu0
        %v2500 = vadd.f32 %v2365, %v2499
        %v2501 = vpop.f32.mrf.mxu0
        %v2502 = vpop.f32.mrf.mxu0
        %v2503 = vadd.f32 %v2365, %v2502
        %v2504 = vpop.f32.mrf.mxu0
        %2505 = vdwg.mxu0
        %v2506 = vmax.f32 %v2444, 0.0
        %v2507 = vmax.f32 %v2447, 0.0
        %v2508 = vmax.f32 %v2452, 0.0
        %v2509 = vmax.f32 %v2455, 0.0
        %v2510 = vmax.f32 %v2460, 0.0
        %v2511 = vmax.f32 %v2463, 0.0
        %v2512 = vmax.f32 %v2468, 0.0
        %v2513 = vmax.f32 %v2471, 0.0
        %v2514 = vmax.f32 %v2476, 0.0
        %v2515 = vmax.f32 %v2479, 0.0
        %v2516 = vmax.f32 %v2484, 0.0
        %v2517 = vmax.f32 %v2487, 0.0
        %v2518 = vmax.f32 %v2492, 0.0
        %v2519 = vmax.f32 %v2495, 0.0
        %v2520 = vmax.f32 %v2500, 0.0
        %v2521 = vmax.f32 %v2503, 0.0
        %v2522 = vpack.c.bf16 %v2507, %v2506
        %v2523 = vpack.c.bf16 %v2509, %v2508
        %v2524 = vpack.c.bf16 %v2511, %v2510
        %v2525 = vpack.c.bf16 %v2513, %v2512
        %v2526 = vpack.c.bf16 %v2515, %v2514
        %v2527 = vpack.c.bf16 %v2517, %v2516
        %v2528 = vpack.c.bf16 %v2519, %v2518
        %v2529 = vpack.c.bf16 %v2521, %v2520
        %v2538 = vunpack.c.l.b16 %v2522
        %v2539 = vunpack.c.h.b16 %v2522
        %v2540 = vunpack.c.l.b16 %v2523
        %v2541 = vunpack.c.h.b16 %v2523
        %v2542 = vunpack.c.l.b16 %v2524
        %v2543 = vunpack.c.h.b16 %v2524
        %v2544 = vunpack.c.l.b16 %v2525
        %v2545 = vunpack.c.h.b16 %v2525
        %v2546 = vunpack.c.l.b16 %v2526
        %v2547 = vunpack.c.h.b16 %v2526
        %v2548 = vunpack.c.l.b16 %v2527
        %v2549 = vunpack.c.h.b16 %v2527
        %v2550 = vunpack.c.l.b16 %v2528
        %v2551 = vunpack.c.h.b16 %v2528
        %v2552 = vunpack.c.l.b16 %v2529
        %v2553 = vunpack.c.h.b16 %v2529
        %v2555 = vunpack.c.l.b16 0
        %v2556 = vpack.c.b16 %v2555, %v2555
        %v2557 = vpack.c.b16 %v2538, %v2555
        %v2558 = vpack.c.b16 %v2540, %v2539
        %v2559 = vpack.c.b16 %v2542, %v2541
        %v2560 = vpack.c.b16 %v2546, %v2555
        %v2561 = vpack.c.b16 %v2548, %v2547
        %v2562 = vpack.c.b16 %v2550, %v2549
        %v2563 = vpack.c.b16 %v2539, %v2538
        %v2564 = vpack.c.b16 %v2541, %v2540
        %v2565 = vpack.c.b16 %v2543, %v2542
        %v2566 = vpack.c.b16 %v2547, %v2546
        %v2567 = vpack.c.b16 %v2549, %v2548
        %v2568 = vpack.c.b16 %v2551, %v2550
        %2569 = vrot.lane.b32.xlu0 %v2556, 8
        %v2570 = vpop.permute.xlu0 %2569
        %2571 = vrot.lane.b32.xlu0 %v2563, 8
        %v2572 = vpop.permute.xlu0 %2571
        %2573 = vrot.lane.b32.xlu0 %v2564, 8
        %v2574 = vpop.permute.xlu0 %2573
        %2575 = vrot.lane.b32.xlu0 %v2565, 8
        %v2576 = vpop.permute.xlu0 %2575
        %2577 = vrot.lane.b32.xlu0 %v2566, 8
        %v2578 = vpop.permute.xlu0 %2577
        %2579 = vrot.lane.b32.xlu0 %v2567, 8
        %v2580 = vpop.permute.xlu0 %2579
        %2581 = vrot.lane.b32.xlu0 %v2568, 8
        %v2582 = vpop.permute.xlu0 %2581
        %v2583 = vpack.c.b16 %v2544, %v2543
        %v2584 = vpack.c.b16 %v2552, %v2551
        %2585 = vrot.lane.b32.xlu0 %v2557, 16
        %v2586 = vpop.permute.xlu0 %2585
        %2587 = vrot.lane.b32.xlu0 %v2558, 16
        %v2588 = vpop.permute.xlu0 %2587
        %2589 = vrot.lane.b32.xlu0 %v2559, 16
        %v2590 = vpop.permute.xlu0 %2589
        %2591 = vrot.lane.b32.xlu0 %v2583, 16
        %v2592 = vpop.permute.xlu0 %2591
        %2593 = vrot.lane.b32.xlu0 %v2560, 16
        %v2594 = vpop.permute.xlu0 %2593
        %2595 = vrot.lane.b32.xlu0 %v2561, 16
        %v2596 = vpop.permute.xlu0 %2595
        %2597 = vrot.lane.b32.xlu0 %v2562, 16
        %v2598 = vpop.permute.xlu0 %2597
        %2599 = vrot.lane.b32.xlu0 %v2584, 16
        %v2600 = vpop.permute.xlu0 %2599
        %v2601 = vpack.c.b16 %v2545, %v2544
        %v2602 = vpack.c.b16 %v2553, %v2552
        %2603 = vrot.lane.b32.xlu0 %v2563, 24
        %v2604 = vpop.permute.xlu0 %2603
        %2605 = vrot.lane.b32.xlu0 %v2564, 24
        %v2606 = vpop.permute.xlu0 %2605
        %2607 = vrot.lane.b32.xlu0 %v2565, 24
        %v2608 = vpop.permute.xlu0 %2607
        %2609 = vrot.lane.b32.xlu0 %v2601, 24
        %v2610 = vpop.permute.xlu0 %2609
        %2611 = vrot.lane.b32.xlu0 %v2566, 24
        %v2612 = vpop.permute.xlu0 %2611
        %2613 = vrot.lane.b32.xlu0 %v2567, 24
        %v2614 = vpop.permute.xlu0 %2613
        %2615 = vrot.lane.b32.xlu0 %v2568, 24
        %v2616 = vpop.permute.xlu0 %2615
        %2617 = vrot.lane.b32.xlu0 %v2602, 24
        %v2618 = vpop.permute.xlu0 %2617
        %v2619 = vpack.c.b16 %v2555, %v2545
        %v2620 = vpack.c.b16 %v2555, %v2553
        %2621 = vrot.lane.b32.xlu0 %v2558, 32
        %v2622 = vpop.permute.xlu0 %2621
        %2623 = vrot.lane.b32.xlu0 %v2559, 32
        %v2624 = vpop.permute.xlu0 %2623
        %2625 = vrot.lane.b32.xlu0 %v2583, 32
        %v2626 = vpop.permute.xlu0 %2625
        %2627 = vrot.lane.b32.xlu0 %v2619, 32
        %v2628 = vpop.permute.xlu0 %2627
        %2629 = vrot.lane.b32.xlu0 %v2561, 32
        %v2630 = vpop.permute.xlu0 %2629
        %2631 = vrot.lane.b32.xlu0 %v2562, 32
        %v2632 = vpop.permute.xlu0 %2631
        %2633 = vrot.lane.b32.xlu0 %v2584, 32
        %v2634 = vpop.permute.xlu0 %2633
        %2635 = vrot.lane.b32.xlu0 %v2620, 32
        %v2636 = vpop.permute.xlu0 %2635
        %2637 = vrot.lane.b32.xlu0 %v2564, 40
        %v2638 = vpop.permute.xlu0 %2637
        %2639 = vrot.lane.b32.xlu0 %v2565, 40
        %v2640 = vpop.permute.xlu0 %2639
        %2641 = vrot.lane.b32.xlu0 %v2601, 40
        %v2642 = vpop.permute.xlu0 %2641
        %2643 = vrot.lane.b32.xlu0 %v2556, 40
        %v2644 = vpop.permute.xlu0 %2643
        %2645 = vrot.lane.b32.xlu0 %v2567, 40
        %v2646 = vpop.permute.xlu0 %2645
        %2647 = vrot.lane.b32.xlu0 %v2568, 40
        %v2648 = vpop.permute.xlu0 %2647
        %2649 = vrot.lane.b32.xlu0 %v2602, 40
        %v2650 = vpop.permute.xlu0 %2649
        %2651 = vrot.lane.b32.xlu0 %v2559, 48
        %v2652 = vpop.permute.xlu0 %2651
        %2653 = vrot.lane.b32.xlu0 %v2583, 48
        %v2654 = vpop.permute.xlu0 %2653
        %2655 = vrot.lane.b32.xlu0 %v2619, 48
        %v2656 = vpop.permute.xlu0 %2655
        %2657 = vrot.lane.b32.xlu0 %v2556, 48
        %v2658 = vpop.permute.xlu0 %2657
        %2659 = vrot.lane.b32.xlu0 %v2562, 48
        %v2660 = vpop.permute.xlu0 %2659
        %2661 = vrot.lane.b32.xlu0 %v2584, 48
        %v2662 = vpop.permute.xlu0 %2661
        %2663 = vrot.lane.b32.xlu0 %v2620, 48
        %v2664 = vpop.permute.xlu0 %2663
        %v2667 = vsel %vm2244, %v2556, %v2570
        %v2670 = vsel %vm2244, %v2557, %v2572
        %v2673 = vsel %vm2244, %v2558, %v2574
        %v2676 = vsel %vm2244, %v2559, %v2576
        %v2679 = vsel %vm2244, %v2560, %v2578
        %v2682 = vsel %vm2244, %v2561, %v2580
        %v2685 = vsel %vm2244, %v2562, %v2582
        %v2687 = vsel %vm607, %v2667, %v2586
        %v2689 = vsel %vm607, %v2670, %v2588
        %v2691 = vsel %vm607, %v2673, %v2590
        %v2693 = vsel %vm607, %v2676, %v2592
        %v2695 = vsel %vm607, %v2667, %v2594
        %v2697 = vsel %vm607, %v2679, %v2596
        %v2699 = vsel %vm607, %v2682, %v2598
        %v2701 = vsel %vm607, %v2685, %v2600
        %v2703 = vsel %vm2285, %v2687, %v2604
        %v2705 = vsel %vm2285, %v2689, %v2606
        %v2707 = vsel %vm2285, %v2691, %v2608
        %v2709 = vsel %vm2285, %v2693, %v2610
        %v2711 = vsel %vm2285, %v2695, %v2612
        %v2713 = vsel %vm2285, %v2697, %v2614
        %v2715 = vsel %vm2285, %v2699, %v2616
        %v2717 = vsel %vm2285, %v2701, %v2618
        %v2719 = vsel %vm2302, %v2703, %v2622
        %v2721 = vsel %vm2302, %v2705, %v2624
        %v2723 = vsel %vm2302, %v2707, %v2626
        %v2725 = vsel %vm2302, %v2709, %v2628
        %v2727 = vsel %vm2302, %v2711, %v2630
        %v2729 = vsel %vm2302, %v2713, %v2632
        %v2731 = vsel %vm2302, %v2715, %v2634
        %v2733 = vsel %vm2302, %v2717, %v2636
        %v2735 = vsel %vm2319, %v2719, %v2638
        %v2737 = vsel %vm2319, %v2721, %v2640
        %v2739 = vsel %vm2319, %v2723, %v2642
        %v2741 = vsel %vm2319, %v2725, %v2644
        %v2743 = vsel %vm2319, %v2727, %v2646
        %v2745 = vsel %vm2319, %v2729, %v2648
        %v2747 = vsel %vm2319, %v2731, %v2650
        %v2748 = vsel %vm2319, %v2733, %v2644
        %v2750 = vsel %vm2336, %v2735, %v2652
        %v2752 = vsel %vm2336, %v2737, %v2654
        %v2754 = vsel %vm2336, %v2739, %v2656
        %v2756 = vsel %vm2336, %v2741, %v2658
        %v2758 = vsel %vm2336, %v2743, %v2660
        %v2760 = vsel %vm2336, %v2745, %v2662
        %v2762 = vsel %vm2336, %v2747, %v2664
        %v2763 = vsel %vm2336, %v2748, %v2658
        %v2764 = vld [vmem:[%s6] sm:$0xff]
        %v2765 = vld [vmem:[%s6 + $0x8] sm:$0xff]
        %v2766 = vld [vmem:[%s6 + $0x10] sm:$0xff]
        %v2767 = vld [vmem:[%s6 + $0x18] sm:$0xff]
        %v2768 = vld [vmem:[%s6 + $0x20] sm:$0xff]
        %v2769 = vld [vmem:[%s6 + $0x28] sm:$0xff]
        %v2770 = vld [vmem:[%s6 + $0x30] sm:$0xff]
        %v2771 = vld [vmem:[%s7] sm:$0x3]
        %v2773 = vlaneseq
        %v2774 = vshrl.u32 %v2773, 7
        %v2775 = vsub.s32 0, %v2774
        %v2776 = vrot.slane %v2771, %v2775
        %v2777 = vlaneseq
        %v2778 = vshrl.u32 %v2777, 7
        %v2779 = vsub.s32 1, %v2778
        %v2780 = vrot.slane %v2771, %v2779
        %v2790 = vunpack.c.l.b16 %v2764
        %v2791 = vunpack.c.h.b16 %v2764
        %v2792 = vunpack.c.l.b16 %v2765
        %v2793 = vunpack.c.h.b16 %v2765
        %v2794 = vunpack.c.l.b16 %v2766
        %v2795 = vunpack.c.h.b16 %v2766
        %v2796 = vunpack.c.l.b16 %v2767
        %v2797 = vunpack.c.h.b16 %v2767
        %v2798 = vunpack.c.l.b16 %v2768
        %v2799 = vunpack.c.h.b16 %v2768
        %v2800 = vunpack.c.l.b16 %v2769
        %v2801 = vunpack.c.h.b16 %v2769
        %v2802 = vunpack.c.l.b16 %v2770
        %v2803 = vunpack.c.h.b16 %v2770
        %v2804 = vpack.c.b16 %v2792, %v2790
        %v2805 = vpack.c.b16 %v2793, %v2791
        %v2806 = vpack.c.b16 %v2796, %v2794
        %v2807 = vpack.c.b16 %v2797, %v2795
        %v2808 = vpack.c.b16 %v2800, %v2798
        %v2809 = vpack.c.b16 %v2801, %v2799
        %v2810 = vpack.c.b16 %v2802, %v2802
        %v2811 = vpack.c.b16 %v2803, %v2803
        %v2818 = vsel %vm2388, %v2750, 0
        %v2820 = vsel %vm2388, %v2752, 0
        %v2822 = vsel %vm2388, %v2754, 0
        %v2824 = vsel %vm2388, %v2756, 0
        %v2826 = vsel %vm2388, %v2758, 0
        %v2828 = vsel %vm2388, %v2760, 0
        %v2830 = vsel %vm2388, %v2762, 0
        %v2832 = vsel %vm2388, %v2763, 0
        %v2835 = vsel %vm2405, %v2810, 0
        %v2838 = vsel %vm2405, %v2811, 0
        %2840 = vmatprep.subr.bf16.mxu0 0
        %2841 = vmatpush1.bf16.msra.mxu0 0
        %2842 = vmatprep.subr.bf16.mxu0 0
        %2843 = vmatpush1.bf16.msra.mxu0 0
        %2844 = vmatprep.subr.bf16.mxu0 0
        %2845 = vmatpush1.bf16.msra.mxu0 0
        %2846 = vmatprep.subr.bf16.mxu0 0
        %2847 = vmatpush1.bf16.msra.mxu0 0
        %2848 = vmatprep.subr.bf16.mxu0 %v2838
        %2849 = vmatpush1.bf16.msra.mxu0 %v2835
        %2850 = vmatprep.subr.bf16.mxu0 %v2809
        %2851 = vmatpush1.bf16.msra.mxu0 %v2808
        %2852 = vmatprep.subr.bf16.mxu0 %v2807
        %2853 = vmatpush1.bf16.msra.mxu0 %v2806
        %2854 = vmatprep.subr.bf16.mxu0 %v2805
        %2855 = vmatpush1.bf16.msra.mxu0 %v2804
        %2856 = vmatprep.subr.bf16.mxu0 0
        %2857 = vmatpush2.bf16.msra.mxu0 0
        %2858 = vmatprep.subr.bf16.mxu0 0
        %2859 = vmatpush2.bf16.msra.mxu0 0
        %2860 = vmatprep.subr.bf16.mxu0 0
        %2861 = vmatpush2.bf16.msra.mxu0 0
        %2862 = vmatprep.subr.bf16.mxu0 0
        %2863 = vmatpush2.bf16.msra.mxu0 0
        %2864 = vmatprep.subr.bf16.mxu0 0
        %2865 = vmatpush2.bf16.msra.mxu0 0
        %2866 = vmatprep.subr.bf16.mxu0 0
        %2867 = vmatpush2.bf16.msra.mxu0 0
        %2868 = vmatprep.subr.bf16.mxu0 0
        %2869 = vmatpush2.bf16.msra.mxu0 0
        %2870 = vmatprep.subr.bf16.mxu0 0
        %2871 = vmatpush2.bf16.msra.mxu0 0
        %2872 = vmatprep.mubr.bf16.mxu0 0
        %2873 = vmatmul.mubr.bf16.gmra.mxu0 %v2818
        %v2874 = vpop.f32.mrf.mxu0
        %v2875 = vadd.f32 %v2776, %v2874
        %v2876 = vpop.f32.mrf.mxu0
        %v2877 = vadd.f32 %v2780, %v2876
        %v2878 = vpop.f32.mrf.mxu0
        %v2879 = vadd.f32 %v2776, %v2878
        %v2880 = vpop.f32.mrf.mxu0
        %v2881 = vadd.f32 %v2780, %v2880
        %2882 = vmatprep.mubr.bf16.mxu0 0
        %2883 = vmatmul.mubr.bf16.gmra.mxu0 %v2820
        %v2884 = vpop.f32.mrf.mxu0
        %v2885 = vadd.f32 %v2776, %v2884
        %v2886 = vpop.f32.mrf.mxu0
        %v2887 = vadd.f32 %v2780, %v2886
        %v2888 = vpop.f32.mrf.mxu0
        %v2889 = vadd.f32 %v2776, %v2888
        %v2890 = vpop.f32.mrf.mxu0
        %v2891 = vadd.f32 %v2780, %v2890
        %2892 = vmatprep.mubr.bf16.mxu0 0
        %2893 = vmatmul.mubr.bf16.gmra.mxu0 %v2822
        %v2894 = vpop.f32.mrf.mxu0
        %v2895 = vadd.f32 %v2776, %v2894
        %v2896 = vpop.f32.mrf.mxu0
        %v2897 = vadd.f32 %v2780, %v2896
        %v2898 = vpop.f32.mrf.mxu0
        %v2899 = vadd.f32 %v2776, %v2898
        %v2900 = vpop.f32.mrf.mxu0
        %v2901 = vadd.f32 %v2780, %v2900
        %2902 = vmatprep.mubr.bf16.mxu0 0
        %2903 = vmatmul.mubr.bf16.gmra.mxu0 %v2824
        %v2904 = vpop.f32.mrf.mxu0
        %v2905 = vadd.f32 %v2776, %v2904
        %v2906 = vpop.f32.mrf.mxu0
        %v2907 = vadd.f32 %v2780, %v2906
        %v2908 = vpop.f32.mrf.mxu0
        %v2909 = vadd.f32 %v2776, %v2908
        %v2910 = vpop.f32.mrf.mxu0
        %v2911 = vadd.f32 %v2780, %v2910
        %2912 = vmatprep.mubr.bf16.mxu0 0
        %2913 = vmatmul.mubr.bf16.gmra.mxu0 %v2826
        %v2914 = vpop.f32.mrf.mxu0
        %v2915 = vadd.f32 %v2776, %v2914
        %v2916 = vpop.f32.mrf.mxu0
        %v2917 = vadd.f32 %v2780, %v2916
        %v2918 = vpop.f32.mrf.mxu0
        %v2919 = vadd.f32 %v2776, %v2918
        %v2920 = vpop.f32.mrf.mxu0
        %v2921 = vadd.f32 %v2780, %v2920
        %2922 = vmatprep.mubr.bf16.mxu0 0
        %2923 = vmatmul.mubr.bf16.gmra.mxu0 %v2828
        %v2924 = vpop.f32.mrf.mxu0
        %v2925 = vadd.f32 %v2776, %v2924
        %v2926 = vpop.f32.mrf.mxu0
        %v2927 = vadd.f32 %v2780, %v2926
        %v2928 = vpop.f32.mrf.mxu0
        %v2929 = vadd.f32 %v2776, %v2928
        %v2930 = vpop.f32.mrf.mxu0
        %v2931 = vadd.f32 %v2780, %v2930
        %2932 = vmatprep.mubr.bf16.mxu0 0
        %2933 = vmatmul.mubr.bf16.gmra.mxu0 %v2830
        %v2934 = vpop.f32.mrf.mxu0
        %v2935 = vadd.f32 %v2776, %v2934
        %v2936 = vpop.f32.mrf.mxu0
        %v2937 = vadd.f32 %v2780, %v2936
        %v2938 = vpop.f32.mrf.mxu0
        %v2939 = vadd.f32 %v2776, %v2938
        %v2940 = vpop.f32.mrf.mxu0
        %v2941 = vadd.f32 %v2780, %v2940
        %2942 = vmatprep.mubr.bf16.mxu0 0
        %2943 = vmatmul.mubr.bf16.gmra.mxu0 %v2832
        %v2944 = vpop.f32.mrf.mxu0
        %v2945 = vadd.f32 %v2776, %v2944
        %v2946 = vpop.f32.mrf.mxu0
        %v2947 = vadd.f32 %v2780, %v2946
        %v2948 = vpop.f32.mrf.mxu0
        %v2949 = vadd.f32 %v2776, %v2948
        %v2950 = vpop.f32.mrf.mxu0
        %v2951 = vadd.f32 %v2780, %v2950
        %2952 = vdwg.mxu0
        %v2953 = vmax.f32 %v2875, 0.0
        %v2954 = vmax.f32 %v2877, 0.0
        %v2955 = vmax.f32 %v2879, 0.0
        %v2956 = vmax.f32 %v2881, 0.0
        %v2957 = vmax.f32 %v2885, 0.0
        %v2958 = vmax.f32 %v2887, 0.0
        %v2959 = vmax.f32 %v2889, 0.0
        %v2960 = vmax.f32 %v2891, 0.0
        %v2961 = vmax.f32 %v2895, 0.0
        %v2962 = vmax.f32 %v2897, 0.0
        %v2963 = vmax.f32 %v2899, 0.0
        %v2964 = vmax.f32 %v2901, 0.0
        %v2965 = vmax.f32 %v2905, 0.0
        %v2966 = vmax.f32 %v2907, 0.0
        %v2967 = vmax.f32 %v2909, 0.0
        %v2968 = vmax.f32 %v2911, 0.0
        %v2969 = vmax.f32 %v2915, 0.0
        %v2970 = vmax.f32 %v2917, 0.0
        %v2971 = vmax.f32 %v2919, 0.0
        %v2972 = vmax.f32 %v2921, 0.0
        %v2973 = vmax.f32 %v2925, 0.0
        %v2974 = vmax.f32 %v2927, 0.0
        %v2975 = vmax.f32 %v2929, 0.0
        %v2976 = vmax.f32 %v2931, 0.0
        %v2977 = vmax.f32 %v2935, 0.0
        %v2978 = vmax.f32 %v2937, 0.0
        %v2979 = vmax.f32 %v2939, 0.0
        %v2980 = vmax.f32 %v2941, 0.0
        %v2981 = vmax.f32 %v2945, 0.0
        %v2982 = vmax.f32 %v2947, 0.0
        %v2983 = vmax.f32 %v2949, 0.0
        %v2984 = vmax.f32 %v2951, 0.0
        %2985 = vrot.lane.b32.xlu0 %v966, 56
        %v2986 = vpop.permute.xlu0 %2985
        %2987 = vrot.lane.b32.xlu0 %v967, 56
        %v2988 = vpop.permute.xlu0 %2987
        %2989 = vrot.lane.b32.xlu0 %v968, 56
        %v2990 = vpop.permute.xlu0 %2989
        %2991 = vrot.lane.b32.xlu0 %v969, 56
        %v2992 = vpop.permute.xlu0 %2991
        %2993 = vrot.lane.b32.xlu0 %v970, 56
        %v2994 = vpop.permute.xlu0 %2993
        %2995 = vrot.lane.b32.xlu0 %v971, 56
        %v2996 = vpop.permute.xlu0 %2995
        %2997 = vrot.lane.b32.xlu0 %v972, 56
        %v2998 = vpop.permute.xlu0 %2997
        %2999 = vrot.lane.b32.xlu0 %v973, 56
        %v3000 = vpop.permute.xlu0 %2999
        %3001 = vrot.lane.b32.xlu0 %v974, 56
        %v3002 = vpop.permute.xlu0 %3001
        %3003 = vrot.lane.b32.xlu0 %v975, 56
        %v3004 = vpop.permute.xlu0 %3003
        %3005 = vrot.lane.b32.xlu0 %v976, 56
        %v3006 = vpop.permute.xlu0 %3005
        %3007 = vrot.lane.b32.xlu0 %v977, 56
        %v3008 = vpop.permute.xlu0 %3007
        %3009 = vrot.lane.b32.xlu0 %v978, 56
        %v3010 = vpop.permute.xlu0 %3009
        %3011 = vrot.lane.b32.xlu0 %v979, 56
        %v3012 = vpop.permute.xlu0 %3011
        %3013 = vrot.lane.b32.xlu0 %v980, 56
        %v3014 = vpop.permute.xlu0 %3013
        %3015 = vrot.lane.b32.xlu0 %v981, 56
        %v3016 = vpop.permute.xlu0 %3015
        %v3017 = vunpack.c.l.b16 %v2986
        %v3018 = vunpack.c.l.b16 %v2988
        %v3019 = vunpack.c.l.b16 %v2990
        %v3020 = vunpack.c.l.b16 %v2992
        %v3021 = vunpack.c.l.b16 %v2994
        %v3022 = vunpack.c.l.b16 %v3002
        %v3023 = vunpack.c.l.b16 %v3004
        %v3024 = vunpack.c.l.b16 %v3006
        %v3025 = vunpack.c.l.b16 %v3008
        %v3026 = vunpack.c.l.b16 %v3010
        %v3027 = vpack.c.b16 %v3017, %v2555
        %v3028 = vpack.c.b16 %v3019, %v3018
        %v3029 = vpack.c.b16 %v3021, %v3020
        %v3030 = vpack.c.b16 %v3022, %v2555
        %v3031 = vpack.c.b16 %v3024, %v3023
        %v3032 = vpack.c.b16 %v3026, %v3025
        %v3033 = vunpack.c.l.b16 %v2996
        %v3034 = vunpack.c.l.b16 %v3012
        %v3035 = vpack.c.b16 %v3018, %v3017
        %v3036 = vpack.c.b16 %v3020, %v3019
        %v3037 = vpack.c.b16 %v3033, %v3021
        %v3038 = vpack.c.b16 %v3023, %v3022
        %v3039 = vpack.c.b16 %v3025, %v3024
        %v3040 = vpack.c.b16 %v3034, %v3026
        %3041 = vrot.lane.b32.xlu0 %v3035, 8
        %v3042 = vpop.permute.xlu0 %3041
        %3043 = vrot.lane.b32.xlu0 %v3036, 8
        %v3044 = vpop.permute.xlu0 %3043
        %3045 = vrot.lane.b32.xlu0 %v3037, 8
        %v3046 = vpop.permute.xlu0 %3045
        %3047 = vrot.lane.b32.xlu0 %v3038, 8
        %v3048 = vpop.permute.xlu0 %3047
        %3049 = vrot.lane.b32.xlu0 %v3039, 8
        %v3050 = vpop.permute.xlu0 %3049
        %3051 = vrot.lane.b32.xlu0 %v3040, 8
        %v3052 = vpop.permute.xlu0 %3051
        %v3053 = vunpack.c.l.b16 %v2998
        %v3054 = vunpack.c.l.b16 %v3014
        %v3055 = vpack.c.b16 %v3053, %v3033
        %v3056 = vpack.c.b16 %v3054, %v3034
        %3057 = vrot.lane.b32.xlu0 %v3027, 16
        %v3058 = vpop.permute.xlu0 %3057
        %3059 = vrot.lane.b32.xlu0 %v3028, 16
        %v3060 = vpop.permute.xlu0 %3059
        %3061 = vrot.lane.b32.xlu0 %v3029, 16
        %v3062 = vpop.permute.xlu0 %3061
        %3063 = vrot.lane.b32.xlu0 %v3055, 16
        %v3064 = vpop.permute.xlu0 %3063
        %3065 = vrot.lane.b32.xlu0 %v3030, 16
        %v3066 = vpop.permute.xlu0 %3065
        %3067 = vrot.lane.b32.xlu0 %v3031, 16
        %v3068 = vpop.permute.xlu0 %3067
        %3069 = vrot.lane.b32.xlu0 %v3032, 16
        %v3070 = vpop.permute.xlu0 %3069
        %3071 = vrot.lane.b32.xlu0 %v3056, 16
        %v3072 = vpop.permute.xlu0 %3071
        %v3073 = vunpack.c.l.b16 %v3000
        %v3074 = vunpack.c.l.b16 %v3016
        %v3075 = vpack.c.b16 %v3073, %v3053
        %v3076 = vpack.c.b16 %v3074, %v3054
        %3077 = vrot.lane.b32.xlu0 %v3035, 24
        %v3078 = vpop.permute.xlu0 %3077
        %3079 = vrot.lane.b32.xlu0 %v3036, 24
        %v3080 = vpop.permute.xlu0 %3079
        %3081 = vrot.lane.b32.xlu0 %v3037, 24
        %v3082 = vpop.permute.xlu0 %3081
        %3083 = vrot.lane.b32.xlu0 %v3075, 24
        %v3084 = vpop.permute.xlu0 %3083
        %3085 = vrot.lane.b32.xlu0 %v3038, 24
        %v3086 = vpop.permute.xlu0 %3085
        %3087 = vrot.lane.b32.xlu0 %v3039, 24
        %v3088 = vpop.permute.xlu0 %3087
        %3089 = vrot.lane.b32.xlu0 %v3040, 24
        %v3090 = vpop.permute.xlu0 %3089
        %3091 = vrot.lane.b32.xlu0 %v3076, 24
        %v3092 = vpop.permute.xlu0 %3091
        %v3093 = vpack.c.b16 %v2555, %v3073
        %v3094 = vpack.c.b16 %v2555, %v3074
        %3095 = vrot.lane.b32.xlu0 %v3028, 32
        %v3096 = vpop.permute.xlu0 %3095
        %3097 = vrot.lane.b32.xlu0 %v3029, 32
        %v3098 = vpop.permute.xlu0 %3097
        %3099 = vrot.lane.b32.xlu0 %v3055, 32
        %v3100 = vpop.permute.xlu0 %3099
        %3101 = vrot.lane.b32.xlu0 %v3093, 32
        %v3102 = vpop.permute.xlu0 %3101
        %3103 = vrot.lane.b32.xlu0 %v3031, 32
        %v3104 = vpop.permute.xlu0 %3103
        %3105 = vrot.lane.b32.xlu0 %v3032, 32
        %v3106 = vpop.permute.xlu0 %3105
        %3107 = vrot.lane.b32.xlu0 %v3056, 32
        %v3108 = vpop.permute.xlu0 %3107
        %3109 = vrot.lane.b32.xlu0 %v3094, 32
        %v3110 = vpop.permute.xlu0 %3109
        %3111 = vrot.lane.b32.xlu0 %v3036, 40
        %v3112 = vpop.permute.xlu0 %3111
        %3113 = vrot.lane.b32.xlu0 %v3037, 40
        %v3114 = vpop.permute.xlu0 %3113
        %3115 = vrot.lane.b32.xlu0 %v3075, 40
        %v3116 = vpop.permute.xlu0 %3115
        %3117 = vrot.lane.b32.xlu0 %v3039, 40
        %v3118 = vpop.permute.xlu0 %3117
        %3119 = vrot.lane.b32.xlu0 %v3040, 40
        %v3120 = vpop.permute.xlu0 %3119
        %3121 = vrot.lane.b32.xlu0 %v3076, 40
        %v3122 = vpop.permute.xlu0 %3121
        %3123 = vrot.lane.b32.xlu0 %v3029, 48
        %v3124 = vpop.permute.xlu0 %3123
        %3125 = vrot.lane.b32.xlu0 %v3055, 48
        %v3126 = vpop.permute.xlu0 %3125
        %3127 = vrot.lane.b32.xlu0 %v3093, 48
        %v3128 = vpop.permute.xlu0 %3127
        %3129 = vrot.lane.b32.xlu0 %v3032, 48
        %v3130 = vpop.permute.xlu0 %3129
        %3131 = vrot.lane.b32.xlu0 %v3056, 48
        %v3132 = vpop.permute.xlu0 %3131
        %3133 = vrot.lane.b32.xlu0 %v3094, 48
        %v3134 = vpop.permute.xlu0 %3133
        %v3137 = vsel %vm2244, %v3027, %v3042
        %v3140 = vsel %vm2244, %v3028, %v3044
        %v3143 = vsel %vm2244, %v3029, %v3046
        %v3146 = vsel %vm2244, %v3030, %v3048
        %v3149 = vsel %vm2244, %v3031, %v3050
        %v3152 = vsel %vm2244, %v3032, %v3052
        %v3154 = vsel %vm607, %v2667, %v3058
        %v3156 = vsel %vm607, %v3137, %v3060
        %v3158 = vsel %vm607, %v3140, %v3062
        %v3160 = vsel %vm607, %v3143, %v3064
        %v3162 = vsel %vm607, %v2667, %v3066
        %v3164 = vsel %vm607, %v3146, %v3068
        %v3166 = vsel %vm607, %v3149, %v3070
        %v3168 = vsel %vm607, %v3152, %v3072
        %v3170 = vsel %vm2285, %v3154, %v3078
        %v3172 = vsel %vm2285, %v3156, %v3080
        %v3174 = vsel %vm2285, %v3158, %v3082
        %v3176 = vsel %vm2285, %v3160, %v3084
        %v3178 = vsel %vm2285, %v3162, %v3086
        %v3180 = vsel %vm2285, %v3164, %v3088
        %v3182 = vsel %vm2285, %v3166, %v3090
        %v3184 = vsel %vm2285, %v3168, %v3092
        %v3186 = vsel %vm2302, %v3170, %v3096
        %v3188 = vsel %vm2302, %v3172, %v3098
        %v3190 = vsel %vm2302, %v3174, %v3100
        %v3192 = vsel %vm2302, %v3176, %v3102
        %v3194 = vsel %vm2302, %v3178, %v3104
        %v3196 = vsel %vm2302, %v3180, %v3106
        %v3198 = vsel %vm2302, %v3182, %v3108
        %v3200 = vsel %vm2302, %v3184, %v3110
        %v3202 = vsel %vm2319, %v3186, %v3112
        %v3204 = vsel %vm2319, %v3188, %v3114
        %v3206 = vsel %vm2319, %v3190, %v3116
        %v3207 = vsel %vm2319, %v3192, %v2644
        %v3209 = vsel %vm2319, %v3194, %v3118
        %v3211 = vsel %vm2319, %v3196, %v3120
        %v3213 = vsel %vm2319, %v3198, %v3122
        %v3214 = vsel %vm2319, %v3200, %v2644
        %v3216 = vsel %vm2336, %v3202, %v3124
        %v3218 = vsel %vm2336, %v3204, %v3126
        %v3220 = vsel %vm2336, %v3206, %v3128
        %v3221 = vsel %vm2336, %v3207, %v2658
        %v3223 = vsel %vm2336, %v3209, %v3130
        %v3225 = vsel %vm2336, %v3211, %v3132
        %v3227 = vsel %vm2336, %v3213, %v3134
        %v3228 = vsel %vm2336, %v3214, %v2658
        %v3229 = vld [vmem:[%s8] sm:$0xf]
        %v3230 = vld [vmem:[%s8 + $0x4] sm:$0xf]
        %v3231 = vld [vmem:[%s8 + $0x8] sm:$0xf]
        %v3232 = vld [vmem:[%s8 + $0xc] sm:$0xf]
        %v3233 = vld [vmem:[%s8 + $0x10] sm:$0xf]
        %v3234 = vld [vmem:[%s8 + $0x14] sm:$0xf]
        %v3235 = vld [vmem:[%s8 + $0x18] sm:$0xf]
        %v3236 = vld [vmem:[%s9] sm:$0x1]
        %v3238 = vlaneseq
        %v3239 = vshrl.u32 %v3238, 7
        %v3240 = vsub.s32 0, %v3239
        %v3241 = vrot.slane %v3236, %v3240
        %v3250 = vunpack.c.l.b16 %v3229
        %v3251 = vunpack.c.l.b16 %v3230
        %v3252 = vunpack.c.l.b16 %v3231
        %v3253 = vunpack.c.l.b16 %v3232
        %v3254 = vunpack.c.l.b16 %v3233
        %v3255 = vunpack.c.l.b16 %v3234
        %v3256 = vunpack.c.l.b16 %v3235
        %v3257 = vpack.c.b16 %v3251, %v3250
        %v3258 = vpack.c.b16 %v3253, %v3252
        %v3259 = vpack.c.b16 %v3255, %v3254
        %v3260 = vpack.c.b16 %v3256, %v3256
        %v3264 = vsel %vm2388, %v3216, 0
        %v3266 = vsel %vm2388, %v3218, 0
        %v3268 = vsel %vm2388, %v3220, 0
        %v3270 = vsel %vm2388, %v3221, 0
        %v3272 = vsel %vm2388, %v3223, 0
        %v3274 = vsel %vm2388, %v3225, 0
        %v3276 = vsel %vm2388, %v3227, 0
        %v3278 = vsel %vm2388, %v3228, 0
        %v3281 = vsel %vm2405, %v3260, 0
        %3283 = vmatprep.subr.bf16.mxu0 0
        %3284 = vmatpush1.bf16.msra.mxu0 0
        %3285 = vmatprep.subr.bf16.mxu0 0
        %3286 = vmatpush1.bf16.msra.mxu0 0
        %3287 = vmatprep.subr.bf16.mxu0 0
        %3288 = vmatpush1.bf16.msra.mxu0 0
        %3289 = vmatprep.subr.bf16.mxu0 0
        %3290 = vmatpush1.bf16.msra.mxu0 0
        %3291 = vmatprep.subr.bf16.mxu0 0
        %3292 = vmatpush1.bf16.msra.mxu0 %v3281
        %3293 = vmatprep.subr.bf16.mxu0 0
        %3294 = vmatpush1.bf16.msra.mxu0 %v3259
        %3295 = vmatprep.subr.bf16.mxu0 0
        %3296 = vmatpush1.bf16.msra.mxu0 %v3258
        %3297 = vmatprep.subr.bf16.mxu0 0
        %3298 = vmatpush1.bf16.msra.mxu0 %v3257
        %3299 = vmatprep.subr.bf16.mxu0 0
        %3300 = vmatpush2.bf16.msra.mxu0 0
        %3301 = vmatprep.subr.bf16.mxu0 0
        %3302 = vmatpush2.bf16.msra.mxu0 0
        %3303 = vmatprep.subr.bf16.mxu0 0
        %3304 = vmatpush2.bf16.msra.mxu0 0
        %3305 = vmatprep.subr.bf16.mxu0 0
        %3306 = vmatpush2.bf16.msra.mxu0 0
        %3307 = vmatprep.subr.bf16.mxu0 0
        %3308 = vmatpush2.bf16.msra.mxu0 0
        %3309 = vmatprep.subr.bf16.mxu0 0
        %3310 = vmatpush2.bf16.msra.mxu0 0
        %3311 = vmatprep.subr.bf16.mxu0 0
        %3312 = vmatpush2.bf16.msra.mxu0 0
        %3313 = vmatprep.subr.bf16.mxu0 0
        %3314 = vmatpush2.bf16.msra.mxu0 0
        %3315 = vmatprep.mubr.bf16.mxu0 0
        %3316 = vmatmul.mubr.bf16.gmra.mxu0 %v3264
        %v3317 = vpop.f32.mrf.mxu0
        %v3318 = vadd.f32 %v3241, %v3317
        %v3319 = vpop.f32.mrf.mxu0
        %v3320 = vpop.f32.mrf.mxu0
        %v3321 = vadd.f32 %v3241, %v3320
        %v3322 = vpop.f32.mrf.mxu0
        %3323 = vmatprep.mubr.bf16.mxu0 0
        %3324 = vmatmul.mubr.bf16.gmra.mxu0 %v3266
        %v3325 = vpop.f32.mrf.mxu0
        %v3326 = vadd.f32 %v3241, %v3325
        %v3327 = vpop.f32.mrf.mxu0
        %v3328 = vpop.f32.mrf.mxu0
        %v3329 = vadd.f32 %v3241, %v3328
        %v3330 = vpop.f32.mrf.mxu0
        %3331 = vmatprep.mubr.bf16.mxu0 0
        %3332 = vmatmul.mubr.bf16.gmra.mxu0 %v3268
        %v3333 = vpop.f32.mrf.mxu0
        %v3334 = vadd.f32 %v3241, %v3333
        %v3335 = vpop.f32.mrf.mxu0
        %v3336 = vpop.f32.mrf.mxu0
        %v3337 = vadd.f32 %v3241, %v3336
        %v3338 = vpop.f32.mrf.mxu0
        %3339 = vmatprep.mubr.bf16.mxu0 0
        %3340 = vmatmul.mubr.bf16.gmra.mxu0 %v3270
        %v3341 = vpop.f32.mrf.mxu0
        %v3342 = vadd.f32 %v3241, %v3341
        %v3343 = vpop.f32.mrf.mxu0
        %v3344 = vpop.f32.mrf.mxu0
        %v3345 = vadd.f32 %v3241, %v3344
        %v3346 = vpop.f32.mrf.mxu0
        %3347 = vmatprep.mubr.bf16.mxu0 0
        %3348 = vmatmul.mubr.bf16.gmra.mxu0 %v3272
        %v3349 = vpop.f32.mrf.mxu0
        %v3350 = vadd.f32 %v3241, %v3349
        %v3351 = vpop.f32.mrf.mxu0
        %v3352 = vpop.f32.mrf.mxu0
        %v3353 = vadd.f32 %v3241, %v3352
        %v3354 = vpop.f32.mrf.mxu0
        %3355 = vmatprep.mubr.bf16.mxu0 0
        %3356 = vmatmul.mubr.bf16.gmra.mxu0 %v3274
        %v3357 = vpop.f32.mrf.mxu0
        %v3358 = vadd.f32 %v3241, %v3357
        %v3359 = vpop.f32.mrf.mxu0
        %v3360 = vpop.f32.mrf.mxu0
        %v3361 = vadd.f32 %v3241, %v3360
        %v3362 = vpop.f32.mrf.mxu0
        %3363 = vmatprep.mubr.bf16.mxu0 0
        %3364 = vmatmul.mubr.bf16.gmra.mxu0 %v3276
        %v3365 = vpop.f32.mrf.mxu0
        %v3366 = vadd.f32 %v3241, %v3365
        %v3367 = vpop.f32.mrf.mxu0
        %v3368 = vpop.f32.mrf.mxu0
        %v3369 = vadd.f32 %v3241, %v3368
        %v3370 = vpop.f32.mrf.mxu0
        %3371 = vmatprep.mubr.bf16.mxu0 0
        %3372 = vmatmul.mubr.bf16.gmra.mxu0 %v3278
        %v3373 = vpop.f32.mrf.mxu0
        %v3374 = vadd.f32 %v3241, %v3373
        %v3375 = vpop.f32.mrf.mxu0
        %v3376 = vpop.f32.mrf.mxu0
        %v3377 = vadd.f32 %v3241, %v3376
        %v3378 = vpop.f32.mrf.mxu0
        %3379 = vdwg.mxu0
        %v3380 = vmax.f32 %v3318, 0.0
        %v3381 = vmax.f32 %v3321, 0.0
        %v3382 = vmax.f32 %v3326, 0.0
        %v3383 = vmax.f32 %v3329, 0.0
        %v3384 = vmax.f32 %v3334, 0.0
        %v3385 = vmax.f32 %v3337, 0.0
        %v3386 = vmax.f32 %v3342, 0.0
        %v3387 = vmax.f32 %v3345, 0.0
        %v3388 = vmax.f32 %v3350, 0.0
        %v3389 = vmax.f32 %v3353, 0.0
        %v3390 = vmax.f32 %v3358, 0.0
        %v3391 = vmax.f32 %v3361, 0.0
        %v3392 = vmax.f32 %v3366, 0.0
        %v3393 = vmax.f32 %v3369, 0.0
        %v3394 = vmax.f32 %v3374, 0.0
        %v3395 = vmax.f32 %v3377, 0.0
        %v3396 = vpack.c.bf16 %v3381, %v3380
        %v3397 = vpack.c.bf16 %v3383, %v3382
        %v3398 = vpack.c.bf16 %v3385, %v3384
        %v3399 = vpack.c.bf16 %v3387, %v3386
        %v3400 = vpack.c.bf16 %v3389, %v3388
        %v3401 = vpack.c.bf16 %v3391, %v3390
        %v3402 = vpack.c.bf16 %v3393, %v3392
        %v3403 = vpack.c.bf16 %v3395, %v3394
        %v3412 = vunpack.c.l.b16 %v3396
        %v3413 = vunpack.c.h.b16 %v3396
        %v3414 = vunpack.c.l.b16 %v3397
        %v3415 = vunpack.c.h.b16 %v3397
        %v3416 = vunpack.c.l.b16 %v3398
        %v3417 = vunpack.c.h.b16 %v3398
        %v3418 = vunpack.c.l.b16 %v3399
        %v3419 = vunpack.c.h.b16 %v3399
        %v3420 = vunpack.c.l.b16 %v3400
        %v3421 = vunpack.c.h.b16 %v3400
        %v3422 = vunpack.c.l.b16 %v3401
        %v3423 = vunpack.c.h.b16 %v3401
        %v3424 = vunpack.c.l.b16 %v3402
        %v3425 = vunpack.c.h.b16 %v3402
        %v3426 = vunpack.c.l.b16 %v3403
        %v3427 = vunpack.c.h.b16 %v3403
        %v3428 = vpack.c.b16 %v3412, %v3412
        %v3429 = vpack.c.b16 %v3413, %v3413
        %v3430 = vpack.c.b16 %v3414, %v3414
        %v3431 = vpack.c.b16 %v3415, %v3415
        %v3432 = vpack.c.b16 %v3416, %v3416
        %v3433 = vpack.c.b16 %v3417, %v3417
        %v3434 = vpack.c.b16 %v3418, %v3418
        %v3435 = vpack.c.b16 %v3419, %v3419
        %v3436 = vpack.c.b16 %v3420, %v3420
        %v3437 = vpack.c.b16 %v3421, %v3421
        %v3438 = vpack.c.b16 %v3422, %v3422
        %v3439 = vpack.c.b16 %v3423, %v3423
        %v3440 = vpack.c.b16 %v3424, %v3424
        %v3441 = vpack.c.b16 %v3425, %v3425
        %v3442 = vpack.c.b16 %v3426, %v3426
        %v3443 = vpack.c.b16 %v3427, %v3427
        %v3445 = vshrl.u32 %v3428, 16
        %v3447 = vrot.slane %v3445, 6
        %v3448 = vshll.u32 %v3428, 16
        %v3450 = vrot.slane %v3448, 7
        %v3451 = vor.u32 %v3447, %v3450
        %v3453 = vshrl.u32 %v3429, 16
        %v3455 = vrot.slane %v3453, 6
        %v3456 = vshll.u32 %v3429, 16
        %v3458 = vrot.slane %v3456, 7
        %v3459 = vor.u32 %v3455, %v3458
        %v3461 = vshrl.u32 %v3430, 16
        %v3463 = vrot.slane %v3461, 6
        %v3464 = vshll.u32 %v3430, 16
        %v3466 = vrot.slane %v3464, 7
        %v3467 = vor.u32 %v3463, %v3466
        %v3469 = vshrl.u32 %v3431, 16
        %v3471 = vrot.slane %v3469, 6
        %v3472 = vshll.u32 %v3431, 16
        %v3474 = vrot.slane %v3472, 7
        %v3475 = vor.u32 %v3471, %v3474
        %v3477 = vshrl.u32 %v3432, 16
        %v3479 = vrot.slane %v3477, 6
        %v3480 = vshll.u32 %v3432, 16
        %v3482 = vrot.slane %v3480, 7
        %v3483 = vor.u32 %v3479, %v3482
        %v3485 = vshrl.u32 %v3433, 16
        %v3487 = vrot.slane %v3485, 6
        %v3488 = vshll.u32 %v3433, 16
        %v3490 = vrot.slane %v3488, 7
        %v3491 = vor.u32 %v3487, %v3490
        %v3493 = vshrl.u32 %v3434, 16
        %v3495 = vrot.slane %v3493, 6
        %v3496 = vshll.u32 %v3434, 16
        %v3498 = vrot.slane %v3496, 7
        %v3499 = vor.u32 %v3495, %v3498
        %v3501 = vshrl.u32 %v3435, 16
        %v3503 = vrot.slane %v3501, 6
        %v3504 = vshll.u32 %v3435, 16
        %v3506 = vrot.slane %v3504, 7
        %v3507 = vor.u32 %v3503, %v3506
        %v3509 = vshrl.u32 %v3436, 16
        %v3511 = vrot.slane %v3509, 6
        %v3512 = vshll.u32 %v3436, 16
        %v3514 = vrot.slane %v3512, 7
        %v3515 = vor.u32 %v3511, %v3514
        %v3517 = vshrl.u32 %v3437, 16
        %v3519 = vrot.slane %v3517, 6
        %v3520 = vshll.u32 %v3437, 16
        %v3522 = vrot.slane %v3520, 7
        %v3523 = vor.u32 %v3519, %v3522
        %v3525 = vshrl.u32 %v3438, 16
        %v3527 = vrot.slane %v3525, 6
        %v3528 = vshll.u32 %v3438, 16
        %v3530 = vrot.slane %v3528, 7
        %v3531 = vor.u32 %v3527, %v3530
        %v3533 = vshrl.u32 %v3439, 16
        %v3535 = vrot.slane %v3533, 6
        %v3536 = vshll.u32 %v3439, 16
        %v3538 = vrot.slane %v3536, 7
        %v3539 = vor.u32 %v3535, %v3538
        %v3541 = vshrl.u32 %v3440, 16
        %v3543 = vrot.slane %v3541, 6
        %v3544 = vshll.u32 %v3440, 16
        %v3546 = vrot.slane %v3544, 7
        %v3547 = vor.u32 %v3543, %v3546
        %v3549 = vshrl.u32 %v3441, 16
        %v3551 = vrot.slane %v3549, 6
        %v3552 = vshll.u32 %v3441, 16
        %v3554 = vrot.slane %v3552, 7
        %v3555 = vor.u32 %v3551, %v3554
        %v3557 = vshrl.u32 %v3442, 16
        %v3559 = vrot.slane %v3557, 6
        %v3560 = vshll.u32 %v3442, 16
        %v3562 = vrot.slane %v3560, 7
        %v3563 = vor.u32 %v3559, %v3562
        %v3565 = vshrl.u32 %v3443, 16
        %v3567 = vrot.slane %v3565, 6
        %v3568 = vshll.u32 %v3443, 16
        %v3570 = vrot.slane %v3568, 7
        %v3571 = vor.u32 %v3567, %v3570
        %v3588 = vsel %vm1160, 0, %v3451
        %v3589 = vsel %vm1160, 0, %v3459
        %v3590 = vsel %vm1160, 0, %v3467
        %v3591 = vsel %vm1160, 0, %v3475
        %v3592 = vsel %vm1160, 0, %v3483
        %v3593 = vsel %vm1160, 0, %v3491
        %v3594 = vsel %vm1160, 0, %v3499
        %v3595 = vsel %vm1160, 0, %v3507
        %v3596 = vsel %vm1160, 0, %v3515
        %v3597 = vsel %vm1160, 0, %v3523
        %v3598 = vsel %vm1160, 0, %v3531
        %v3599 = vsel %vm1160, 0, %v3539
        %v3600 = vsel %vm1160, 0, %v3547
        %v3601 = vsel %vm1160, 0, %v3555
        %v3602 = vsel %vm1160, 0, %v3563
        %v3603 = vsel %vm1160, 0, %v3571
        %v3604 = vsel %vm1179, %v3588, 0
        %v3605 = vsel %vm1179, %v3589, 0
        %v3606 = vsel %vm1179, %v3590, 0
        %v3607 = vsel %vm1179, %v3591, 0
        %v3608 = vsel %vm1179, %v3592, 0
        %v3609 = vsel %vm1179, %v3593, 0
        %v3610 = vsel %vm1179, %v3594, 0
        %v3611 = vsel %vm1179, %v3595, 0
        %v3612 = vsel %vm1179, %v3596, 0
        %v3613 = vsel %vm1179, %v3597, 0
        %v3614 = vsel %vm1179, %v3598, 0
        %v3615 = vsel %vm1179, %v3599, 0
        %v3616 = vsel %vm1179, %v3600, 0
        %v3617 = vsel %vm1179, %v3601, 0
        %v3618 = vsel %vm1179, %v3602, 0
        %v3619 = vsel %vm1179, %v3603, 0
        %v3636 = vunpack.c.l.b16 %v3604
        %v3637 = vunpack.c.h.b16 %v3604
        %v3638 = vunpack.c.l.b16 %v3605
        %v3639 = vunpack.c.h.b16 %v3605
        %v3640 = vunpack.c.l.b16 %v3606
        %v3641 = vunpack.c.h.b16 %v3606
        %v3642 = vunpack.c.l.b16 %v3607
        %v3643 = vunpack.c.h.b16 %v3607
        %v3644 = vunpack.c.l.b16 %v3608
        %v3645 = vunpack.c.h.b16 %v3608
        %v3646 = vunpack.c.l.b16 %v3609
        %v3647 = vunpack.c.h.b16 %v3609
        %v3648 = vunpack.c.l.b16 %v3610
        %v3649 = vunpack.c.h.b16 %v3610
        %v3650 = vunpack.c.l.b16 %v3611
        %v3651 = vunpack.c.h.b16 %v3611
        %v3652 = vunpack.c.l.b16 %v3612
        %v3653 = vunpack.c.h.b16 %v3612
        %v3654 = vunpack.c.l.b16 %v3613
        %v3655 = vunpack.c.h.b16 %v3613
        %v3656 = vunpack.c.l.b16 %v3614
        %v3657 = vunpack.c.h.b16 %v3614
        %v3658 = vunpack.c.l.b16 %v3615
        %v3659 = vunpack.c.h.b16 %v3615
        %v3660 = vunpack.c.l.b16 %v3616
        %v3661 = vunpack.c.h.b16 %v3616
        %v3662 = vunpack.c.l.b16 %v3617
        %v3663 = vunpack.c.h.b16 %v3617
        %v3664 = vunpack.c.l.b16 %v3618
        %v3665 = vunpack.c.h.b16 %v3618
        %v3666 = vunpack.c.l.b16 %v3619
        %v3667 = vunpack.c.h.b16 %v3619
        %v3668 = vpack.c.b16 %v3636, %v3636
        %v3669 = vpack.c.b16 %v3637, %v3637
        %v3670 = vpack.c.b16 %v3638, %v3638
        %v3671 = vpack.c.b16 %v3639, %v3639
        %v3672 = vpack.c.b16 %v3640, %v3640
        %v3673 = vpack.c.b16 %v3641, %v3641
        %v3674 = vpack.c.b16 %v3642, %v3642
        %v3675 = vpack.c.b16 %v3643, %v3643
        %v3676 = vpack.c.b16 %v3644, %v3644
        %v3677 = vpack.c.b16 %v3645, %v3645
        %v3678 = vpack.c.b16 %v3646, %v3646
        %v3679 = vpack.c.b16 %v3647, %v3647
        %v3680 = vpack.c.b16 %v3648, %v3648
        %v3681 = vpack.c.b16 %v3649, %v3649
        %v3682 = vpack.c.b16 %v3650, %v3650
        %v3683 = vpack.c.b16 %v3651, %v3651
        %v3684 = vpack.c.b16 %v3652, %v3652
        %v3685 = vpack.c.b16 %v3653, %v3653
        %v3686 = vpack.c.b16 %v3654, %v3654
        %v3687 = vpack.c.b16 %v3655, %v3655
        %v3688 = vpack.c.b16 %v3656, %v3656
        %v3689 = vpack.c.b16 %v3657, %v3657
        %v3690 = vpack.c.b16 %v3658, %v3658
        %v3691 = vpack.c.b16 %v3659, %v3659
        %v3692 = vpack.c.b16 %v3660, %v3660
        %v3693 = vpack.c.b16 %v3661, %v3661
        %v3694 = vpack.c.b16 %v3662, %v3662
        %v3695 = vpack.c.b16 %v3663, %v3663
        %v3696 = vpack.c.b16 %v3664, %v3664
        %v3697 = vpack.c.b16 %v3665, %v3665
        %v3698 = vpack.c.b16 %v3666, %v3666
        %v3699 = vpack.c.b16 %v3667, %v3667
        %v3701 = vshrl.u32 %v3668, 16
        %v3703 = vrot.slane %v3701, 4
        %v3704 = vshll.u32 %v3668, 16
        %v3706 = vrot.slane %v3704, 5
        %v3707 = vor.u32 %v3703, %v3706
        %v3708 = vrot.slane %v3707, 4
        %v3710 = vshll.u32 %v3669, 16
        %v3712 = vrot.slane %v3710, 5
        %v3713 = vsel %vm1278, %v3708, %v3712
        %v3715 = vshrl.u32 %v3670, 16
        %v3717 = vrot.slane %v3715, 4
        %v3718 = vshll.u32 %v3670, 16
        %v3720 = vrot.slane %v3718, 5
        %v3721 = vor.u32 %v3717, %v3720
        %v3722 = vrot.slane %v3721, 4
        %v3724 = vshll.u32 %v3671, 16
        %v3726 = vrot.slane %v3724, 5
        %v3727 = vsel %vm1278, %v3722, %v3726
        %v3729 = vshrl.u32 %v3672, 16
        %v3731 = vrot.slane %v3729, 4
        %v3732 = vshll.u32 %v3672, 16
        %v3734 = vrot.slane %v3732, 5
        %v3735 = vor.u32 %v3731, %v3734
        %v3736 = vrot.slane %v3735, 4
        %v3738 = vshll.u32 %v3673, 16
        %v3740 = vrot.slane %v3738, 5
        %v3741 = vsel %vm1278, %v3736, %v3740
        %v3743 = vshrl.u32 %v3674, 16
        %v3745 = vrot.slane %v3743, 4
        %v3746 = vshll.u32 %v3674, 16
        %v3748 = vrot.slane %v3746, 5
        %v3749 = vor.u32 %v3745, %v3748
        %v3750 = vrot.slane %v3749, 4
        %v3752 = vshll.u32 %v3675, 16
        %v3754 = vrot.slane %v3752, 5
        %v3755 = vsel %vm1278, %v3750, %v3754
        %v3757 = vshrl.u32 %v3676, 16
        %v3759 = vrot.slane %v3757, 4
        %v3760 = vshll.u32 %v3676, 16
        %v3762 = vrot.slane %v3760, 5
        %v3763 = vor.u32 %v3759, %v3762
        %v3764 = vrot.slane %v3763, 4
        %v3766 = vshll.u32 %v3677, 16
        %v3768 = vrot.slane %v3766, 5
        %v3769 = vsel %vm1278, %v3764, %v3768
        %v3771 = vshrl.u32 %v3678, 16
        %v3773 = vrot.slane %v3771, 4
        %v3774 = vshll.u32 %v3678, 16
        %v3776 = vrot.slane %v3774, 5
        %v3777 = vor.u32 %v3773, %v3776
        %v3778 = vrot.slane %v3777, 4
        %v3780 = vshll.u32 %v3679, 16
        %v3782 = vrot.slane %v3780, 5
        %v3783 = vsel %vm1278, %v3778, %v3782
        %v3785 = vshrl.u32 %v3680, 16
        %v3787 = vrot.slane %v3785, 4
        %v3788 = vshll.u32 %v3680, 16
        %v3790 = vrot.slane %v3788, 5
        %v3791 = vor.u32 %v3787, %v3790
        %v3792 = vrot.slane %v3791, 4
        %v3794 = vshll.u32 %v3681, 16
        %v3796 = vrot.slane %v3794, 5
        %v3797 = vsel %vm1278, %v3792, %v3796
        %v3799 = vshrl.u32 %v3682, 16
        %v3801 = vrot.slane %v3799, 4
        %v3802 = vshll.u32 %v3682, 16
        %v3804 = vrot.slane %v3802, 5
        %v3805 = vor.u32 %v3801, %v3804
        %v3806 = vrot.slane %v3805, 4
        %v3808 = vshll.u32 %v3683, 16
        %v3810 = vrot.slane %v3808, 5
        %v3811 = vsel %vm1278, %v3806, %v3810
        %v3813 = vshrl.u32 %v3684, 16
        %v3815 = vrot.slane %v3813, 4
        %v3816 = vshll.u32 %v3684, 16
        %v3818 = vrot.slane %v3816, 5
        %v3819 = vor.u32 %v3815, %v3818
        %v3820 = vrot.slane %v3819, 4
        %v3822 = vshll.u32 %v3685, 16
        %v3824 = vrot.slane %v3822, 5
        %v3825 = vsel %vm1278, %v3820, %v3824
        %v3827 = vshrl.u32 %v3686, 16
        %v3829 = vrot.slane %v3827, 4
        %v3830 = vshll.u32 %v3686, 16
        %v3832 = vrot.slane %v3830, 5
        %v3833 = vor.u32 %v3829, %v3832
        %v3834 = vrot.slane %v3833, 4
        %v3836 = vshll.u32 %v3687, 16
        %v3838 = vrot.slane %v3836, 5
        %v3839 = vsel %vm1278, %v3834, %v3838
        %v3841 = vshrl.u32 %v3688, 16
        %v3843 = vrot.slane %v3841, 4
        %v3844 = vshll.u32 %v3688, 16
        %v3846 = vrot.slane %v3844, 5
        %v3847 = vor.u32 %v3843, %v3846
        %v3848 = vrot.slane %v3847, 4
        %v3850 = vshll.u32 %v3689, 16
        %v3852 = vrot.slane %v3850, 5
        %v3853 = vsel %vm1278, %v3848, %v3852
        %v3855 = vshrl.u32 %v3690, 16
        %v3857 = vrot.slane %v3855, 4
        %v3858 = vshll.u32 %v3690, 16
        %v3860 = vrot.slane %v3858, 5
        %v3861 = vor.u32 %v3857, %v3860
        %v3862 = vrot.slane %v3861, 4
        %v3864 = vshll.u32 %v3691, 16
        %v3866 = vrot.slane %v3864, 5
        %v3867 = vsel %vm1278, %v3862, %v3866
        %v3869 = vshrl.u32 %v3692, 16
        %v3871 = vrot.slane %v3869, 4
        %v3872 = vshll.u32 %v3692, 16
        %v3874 = vrot.slane %v3872, 5
        %v3875 = vor.u32 %v3871, %v3874
        %v3876 = vrot.slane %v3875, 4
        %v3878 = vshll.u32 %v3693, 16
        %v3880 = vrot.slane %v3878, 5
        %v3881 = vsel %vm1278, %v3876, %v3880
        %v3883 = vshrl.u32 %v3694, 16
        %v3885 = vrot.slane %v3883, 4
        %v3886 = vshll.u32 %v3694, 16
        %v3888 = vrot.slane %v3886, 5
        %v3889 = vor.u32 %v3885, %v3888
        %v3890 = vrot.slane %v3889, 4
        %v3892 = vshll.u32 %v3695, 16
        %v3894 = vrot.slane %v3892, 5
        %v3895 = vsel %vm1278, %v3890, %v3894
        %v3897 = vshrl.u32 %v3696, 16
        %v3899 = vrot.slane %v3897, 4
        %v3900 = vshll.u32 %v3696, 16
        %v3902 = vrot.slane %v3900, 5
        %v3903 = vor.u32 %v3899, %v3902
        %v3904 = vrot.slane %v3903, 4
        %v3906 = vshll.u32 %v3697, 16
        %v3908 = vrot.slane %v3906, 5
        %v3909 = vsel %vm1278, %v3904, %v3908
        %v3911 = vshrl.u32 %v3698, 16
        %v3913 = vrot.slane %v3911, 4
        %v3914 = vshll.u32 %v3698, 16
        %v3916 = vrot.slane %v3914, 5
        %v3917 = vor.u32 %v3913, %v3916
        %v3918 = vrot.slane %v3917, 4
        %v3920 = vshll.u32 %v3699, 16
        %v3922 = vrot.slane %v3920, 5
        %v3923 = vsel %vm1278, %v3918, %v3922
        %v3924 = vrot.slane %v3668, 5
        %v3925 = vrot.slane %v3924, 4
        %v3926 = vrot.slane %v3669, 5
        %v3927 = vsel %vm1505, %v3925, %v3926
        %v3928 = vrot.slane %v3670, 5
        %v3929 = vrot.slane %v3928, 4
        %v3930 = vrot.slane %v3671, 5
        %v3931 = vsel %vm1505, %v3929, %v3930
        %v3932 = vrot.slane %v3672, 5
        %v3933 = vrot.slane %v3932, 4
        %v3934 = vrot.slane %v3673, 5
        %v3935 = vsel %vm1505, %v3933, %v3934
        %v3936 = vrot.slane %v3674, 5
        %v3937 = vrot.slane %v3936, 4
        %v3938 = vrot.slane %v3675, 5
        %v3939 = vsel %vm1505, %v3937, %v3938
        %v3940 = vrot.slane %v3676, 5
        %v3941 = vrot.slane %v3940, 4
        %v3942 = vrot.slane %v3677, 5
        %v3943 = vsel %vm1505, %v3941, %v3942
        %v3944 = vrot.slane %v3678, 5
        %v3945 = vrot.slane %v3944, 4
        %v3946 = vrot.slane %v3679, 5
        %v3947 = vsel %vm1505, %v3945, %v3946
        %v3948 = vrot.slane %v3680, 5
        %v3949 = vrot.slane %v3948, 4
        %v3950 = vrot.slane %v3681, 5
        %v3951 = vsel %vm1505, %v3949, %v3950
        %v3952 = vrot.slane %v3682, 5
        %v3953 = vrot.slane %v3952, 4
        %v3954 = vrot.slane %v3683, 5
        %v3955 = vsel %vm1505, %v3953, %v3954
        %v3956 = vrot.slane %v3684, 5
        %v3957 = vrot.slane %v3956, 4
        %v3958 = vrot.slane %v3685, 5
        %v3959 = vsel %vm1505, %v3957, %v3958
        %v3960 = vrot.slane %v3686, 5
        %v3961 = vrot.slane %v3960, 4
        %v3962 = vrot.slane %v3687, 5
        %v3963 = vsel %vm1505, %v3961, %v3962
        %v3964 = vrot.slane %v3688, 5
        %v3965 = vrot.slane %v3964, 4
        %v3966 = vrot.slane %v3689, 5
        %v3967 = vsel %vm1505, %v3965, %v3966
        %v3968 = vrot.slane %v3690, 5
        %v3969 = vrot.slane %v3968, 4
        %v3970 = vrot.slane %v3691, 5
        %v3971 = vsel %vm1505, %v3969, %v3970
        %v3972 = vrot.slane %v3692, 5
        %v3973 = vrot.slane %v3972, 4
        %v3974 = vrot.slane %v3693, 5
        %v3975 = vsel %vm1505, %v3973, %v3974
        %v3976 = vrot.slane %v3694, 5
        %v3977 = vrot.slane %v3976, 4
        %v3978 = vrot.slane %v3695, 5
        %v3979 = vsel %vm1505, %v3977, %v3978
        %v3980 = vrot.slane %v3696, 5
        %v3981 = vrot.slane %v3980, 4
        %v3982 = vrot.slane %v3697, 5
        %v3983 = vsel %vm1505, %v3981, %v3982
        %v3984 = vrot.slane %v3698, 5
        %v3985 = vrot.slane %v3984, 4
        %v3986 = vrot.slane %v3699, 5
        %v3987 = vsel %vm1505, %v3985, %v3986
        %v3988 = vrot.slane %v3701, 5
        %v3989 = vrot.slane %v3704, 6
        %v3990 = vor.u32 %v3988, %v3989
        %v3991 = vrot.slane %v3990, 4
        %v3992 = vshrl.u32 %v3669, 16
        %v3994 = vrot.slane %v3992, 5
        %v3995 = vrot.slane %v3710, 6
        %v3996 = vor.u32 %v3994, %v3995
        %v3997 = vsel %vm1572, %v3991, %v3996
        %v3998 = vrot.slane %v3715, 5
        %v3999 = vrot.slane %v3718, 6
        %v4000 = vor.u32 %v3998, %v3999
        %v4001 = vrot.slane %v4000, 4
        %v4002 = vshrl.u32 %v3671, 16
        %v4004 = vrot.slane %v4002, 5
        %v4005 = vrot.slane %v3724, 6
        %v4006 = vor.u32 %v4004, %v4005
        %v4007 = vsel %vm1572, %v4001, %v4006
        %v4008 = vrot.slane %v3729, 5
        %v4009 = vrot.slane %v3732, 6
        %v4010 = vor.u32 %v4008, %v4009
        %v4011 = vrot.slane %v4010, 4
        %v4012 = vshrl.u32 %v3673, 16
        %v4014 = vrot.slane %v4012, 5
        %v4015 = vrot.slane %v3738, 6
        %v4016 = vor.u32 %v4014, %v4015
        %v4017 = vsel %vm1572, %v4011, %v4016
        %v4018 = vrot.slane %v3743, 5
        %v4019 = vrot.slane %v3746, 6
        %v4020 = vor.u32 %v4018, %v4019
        %v4021 = vrot.slane %v4020, 4
        %v4022 = vshrl.u32 %v3675, 16
        %v4024 = vrot.slane %v4022, 5
        %v4025 = vrot.slane %v3752, 6
        %v4026 = vor.u32 %v4024, %v4025
        %v4027 = vsel %vm1572, %v4021, %v4026
        %v4028 = vrot.slane %v3757, 5
        %v4029 = vrot.slane %v3760, 6
        %v4030 = vor.u32 %v4028, %v4029
        %v4031 = vrot.slane %v4030, 4
        %v4032 = vshrl.u32 %v3677, 16
        %v4034 = vrot.slane %v4032, 5
        %v4035 = vrot.slane %v3766, 6
        %v4036 = vor.u32 %v4034, %v4035
        %v4037 = vsel %vm1572, %v4031, %v4036
        %v4038 = vrot.slane %v3771, 5
        %v4039 = vrot.slane %v3774, 6
        %v4040 = vor.u32 %v4038, %v4039
        %v4041 = vrot.slane %v4040, 4
        %v4042 = vshrl.u32 %v3679, 16
        %v4044 = vrot.slane %v4042, 5
        %v4045 = vrot.slane %v3780, 6
        %v4046 = vor.u32 %v4044, %v4045
        %v4047 = vsel %vm1572, %v4041, %v4046
        %v4048 = vrot.slane %v3785, 5
        %v4049 = vrot.slane %v3788, 6
        %v4050 = vor.u32 %v4048, %v4049
        %v4051 = vrot.slane %v4050, 4
        %v4052 = vshrl.u32 %v3681, 16
        %v4054 = vrot.slane %v4052, 5
        %v4055 = vrot.slane %v3794, 6
        %v4056 = vor.u32 %v4054, %v4055
        %v4057 = vsel %vm1572, %v4051, %v4056
        %v4058 = vrot.slane %v3799, 5
        %v4059 = vrot.slane %v3802, 6
        %v4060 = vor.u32 %v4058, %v4059
        %v4061 = vrot.slane %v4060, 4
        %v4062 = vshrl.u32 %v3683, 16
        %v4064 = vrot.slane %v4062, 5
        %v4065 = vrot.slane %v3808, 6
        %v4066 = vor.u32 %v4064, %v4065
        %v4067 = vsel %vm1572, %v4061, %v4066
        %v4068 = vrot.slane %v3813, 5
        %v4069 = vrot.slane %v3816, 6
        %v4070 = vor.u32 %v4068, %v4069
        %v4071 = vrot.slane %v4070, 4
        %v4072 = vshrl.u32 %v3685, 16
        %v4074 = vrot.slane %v4072, 5
        %v4075 = vrot.slane %v3822, 6
        %v4076 = vor.u32 %v4074, %v4075
        %v4077 = vsel %vm1572, %v4071, %v4076
        %v4078 = vrot.slane %v3827, 5
        %v4079 = vrot.slane %v3830, 6
        %v4080 = vor.u32 %v4078, %v4079
        %v4081 = vrot.slane %v4080, 4
        %v4082 = vshrl.u32 %v3687, 16
        %v4084 = vrot.slane %v4082, 5
        %v4085 = vrot.slane %v3836, 6
        %v4086 = vor.u32 %v4084, %v4085
        %v4087 = vsel %vm1572, %v4081, %v4086
        %v4088 = vrot.slane %v3841, 5
        %v4089 = vrot.slane %v3844, 6
        %v4090 = vor.u32 %v4088, %v4089
        %v4091 = vrot.slane %v4090, 4
        %v4092 = vshrl.u32 %v3689, 16
        %v4094 = vrot.slane %v4092, 5
        %v4095 = vrot.slane %v3850, 6
        %v4096 = vor.u32 %v4094, %v4095
        %v4097 = vsel %vm1572, %v4091, %v4096
        %v4098 = vrot.slane %v3855, 5
        %v4099 = vrot.slane %v3858, 6
        %v4100 = vor.u32 %v4098, %v4099
        %v4101 = vrot.slane %v4100, 4
        %v4102 = vshrl.u32 %v3691, 16
        %v4104 = vrot.slane %v4102, 5
        %v4105 = vrot.slane %v3864, 6
        %v4106 = vor.u32 %v4104, %v4105
        %v4107 = vsel %vm1572, %v4101, %v4106
        %v4108 = vrot.slane %v3869, 5
        %v4109 = vrot.slane %v3872, 6
        %v4110 = vor.u32 %v4108, %v4109
        %v4111 = vrot.slane %v4110, 4
        %v4112 = vshrl.u32 %v3693, 16
        %v4114 = vrot.slane %v4112, 5
        %v4115 = vrot.slane %v3878, 6
        %v4116 = vor.u32 %v4114, %v4115
        %v4117 = vsel %vm1572, %v4111, %v4116
        %v4118 = vrot.slane %v3883, 5
        %v4119 = vrot.slane %v3886, 6
        %v4120 = vor.u32 %v4118, %v4119
        %v4121 = vrot.slane %v4120, 4
        %v4122 = vshrl.u32 %v3695, 16
        %v4124 = vrot.slane %v4122, 5
        %v4125 = vrot.slane %v3892, 6
        %v4126 = vor.u32 %v4124, %v4125
        %v4127 = vsel %vm1572, %v4121, %v4126
        %v4128 = vrot.slane %v3897, 5
        %v4129 = vrot.slane %v3900, 6
        %v4130 = vor.u32 %v4128, %v4129
        %v4131 = vrot.slane %v4130, 4
        %v4132 = vshrl.u32 %v3697, 16
        %v4134 = vrot.slane %v4132, 5
        %v4135 = vrot.slane %v3906, 6
        %v4136 = vor.u32 %v4134, %v4135
        %v4137 = vsel %vm1572, %v4131, %v4136
        %v4138 = vrot.slane %v3911, 5
        %v4139 = vrot.slane %v3914, 6
        %v4140 = vor.u32 %v4138, %v4139
        %v4141 = vrot.slane %v4140, 4
        %v4142 = vshrl.u32 %v3699, 16
        %v4144 = vrot.slane %v4142, 5
        %v4145 = vrot.slane %v3920, 6
        %v4146 = vor.u32 %v4144, %v4145
        %v4147 = vsel %vm1572, %v4141, %v4146
        %v4148 = vrot.slane %v3668, 6
        %v4149 = vrot.slane %v4148, 4
        %v4150 = vrot.slane %v3669, 6
        %v4151 = vsel %vm1734, %v4149, %v4150
        %v4152 = vrot.slane %v3670, 6
        %v4153 = vrot.slane %v4152, 4
        %v4154 = vrot.slane %v3671, 6
        %v4155 = vsel %vm1734, %v4153, %v4154
        %v4156 = vrot.slane %v3672, 6
        %v4157 = vrot.slane %v4156, 4
        %v4158 = vrot.slane %v3673, 6
        %v4159 = vsel %vm1734, %v4157, %v4158
        %v4160 = vrot.slane %v3674, 6
        %v4161 = vrot.slane %v4160, 4
        %v4162 = vrot.slane %v3675, 6
        %v4163 = vsel %vm1734, %v4161, %v4162
        %v4164 = vrot.slane %v3676, 6
        %v4165 = vrot.slane %v4164, 4
        %v4166 = vrot.slane %v3677, 6
        %v4167 = vsel %vm1734, %v4165, %v4166
        %v4168 = vrot.slane %v3678, 6
        %v4169 = vrot.slane %v4168, 4
        %v4170 = vrot.slane %v3679, 6
        %v4171 = vsel %vm1734, %v4169, %v4170
        %v4172 = vrot.slane %v3680, 6
        %v4173 = vrot.slane %v4172, 4
        %v4174 = vrot.slane %v3681, 6
        %v4175 = vsel %vm1734, %v4173, %v4174
        %v4176 = vrot.slane %v3682, 6
        %v4177 = vrot.slane %v4176, 4
        %v4178 = vrot.slane %v3683, 6
        %v4179 = vsel %vm1734, %v4177, %v4178
        %v4180 = vrot.slane %v3684, 6
        %v4181 = vrot.slane %v4180, 4
        %v4182 = vrot.slane %v3685, 6
        %v4183 = vsel %vm1734, %v4181, %v4182
        %v4184 = vrot.slane %v3686, 6
        %v4185 = vrot.slane %v4184, 4
        %v4186 = vrot.slane %v3687, 6
        %v4187 = vsel %vm1734, %v4185, %v4186
        %v4188 = vrot.slane %v3688, 6
        %v4189 = vrot.slane %v4188, 4
        %v4190 = vrot.slane %v3689, 6
        %v4191 = vsel %vm1734, %v4189, %v4190
        %v4192 = vrot.slane %v3690, 6
        %v4193 = vrot.slane %v4192, 4
        %v4194 = vrot.slane %v3691, 6
        %v4195 = vsel %vm1734, %v4193, %v4194
        %v4196 = vrot.slane %v3692, 6
        %v4197 = vrot.slane %v4196, 4
        %v4198 = vrot.slane %v3693, 6
        %v4199 = vsel %vm1734, %v4197, %v4198
        %v4200 = vrot.slane %v3694, 6
        %v4201 = vrot.slane %v4200, 4
        %v4202 = vrot.slane %v3695, 6
        %v4203 = vsel %vm1734, %v4201, %v4202
        %v4204 = vrot.slane %v3696, 6
        %v4205 = vrot.slane %v4204, 4
        %v4206 = vrot.slane %v3697, 6
        %v4207 = vsel %vm1734, %v4205, %v4206
        %v4208 = vrot.slane %v3698, 6
        %v4209 = vrot.slane %v4208, 4
        %v4210 = vrot.slane %v3699, 6
        %v4211 = vsel %vm1734, %v4209, %v4210
        %v4212 = vrot.slane %v3701, 6
        %v4213 = vrot.slane %v3704, 7
        %v4214 = vor.u32 %v4212, %v4213
        %v4215 = vrot.slane %v4214, 4
        %v4216 = vrot.slane %v3992, 6
        %v4217 = vrot.slane %v3710, 7
        %v4218 = vor.u32 %v4216, %v4217
        %v4219 = vsel %vm1800, %v4215, %v4218
        %v4220 = vrot.slane %v3715, 6
        %v4221 = vrot.slane %v3718, 7
        %v4222 = vor.u32 %v4220, %v4221
        %v4223 = vrot.slane %v4222, 4
        %v4224 = vrot.slane %v4002, 6
        %v4225 = vrot.slane %v3724, 7
        %v4226 = vor.u32 %v4224, %v4225
        %v4227 = vsel %vm1800, %v4223, %v4226
        %v4228 = vrot.slane %v3729, 6
        %v4229 = vrot.slane %v3732, 7
        %v4230 = vor.u32 %v4228, %v4229
        %v4231 = vrot.slane %v4230, 4
        %v4232 = vrot.slane %v4012, 6
        %v4233 = vrot.slane %v3738, 7
        %v4234 = vor.u32 %v4232, %v4233
        %v4235 = vsel %vm1800, %v4231, %v4234
        %v4236 = vrot.slane %v3743, 6
        %v4237 = vrot.slane %v3746, 7
        %v4238 = vor.u32 %v4236, %v4237
        %v4239 = vrot.slane %v4238, 4
        %v4240 = vrot.slane %v4022, 6
        %v4241 = vrot.slane %v3752, 7
        %v4242 = vor.u32 %v4240, %v4241
        %v4243 = vsel %vm1800, %v4239, %v4242
        %v4244 = vrot.slane %v3757, 6
        %v4245 = vrot.slane %v3760, 7
        %v4246 = vor.u32 %v4244, %v4245
        %v4247 = vrot.slane %v4246, 4
        %v4248 = vrot.slane %v4032, 6
        %v4249 = vrot.slane %v3766, 7
        %v4250 = vor.u32 %v4248, %v4249
        %v4251 = vsel %vm1800, %v4247, %v4250
        %v4252 = vrot.slane %v3771, 6
        %v4253 = vrot.slane %v3774, 7
        %v4254 = vor.u32 %v4252, %v4253
        %v4255 = vrot.slane %v4254, 4
        %v4256 = vrot.slane %v4042, 6
        %v4257 = vrot.slane %v3780, 7
        %v4258 = vor.u32 %v4256, %v4257
        %v4259 = vsel %vm1800, %v4255, %v4258
        %v4260 = vrot.slane %v3785, 6
        %v4261 = vrot.slane %v3788, 7
        %v4262 = vor.u32 %v4260, %v4261
        %v4263 = vrot.slane %v4262, 4
        %v4264 = vrot.slane %v4052, 6
        %v4265 = vrot.slane %v3794, 7
        %v4266 = vor.u32 %v4264, %v4265
        %v4267 = vsel %vm1800, %v4263, %v4266
        %v4268 = vrot.slane %v3799, 6
        %v4269 = vrot.slane %v3802, 7
        %v4270 = vor.u32 %v4268, %v4269
        %v4271 = vrot.slane %v4270, 4
        %v4272 = vrot.slane %v4062, 6
        %v4273 = vrot.slane %v3808, 7
        %v4274 = vor.u32 %v4272, %v4273
        %v4275 = vsel %vm1800, %v4271, %v4274
        %v4276 = vrot.slane %v3813, 6
        %v4277 = vrot.slane %v3816, 7
        %v4278 = vor.u32 %v4276, %v4277
        %v4279 = vrot.slane %v4278, 4
        %v4280 = vrot.slane %v4072, 6
        %v4281 = vrot.slane %v3822, 7
        %v4282 = vor.u32 %v4280, %v4281
        %v4283 = vsel %vm1800, %v4279, %v4282
        %v4284 = vrot.slane %v3827, 6
        %v4285 = vrot.slane %v3830, 7
        %v4286 = vor.u32 %v4284, %v4285
        %v4287 = vrot.slane %v4286, 4
        %v4288 = vrot.slane %v4082, 6
        %v4289 = vrot.slane %v3836, 7
        %v4290 = vor.u32 %v4288, %v4289
        %v4291 = vsel %vm1800, %v4287, %v4290
        %v4292 = vrot.slane %v3841, 6
        %v4293 = vrot.slane %v3844, 7
        %v4294 = vor.u32 %v4292, %v4293
        %v4295 = vrot.slane %v4294, 4
        %v4296 = vrot.slane %v4092, 6
        %v4297 = vrot.slane %v3850, 7
        %v4298 = vor.u32 %v4296, %v4297
        %v4299 = vsel %vm1800, %v4295, %v4298
        %v4300 = vrot.slane %v3855, 6
        %v4301 = vrot.slane %v3858, 7
        %v4302 = vor.u32 %v4300, %v4301
        %v4303 = vrot.slane %v4302, 4
        %v4304 = vrot.slane %v4102, 6
        %v4305 = vrot.slane %v3864, 7
        %v4306 = vor.u32 %v4304, %v4305
        %v4307 = vsel %vm1800, %v4303, %v4306
        %v4308 = vrot.slane %v3869, 6
        %v4309 = vrot.slane %v3872, 7
        %v4310 = vor.u32 %v4308, %v4309
        %v4311 = vrot.slane %v4310, 4
        %v4312 = vrot.slane %v4112, 6
        %v4313 = vrot.slane %v3878, 7
        %v4314 = vor.u32 %v4312, %v4313
        %v4315 = vsel %vm1800, %v4311, %v4314
        %v4316 = vrot.slane %v3883, 6
        %v4317 = vrot.slane %v3886, 7
        %v4318 = vor.u32 %v4316, %v4317
        %v4319 = vrot.slane %v4318, 4
        %v4320 = vrot.slane %v4122, 6
        %v4321 = vrot.slane %v3892, 7
        %v4322 = vor.u32 %v4320, %v4321
        %v4323 = vsel %vm1800, %v4319, %v4322
        %v4324 = vrot.slane %v3897, 6
        %v4325 = vrot.slane %v3900, 7
        %v4326 = vor.u32 %v4324, %v4325
        %v4327 = vrot.slane %v4326, 4
        %v4328 = vrot.slane %v4132, 6
        %v4329 = vrot.slane %v3906, 7
        %v4330 = vor.u32 %v4328, %v4329
        %v4331 = vsel %vm1800, %v4327, %v4330
        %v4332 = vrot.slane %v3911, 6
        %v4333 = vrot.slane %v3914, 7
        %v4334 = vor.u32 %v4332, %v4333
        %v4335 = vrot.slane %v4334, 4
        %v4336 = vrot.slane %v4142, 6
        %v4337 = vrot.slane %v3920, 7
        %v4338 = vor.u32 %v4336, %v4337
        %v4339 = vsel %vm1800, %v4335, %v4338
        %v4340 = vrot.slane %v3668, 7
        %v4341 = vrot.slane %v4340, 4
        %v4342 = vrot.slane %v3669, 7
        %v4343 = vsel %vm1931, %v4341, %v4342
        %v4344 = vrot.slane %v3670, 7
        %v4345 = vrot.slane %v4344, 4
        %v4346 = vrot.slane %v3671, 7
        %v4347 = vsel %vm1931, %v4345, %v4346
        %v4348 = vrot.slane %v3672, 7
        %v4349 = vrot.slane %v4348, 4
        %v4350 = vrot.slane %v3673, 7
        %v4351 = vsel %vm1931, %v4349, %v4350
        %v4352 = vrot.slane %v3674, 7
        %v4353 = vrot.slane %v4352, 4
        %v4354 = vrot.slane %v3675, 7
        %v4355 = vsel %vm1931, %v4353, %v4354
        %v4356 = vrot.slane %v3676, 7
        %v4357 = vrot.slane %v4356, 4
        %v4358 = vrot.slane %v3677, 7
        %v4359 = vsel %vm1931, %v4357, %v4358
        %v4360 = vrot.slane %v3678, 7
        %v4361 = vrot.slane %v4360, 4
        %v4362 = vrot.slane %v3679, 7
        %v4363 = vsel %vm1931, %v4361, %v4362
        %v4364 = vrot.slane %v3680, 7
        %v4365 = vrot.slane %v4364, 4
        %v4366 = vrot.slane %v3681, 7
        %v4367 = vsel %vm1931, %v4365, %v4366
        %v4368 = vrot.slane %v3682, 7
        %v4369 = vrot.slane %v4368, 4
        %v4370 = vrot.slane %v3683, 7
        %v4371 = vsel %vm1931, %v4369, %v4370
        %v4372 = vrot.slane %v3684, 7
        %v4373 = vrot.slane %v4372, 4
        %v4374 = vrot.slane %v3685, 7
        %v4375 = vsel %vm1931, %v4373, %v4374
        %v4376 = vrot.slane %v3686, 7
        %v4377 = vrot.slane %v4376, 4
        %v4378 = vrot.slane %v3687, 7
        %v4379 = vsel %vm1931, %v4377, %v4378
        %v4380 = vrot.slane %v3688, 7
        %v4381 = vrot.slane %v4380, 4
        %v4382 = vrot.slane %v3689, 7
        %v4383 = vsel %vm1931, %v4381, %v4382
        %v4384 = vrot.slane %v3690, 7
        %v4385 = vrot.slane %v4384, 4
        %v4386 = vrot.slane %v3691, 7
        %v4387 = vsel %vm1931, %v4385, %v4386
        %v4388 = vrot.slane %v3692, 7
        %v4389 = vrot.slane %v4388, 4
        %v4390 = vrot.slane %v3693, 7
        %v4391 = vsel %vm1931, %v4389, %v4390
        %v4392 = vrot.slane %v3694, 7
        %v4393 = vrot.slane %v4392, 4
        %v4394 = vrot.slane %v3695, 7
        %v4395 = vsel %vm1931, %v4393, %v4394
        %v4396 = vrot.slane %v3696, 7
        %v4397 = vrot.slane %v4396, 4
        %v4398 = vrot.slane %v3697, 7
        %v4399 = vsel %vm1931, %v4397, %v4398
        %v4400 = vrot.slane %v3698, 7
        %v4401 = vrot.slane %v4400, 4
        %v4402 = vrot.slane %v3699, 7
        %v4403 = vsel %vm1931, %v4401, %v4402
        %v4404 = vpack.c.b16 %v3638, %v3636
        %v4405 = vpack.c.b16 %v3642, %v3640
        %v4406 = vpack.c.b16 %v3646, %v3644
        %v4407 = vpack.c.b16 %v3650, %v3648
        %v4408 = vpack.c.b16 %v3654, %v3652
        %v4409 = vpack.c.b16 %v3658, %v3656
        %v4410 = vpack.c.b16 %v3662, %v3660
        %v4411 = vpack.c.b16 %v3666, %v3664
        %v4412 = vunpack.c.l.b16 %v3713
        %v4413 = vunpack.c.l.b16 %v3727
        %v4414 = vunpack.c.l.b16 %v3741
        %v4415 = vunpack.c.l.b16 %v3755
        %v4416 = vunpack.c.l.b16 %v3769
        %v4417 = vunpack.c.l.b16 %v3783
        %v4418 = vunpack.c.l.b16 %v3797
        %v4419 = vunpack.c.l.b16 %v3811
        %v4420 = vunpack.c.l.b16 %v3825
        %v4421 = vunpack.c.l.b16 %v3839
        %v4422 = vunpack.c.l.b16 %v3853
        %v4423 = vunpack.c.l.b16 %v3867
        %v4424 = vunpack.c.l.b16 %v3881
        %v4425 = vunpack.c.l.b16 %v3895
        %v4426 = vunpack.c.l.b16 %v3909
        %v4427 = vunpack.c.l.b16 %v3923
        %v4428 = vpack.c.b16 %v4413, %v4412
        %v4429 = vpack.c.b16 %v4415, %v4414
        %v4430 = vpack.c.b16 %v4417, %v4416
        %v4431 = vpack.c.b16 %v4419, %v4418
        %v4432 = vpack.c.b16 %v4421, %v4420
        %v4433 = vpack.c.b16 %v4423, %v4422
        %v4434 = vpack.c.b16 %v4425, %v4424
        %v4435 = vpack.c.b16 %v4427, %v4426
        %4436 = vrot.lane.b32.xlu0 %v4428, 8
        %v4437 = vpop.permute.xlu0 %4436
        %4438 = vrot.lane.b32.xlu0 %v4429, 8
        %v4439 = vpop.permute.xlu0 %4438
        %4440 = vrot.lane.b32.xlu0 %v4430, 8
        %v4441 = vpop.permute.xlu0 %4440
        %4442 = vrot.lane.b32.xlu0 %v4431, 8
        %v4443 = vpop.permute.xlu0 %4442
        %4444 = vrot.lane.b32.xlu0 %v4432, 8
        %v4445 = vpop.permute.xlu0 %4444
        %4446 = vrot.lane.b32.xlu0 %v4433, 8
        %v4447 = vpop.permute.xlu0 %4446
        %4448 = vrot.lane.b32.xlu0 %v4434, 8
        %v4449 = vpop.permute.xlu0 %4448
        %4450 = vrot.lane.b32.xlu0 %v4435, 8
        %v4451 = vpop.permute.xlu0 %4450
        %v4452 = vunpack.c.l.b16 %v3927
        %v4453 = vunpack.c.l.b16 %v3931
        %v4454 = vunpack.c.l.b16 %v3935
        %v4455 = vunpack.c.l.b16 %v3939
        %v4456 = vunpack.c.l.b16 %v3943
        %v4457 = vunpack.c.l.b16 %v3947
        %v4458 = vunpack.c.l.b16 %v3951
        %v4459 = vunpack.c.l.b16 %v3955
        %v4460 = vunpack.c.l.b16 %v3959
        %v4461 = vunpack.c.l.b16 %v3963
        %v4462 = vunpack.c.l.b16 %v3967
        %v4463 = vunpack.c.l.b16 %v3971
        %v4464 = vunpack.c.l.b16 %v3975
        %v4465 = vunpack.c.l.b16 %v3979
        %v4466 = vunpack.c.l.b16 %v3983
        %v4467 = vunpack.c.l.b16 %v3987
        %v4468 = vpack.c.b16 %v4453, %v4452
        %v4469 = vpack.c.b16 %v4455, %v4454
        %v4470 = vpack.c.b16 %v4457, %v4456
        %v4471 = vpack.c.b16 %v4459, %v4458
        %v4472 = vpack.c.b16 %v4461, %v4460
        %v4473 = vpack.c.b16 %v4463, %v4462
        %v4474 = vpack.c.b16 %v4465, %v4464
        %v4475 = vpack.c.b16 %v4467, %v4466
        %4476 = vrot.lane.b32.xlu0 %v4468, 16
        %v4477 = vpop.permute.xlu0 %4476
        %4478 = vrot.lane.b32.xlu0 %v4469, 16
        %v4479 = vpop.permute.xlu0 %4478
        %4480 = vrot.lane.b32.xlu0 %v4470, 16
        %v4481 = vpop.permute.xlu0 %4480
        %4482 = vrot.lane.b32.xlu0 %v4471, 16
        %v4483 = vpop.permute.xlu0 %4482
        %4484 = vrot.lane.b32.xlu0 %v4472, 16
        %v4485 = vpop.permute.xlu0 %4484
        %4486 = vrot.lane.b32.xlu0 %v4473, 16
        %v4487 = vpop.permute.xlu0 %4486
        %4488 = vrot.lane.b32.xlu0 %v4474, 16
        %v4489 = vpop.permute.xlu0 %4488
        %4490 = vrot.lane.b32.xlu0 %v4475, 16
        %v4491 = vpop.permute.xlu0 %4490
        %v4492 = vunpack.c.l.b16 %v3997
        %v4493 = vunpack.c.l.b16 %v4007
        %v4494 = vunpack.c.l.b16 %v4017
        %v4495 = vunpack.c.l.b16 %v4027
        %v4496 = vunpack.c.l.b16 %v4037
        %v4497 = vunpack.c.l.b16 %v4047
        %v4498 = vunpack.c.l.b16 %v4057
        %v4499 = vunpack.c.l.b16 %v4067
        %v4500 = vunpack.c.l.b16 %v4077
        %v4501 = vunpack.c.l.b16 %v4087
        %v4502 = vunpack.c.l.b16 %v4097
        %v4503 = vunpack.c.l.b16 %v4107
        %v4504 = vunpack.c.l.b16 %v4117
        %v4505 = vunpack.c.l.b16 %v4127
        %v4506 = vunpack.c.l.b16 %v4137
        %v4507 = vunpack.c.l.b16 %v4147
        %v4508 = vpack.c.b16 %v4493, %v4492
        %v4509 = vpack.c.b16 %v4495, %v4494
        %v4510 = vpack.c.b16 %v4497, %v4496
        %v4511 = vpack.c.b16 %v4499, %v4498
        %v4512 = vpack.c.b16 %v4501, %v4500
        %v4513 = vpack.c.b16 %v4503, %v4502
        %v4514 = vpack.c.b16 %v4505, %v4504
        %v4515 = vpack.c.b16 %v4507, %v4506
        %4516 = vrot.lane.b32.xlu0 %v4508, 24
        %v4517 = vpop.permute.xlu0 %4516
        %4518 = vrot.lane.b32.xlu0 %v4509, 24
        %v4519 = vpop.permute.xlu0 %4518
        %4520 = vrot.lane.b32.xlu0 %v4510, 24
        %v4521 = vpop.permute.xlu0 %4520
        %4522 = vrot.lane.b32.xlu0 %v4511, 24
        %v4523 = vpop.permute.xlu0 %4522
        %4524 = vrot.lane.b32.xlu0 %v4512, 24
        %v4525 = vpop.permute.xlu0 %4524
        %4526 = vrot.lane.b32.xlu0 %v4513, 24
        %v4527 = vpop.permute.xlu0 %4526
        %4528 = vrot.lane.b32.xlu0 %v4514, 24
        %v4529 = vpop.permute.xlu0 %4528
        %4530 = vrot.lane.b32.xlu0 %v4515, 24
        %v4531 = vpop.permute.xlu0 %4530
        %v4532 = vunpack.c.l.b16 %v4151
        %v4533 = vunpack.c.l.b16 %v4155
        %v4534 = vunpack.c.l.b16 %v4159
        %v4535 = vunpack.c.l.b16 %v4163
        %v4536 = vunpack.c.l.b16 %v4167
        %v4537 = vunpack.c.l.b16 %v4171
        %v4538 = vunpack.c.l.b16 %v4175
        %v4539 = vunpack.c.l.b16 %v4179
        %v4540 = vunpack.c.l.b16 %v4183
        %v4541 = vunpack.c.l.b16 %v4187
        %v4542 = vunpack.c.l.b16 %v4191
        %v4543 = vunpack.c.l.b16 %v4195
        %v4544 = vunpack.c.l.b16 %v4199
        %v4545 = vunpack.c.l.b16 %v4203
        %v4546 = vunpack.c.l.b16 %v4207
        %v4547 = vunpack.c.l.b16 %v4211
        %v4548 = vpack.c.b16 %v4533, %v4532
        %v4549 = vpack.c.b16 %v4535, %v4534
        %v4550 = vpack.c.b16 %v4537, %v4536
        %v4551 = vpack.c.b16 %v4539, %v4538
        %v4552 = vpack.c.b16 %v4541, %v4540
        %v4553 = vpack.c.b16 %v4543, %v4542
        %v4554 = vpack.c.b16 %v4545, %v4544
        %v4555 = vpack.c.b16 %v4547, %v4546
        %4556 = vrot.lane.b32.xlu0 %v4548, 32
        %v4557 = vpop.permute.xlu0 %4556
        %4558 = vrot.lane.b32.xlu0 %v4549, 32
        %v4559 = vpop.permute.xlu0 %4558
        %4560 = vrot.lane.b32.xlu0 %v4550, 32
        %v4561 = vpop.permute.xlu0 %4560
        %4562 = vrot.lane.b32.xlu0 %v4551, 32
        %v4563 = vpop.permute.xlu0 %4562
        %4564 = vrot.lane.b32.xlu0 %v4552, 32
        %v4565 = vpop.permute.xlu0 %4564
        %4566 = vrot.lane.b32.xlu0 %v4553, 32
        %v4567 = vpop.permute.xlu0 %4566
        %4568 = vrot.lane.b32.xlu0 %v4554, 32
        %v4569 = vpop.permute.xlu0 %4568
        %4570 = vrot.lane.b32.xlu0 %v4555, 32
        %v4571 = vpop.permute.xlu0 %4570
        %v4572 = vunpack.c.l.b16 %v4219
        %v4573 = vunpack.c.l.b16 %v4227
        %v4574 = vunpack.c.l.b16 %v4235
        %v4575 = vunpack.c.l.b16 %v4243
        %v4576 = vunpack.c.l.b16 %v4251
        %v4577 = vunpack.c.l.b16 %v4259
        %v4578 = vunpack.c.l.b16 %v4267
        %v4579 = vunpack.c.l.b16 %v4275
        %v4580 = vunpack.c.l.b16 %v4283
        %v4581 = vunpack.c.l.b16 %v4291
        %v4582 = vunpack.c.l.b16 %v4299
        %v4583 = vunpack.c.l.b16 %v4307
        %v4584 = vunpack.c.l.b16 %v4315
        %v4585 = vunpack.c.l.b16 %v4323
        %v4586 = vunpack.c.l.b16 %v4331
        %v4587 = vunpack.c.l.b16 %v4339
        %v4588 = vpack.c.b16 %v4573, %v4572
        %v4589 = vpack.c.b16 %v4575, %v4574
        %v4590 = vpack.c.b16 %v4577, %v4576
        %v4591 = vpack.c.b16 %v4579, %v4578
        %v4592 = vpack.c.b16 %v4581, %v4580
        %v4593 = vpack.c.b16 %v4583, %v4582
        %v4594 = vpack.c.b16 %v4585, %v4584
        %v4595 = vpack.c.b16 %v4587, %v4586
        %4596 = vrot.lane.b32.xlu0 %v4588, 40
        %v4597 = vpop.permute.xlu0 %4596
        %4598 = vrot.lane.b32.xlu0 %v4589, 40
        %v4599 = vpop.permute.xlu0 %4598
        %4600 = vrot.lane.b32.xlu0 %v4590, 40
        %v4601 = vpop.permute.xlu0 %4600
        %4602 = vrot.lane.b32.xlu0 %v4591, 40
        %v4603 = vpop.permute.xlu0 %4602
        %4604 = vrot.lane.b32.xlu0 %v4592, 40
        %v4605 = vpop.permute.xlu0 %4604
        %4606 = vrot.lane.b32.xlu0 %v4593, 40
        %v4607 = vpop.permute.xlu0 %4606
        %4608 = vrot.lane.b32.xlu0 %v4594, 40
        %v4609 = vpop.permute.xlu0 %4608
        %4610 = vrot.lane.b32.xlu0 %v4595, 40
        %v4611 = vpop.permute.xlu0 %4610
        %v4612 = vunpack.c.l.b16 %v4343
        %v4613 = vunpack.c.l.b16 %v4347
        %v4614 = vunpack.c.l.b16 %v4351
        %v4615 = vunpack.c.l.b16 %v4355
        %v4616 = vunpack.c.l.b16 %v4359
        %v4617 = vunpack.c.l.b16 %v4363
        %v4618 = vunpack.c.l.b16 %v4367
        %v4619 = vunpack.c.l.b16 %v4371
        %v4620 = vunpack.c.l.b16 %v4375
        %v4621 = vunpack.c.l.b16 %v4379
        %v4622 = vunpack.c.l.b16 %v4383
        %v4623 = vunpack.c.l.b16 %v4387
        %v4624 = vunpack.c.l.b16 %v4391
        %v4625 = vunpack.c.l.b16 %v4395
        %v4626 = vunpack.c.l.b16 %v4399
        %v4627 = vunpack.c.l.b16 %v4403
        %v4628 = vpack.c.b16 %v4613, %v4612
        %v4629 = vpack.c.b16 %v4615, %v4614
        %v4630 = vpack.c.b16 %v4617, %v4616
        %v4631 = vpack.c.b16 %v4619, %v4618
        %v4632 = vpack.c.b16 %v4621, %v4620
        %v4633 = vpack.c.b16 %v4623, %v4622
        %v4634 = vpack.c.b16 %v4625, %v4624
        %v4635 = vpack.c.b16 %v4627, %v4626
        %4636 = vrot.lane.b32.xlu0 %v4628, 48
        %v4637 = vpop.permute.xlu0 %4636
        %4638 = vrot.lane.b32.xlu0 %v4629, 48
        %v4639 = vpop.permute.xlu0 %4638
        %4640 = vrot.lane.b32.xlu0 %v4630, 48
        %v4641 = vpop.permute.xlu0 %4640
        %4642 = vrot.lane.b32.xlu0 %v4631, 48
        %v4643 = vpop.permute.xlu0 %4642
        %4644 = vrot.lane.b32.xlu0 %v4632, 48
        %v4645 = vpop.permute.xlu0 %4644
        %4646 = vrot.lane.b32.xlu0 %v4633, 48
        %v4647 = vpop.permute.xlu0 %4646
        %4648 = vrot.lane.b32.xlu0 %v4634, 48
        %v4649 = vpop.permute.xlu0 %4648
        %4650 = vrot.lane.b32.xlu0 %v4635, 48
        %v4651 = vpop.permute.xlu0 %4650
        %v4654 = vsel %vm2244, %v4404, %v4437
        %v4657 = vsel %vm2244, %v4405, %v4439
        %v4660 = vsel %vm2244, %v4406, %v4441
        %v4663 = vsel %vm2244, %v4407, %v4443
        %v4666 = vsel %vm2244, %v4408, %v4445
        %v4669 = vsel %vm2244, %v4409, %v4447
        %v4672 = vsel %vm2244, %v4410, %v4449
        %v4675 = vsel %vm2244, %v4411, %v4451
        %v4677 = vsel %vm607, %v4654, %v4477
        %v4679 = vsel %vm607, %v4657, %v4479
        %v4681 = vsel %vm607, %v4660, %v4481
        %v4683 = vsel %vm607, %v4663, %v4483
        %v4685 = vsel %vm607, %v4666, %v4485
        %v4687 = vsel %vm607, %v4669, %v4487
        %v4689 = vsel %vm607, %v4672, %v4489
        %v4691 = vsel %vm607, %v4675, %v4491
        %v4693 = vsel %vm2285, %v4677, %v4517
        %v4695 = vsel %vm2285, %v4679, %v4519
        %v4697 = vsel %vm2285, %v4681, %v4521
        %v4699 = vsel %vm2285, %v4683, %v4523
        %v4701 = vsel %vm2285, %v4685, %v4525
        %v4703 = vsel %vm2285, %v4687, %v4527
        %v4705 = vsel %vm2285, %v4689, %v4529
        %v4707 = vsel %vm2285, %v4691, %v4531
        %v4709 = vsel %vm2302, %v4693, %v4557
        %v4711 = vsel %vm2302, %v4695, %v4559
        %v4713 = vsel %vm2302, %v4697, %v4561
        %v4715 = vsel %vm2302, %v4699, %v4563
        %v4717 = vsel %vm2302, %v4701, %v4565
        %v4719 = vsel %vm2302, %v4703, %v4567
        %v4721 = vsel %vm2302, %v4705, %v4569
        %v4723 = vsel %vm2302, %v4707, %v4571
        %v4725 = vsel %vm2319, %v4709, %v4597
        %v4727 = vsel %vm2319, %v4711, %v4599
        %v4729 = vsel %vm2319, %v4713, %v4601
        %v4731 = vsel %vm2319, %v4715, %v4603
        %v4733 = vsel %vm2319, %v4717, %v4605
        %v4735 = vsel %vm2319, %v4719, %v4607
        %v4737 = vsel %vm2319, %v4721, %v4609
        %v4739 = vsel %vm2319, %v4723, %v4611
        %v4741 = vsel %vm2336, %v4725, %v4637
        %v4743 = vsel %vm2336, %v4727, %v4639
        %v4745 = vsel %vm2336, %v4729, %v4641
        %v4747 = vsel %vm2336, %v4731, %v4643
        %v4749 = vsel %vm2336, %v4733, %v4645
        %v4751 = vsel %vm2336, %v4735, %v4647
        %v4753 = vsel %vm2336, %v4737, %v4649
        %v4755 = vsel %vm2336, %v4739, %v4651
        %v4756 = vld [vmem:[%s10] sm:$0xf]
        %v4757 = vld [vmem:[%s10 + $0x4] sm:$0xf]
        %v4758 = vld [vmem:[%s10 + $0x8] sm:$0xf]
        %v4759 = vld [vmem:[%s10 + $0xc] sm:$0xf]
        %v4760 = vld [vmem:[%s10 + $0x10] sm:$0xf]
        %v4761 = vld [vmem:[%s10 + $0x14] sm:$0xf]
        %v4762 = vld [vmem:[%s10 + $0x18] sm:$0xf]
        %v4763 = vld [vmem:[%s11] sm:$0x1]
        %v4765 = vlaneseq
        %v4766 = vshrl.u32 %v4765, 7
        %v4767 = vsub.s32 0, %v4766
        %v4768 = vrot.slane %v4763, %v4767
        %v4777 = vunpack.c.l.b16 %v4756
        %v4778 = vunpack.c.l.b16 %v4757
        %v4779 = vunpack.c.l.b16 %v4758
        %v4780 = vunpack.c.l.b16 %v4759
        %v4781 = vunpack.c.l.b16 %v4760
        %v4782 = vunpack.c.l.b16 %v4761
        %v4783 = vunpack.c.l.b16 %v4762
        %v4784 = vpack.c.b16 %v4778, %v4777
        %v4785 = vpack.c.b16 %v4780, %v4779
        %v4786 = vpack.c.b16 %v4782, %v4781
        %v4787 = vpack.c.b16 %v4783, %v4783
        %v4791 = vsel %vm2388, %v4741, 0
        %v4793 = vsel %vm2388, %v4743, 0
        %v4795 = vsel %vm2388, %v4745, 0
        %v4797 = vsel %vm2388, %v4747, 0
        %v4799 = vsel %vm2388, %v4749, 0
        %v4801 = vsel %vm2388, %v4751, 0
        %v4803 = vsel %vm2388, %v4753, 0
        %v4805 = vsel %vm2388, %v4755, 0
        %v4808 = vsel %vm2405, %v4787, 0
        %4810 = vmatprep.subr.bf16.mxu0 0
        %4811 = vmatpush1.bf16.msra.mxu0 0
        %4812 = vmatprep.subr.bf16.mxu0 0
        %4813 = vmatpush1.bf16.msra.mxu0 0
        %4814 = vmatprep.subr.bf16.mxu0 0
        %4815 = vmatpush1.bf16.msra.mxu0 0
        %4816 = vmatprep.subr.bf16.mxu0 0
        %4817 = vmatpush1.bf16.msra.mxu0 0
        %4818 = vmatprep.subr.bf16.mxu0 0
        %4819 = vmatpush1.bf16.msra.mxu0 %v4808
        %4820 = vmatprep.subr.bf16.mxu0 0
        %4821 = vmatpush1.bf16.msra.mxu0 %v4786
        %4822 = vmatprep.subr.bf16.mxu0 0
        %4823 = vmatpush1.bf16.msra.mxu0 %v4785
        %4824 = vmatprep.subr.bf16.mxu0 0
        %4825 = vmatpush1.bf16.msra.mxu0 %v4784
        %4826 = vmatprep.subr.bf16.mxu0 0
        %4827 = vmatpush2.bf16.msra.mxu0 0
        %4828 = vmatprep.subr.bf16.mxu0 0
        %4829 = vmatpush2.bf16.msra.mxu0 0
        %4830 = vmatprep.subr.bf16.mxu0 0
        %4831 = vmatpush2.bf16.msra.mxu0 0
        %4832 = vmatprep.subr.bf16.mxu0 0
        %4833 = vmatpush2.bf16.msra.mxu0 0
        %4834 = vmatprep.subr.bf16.mxu0 0
        %4835 = vmatpush2.bf16.msra.mxu0 0
        %4836 = vmatprep.subr.bf16.mxu0 0
        %4837 = vmatpush2.bf16.msra.mxu0 0
        %4838 = vmatprep.subr.bf16.mxu0 0
        %4839 = vmatpush2.bf16.msra.mxu0 0
        %4840 = vmatprep.subr.bf16.mxu0 0
        %4841 = vmatpush2.bf16.msra.mxu0 0
        %4842 = vmatprep.mubr.bf16.mxu0 0
        %4843 = vmatmul.mubr.bf16.gmra.mxu0 %v4791
        %v4844 = vpop.f32.mrf.mxu0
        %v4845 = vadd.f32 %v4768, %v4844
        %v4846 = vpop.f32.mrf.mxu0
        %v4847 = vpop.f32.mrf.mxu0
        %v4848 = vadd.f32 %v4768, %v4847
        %v4849 = vpop.f32.mrf.mxu0
        %4850 = vmatprep.mubr.bf16.mxu0 0
        %4851 = vmatmul.mubr.bf16.gmra.mxu0 %v4793
        %v4852 = vpop.f32.mrf.mxu0
        %v4853 = vadd.f32 %v4768, %v4852
        %v4854 = vpop.f32.mrf.mxu0
        %v4855 = vpop.f32.mrf.mxu0
        %v4856 = vadd.f32 %v4768, %v4855
        %v4857 = vpop.f32.mrf.mxu0
        %4858 = vmatprep.mubr.bf16.mxu0 0
        %4859 = vmatmul.mubr.bf16.gmra.mxu0 %v4795
        %v4860 = vpop.f32.mrf.mxu0
        %v4861 = vadd.f32 %v4768, %v4860
        %v4862 = vpop.f32.mrf.mxu0
        %v4863 = vpop.f32.mrf.mxu0
        %v4864 = vadd.f32 %v4768, %v4863
        %v4865 = vpop.f32.mrf.mxu0
        %4866 = vmatprep.mubr.bf16.mxu0 0
        %4867 = vmatmul.mubr.bf16.gmra.mxu0 %v4797
        %v4868 = vpop.f32.mrf.mxu0
        %v4869 = vadd.f32 %v4768, %v4868
        %v4870 = vpop.f32.mrf.mxu0
        %v4871 = vpop.f32.mrf.mxu0
        %v4872 = vadd.f32 %v4768, %v4871
        %v4873 = vpop.f32.mrf.mxu0
        %4874 = vmatprep.mubr.bf16.mxu0 0
        %4875 = vmatmul.mubr.bf16.gmra.mxu0 %v4799
        %v4876 = vpop.f32.mrf.mxu0
        %v4877 = vadd.f32 %v4768, %v4876
        %v4878 = vpop.f32.mrf.mxu0
        %v4879 = vpop.f32.mrf.mxu0
        %v4880 = vadd.f32 %v4768, %v4879
        %v4881 = vpop.f32.mrf.mxu0
        %4882 = vmatprep.mubr.bf16.mxu0 0
        %4883 = vmatmul.mubr.bf16.gmra.mxu0 %v4801
        %v4884 = vpop.f32.mrf.mxu0
        %v4885 = vadd.f32 %v4768, %v4884
        %v4886 = vpop.f32.mrf.mxu0
        %v4887 = vpop.f32.mrf.mxu0
        %v4888 = vadd.f32 %v4768, %v4887
        %v4889 = vpop.f32.mrf.mxu0
        %4890 = vmatprep.mubr.bf16.mxu0 0
        %4891 = vmatmul.mubr.bf16.gmra.mxu0 %v4803
        %v4892 = vpop.f32.mrf.mxu0
        %v4893 = vadd.f32 %v4768, %v4892
        %v4894 = vpop.f32.mrf.mxu0
        %v4895 = vpop.f32.mrf.mxu0
        %v4896 = vadd.f32 %v4768, %v4895
        %v4897 = vpop.f32.mrf.mxu0
        %4898 = vmatprep.mubr.bf16.mxu0 0
        %4899 = vmatmul.mubr.bf16.gmra.mxu0 %v4805
        %v4900 = vpop.f32.mrf.mxu0
        %v4901 = vadd.f32 %v4768, %v4900
        %v4902 = vpop.f32.mrf.mxu0
        %v4903 = vpop.f32.mrf.mxu0
        %v4904 = vadd.f32 %v4768, %v4903
        %v4905 = vpop.f32.mrf.mxu0
        %4906 = vdwg.mxu0
        %v4907 = vmax.f32 %v4845, 0.0
        %v4908 = vmax.f32 %v4848, 0.0
        %v4909 = vmax.f32 %v4853, 0.0
        %v4910 = vmax.f32 %v4856, 0.0
        %v4911 = vmax.f32 %v4861, 0.0
        %v4912 = vmax.f32 %v4864, 0.0
        %v4913 = vmax.f32 %v4869, 0.0
        %v4914 = vmax.f32 %v4872, 0.0
        %v4915 = vmax.f32 %v4877, 0.0
        %v4916 = vmax.f32 %v4880, 0.0
        %v4917 = vmax.f32 %v4885, 0.0
        %v4918 = vmax.f32 %v4888, 0.0
        %v4919 = vmax.f32 %v4893, 0.0
        %v4920 = vmax.f32 %v4896, 0.0
        %v4921 = vmax.f32 %v4901, 0.0
        %v4922 = vmax.f32 %v4904, 0.0
        %v4923 = vpack.c.bf16 %v4908, %v4907
        %v4924 = vpack.c.bf16 %v4910, %v4909
        %v4925 = vpack.c.bf16 %v4912, %v4911
        %v4926 = vpack.c.bf16 %v4914, %v4913
        %v4927 = vpack.c.bf16 %v4916, %v4915
        %v4928 = vpack.c.bf16 %v4918, %v4917
        %v4929 = vpack.c.bf16 %v4920, %v4919
        %v4930 = vpack.c.bf16 %v4922, %v4921
        %v4939 = vunpack.c.l.b16 %v4923
        %v4940 = vunpack.c.h.b16 %v4923
        %v4941 = vunpack.c.l.b16 %v4924
        %v4942 = vunpack.c.h.b16 %v4924
        %v4943 = vunpack.c.l.b16 %v4925
        %v4944 = vunpack.c.h.b16 %v4925
        %v4945 = vunpack.c.l.b16 %v4926
        %v4946 = vunpack.c.h.b16 %v4926
        %v4947 = vunpack.c.l.b16 %v4927
        %v4948 = vunpack.c.h.b16 %v4927
        %v4949 = vunpack.c.l.b16 %v4928
        %v4950 = vunpack.c.h.b16 %v4928
        %v4951 = vunpack.c.l.b16 %v4929
        %v4952 = vunpack.c.h.b16 %v4929
        %v4953 = vunpack.c.l.b16 %v4930
        %v4954 = vunpack.c.h.b16 %v4930
        %v4955 = vpack.c.b16 %v4939, %v2555
        %v4956 = vpack.c.b16 %v4941, %v4940
        %v4957 = vpack.c.b16 %v4943, %v4942
        %v4958 = vpack.c.b16 %v4947, %v2555
        %v4959 = vpack.c.b16 %v4949, %v4948
        %v4960 = vpack.c.b16 %v4951, %v4950
        %v4961 = vpack.c.b16 %v4940, %v4939
        %v4962 = vpack.c.b16 %v4942, %v4941
        %v4963 = vpack.c.b16 %v4944, %v4943
        %v4964 = vpack.c.b16 %v4948, %v4947
        %v4965 = vpack.c.b16 %v4950, %v4949
        %v4966 = vpack.c.b16 %v4952, %v4951
        %4967 = vrot.lane.b32.xlu0 %v4961, 8
        %v4968 = vpop.permute.xlu0 %4967
        %4969 = vrot.lane.b32.xlu0 %v4962, 8
        %v4970 = vpop.permute.xlu0 %4969
        %4971 = vrot.lane.b32.xlu0 %v4963, 8
        %v4972 = vpop.permute.xlu0 %4971
        %4973 = vrot.lane.b32.xlu0 %v4964, 8
        %v4974 = vpop.permute.xlu0 %4973
        %4975 = vrot.lane.b32.xlu0 %v4965, 8
        %v4976 = vpop.permute.xlu0 %4975
        %4977 = vrot.lane.b32.xlu0 %v4966, 8
        %v4978 = vpop.permute.xlu0 %4977
        %v4979 = vpack.c.b16 %v4945, %v4944
        %v4980 = vpack.c.b16 %v4953, %v4952
        %4981 = vrot.lane.b32.xlu0 %v4955, 16
        %v4982 = vpop.permute.xlu0 %4981
        %4983 = vrot.lane.b32.xlu0 %v4956, 16
        %v4984 = vpop.permute.xlu0 %4983
        %4985 = vrot.lane.b32.xlu0 %v4957, 16
        %v4986 = vpop.permute.xlu0 %4985
        %4987 = vrot.lane.b32.xlu0 %v4979, 16
        %v4988 = vpop.permute.xlu0 %4987
        %4989 = vrot.lane.b32.xlu0 %v4958, 16
        %v4990 = vpop.permute.xlu0 %4989
        %4991 = vrot.lane.b32.xlu0 %v4959, 16
        %v4992 = vpop.permute.xlu0 %4991
        %4993 = vrot.lane.b32.xlu0 %v4960, 16
        %v4994 = vpop.permute.xlu0 %4993
        %4995 = vrot.lane.b32.xlu0 %v4980, 16
        %v4996 = vpop.permute.xlu0 %4995
        %v4997 = vpack.c.b16 %v4946, %v4945
        %v4998 = vpack.c.b16 %v4954, %v4953
        %4999 = vrot.lane.b32.xlu0 %v4961, 24
        %v5000 = vpop.permute.xlu0 %4999
        %5001 = vrot.lane.b32.xlu0 %v4962, 24
        %v5002 = vpop.permute.xlu0 %5001
        %5003 = vrot.lane.b32.xlu0 %v4963, 24
        %v5004 = vpop.permute.xlu0 %5003
        %5005 = vrot.lane.b32.xlu0 %v4997, 24
        %v5006 = vpop.permute.xlu0 %5005
        %5007 = vrot.lane.b32.xlu0 %v4964, 24
        %v5008 = vpop.permute.xlu0 %5007
        %5009 = vrot.lane.b32.xlu0 %v4965, 24
        %v5010 = vpop.permute.xlu0 %5009
        %5011 = vrot.lane.b32.xlu0 %v4966, 24
        %v5012 = vpop.permute.xlu0 %5011
        %5013 = vrot.lane.b32.xlu0 %v4998, 24
        %v5014 = vpop.permute.xlu0 %5013
        %v5015 = vpack.c.b16 %v2555, %v4946
        %v5016 = vpack.c.b16 %v2555, %v4954
        %5017 = vrot.lane.b32.xlu0 %v4956, 32
        %v5018 = vpop.permute.xlu0 %5017
        %5019 = vrot.lane.b32.xlu0 %v4957, 32
        %v5020 = vpop.permute.xlu0 %5019
        %5021 = vrot.lane.b32.xlu0 %v4979, 32
        %v5022 = vpop.permute.xlu0 %5021
        %5023 = vrot.lane.b32.xlu0 %v5015, 32
        %v5024 = vpop.permute.xlu0 %5023
        %5025 = vrot.lane.b32.xlu0 %v4959, 32
        %v5026 = vpop.permute.xlu0 %5025
        %5027 = vrot.lane.b32.xlu0 %v4960, 32
        %v5028 = vpop.permute.xlu0 %5027
        %5029 = vrot.lane.b32.xlu0 %v4980, 32
        %v5030 = vpop.permute.xlu0 %5029
        %5031 = vrot.lane.b32.xlu0 %v5016, 32
        %v5032 = vpop.permute.xlu0 %5031
        %5033 = vrot.lane.b32.xlu0 %v4962, 40
        %v5034 = vpop.permute.xlu0 %5033
        %5035 = vrot.lane.b32.xlu0 %v4963, 40
        %v5036 = vpop.permute.xlu0 %5035
        %5037 = vrot.lane.b32.xlu0 %v4997, 40
        %v5038 = vpop.permute.xlu0 %5037
        %5039 = vrot.lane.b32.xlu0 %v4965, 40
        %v5040 = vpop.permute.xlu0 %5039
        %5041 = vrot.lane.b32.xlu0 %v4966, 40
        %v5042 = vpop.permute.xlu0 %5041
        %5043 = vrot.lane.b32.xlu0 %v4998, 40
        %v5044 = vpop.permute.xlu0 %5043
        %5045 = vrot.lane.b32.xlu0 %v4957, 48
        %v5046 = vpop.permute.xlu0 %5045
        %5047 = vrot.lane.b32.xlu0 %v4979, 48
        %v5048 = vpop.permute.xlu0 %5047
        %5049 = vrot.lane.b32.xlu0 %v5015, 48
        %v5050 = vpop.permute.xlu0 %5049
        %5051 = vrot.lane.b32.xlu0 %v4960, 48
        %v5052 = vpop.permute.xlu0 %5051
        %5053 = vrot.lane.b32.xlu0 %v4980, 48
        %v5054 = vpop.permute.xlu0 %5053
        %5055 = vrot.lane.b32.xlu0 %v5016, 48
        %v5056 = vpop.permute.xlu0 %5055
        %v5059 = vsel %vm2244, %v4955, %v4968
        %v5062 = vsel %vm2244, %v4956, %v4970
        %v5065 = vsel %vm2244, %v4957, %v4972
        %v5068 = vsel %vm2244, %v4958, %v4974
        %v5071 = vsel %vm2244, %v4959, %v4976
        %v5074 = vsel %vm2244, %v4960, %v4978
        %v5076 = vsel %vm607, %v2667, %v4982
        %v5078 = vsel %vm607, %v5059, %v4984
        %v5080 = vsel %vm607, %v5062, %v4986
        %v5082 = vsel %vm607, %v5065, %v4988
        %v5084 = vsel %vm607, %v2667, %v4990
        %v5086 = vsel %vm607, %v5068, %v4992
        %v5088 = vsel %vm607, %v5071, %v4994
        %v5090 = vsel %vm607, %v5074, %v4996
        %v5092 = vsel %vm2285, %v5076, %v5000
        %v5094 = vsel %vm2285, %v5078, %v5002
        %v5096 = vsel %vm2285, %v5080, %v5004
        %v5098 = vsel %vm2285, %v5082, %v5006
        %v5100 = vsel %vm2285, %v5084, %v5008
        %v5102 = vsel %vm2285, %v5086, %v5010
        %v5104 = vsel %vm2285, %v5088, %v5012
        %v5106 = vsel %vm2285, %v5090, %v5014
        %v5108 = vsel %vm2302, %v5092, %v5018
        %v5110 = vsel %vm2302, %v5094, %v5020
        %v5112 = vsel %vm2302, %v5096, %v5022
        %v5114 = vsel %vm2302, %v5098, %v5024
        %v5116 = vsel %vm2302, %v5100, %v5026
        %v5118 = vsel %vm2302, %v5102, %v5028
        %v5120 = vsel %vm2302, %v5104, %v5030
        %v5122 = vsel %vm2302, %v5106, %v5032
        %v5124 = vsel %vm2319, %v5108, %v5034
        %v5126 = vsel %vm2319, %v5110, %v5036
        %v5128 = vsel %vm2319, %v5112, %v5038
        %v5129 = vsel %vm2319, %v5114, %v2644
        %v5131 = vsel %vm2319, %v5116, %v5040
        %v5133 = vsel %vm2319, %v5118, %v5042
        %v5135 = vsel %vm2319, %v5120, %v5044
        %v5136 = vsel %vm2319, %v5122, %v2644
        %v5138 = vsel %vm2336, %v5124, %v5046
        %v5140 = vsel %vm2336, %v5126, %v5048
        %v5142 = vsel %vm2336, %v5128, %v5050
        %v5143 = vsel %vm2336, %v5129, %v2658
        %v5145 = vsel %vm2336, %v5131, %v5052
        %v5147 = vsel %vm2336, %v5133, %v5054
        %v5149 = vsel %vm2336, %v5135, %v5056
        %v5150 = vsel %vm2336, %v5136, %v2658
        %v5151 = vld [vmem:[%s12] sm:$0xf]
        %v5152 = vld [vmem:[%s12 + $0x4] sm:$0xf]
        %v5153 = vld [vmem:[%s12 + $0x8] sm:$0xf]
        %v5154 = vld [vmem:[%s12 + $0xc] sm:$0xf]
        %v5155 = vld [vmem:[%s12 + $0x10] sm:$0xf]
        %v5156 = vld [vmem:[%s12 + $0x14] sm:$0xf]
        %v5157 = vld [vmem:[%s12 + $0x18] sm:$0xf]
        %v5158 = vld [vmem:[%s13] sm:$0x1]
        %v5160 = vlaneseq
        %v5161 = vshrl.u32 %v5160, 7
        %v5162 = vsub.s32 0, %v5161
        %v5163 = vrot.slane %v5158, %v5162
        %v5172 = vunpack.c.l.b16 %v5151
        %v5173 = vunpack.c.l.b16 %v5152
        %v5174 = vunpack.c.l.b16 %v5153
        %v5175 = vunpack.c.l.b16 %v5154
        %v5176 = vunpack.c.l.b16 %v5155
        %v5177 = vunpack.c.l.b16 %v5156
        %v5178 = vunpack.c.l.b16 %v5157
        %v5179 = vpack.c.b16 %v5173, %v5172
        %v5180 = vpack.c.b16 %v5175, %v5174
        %v5181 = vpack.c.b16 %v5177, %v5176
        %v5182 = vpack.c.b16 %v5178, %v5178
        %v5186 = vsel %vm2388, %v5138, 0
        %v5188 = vsel %vm2388, %v5140, 0
        %v5190 = vsel %vm2388, %v5142, 0
        %v5192 = vsel %vm2388, %v5143, 0
        %v5194 = vsel %vm2388, %v5145, 0
        %v5196 = vsel %vm2388, %v5147, 0
        %v5198 = vsel %vm2388, %v5149, 0
        %v5200 = vsel %vm2388, %v5150, 0
        %v5203 = vsel %vm2405, %v5182, 0
        %5205 = vmatprep.subr.bf16.mxu0 0
        %5206 = vmatpush1.bf16.msra.mxu0 0
        %5207 = vmatprep.subr.bf16.mxu0 0
        %5208 = vmatpush1.bf16.msra.mxu0 0
        %5209 = vmatprep.subr.bf16.mxu0 0
        %5210 = vmatpush1.bf16.msra.mxu0 0
        %5211 = vmatprep.subr.bf16.mxu0 0
        %5212 = vmatpush1.bf16.msra.mxu0 0
        %5213 = vmatprep.subr.bf16.mxu0 0
        %5214 = vmatpush1.bf16.msra.mxu0 %v5203
        %5215 = vmatprep.subr.bf16.mxu0 0
        %5216 = vmatpush1.bf16.msra.mxu0 %v5181
        %5217 = vmatprep.subr.bf16.mxu0 0
        %5218 = vmatpush1.bf16.msra.mxu0 %v5180
        %5219 = vmatprep.subr.bf16.mxu0 0
        %5220 = vmatpush1.bf16.msra.mxu0 %v5179
        %5221 = vmatprep.subr.bf16.mxu0 0
        %5222 = vmatpush2.bf16.msra.mxu0 0
        %5223 = vmatprep.subr.bf16.mxu0 0
        %5224 = vmatpush2.bf16.msra.mxu0 0
        %5225 = vmatprep.subr.bf16.mxu0 0
        %5226 = vmatpush2.bf16.msra.mxu0 0
        %5227 = vmatprep.subr.bf16.mxu0 0
        %5228 = vmatpush2.bf16.msra.mxu0 0
        %5229 = vmatprep.subr.bf16.mxu0 0
        %5230 = vmatpush2.bf16.msra.mxu0 0
        %5231 = vmatprep.subr.bf16.mxu0 0
        %5232 = vmatpush2.bf16.msra.mxu0 0
        %5233 = vmatprep.subr.bf16.mxu0 0
        %5234 = vmatpush2.bf16.msra.mxu0 0
        %5235 = vmatprep.subr.bf16.mxu0 0
        %5236 = vmatpush2.bf16.msra.mxu0 0
        %5237 = vmatprep.mubr.bf16.mxu0 0
        %5238 = vmatmul.mubr.bf16.gmra.mxu0 %v5186
        %v5239 = vpop.f32.mrf.mxu0
        %v5240 = vadd.f32 %v5163, %v5239
        %v5241 = vpop.f32.mrf.mxu0
        %v5242 = vpop.f32.mrf.mxu0
        %v5243 = vadd.f32 %v5163, %v5242
        %v5244 = vpop.f32.mrf.mxu0
        %5245 = vmatprep.mubr.bf16.mxu0 0
        %5246 = vmatmul.mubr.bf16.gmra.mxu0 %v5188
        %v5247 = vpop.f32.mrf.mxu0
        %v5248 = vadd.f32 %v5163, %v5247
        %v5249 = vpop.f32.mrf.mxu0
        %v5250 = vpop.f32.mrf.mxu0
        %v5251 = vadd.f32 %v5163, %v5250
        %v5252 = vpop.f32.mrf.mxu0
        %5253 = vmatprep.mubr.bf16.mxu0 0
        %5254 = vmatmul.mubr.bf16.gmra.mxu0 %v5190
        %v5255 = vpop.f32.mrf.mxu0
        %v5256 = vadd.f32 %v5163, %v5255
        %v5257 = vpop.f32.mrf.mxu0
        %v5258 = vpop.f32.mrf.mxu0
        %v5259 = vadd.f32 %v5163, %v5258
        %v5260 = vpop.f32.mrf.mxu0
        %5261 = vmatprep.mubr.bf16.mxu0 0
        %5262 = vmatmul.mubr.bf16.gmra.mxu0 %v5192
        %v5263 = vpop.f32.mrf.mxu0
        %v5264 = vadd.f32 %v5163, %v5263
        %v5265 = vpop.f32.mrf.mxu0
        %v5266 = vpop.f32.mrf.mxu0
        %v5267 = vadd.f32 %v5163, %v5266
        %v5268 = vpop.f32.mrf.mxu0
        %5269 = vmatprep.mubr.bf16.mxu0 0
        %5270 = vmatmul.mubr.bf16.gmra.mxu0 %v5194
        %v5271 = vpop.f32.mrf.mxu0
        %v5272 = vadd.f32 %v5163, %v5271
        %v5273 = vpop.f32.mrf.mxu0
        %v5274 = vpop.f32.mrf.mxu0
        %v5275 = vadd.f32 %v5163, %v5274
        %v5276 = vpop.f32.mrf.mxu0
        %5277 = vmatprep.mubr.bf16.mxu0 0
        %5278 = vmatmul.mubr.bf16.gmra.mxu0 %v5196
        %v5279 = vpop.f32.mrf.mxu0
        %v5280 = vadd.f32 %v5163, %v5279
        %v5281 = vpop.f32.mrf.mxu0
        %v5282 = vpop.f32.mrf.mxu0
        %v5283 = vadd.f32 %v5163, %v5282
        %v5284 = vpop.f32.mrf.mxu0
        %5285 = vmatprep.mubr.bf16.mxu0 0
        %5286 = vmatmul.mubr.bf16.gmra.mxu0 %v5198
        %v5287 = vpop.f32.mrf.mxu0
        %v5288 = vadd.f32 %v5163, %v5287
        %v5289 = vpop.f32.mrf.mxu0
        %v5290 = vpop.f32.mrf.mxu0
        %v5291 = vadd.f32 %v5163, %v5290
        %v5292 = vpop.f32.mrf.mxu0
        %5293 = vmatprep.mubr.bf16.mxu0 0
        %5294 = vmatmul.mubr.bf16.gmra.mxu0 %v5200
        %v5295 = vpop.f32.mrf.mxu0
        %v5296 = vadd.f32 %v5163, %v5295
        %v5297 = vpop.f32.mrf.mxu0
        %v5298 = vpop.f32.mrf.mxu0
        %v5299 = vadd.f32 %v5163, %v5298
        %v5300 = vpop.f32.mrf.mxu0
        %5301 = vdwg.mxu0
        %v5302 = vmax.f32 %v5240, 0.0
        %v5303 = vmax.f32 %v5243, 0.0
        %v5304 = vmax.f32 %v5248, 0.0
        %v5305 = vmax.f32 %v5251, 0.0
        %v5306 = vmax.f32 %v5256, 0.0
        %v5307 = vmax.f32 %v5259, 0.0
        %v5308 = vmax.f32 %v5264, 0.0
        %v5309 = vmax.f32 %v5267, 0.0
        %v5310 = vmax.f32 %v5272, 0.0
        %v5311 = vmax.f32 %v5275, 0.0
        %v5312 = vmax.f32 %v5280, 0.0
        %v5313 = vmax.f32 %v5283, 0.0
        %v5314 = vmax.f32 %v5288, 0.0
        %v5315 = vmax.f32 %v5291, 0.0
        %v5316 = vmax.f32 %v5296, 0.0
        %v5317 = vmax.f32 %v5299, 0.0
        %v5318 = vpack.c.bf16 %v5303, %v5302
        %v5319 = vpack.c.bf16 %v5305, %v5304
        %v5320 = vpack.c.bf16 %v5307, %v5306
        %v5321 = vpack.c.bf16 %v5309, %v5308
        %v5322 = vpack.c.bf16 %v5311, %v5310
        %v5323 = vpack.c.bf16 %v5313, %v5312
        %v5324 = vpack.c.bf16 %v5315, %v5314
        %v5325 = vpack.c.bf16 %v5317, %v5316
        %v5334 = vunpack.c.l.b16 %v5318
        %v5335 = vunpack.c.h.b16 %v5318
        %v5336 = vunpack.c.l.b16 %v5319
        %v5337 = vunpack.c.h.b16 %v5319
        %v5338 = vunpack.c.l.b16 %v5320
        %v5339 = vunpack.c.h.b16 %v5320
        %v5340 = vunpack.c.l.b16 %v5321
        %v5341 = vunpack.c.h.b16 %v5321
        %v5342 = vunpack.c.l.b16 %v5322
        %v5343 = vunpack.c.h.b16 %v5322
        %v5344 = vunpack.c.l.b16 %v5323
        %v5345 = vunpack.c.h.b16 %v5323
        %v5346 = vunpack.c.l.b16 %v5324
        %v5347 = vunpack.c.h.b16 %v5324
        %v5348 = vunpack.c.l.b16 %v5325
        %v5349 = vunpack.c.h.b16 %v5325
        %v5350 = vpack.c.b16 %v5334, %v5334
        %v5351 = vpack.c.b16 %v5335, %v5335
        %v5352 = vpack.c.b16 %v5336, %v5336
        %v5353 = vpack.c.b16 %v5337, %v5337
        %v5354 = vpack.c.b16 %v5338, %v5338
        %v5355 = vpack.c.b16 %v5339, %v5339
        %v5356 = vpack.c.b16 %v5340, %v5340
        %v5357 = vpack.c.b16 %v5341, %v5341
        %v5358 = vpack.c.b16 %v5342, %v5342
        %v5359 = vpack.c.b16 %v5343, %v5343
        %v5360 = vpack.c.b16 %v5344, %v5344
        %v5361 = vpack.c.b16 %v5345, %v5345
        %v5362 = vpack.c.b16 %v5346, %v5346
        %v5363 = vpack.c.b16 %v5347, %v5347
        %v5364 = vpack.c.b16 %v5348, %v5348
        %v5365 = vpack.c.b16 %v5349, %v5349
        %v5367 = vshrl.u32 %v5350, 16
        %v5369 = vrot.slane %v5367, 6
        %v5370 = vshll.u32 %v5350, 16
        %v5372 = vrot.slane %v5370, 7
        %v5373 = vor.u32 %v5369, %v5372
        %v5375 = vshrl.u32 %v5351, 16
        %v5377 = vrot.slane %v5375, 6
        %v5378 = vshll.u32 %v5351, 16
        %v5380 = vrot.slane %v5378, 7
        %v5381 = vor.u32 %v5377, %v5380
        %v5383 = vshrl.u32 %v5352, 16
        %v5385 = vrot.slane %v5383, 6
        %v5386 = vshll.u32 %v5352, 16
        %v5388 = vrot.slane %v5386, 7
        %v5389 = vor.u32 %v5385, %v5388
        %v5391 = vshrl.u32 %v5353, 16
        %v5393 = vrot.slane %v5391, 6
        %v5394 = vshll.u32 %v5353, 16
        %v5396 = vrot.slane %v5394, 7
        %v5397 = vor.u32 %v5393, %v5396
        %v5399 = vshrl.u32 %v5354, 16
        %v5401 = vrot.slane %v5399, 6
        %v5402 = vshll.u32 %v5354, 16
        %v5404 = vrot.slane %v5402, 7
        %v5405 = vor.u32 %v5401, %v5404
        %v5407 = vshrl.u32 %v5355, 16
        %v5409 = vrot.slane %v5407, 6
        %v5410 = vshll.u32 %v5355, 16
        %v5412 = vrot.slane %v5410, 7
        %v5413 = vor.u32 %v5409, %v5412
        %v5415 = vshrl.u32 %v5356, 16
        %v5417 = vrot.slane %v5415, 6
        %v5418 = vshll.u32 %v5356, 16
        %v5420 = vrot.slane %v5418, 7
        %v5421 = vor.u32 %v5417, %v5420
        %v5423 = vshrl.u32 %v5357, 16
        %v5425 = vrot.slane %v5423, 6
        %v5426 = vshll.u32 %v5357, 16
        %v5428 = vrot.slane %v5426, 7
        %v5429 = vor.u32 %v5425, %v5428
        %v5431 = vshrl.u32 %v5358, 16
        %v5433 = vrot.slane %v5431, 6
        %v5434 = vshll.u32 %v5358, 16
        %v5436 = vrot.slane %v5434, 7
        %v5437 = vor.u32 %v5433, %v5436
        %v5439 = vshrl.u32 %v5359, 16
        %v5441 = vrot.slane %v5439, 6
        %v5442 = vshll.u32 %v5359, 16
        %v5444 = vrot.slane %v5442, 7
        %v5445 = vor.u32 %v5441, %v5444
        %v5447 = vshrl.u32 %v5360, 16
        %v5449 = vrot.slane %v5447, 6
        %v5450 = vshll.u32 %v5360, 16
        %v5452 = vrot.slane %v5450, 7
        %v5453 = vor.u32 %v5449, %v5452
        %v5455 = vshrl.u32 %v5361, 16
        %v5457 = vrot.slane %v5455, 6
        %v5458 = vshll.u32 %v5361, 16
        %v5460 = vrot.slane %v5458, 7
        %v5461 = vor.u32 %v5457, %v5460
        %v5463 = vshrl.u32 %v5362, 16
        %v5465 = vrot.slane %v5463, 6
        %v5466 = vshll.u32 %v5362, 16
        %v5468 = vrot.slane %v5466, 7
        %v5469 = vor.u32 %v5465, %v5468
        %v5471 = vshrl.u32 %v5363, 16
        %v5473 = vrot.slane %v5471, 6
        %v5474 = vshll.u32 %v5363, 16
        %v5476 = vrot.slane %v5474, 7
        %v5477 = vor.u32 %v5473, %v5476
        %v5479 = vshrl.u32 %v5364, 16
        %v5481 = vrot.slane %v5479, 6
        %v5482 = vshll.u32 %v5364, 16
        %v5484 = vrot.slane %v5482, 7
        %v5485 = vor.u32 %v5481, %v5484
        %v5487 = vshrl.u32 %v5365, 16
        %v5489 = vrot.slane %v5487, 6
        %v5490 = vshll.u32 %v5365, 16
        %v5492 = vrot.slane %v5490, 7
        %v5493 = vor.u32 %v5489, %v5492
        %v5510 = vsel %vm1160, 0, %v5373
        %v5511 = vsel %vm1160, 0, %v5381
        %v5512 = vsel %vm1160, 0, %v5389
        %v5513 = vsel %vm1160, 0, %v5397
        %v5514 = vsel %vm1160, 0, %v5405
        %v5515 = vsel %vm1160, 0, %v5413
        %v5516 = vsel %vm1160, 0, %v5421
        %v5517 = vsel %vm1160, 0, %v5429
        %v5518 = vsel %vm1160, 0, %v5437
        %v5519 = vsel %vm1160, 0, %v5445
        %v5520 = vsel %vm1160, 0, %v5453
        %v5521 = vsel %vm1160, 0, %v5461
        %v5522 = vsel %vm1160, 0, %v5469
        %v5523 = vsel %vm1160, 0, %v5477
        %v5524 = vsel %vm1160, 0, %v5485
        %v5525 = vsel %vm1160, 0, %v5493
        %v5526 = vsel %vm1179, %v5510, 0
        %v5527 = vsel %vm1179, %v5511, 0
        %v5528 = vsel %vm1179, %v5512, 0
        %v5529 = vsel %vm1179, %v5513, 0
        %v5530 = vsel %vm1179, %v5514, 0
        %v5531 = vsel %vm1179, %v5515, 0
        %v5532 = vsel %vm1179, %v5516, 0
        %v5533 = vsel %vm1179, %v5517, 0
        %v5534 = vsel %vm1179, %v5518, 0
        %v5535 = vsel %vm1179, %v5519, 0
        %v5536 = vsel %vm1179, %v5520, 0
        %v5537 = vsel %vm1179, %v5521, 0
        %v5538 = vsel %vm1179, %v5522, 0
        %v5539 = vsel %vm1179, %v5523, 0
        %v5540 = vsel %vm1179, %v5524, 0
        %v5541 = vsel %vm1179, %v5525, 0
        %v5558 = vunpack.c.l.b16 %v5526
        %v5559 = vunpack.c.h.b16 %v5526
        %v5560 = vunpack.c.l.b16 %v5527
        %v5561 = vunpack.c.h.b16 %v5527
        %v5562 = vunpack.c.l.b16 %v5528
        %v5563 = vunpack.c.h.b16 %v5528
        %v5564 = vunpack.c.l.b16 %v5529
        %v5565 = vunpack.c.h.b16 %v5529
        %v5566 = vunpack.c.l.b16 %v5530
        %v5567 = vunpack.c.h.b16 %v5530
        %v5568 = vunpack.c.l.b16 %v5531
        %v5569 = vunpack.c.h.b16 %v5531
        %v5570 = vunpack.c.l.b16 %v5532
        %v5571 = vunpack.c.h.b16 %v5532
        %v5572 = vunpack.c.l.b16 %v5533
        %v5573 = vunpack.c.h.b16 %v5533
        %v5574 = vunpack.c.l.b16 %v5534
        %v5575 = vunpack.c.h.b16 %v5534
        %v5576 = vunpack.c.l.b16 %v5535
        %v5577 = vunpack.c.h.b16 %v5535
        %v5578 = vunpack.c.l.b16 %v5536
        %v5579 = vunpack.c.h.b16 %v5536
        %v5580 = vunpack.c.l.b16 %v5537
        %v5581 = vunpack.c.h.b16 %v5537
        %v5582 = vunpack.c.l.b16 %v5538
        %v5583 = vunpack.c.h.b16 %v5538
        %v5584 = vunpack.c.l.b16 %v5539
        %v5585 = vunpack.c.h.b16 %v5539
        %v5586 = vunpack.c.l.b16 %v5540
        %v5587 = vunpack.c.h.b16 %v5540
        %v5588 = vunpack.c.l.b16 %v5541
        %v5589 = vunpack.c.h.b16 %v5541
        %v5590 = vpack.c.b16 %v5558, %v5558
        %v5591 = vpack.c.b16 %v5559, %v5559
        %v5592 = vpack.c.b16 %v5560, %v5560
        %v5593 = vpack.c.b16 %v5561, %v5561
        %v5594 = vpack.c.b16 %v5562, %v5562
        %v5595 = vpack.c.b16 %v5563, %v5563
        %v5596 = vpack.c.b16 %v5564, %v5564
        %v5597 = vpack.c.b16 %v5565, %v5565
        %v5598 = vpack.c.b16 %v5566, %v5566
        %v5599 = vpack.c.b16 %v5567, %v5567
        %v5600 = vpack.c.b16 %v5568, %v5568
        %v5601 = vpack.c.b16 %v5569, %v5569
        %v5602 = vpack.c.b16 %v5570, %v5570
        %v5603 = vpack.c.b16 %v5571, %v5571
        %v5604 = vpack.c.b16 %v5572, %v5572
        %v5605 = vpack.c.b16 %v5573, %v5573
        %v5606 = vpack.c.b16 %v5574, %v5574
        %v5607 = vpack.c.b16 %v5575, %v5575
        %v5608 = vpack.c.b16 %v5576, %v5576
        %v5609 = vpack.c.b16 %v5577, %v5577
        %v5610 = vpack.c.b16 %v5578, %v5578
        %v5611 = vpack.c.b16 %v5579, %v5579
        %v5612 = vpack.c.b16 %v5580, %v5580
        %v5613 = vpack.c.b16 %v5581, %v5581
        %v5614 = vpack.c.b16 %v5582, %v5582
        %v5615 = vpack.c.b16 %v5583, %v5583
        %v5616 = vpack.c.b16 %v5584, %v5584
        %v5617 = vpack.c.b16 %v5585, %v5585
        %v5618 = vpack.c.b16 %v5586, %v5586
        %v5619 = vpack.c.b16 %v5587, %v5587
        %v5620 = vpack.c.b16 %v5588, %v5588
        %v5621 = vpack.c.b16 %v5589, %v5589
        %v5623 = vshrl.u32 %v5590, 16
        %v5625 = vrot.slane %v5623, 4
        %v5626 = vshll.u32 %v5590, 16
        %v5628 = vrot.slane %v5626, 5
        %v5629 = vor.u32 %v5625, %v5628
        %v5630 = vrot.slane %v5629, 4
        %v5632 = vshll.u32 %v5591, 16
        %v5634 = vrot.slane %v5632, 5
        %v5635 = vsel %vm1278, %v5630, %v5634
        %v5637 = vshrl.u32 %v5592, 16
        %v5639 = vrot.slane %v5637, 4
        %v5640 = vshll.u32 %v5592, 16
        %v5642 = vrot.slane %v5640, 5
        %v5643 = vor.u32 %v5639, %v5642
        %v5644 = vrot.slane %v5643, 4
        %v5646 = vshll.u32 %v5593, 16
        %v5648 = vrot.slane %v5646, 5
        %v5649 = vsel %vm1278, %v5644, %v5648
        %v5651 = vshrl.u32 %v5594, 16
        %v5653 = vrot.slane %v5651, 4
        %v5654 = vshll.u32 %v5594, 16
        %v5656 = vrot.slane %v5654, 5
        %v5657 = vor.u32 %v5653, %v5656
        %v5658 = vrot.slane %v5657, 4
        %v5660 = vshll.u32 %v5595, 16
        %v5662 = vrot.slane %v5660, 5
        %v5663 = vsel %vm1278, %v5658, %v5662
        %v5665 = vshrl.u32 %v5596, 16
        %v5667 = vrot.slane %v5665, 4
        %v5668 = vshll.u32 %v5596, 16
        %v5670 = vrot.slane %v5668, 5
        %v5671 = vor.u32 %v5667, %v5670
        %v5672 = vrot.slane %v5671, 4
        %v5674 = vshll.u32 %v5597, 16
        %v5676 = vrot.slane %v5674, 5
        %v5677 = vsel %vm1278, %v5672, %v5676
        %v5679 = vshrl.u32 %v5598, 16
        %v5681 = vrot.slane %v5679, 4
        %v5682 = vshll.u32 %v5598, 16
        %v5684 = vrot.slane %v5682, 5
        %v5685 = vor.u32 %v5681, %v5684
        %v5686 = vrot.slane %v5685, 4
        %v5688 = vshll.u32 %v5599, 16
        %v5690 = vrot.slane %v5688, 5
        %v5691 = vsel %vm1278, %v5686, %v5690
        %v5693 = vshrl.u32 %v5600, 16
        %v5695 = vrot.slane %v5693, 4
        %v5696 = vshll.u32 %v5600, 16
        %v5698 = vrot.slane %v5696, 5
        %v5699 = vor.u32 %v5695, %v5698
        %v5700 = vrot.slane %v5699, 4
        %v5702 = vshll.u32 %v5601, 16
        %v5704 = vrot.slane %v5702, 5
        %v5705 = vsel %vm1278, %v5700, %v5704
        %v5707 = vshrl.u32 %v5602, 16
        %v5709 = vrot.slane %v5707, 4
        %v5710 = vshll.u32 %v5602, 16
        %v5712 = vrot.slane %v5710, 5
        %v5713 = vor.u32 %v5709, %v5712
        %v5714 = vrot.slane %v5713, 4
        %v5716 = vshll.u32 %v5603, 16
        %v5718 = vrot.slane %v5716, 5
        %v5719 = vsel %vm1278, %v5714, %v5718
        %v5721 = vshrl.u32 %v5604, 16
        %v5723 = vrot.slane %v5721, 4
        %v5724 = vshll.u32 %v5604, 16
        %v5726 = vrot.slane %v5724, 5
        %v5727 = vor.u32 %v5723, %v5726
        %v5728 = vrot.slane %v5727, 4
        %v5730 = vshll.u32 %v5605, 16
        %v5732 = vrot.slane %v5730, 5
        %v5733 = vsel %vm1278, %v5728, %v5732
        %v5735 = vshrl.u32 %v5606, 16
        %v5737 = vrot.slane %v5735, 4
        %v5738 = vshll.u32 %v5606, 16
        %v5740 = vrot.slane %v5738, 5
        %v5741 = vor.u32 %v5737, %v5740
        %v5742 = vrot.slane %v5741, 4
        %v5744 = vshll.u32 %v5607, 16
        %v5746 = vrot.slane %v5744, 5
        %v5747 = vsel %vm1278, %v5742, %v5746
        %v5749 = vshrl.u32 %v5608, 16
        %v5751 = vrot.slane %v5749, 4
        %v5752 = vshll.u32 %v5608, 16
        %v5754 = vrot.slane %v5752, 5
        %v5755 = vor.u32 %v5751, %v5754
        %v5756 = vrot.slane %v5755, 4
        %v5758 = vshll.u32 %v5609, 16
        %v5760 = vrot.slane %v5758, 5
        %v5761 = vsel %vm1278, %v5756, %v5760
        %v5763 = vshrl.u32 %v5610, 16
        %v5765 = vrot.slane %v5763, 4
        %v5766 = vshll.u32 %v5610, 16
        %v5768 = vrot.slane %v5766, 5
        %v5769 = vor.u32 %v5765, %v5768
        %v5770 = vrot.slane %v5769, 4
        %v5772 = vshll.u32 %v5611, 16
        %v5774 = vrot.slane %v5772, 5
        %v5775 = vsel %vm1278, %v5770, %v5774
        %v5777 = vshrl.u32 %v5612, 16
        %v5779 = vrot.slane %v5777, 4
        %v5780 = vshll.u32 %v5612, 16
        %v5782 = vrot.slane %v5780, 5
        %v5783 = vor.u32 %v5779, %v5782
        %v5784 = vrot.slane %v5783, 4
        %v5786 = vshll.u32 %v5613, 16
        %v5788 = vrot.slane %v5786, 5
        %v5789 = vsel %vm1278, %v5784, %v5788
        %v5791 = vshrl.u32 %v5614, 16
        %v5793 = vrot.slane %v5791, 4
        %v5794 = vshll.u32 %v5614, 16
        %v5796 = vrot.slane %v5794, 5
        %v5797 = vor.u32 %v5793, %v5796
        %v5798 = vrot.slane %v5797, 4
        %v5800 = vshll.u32 %v5615, 16
        %v5802 = vrot.slane %v5800, 5
        %v5803 = vsel %vm1278, %v5798, %v5802
        %v5805 = vshrl.u32 %v5616, 16
        %v5807 = vrot.slane %v5805, 4
        %v5808 = vshll.u32 %v5616, 16
        %v5810 = vrot.slane %v5808, 5
        %v5811 = vor.u32 %v5807, %v5810
        %v5812 = vrot.slane %v5811, 4
        %v5814 = vshll.u32 %v5617, 16
        %v5816 = vrot.slane %v5814, 5
        %v5817 = vsel %vm1278, %v5812, %v5816
        %v5819 = vshrl.u32 %v5618, 16
        %v5821 = vrot.slane %v5819, 4
        %v5822 = vshll.u32 %v5618, 16
        %v5824 = vrot.slane %v5822, 5
        %v5825 = vor.u32 %v5821, %v5824
        %v5826 = vrot.slane %v5825, 4
        %v5828 = vshll.u32 %v5619, 16
        %v5830 = vrot.slane %v5828, 5
        %v5831 = vsel %vm1278, %v5826, %v5830
        %v5833 = vshrl.u32 %v5620, 16
        %v5835 = vrot.slane %v5833, 4
        %v5836 = vshll.u32 %v5620, 16
        %v5838 = vrot.slane %v5836, 5
        %v5839 = vor.u32 %v5835, %v5838
        %v5840 = vrot.slane %v5839, 4
        %v5842 = vshll.u32 %v5621, 16
        %v5844 = vrot.slane %v5842, 5
        %v5845 = vsel %vm1278, %v5840, %v5844
        %v5846 = vrot.slane %v5590, 5
        %v5847 = vrot.slane %v5846, 4
        %v5848 = vrot.slane %v5591, 5
        %v5849 = vsel %vm1505, %v5847, %v5848
        %v5850 = vrot.slane %v5592, 5
        %v5851 = vrot.slane %v5850, 4
        %v5852 = vrot.slane %v5593, 5
        %v5853 = vsel %vm1505, %v5851, %v5852
        %v5854 = vrot.slane %v5594, 5
        %v5855 = vrot.slane %v5854, 4
        %v5856 = vrot.slane %v5595, 5
        %v5857 = vsel %vm1505, %v5855, %v5856
        %v5858 = vrot.slane %v5596, 5
        %v5859 = vrot.slane %v5858, 4
        %v5860 = vrot.slane %v5597, 5
        %v5861 = vsel %vm1505, %v5859, %v5860
        %v5862 = vrot.slane %v5598, 5
        %v5863 = vrot.slane %v5862, 4
        %v5864 = vrot.slane %v5599, 5
        %v5865 = vsel %vm1505, %v5863, %v5864
        %v5866 = vrot.slane %v5600, 5
        %v5867 = vrot.slane %v5866, 4
        %v5868 = vrot.slane %v5601, 5
        %v5869 = vsel %vm1505, %v5867, %v5868
        %v5870 = vrot.slane %v5602, 5
        %v5871 = vrot.slane %v5870, 4
        %v5872 = vrot.slane %v5603, 5
        %v5873 = vsel %vm1505, %v5871, %v5872
        %v5874 = vrot.slane %v5604, 5
        %v5875 = vrot.slane %v5874, 4
        %v5876 = vrot.slane %v5605, 5
        %v5877 = vsel %vm1505, %v5875, %v5876
        %v5878 = vrot.slane %v5606, 5
        %v5879 = vrot.slane %v5878, 4
        %v5880 = vrot.slane %v5607, 5
        %v5881 = vsel %vm1505, %v5879, %v5880
        %v5882 = vrot.slane %v5608, 5
        %v5883 = vrot.slane %v5882, 4
        %v5884 = vrot.slane %v5609, 5
        %v5885 = vsel %vm1505, %v5883, %v5884
        %v5886 = vrot.slane %v5610, 5
        %v5887 = vrot.slane %v5886, 4
        %v5888 = vrot.slane %v5611, 5
        %v5889 = vsel %vm1505, %v5887, %v5888
        %v5890 = vrot.slane %v5612, 5
        %v5891 = vrot.slane %v5890, 4
        %v5892 = vrot.slane %v5613, 5
        %v5893 = vsel %vm1505, %v5891, %v5892
        %v5894 = vrot.slane %v5614, 5
        %v5895 = vrot.slane %v5894, 4
        %v5896 = vrot.slane %v5615, 5
        %v5897 = vsel %vm1505, %v5895, %v5896
        %v5898 = vrot.slane %v5616, 5
        %v5899 = vrot.slane %v5898, 4
        %v5900 = vrot.slane %v5617, 5
        %v5901 = vsel %vm1505, %v5899, %v5900
        %v5902 = vrot.slane %v5618, 5
        %v5903 = vrot.slane %v5902, 4
        %v5904 = vrot.slane %v5619, 5
        %v5905 = vsel %vm1505, %v5903, %v5904
        %v5906 = vrot.slane %v5620, 5
        %v5907 = vrot.slane %v5906, 4
        %v5908 = vrot.slane %v5621, 5
        %v5909 = vsel %vm1505, %v5907, %v5908
        %v5910 = vrot.slane %v5623, 5
        %v5911 = vrot.slane %v5626, 6
        %v5912 = vor.u32 %v5910, %v5911
        %v5913 = vrot.slane %v5912, 4
        %v5914 = vshrl.u32 %v5591, 16
        %v5916 = vrot.slane %v5914, 5
        %v5917 = vrot.slane %v5632, 6
        %v5918 = vor.u32 %v5916, %v5917
        %v5919 = vsel %vm1572, %v5913, %v5918
        %v5920 = vrot.slane %v5637, 5
        %v5921 = vrot.slane %v5640, 6
        %v5922 = vor.u32 %v5920, %v5921
        %v5923 = vrot.slane %v5922, 4
        %v5924 = vshrl.u32 %v5593, 16
        %v5926 = vrot.slane %v5924, 5
        %v5927 = vrot.slane %v5646, 6
        %v5928 = vor.u32 %v5926, %v5927
        %v5929 = vsel %vm1572, %v5923, %v5928
        %v5930 = vrot.slane %v5651, 5
        %v5931 = vrot.slane %v5654, 6
        %v5932 = vor.u32 %v5930, %v5931
        %v5933 = vrot.slane %v5932, 4
        %v5934 = vshrl.u32 %v5595, 16
        %v5936 = vrot.slane %v5934, 5
        %v5937 = vrot.slane %v5660, 6
        %v5938 = vor.u32 %v5936, %v5937
        %v5939 = vsel %vm1572, %v5933, %v5938
        %v5940 = vrot.slane %v5665, 5
        %v5941 = vrot.slane %v5668, 6
        %v5942 = vor.u32 %v5940, %v5941
        %v5943 = vrot.slane %v5942, 4
        %v5944 = vshrl.u32 %v5597, 16
        %v5946 = vrot.slane %v5944, 5
        %v5947 = vrot.slane %v5674, 6
        %v5948 = vor.u32 %v5946, %v5947
        %v5949 = vsel %vm1572, %v5943, %v5948
        %v5950 = vrot.slane %v5679, 5
        %v5951 = vrot.slane %v5682, 6
        %v5952 = vor.u32 %v5950, %v5951
        %v5953 = vrot.slane %v5952, 4
        %v5954 = vshrl.u32 %v5599, 16
        %v5956 = vrot.slane %v5954, 5
        %v5957 = vrot.slane %v5688, 6
        %v5958 = vor.u32 %v5956, %v5957
        %v5959 = vsel %vm1572, %v5953, %v5958
        %v5960 = vrot.slane %v5693, 5
        %v5961 = vrot.slane %v5696, 6
        %v5962 = vor.u32 %v5960, %v5961
        %v5963 = vrot.slane %v5962, 4
        %v5964 = vshrl.u32 %v5601, 16
        %v5966 = vrot.slane %v5964, 5
        %v5967 = vrot.slane %v5702, 6
        %v5968 = vor.u32 %v5966, %v5967
        %v5969 = vsel %vm1572, %v5963, %v5968
        %v5970 = vrot.slane %v5707, 5
        %v5971 = vrot.slane %v5710, 6
        %v5972 = vor.u32 %v5970, %v5971
        %v5973 = vrot.slane %v5972, 4
        %v5974 = vshrl.u32 %v5603, 16
        %v5976 = vrot.slane %v5974, 5
        %v5977 = vrot.slane %v5716, 6
        %v5978 = vor.u32 %v5976, %v5977
        %v5979 = vsel %vm1572, %v5973, %v5978
        %v5980 = vrot.slane %v5721, 5
        %v5981 = vrot.slane %v5724, 6
        %v5982 = vor.u32 %v5980, %v5981
        %v5983 = vrot.slane %v5982, 4
        %v5984 = vshrl.u32 %v5605, 16
        %v5986 = vrot.slane %v5984, 5
        %v5987 = vrot.slane %v5730, 6
        %v5988 = vor.u32 %v5986, %v5987
        %v5989 = vsel %vm1572, %v5983, %v5988
        %v5990 = vrot.slane %v5735, 5
        %v5991 = vrot.slane %v5738, 6
        %v5992 = vor.u32 %v5990, %v5991
        %v5993 = vrot.slane %v5992, 4
        %v5994 = vshrl.u32 %v5607, 16
        %v5996 = vrot.slane %v5994, 5
        %v5997 = vrot.slane %v5744, 6
        %v5998 = vor.u32 %v5996, %v5997
        %v5999 = vsel %vm1572, %v5993, %v5998
        %v6000 = vrot.slane %v5749, 5
        %v6001 = vrot.slane %v5752, 6
        %v6002 = vor.u32 %v6000, %v6001
        %v6003 = vrot.slane %v6002, 4
        %v6004 = vshrl.u32 %v5609, 16
        %v6006 = vrot.slane %v6004, 5
        %v6007 = vrot.slane %v5758, 6
        %v6008 = vor.u32 %v6006, %v6007
        %v6009 = vsel %vm1572, %v6003, %v6008
        %v6010 = vrot.slane %v5763, 5
        %v6011 = vrot.slane %v5766, 6
        %v6012 = vor.u32 %v6010, %v6011
        %v6013 = vrot.slane %v6012, 4
        %v6014 = vshrl.u32 %v5611, 16
        %v6016 = vrot.slane %v6014, 5
        %v6017 = vrot.slane %v5772, 6
        %v6018 = vor.u32 %v6016, %v6017
        %v6019 = vsel %vm1572, %v6013, %v6018
        %v6020 = vrot.slane %v5777, 5
        %v6021 = vrot.slane %v5780, 6
        %v6022 = vor.u32 %v6020, %v6021
        %v6023 = vrot.slane %v6022, 4
        %v6024 = vshrl.u32 %v5613, 16
        %v6026 = vrot.slane %v6024, 5
        %v6027 = vrot.slane %v5786, 6
        %v6028 = vor.u32 %v6026, %v6027
        %v6029 = vsel %vm1572, %v6023, %v6028
        %v6030 = vrot.slane %v5791, 5
        %v6031 = vrot.slane %v5794, 6
        %v6032 = vor.u32 %v6030, %v6031
        %v6033 = vrot.slane %v6032, 4
        %v6034 = vshrl.u32 %v5615, 16
        %v6036 = vrot.slane %v6034, 5
        %v6037 = vrot.slane %v5800, 6
        %v6038 = vor.u32 %v6036, %v6037
        %v6039 = vsel %vm1572, %v6033, %v6038
        %v6040 = vrot.slane %v5805, 5
        %v6041 = vrot.slane %v5808, 6
        %v6042 = vor.u32 %v6040, %v6041
        %v6043 = vrot.slane %v6042, 4
        %v6044 = vshrl.u32 %v5617, 16
        %v6046 = vrot.slane %v6044, 5
        %v6047 = vrot.slane %v5814, 6
        %v6048 = vor.u32 %v6046, %v6047
        %v6049 = vsel %vm1572, %v6043, %v6048
        %v6050 = vrot.slane %v5819, 5
        %v6051 = vrot.slane %v5822, 6
        %v6052 = vor.u32 %v6050, %v6051
        %v6053 = vrot.slane %v6052, 4
        %v6054 = vshrl.u32 %v5619, 16
        %v6056 = vrot.slane %v6054, 5
        %v6057 = vrot.slane %v5828, 6
        %v6058 = vor.u32 %v6056, %v6057
        %v6059 = vsel %vm1572, %v6053, %v6058
        %v6060 = vrot.slane %v5833, 5
        %v6061 = vrot.slane %v5836, 6
        %v6062 = vor.u32 %v6060, %v6061
        %v6063 = vrot.slane %v6062, 4
        %v6064 = vshrl.u32 %v5621, 16
        %v6066 = vrot.slane %v6064, 5
        %v6067 = vrot.slane %v5842, 6
        %v6068 = vor.u32 %v6066, %v6067
        %v6069 = vsel %vm1572, %v6063, %v6068
        %v6070 = vrot.slane %v5590, 6
        %v6071 = vrot.slane %v6070, 4
        %v6072 = vrot.slane %v5591, 6
        %v6073 = vsel %vm1734, %v6071, %v6072
        %v6074 = vrot.slane %v5592, 6
        %v6075 = vrot.slane %v6074, 4
        %v6076 = vrot.slane %v5593, 6
        %v6077 = vsel %vm1734, %v6075, %v6076
        %v6078 = vrot.slane %v5594, 6
        %v6079 = vrot.slane %v6078, 4
        %v6080 = vrot.slane %v5595, 6
        %v6081 = vsel %vm1734, %v6079, %v6080
        %v6082 = vrot.slane %v5596, 6
        %v6083 = vrot.slane %v6082, 4
        %v6084 = vrot.slane %v5597, 6
        %v6085 = vsel %vm1734, %v6083, %v6084
        %v6086 = vrot.slane %v5598, 6
        %v6087 = vrot.slane %v6086, 4
        %v6088 = vrot.slane %v5599, 6
        %v6089 = vsel %vm1734, %v6087, %v6088
        %v6090 = vrot.slane %v5600, 6
        %v6091 = vrot.slane %v6090, 4
        %v6092 = vrot.slane %v5601, 6
        %v6093 = vsel %vm1734, %v6091, %v6092
        %v6094 = vrot.slane %v5602, 6
        %v6095 = vrot.slane %v6094, 4
        %v6096 = vrot.slane %v5603, 6
        %v6097 = vsel %vm1734, %v6095, %v6096
        %v6098 = vrot.slane %v5604, 6
        %v6099 = vrot.slane %v6098, 4
        %v6100 = vrot.slane %v5605, 6
        %v6101 = vsel %vm1734, %v6099, %v6100
        %v6102 = vrot.slane %v5606, 6
        %v6103 = vrot.slane %v6102, 4
        %v6104 = vrot.slane %v5607, 6
        %v6105 = vsel %vm1734, %v6103, %v6104
        %v6106 = vrot.slane %v5608, 6
        %v6107 = vrot.slane %v6106, 4
        %v6108 = vrot.slane %v5609, 6
        %v6109 = vsel %vm1734, %v6107, %v6108
        %v6110 = vrot.slane %v5610, 6
        %v6111 = vrot.slane %v6110, 4
        %v6112 = vrot.slane %v5611, 6
        %v6113 = vsel %vm1734, %v6111, %v6112
        %v6114 = vrot.slane %v5612, 6
        %v6115 = vrot.slane %v6114, 4
        %v6116 = vrot.slane %v5613, 6
        %v6117 = vsel %vm1734, %v6115, %v6116
        %v6118 = vrot.slane %v5614, 6
        %v6119 = vrot.slane %v6118, 4
        %v6120 = vrot.slane %v5615, 6
        %v6121 = vsel %vm1734, %v6119, %v6120
        %v6122 = vrot.slane %v5616, 6
        %v6123 = vrot.slane %v6122, 4
        %v6124 = vrot.slane %v5617, 6
        %v6125 = vsel %vm1734, %v6123, %v6124
        %v6126 = vrot.slane %v5618, 6
        %v6127 = vrot.slane %v6126, 4
        %v6128 = vrot.slane %v5619, 6
        %v6129 = vsel %vm1734, %v6127, %v6128
        %v6130 = vrot.slane %v5620, 6
        %v6131 = vrot.slane %v6130, 4
        %v6132 = vrot.slane %v5621, 6
        %v6133 = vsel %vm1734, %v6131, %v6132
        %v6134 = vrot.slane %v5623, 6
        %v6135 = vrot.slane %v5626, 7
        %v6136 = vor.u32 %v6134, %v6135
        %v6137 = vrot.slane %v6136, 4
        %v6138 = vrot.slane %v5914, 6
        %v6139 = vrot.slane %v5632, 7
        %v6140 = vor.u32 %v6138, %v6139
        %v6141 = vsel %vm1800, %v6137, %v6140
        %v6142 = vrot.slane %v5637, 6
        %v6143 = vrot.slane %v5640, 7
        %v6144 = vor.u32 %v6142, %v6143
        %v6145 = vrot.slane %v6144, 4
        %v6146 = vrot.slane %v5924, 6
        %v6147 = vrot.slane %v5646, 7
        %v6148 = vor.u32 %v6146, %v6147
        %v6149 = vsel %vm1800, %v6145, %v6148
        %v6150 = vrot.slane %v5651, 6
        %v6151 = vrot.slane %v5654, 7
        %v6152 = vor.u32 %v6150, %v6151
        %v6153 = vrot.slane %v6152, 4
        %v6154 = vrot.slane %v5934, 6
        %v6155 = vrot.slane %v5660, 7
        %v6156 = vor.u32 %v6154, %v6155
        %v6157 = vsel %vm1800, %v6153, %v6156
        %v6158 = vrot.slane %v5665, 6
        %v6159 = vrot.slane %v5668, 7
        %v6160 = vor.u32 %v6158, %v6159
        %v6161 = vrot.slane %v6160, 4
        %v6162 = vrot.slane %v5944, 6
        %v6163 = vrot.slane %v5674, 7
        %v6164 = vor.u32 %v6162, %v6163
        %v6165 = vsel %vm1800, %v6161, %v6164
        %v6166 = vrot.slane %v5679, 6
        %v6167 = vrot.slane %v5682, 7
        %v6168 = vor.u32 %v6166, %v6167
        %v6169 = vrot.slane %v6168, 4
        %v6170 = vrot.slane %v5954, 6
        %v6171 = vrot.slane %v5688, 7
        %v6172 = vor.u32 %v6170, %v6171
        %v6173 = vsel %vm1800, %v6169, %v6172
        %v6174 = vrot.slane %v5693, 6
        %v6175 = vrot.slane %v5696, 7
        %v6176 = vor.u32 %v6174, %v6175
        %v6177 = vrot.slane %v6176, 4
        %v6178 = vrot.slane %v5964, 6
        %v6179 = vrot.slane %v5702, 7
        %v6180 = vor.u32 %v6178, %v6179
        %v6181 = vsel %vm1800, %v6177, %v6180
        %v6182 = vrot.slane %v5707, 6
        %v6183 = vrot.slane %v5710, 7
        %v6184 = vor.u32 %v6182, %v6183
        %v6185 = vrot.slane %v6184, 4
        %v6186 = vrot.slane %v5974, 6
        %v6187 = vrot.slane %v5716, 7
        %v6188 = vor.u32 %v6186, %v6187
        %v6189 = vsel %vm1800, %v6185, %v6188
        %v6190 = vrot.slane %v5721, 6
        %v6191 = vrot.slane %v5724, 7
        %v6192 = vor.u32 %v6190, %v6191
        %v6193 = vrot.slane %v6192, 4
        %v6194 = vrot.slane %v5984, 6
        %v6195 = vrot.slane %v5730, 7
        %v6196 = vor.u32 %v6194, %v6195
        %v6197 = vsel %vm1800, %v6193, %v6196
        %v6198 = vrot.slane %v5735, 6
        %v6199 = vrot.slane %v5738, 7
        %v6200 = vor.u32 %v6198, %v6199
        %v6201 = vrot.slane %v6200, 4
        %v6202 = vrot.slane %v5994, 6
        %v6203 = vrot.slane %v5744, 7
        %v6204 = vor.u32 %v6202, %v6203
        %v6205 = vsel %vm1800, %v6201, %v6204
        %v6206 = vrot.slane %v5749, 6
        %v6207 = vrot.slane %v5752, 7
        %v6208 = vor.u32 %v6206, %v6207
        %v6209 = vrot.slane %v6208, 4
        %v6210 = vrot.slane %v6004, 6
        %v6211 = vrot.slane %v5758, 7
        %v6212 = vor.u32 %v6210, %v6211
        %v6213 = vsel %vm1800, %v6209, %v6212
        %v6214 = vrot.slane %v5763, 6
        %v6215 = vrot.slane %v5766, 7
        %v6216 = vor.u32 %v6214, %v6215
        %v6217 = vrot.slane %v6216, 4
        %v6218 = vrot.slane %v6014, 6
        %v6219 = vrot.slane %v5772, 7
        %v6220 = vor.u32 %v6218, %v6219
        %v6221 = vsel %vm1800, %v6217, %v6220
        %v6222 = vrot.slane %v5777, 6
        %v6223 = vrot.slane %v5780, 7
        %v6224 = vor.u32 %v6222, %v6223
        %v6225 = vrot.slane %v6224, 4
        %v6226 = vrot.slane %v6024, 6
        %v6227 = vrot.slane %v5786, 7
        %v6228 = vor.u32 %v6226, %v6227
        %v6229 = vsel %vm1800, %v6225, %v6228
        %v6230 = vrot.slane %v5791, 6
        %v6231 = vrot.slane %v5794, 7
        %v6232 = vor.u32 %v6230, %v6231
        %v6233 = vrot.slane %v6232, 4
        %v6234 = vrot.slane %v6034, 6
        %v6235 = vrot.slane %v5800, 7
        %v6236 = vor.u32 %v6234, %v6235
        %v6237 = vsel %vm1800, %v6233, %v6236
        %v6238 = vrot.slane %v5805, 6
        %v6239 = vrot.slane %v5808, 7
        %v6240 = vor.u32 %v6238, %v6239
        %v6241 = vrot.slane %v6240, 4
        %v6242 = vrot.slane %v6044, 6
        %v6243 = vrot.slane %v5814, 7
        %v6244 = vor.u32 %v6242, %v6243
        %v6245 = vsel %vm1800, %v6241, %v6244
        %v6246 = vrot.slane %v5819, 6
        %v6247 = vrot.slane %v5822, 7
        %v6248 = vor.u32 %v6246, %v6247
        %v6249 = vrot.slane %v6248, 4
        %v6250 = vrot.slane %v6054, 6
        %v6251 = vrot.slane %v5828, 7
        %v6252 = vor.u32 %v6250, %v6251
        %v6253 = vsel %vm1800, %v6249, %v6252
        %v6254 = vrot.slane %v5833, 6
        %v6255 = vrot.slane %v5836, 7
        %v6256 = vor.u32 %v6254, %v6255
        %v6257 = vrot.slane %v6256, 4
        %v6258 = vrot.slane %v6064, 6
        %v6259 = vrot.slane %v5842, 7
        %v6260 = vor.u32 %v6258, %v6259
        %v6261 = vsel %vm1800, %v6257, %v6260
        %v6262 = vrot.slane %v5590, 7
        %v6263 = vrot.slane %v6262, 4
        %v6264 = vrot.slane %v5591, 7
        %v6265 = vsel %vm1931, %v6263, %v6264
        %v6266 = vrot.slane %v5592, 7
        %v6267 = vrot.slane %v6266, 4
        %v6268 = vrot.slane %v5593, 7
        %v6269 = vsel %vm1931, %v6267, %v6268
        %v6270 = vrot.slane %v5594, 7
        %v6271 = vrot.slane %v6270, 4
        %v6272 = vrot.slane %v5595, 7
        %v6273 = vsel %vm1931, %v6271, %v6272
        %v6274 = vrot.slane %v5596, 7
        %v6275 = vrot.slane %v6274, 4
        %v6276 = vrot.slane %v5597, 7
        %v6277 = vsel %vm1931, %v6275, %v6276
        %v6278 = vrot.slane %v5598, 7
        %v6279 = vrot.slane %v6278, 4
        %v6280 = vrot.slane %v5599, 7
        %v6281 = vsel %vm1931, %v6279, %v6280
        %v6282 = vrot.slane %v5600, 7
        %v6283 = vrot.slane %v6282, 4
        %v6284 = vrot.slane %v5601, 7
        %v6285 = vsel %vm1931, %v6283, %v6284
        %v6286 = vrot.slane %v5602, 7
        %v6287 = vrot.slane %v6286, 4
        %v6288 = vrot.slane %v5603, 7
        %v6289 = vsel %vm1931, %v6287, %v6288
        %v6290 = vrot.slane %v5604, 7
        %v6291 = vrot.slane %v6290, 4
        %v6292 = vrot.slane %v5605, 7
        %v6293 = vsel %vm1931, %v6291, %v6292
        %v6294 = vrot.slane %v5606, 7
        %v6295 = vrot.slane %v6294, 4
        %v6296 = vrot.slane %v5607, 7
        %v6297 = vsel %vm1931, %v6295, %v6296
        %v6298 = vrot.slane %v5608, 7
        %v6299 = vrot.slane %v6298, 4
        %v6300 = vrot.slane %v5609, 7
        %v6301 = vsel %vm1931, %v6299, %v6300
        %v6302 = vrot.slane %v5610, 7
        %v6303 = vrot.slane %v6302, 4
        %v6304 = vrot.slane %v5611, 7
        %v6305 = vsel %vm1931, %v6303, %v6304
        %v6306 = vrot.slane %v5612, 7
        %v6307 = vrot.slane %v6306, 4
        %v6308 = vrot.slane %v5613, 7
        %v6309 = vsel %vm1931, %v6307, %v6308
        %v6310 = vrot.slane %v5614, 7
        %v6311 = vrot.slane %v6310, 4
        %v6312 = vrot.slane %v5615, 7
        %v6313 = vsel %vm1931, %v6311, %v6312
        %v6314 = vrot.slane %v5616, 7
        %v6315 = vrot.slane %v6314, 4
        %v6316 = vrot.slane %v5617, 7
        %v6317 = vsel %vm1931, %v6315, %v6316
        %v6318 = vrot.slane %v5618, 7
        %v6319 = vrot.slane %v6318, 4
        %v6320 = vrot.slane %v5619, 7
        %v6321 = vsel %vm1931, %v6319, %v6320
        %v6322 = vrot.slane %v5620, 7
        %v6323 = vrot.slane %v6322, 4
        %v6324 = vrot.slane %v5621, 7
        %v6325 = vsel %vm1931, %v6323, %v6324
        %v6326 = vpack.c.b16 %v5560, %v5558
        %v6327 = vpack.c.b16 %v5564, %v5562
        %v6328 = vpack.c.b16 %v5568, %v5566
        %v6329 = vpack.c.b16 %v5572, %v5570
        %v6330 = vpack.c.b16 %v5576, %v5574
        %v6331 = vpack.c.b16 %v5580, %v5578
        %v6332 = vpack.c.b16 %v5584, %v5582
        %v6333 = vpack.c.b16 %v5588, %v5586
        %v6334 = vunpack.c.l.b16 %v5635
        %v6335 = vunpack.c.l.b16 %v5649
        %v6336 = vunpack.c.l.b16 %v5663
        %v6337 = vunpack.c.l.b16 %v5677
        %v6338 = vunpack.c.l.b16 %v5691
        %v6339 = vunpack.c.l.b16 %v5705
        %v6340 = vunpack.c.l.b16 %v5719
        %v6341 = vunpack.c.l.b16 %v5733
        %v6342 = vunpack.c.l.b16 %v5747
        %v6343 = vunpack.c.l.b16 %v5761
        %v6344 = vunpack.c.l.b16 %v5775
        %v6345 = vunpack.c.l.b16 %v5789
        %v6346 = vunpack.c.l.b16 %v5803
        %v6347 = vunpack.c.l.b16 %v5817
        %v6348 = vunpack.c.l.b16 %v5831
        %v6349 = vunpack.c.l.b16 %v5845
        %v6350 = vpack.c.b16 %v6335, %v6334
        %v6351 = vpack.c.b16 %v6337, %v6336
        %v6352 = vpack.c.b16 %v6339, %v6338
        %v6353 = vpack.c.b16 %v6341, %v6340
        %v6354 = vpack.c.b16 %v6343, %v6342
        %v6355 = vpack.c.b16 %v6345, %v6344
        %v6356 = vpack.c.b16 %v6347, %v6346
        %v6357 = vpack.c.b16 %v6349, %v6348
        %6358 = vrot.lane.b32.xlu0 %v6350, 8
        %v6359 = vpop.permute.xlu0 %6358
        %6360 = vrot.lane.b32.xlu0 %v6351, 8
        %v6361 = vpop.permute.xlu0 %6360
        %6362 = vrot.lane.b32.xlu0 %v6352, 8
        %v6363 = vpop.permute.xlu0 %6362
        %6364 = vrot.lane.b32.xlu0 %v6353, 8
        %v6365 = vpop.permute.xlu0 %6364
        %6366 = vrot.lane.b32.xlu0 %v6354, 8
        %v6367 = vpop.permute.xlu0 %6366
        %6368 = vrot.lane.b32.xlu0 %v6355, 8
        %v6369 = vpop.permute.xlu0 %6368
        %6370 = vrot.lane.b32.xlu0 %v6356, 8
        %v6371 = vpop.permute.xlu0 %6370
        %6372 = vrot.lane.b32.xlu0 %v6357, 8
        %v6373 = vpop.permute.xlu0 %6372
        %v6374 = vunpack.c.l.b16 %v5849
        %v6375 = vunpack.c.l.b16 %v5853
        %v6376 = vunpack.c.l.b16 %v5857
        %v6377 = vunpack.c.l.b16 %v5861
        %v6378 = vunpack.c.l.b16 %v5865
        %v6379 = vunpack.c.l.b16 %v5869
        %v6380 = vunpack.c.l.b16 %v5873
        %v6381 = vunpack.c.l.b16 %v5877
        %v6382 = vunpack.c.l.b16 %v5881
        %v6383 = vunpack.c.l.b16 %v5885
        %v6384 = vunpack.c.l.b16 %v5889
        %v6385 = vunpack.c.l.b16 %v5893
        %v6386 = vunpack.c.l.b16 %v5897
        %v6387 = vunpack.c.l.b16 %v5901
        %v6388 = vunpack.c.l.b16 %v5905
        %v6389 = vunpack.c.l.b16 %v5909
        %v6390 = vpack.c.b16 %v6375, %v6374
        %v6391 = vpack.c.b16 %v6377, %v6376
        %v6392 = vpack.c.b16 %v6379, %v6378
        %v6393 = vpack.c.b16 %v6381, %v6380
        %v6394 = vpack.c.b16 %v6383, %v6382
        %v6395 = vpack.c.b16 %v6385, %v6384
        %v6396 = vpack.c.b16 %v6387, %v6386
        %v6397 = vpack.c.b16 %v6389, %v6388
        %6398 = vrot.lane.b32.xlu0 %v6390, 16
        %v6399 = vpop.permute.xlu0 %6398
        %6400 = vrot.lane.b32.xlu0 %v6391, 16
        %v6401 = vpop.permute.xlu0 %6400
        %6402 = vrot.lane.b32.xlu0 %v6392, 16
        %v6403 = vpop.permute.xlu0 %6402
        %6404 = vrot.lane.b32.xlu0 %v6393, 16
        %v6405 = vpop.permute.xlu0 %6404
        %6406 = vrot.lane.b32.xlu0 %v6394, 16
        %v6407 = vpop.permute.xlu0 %6406
        %6408 = vrot.lane.b32.xlu0 %v6395, 16
        %v6409 = vpop.permute.xlu0 %6408
        %6410 = vrot.lane.b32.xlu0 %v6396, 16
        %v6411 = vpop.permute.xlu0 %6410
        %6412 = vrot.lane.b32.xlu0 %v6397, 16
        %v6413 = vpop.permute.xlu0 %6412
        %v6414 = vunpack.c.l.b16 %v5919
        %v6415 = vunpack.c.l.b16 %v5929
        %v6416 = vunpack.c.l.b16 %v5939
        %v6417 = vunpack.c.l.b16 %v5949
        %v6418 = vunpack.c.l.b16 %v5959
        %v6419 = vunpack.c.l.b16 %v5969
        %v6420 = vunpack.c.l.b16 %v5979
        %v6421 = vunpack.c.l.b16 %v5989
        %v6422 = vunpack.c.l.b16 %v5999
        %v6423 = vunpack.c.l.b16 %v6009
        %v6424 = vunpack.c.l.b16 %v6019
        %v6425 = vunpack.c.l.b16 %v6029
        %v6426 = vunpack.c.l.b16 %v6039
        %v6427 = vunpack.c.l.b16 %v6049
        %v6428 = vunpack.c.l.b16 %v6059
        %v6429 = vunpack.c.l.b16 %v6069
        %v6430 = vpack.c.b16 %v6415, %v6414
        %v6431 = vpack.c.b16 %v6417, %v6416
        %v6432 = vpack.c.b16 %v6419, %v6418
        %v6433 = vpack.c.b16 %v6421, %v6420
        %v6434 = vpack.c.b16 %v6423, %v6422
        %v6435 = vpack.c.b16 %v6425, %v6424
        %v6436 = vpack.c.b16 %v6427, %v6426
        %v6437 = vpack.c.b16 %v6429, %v6428
        %6438 = vrot.lane.b32.xlu0 %v6430, 24
        %v6439 = vpop.permute.xlu0 %6438
        %6440 = vrot.lane.b32.xlu0 %v6431, 24
        %v6441 = vpop.permute.xlu0 %6440
        %6442 = vrot.lane.b32.xlu0 %v6432, 24
        %v6443 = vpop.permute.xlu0 %6442
        %6444 = vrot.lane.b32.xlu0 %v6433, 24
        %v6445 = vpop.permute.xlu0 %6444
        %6446 = vrot.lane.b32.xlu0 %v6434, 24
        %v6447 = vpop.permute.xlu0 %6446
        %6448 = vrot.lane.b32.xlu0 %v6435, 24
        %v6449 = vpop.permute.xlu0 %6448
        %6450 = vrot.lane.b32.xlu0 %v6436, 24
        %v6451 = vpop.permute.xlu0 %6450
        %6452 = vrot.lane.b32.xlu0 %v6437, 24
        %v6453 = vpop.permute.xlu0 %6452
        %v6454 = vunpack.c.l.b16 %v6073
        %v6455 = vunpack.c.l.b16 %v6077
        %v6456 = vunpack.c.l.b16 %v6081
        %v6457 = vunpack.c.l.b16 %v6085
        %v6458 = vunpack.c.l.b16 %v6089
        %v6459 = vunpack.c.l.b16 %v6093
        %v6460 = vunpack.c.l.b16 %v6097
        %v6461 = vunpack.c.l.b16 %v6101
        %v6462 = vunpack.c.l.b16 %v6105
        %v6463 = vunpack.c.l.b16 %v6109
        %v6464 = vunpack.c.l.b16 %v6113
        %v6465 = vunpack.c.l.b16 %v6117
        %v6466 = vunpack.c.l.b16 %v6121
        %v6467 = vunpack.c.l.b16 %v6125
        %v6468 = vunpack.c.l.b16 %v6129
        %v6469 = vunpack.c.l.b16 %v6133
        %v6470 = vpack.c.b16 %v6455, %v6454
        %v6471 = vpack.c.b16 %v6457, %v6456
        %v6472 = vpack.c.b16 %v6459, %v6458
        %v6473 = vpack.c.b16 %v6461, %v6460
        %v6474 = vpack.c.b16 %v6463, %v6462
        %v6475 = vpack.c.b16 %v6465, %v6464
        %v6476 = vpack.c.b16 %v6467, %v6466
        %v6477 = vpack.c.b16 %v6469, %v6468
        %6478 = vrot.lane.b32.xlu0 %v6470, 32
        %v6479 = vpop.permute.xlu0 %6478
        %6480 = vrot.lane.b32.xlu0 %v6471, 32
        %v6481 = vpop.permute.xlu0 %6480
        %6482 = vrot.lane.b32.xlu0 %v6472, 32
        %v6483 = vpop.permute.xlu0 %6482
        %6484 = vrot.lane.b32.xlu0 %v6473, 32
        %v6485 = vpop.permute.xlu0 %6484
        %6486 = vrot.lane.b32.xlu0 %v6474, 32
        %v6487 = vpop.permute.xlu0 %6486
        %6488 = vrot.lane.b32.xlu0 %v6475, 32
        %v6489 = vpop.permute.xlu0 %6488
        %6490 = vrot.lane.b32.xlu0 %v6476, 32
        %v6491 = vpop.permute.xlu0 %6490
        %6492 = vrot.lane.b32.xlu0 %v6477, 32
        %v6493 = vpop.permute.xlu0 %6492
        %v6494 = vunpack.c.l.b16 %v6141
        %v6495 = vunpack.c.l.b16 %v6149
        %v6496 = vunpack.c.l.b16 %v6157
        %v6497 = vunpack.c.l.b16 %v6165
        %v6498 = vunpack.c.l.b16 %v6173
        %v6499 = vunpack.c.l.b16 %v6181
        %v6500 = vunpack.c.l.b16 %v6189
        %v6501 = vunpack.c.l.b16 %v6197
        %v6502 = vunpack.c.l.b16 %v6205
        %v6503 = vunpack.c.l.b16 %v6213
        %v6504 = vunpack.c.l.b16 %v6221
        %v6505 = vunpack.c.l.b16 %v6229
        %v6506 = vunpack.c.l.b16 %v6237
        %v6507 = vunpack.c.l.b16 %v6245
        %v6508 = vunpack.c.l.b16 %v6253
        %v6509 = vunpack.c.l.b16 %v6261
        %v6510 = vpack.c.b16 %v6495, %v6494
        %v6511 = vpack.c.b16 %v6497, %v6496
        %v6512 = vpack.c.b16 %v6499, %v6498
        %v6513 = vpack.c.b16 %v6501, %v6500
        %v6514 = vpack.c.b16 %v6503, %v6502
        %v6515 = vpack.c.b16 %v6505, %v6504
        %v6516 = vpack.c.b16 %v6507, %v6506
        %v6517 = vpack.c.b16 %v6509, %v6508
        %6518 = vrot.lane.b32.xlu0 %v6510, 40
        %v6519 = vpop.permute.xlu0 %6518
        %6520 = vrot.lane.b32.xlu0 %v6511, 40
        %v6521 = vpop.permute.xlu0 %6520
        %6522 = vrot.lane.b32.xlu0 %v6512, 40
        %v6523 = vpop.permute.xlu0 %6522
        %6524 = vrot.lane.b32.xlu0 %v6513, 40
        %v6525 = vpop.permute.xlu0 %6524
        %6526 = vrot.lane.b32.xlu0 %v6514, 40
        %v6527 = vpop.permute.xlu0 %6526
        %6528 = vrot.lane.b32.xlu0 %v6515, 40
        %v6529 = vpop.permute.xlu0 %6528
        %6530 = vrot.lane.b32.xlu0 %v6516, 40
        %v6531 = vpop.permute.xlu0 %6530
        %6532 = vrot.lane.b32.xlu0 %v6517, 40
        %v6533 = vpop.permute.xlu0 %6532
        %v6534 = vunpack.c.l.b16 %v6265
        %v6535 = vunpack.c.l.b16 %v6269
        %v6536 = vunpack.c.l.b16 %v6273
        %v6537 = vunpack.c.l.b16 %v6277
        %v6538 = vunpack.c.l.b16 %v6281
        %v6539 = vunpack.c.l.b16 %v6285
        %v6540 = vunpack.c.l.b16 %v6289
        %v6541 = vunpack.c.l.b16 %v6293
        %v6542 = vunpack.c.l.b16 %v6297
        %v6543 = vunpack.c.l.b16 %v6301
        %v6544 = vunpack.c.l.b16 %v6305
        %v6545 = vunpack.c.l.b16 %v6309
        %v6546 = vunpack.c.l.b16 %v6313
        %v6547 = vunpack.c.l.b16 %v6317
        %v6548 = vunpack.c.l.b16 %v6321
        %v6549 = vunpack.c.l.b16 %v6325
        %v6550 = vpack.c.b16 %v6535, %v6534
        %v6551 = vpack.c.b16 %v6537, %v6536
        %v6552 = vpack.c.b16 %v6539, %v6538
        %v6553 = vpack.c.b16 %v6541, %v6540
        %v6554 = vpack.c.b16 %v6543, %v6542
        %v6555 = vpack.c.b16 %v6545, %v6544
        %v6556 = vpack.c.b16 %v6547, %v6546
        %v6557 = vpack.c.b16 %v6549, %v6548
        %6558 = vrot.lane.b32.xlu0 %v6550, 48
        %v6559 = vpop.permute.xlu0 %6558
        %6560 = vrot.lane.b32.xlu0 %v6551, 48
        %v6561 = vpop.permute.xlu0 %6560
        %6562 = vrot.lane.b32.xlu0 %v6552, 48
        %v6563 = vpop.permute.xlu0 %6562
        %6564 = vrot.lane.b32.xlu0 %v6553, 48
        %v6565 = vpop.permute.xlu0 %6564
        %6566 = vrot.lane.b32.xlu0 %v6554, 48
        %v6567 = vpop.permute.xlu0 %6566
        %6568 = vrot.lane.b32.xlu0 %v6555, 48
        %v6569 = vpop.permute.xlu0 %6568
        %6570 = vrot.lane.b32.xlu0 %v6556, 48
        %v6571 = vpop.permute.xlu0 %6570
        %6572 = vrot.lane.b32.xlu0 %v6557, 48
        %v6573 = vpop.permute.xlu0 %6572
        %v6576 = vsel %vm2244, %v6326, %v6359
        %v6579 = vsel %vm2244, %v6327, %v6361
        %v6582 = vsel %vm2244, %v6328, %v6363
        %v6585 = vsel %vm2244, %v6329, %v6365
        %v6588 = vsel %vm2244, %v6330, %v6367
        %v6591 = vsel %vm2244, %v6331, %v6369
        %v6594 = vsel %vm2244, %v6332, %v6371
        %v6597 = vsel %vm2244, %v6333, %v6373
        %v6599 = vsel %vm607, %v6576, %v6399
        %v6601 = vsel %vm607, %v6579, %v6401
        %v6603 = vsel %vm607, %v6582, %v6403
        %v6605 = vsel %vm607, %v6585, %v6405
        %v6607 = vsel %vm607, %v6588, %v6407
        %v6609 = vsel %vm607, %v6591, %v6409
        %v6611 = vsel %vm607, %v6594, %v6411
        %v6613 = vsel %vm607, %v6597, %v6413
        %v6615 = vsel %vm2285, %v6599, %v6439
        %v6617 = vsel %vm2285, %v6601, %v6441
        %v6619 = vsel %vm2285, %v6603, %v6443
        %v6621 = vsel %vm2285, %v6605, %v6445
        %v6623 = vsel %vm2285, %v6607, %v6447
        %v6625 = vsel %vm2285, %v6609, %v6449
        %v6627 = vsel %vm2285, %v6611, %v6451
        %v6629 = vsel %vm2285, %v6613, %v6453
        %v6631 = vsel %vm2302, %v6615, %v6479
        %v6633 = vsel %vm2302, %v6617, %v6481
        %v6635 = vsel %vm2302, %v6619, %v6483
        %v6637 = vsel %vm2302, %v6621, %v6485
        %v6639 = vsel %vm2302, %v6623, %v6487
        %v6641 = vsel %vm2302, %v6625, %v6489
        %v6643 = vsel %vm2302, %v6627, %v6491
        %v6645 = vsel %vm2302, %v6629, %v6493
        %v6647 = vsel %vm2319, %v6631, %v6519
        %v6649 = vsel %vm2319, %v6633, %v6521
        %v6651 = vsel %vm2319, %v6635, %v6523
        %v6653 = vsel %vm2319, %v6637, %v6525
        %v6655 = vsel %vm2319, %v6639, %v6527
        %v6657 = vsel %vm2319, %v6641, %v6529
        %v6659 = vsel %vm2319, %v6643, %v6531
        %v6661 = vsel %vm2319, %v6645, %v6533
        %v6663 = vsel %vm2336, %v6647, %v6559
        %v6665 = vsel %vm2336, %v6649, %v6561
        %v6667 = vsel %vm2336, %v6651, %v6563
        %v6669 = vsel %vm2336, %v6653, %v6565
        %v6671 = vsel %vm2336, %v6655, %v6567
        %v6673 = vsel %vm2336, %v6657, %v6569
        %v6675 = vsel %vm2336, %v6659, %v6571
        %v6677 = vsel %vm2336, %v6661, %v6573
        %v6678 = vld [vmem:[%s14] sm:$0xff]
        %v6679 = vld [vmem:[%s14 + $0x8] sm:$0xff]
        %v6680 = vld [vmem:[%s14 + $0x10] sm:$0xff]
        %v6681 = vld [vmem:[%s14 + $0x18] sm:$0xff]
        %v6682 = vld [vmem:[%s14 + $0x20] sm:$0xff]
        %v6683 = vld [vmem:[%s14 + $0x28] sm:$0xff]
        %v6684 = vld [vmem:[%s14 + $0x30] sm:$0xff]
        %v6685 = vld [vmem:[%s15] sm:$0x3]
        %v6687 = vlaneseq
        %v6688 = vshrl.u32 %v6687, 7
        %v6689 = vsub.s32 0, %v6688
        %v6690 = vrot.slane %v6685, %v6689
        %v6691 = vlaneseq
        %v6692 = vshrl.u32 %v6691, 7
        %v6693 = vsub.s32 1, %v6692
        %v6694 = vrot.slane %v6685, %v6693
        %v6704 = vunpack.c.l.b16 %v6678
        %v6705 = vunpack.c.h.b16 %v6678
        %v6706 = vunpack.c.l.b16 %v6679
        %v6707 = vunpack.c.h.b16 %v6679
        %v6708 = vunpack.c.l.b16 %v6680
        %v6709 = vunpack.c.h.b16 %v6680
        %v6710 = vunpack.c.l.b16 %v6681
        %v6711 = vunpack.c.h.b16 %v6681
        %v6712 = vunpack.c.l.b16 %v6682
        %v6713 = vunpack.c.h.b16 %v6682
        %v6714 = vunpack.c.l.b16 %v6683
        %v6715 = vunpack.c.h.b16 %v6683
        %v6716 = vunpack.c.l.b16 %v6684
        %v6717 = vunpack.c.h.b16 %v6684
        %v6718 = vpack.c.b16 %v6706, %v6704
        %v6719 = vpack.c.b16 %v6707, %v6705
        %v6720 = vpack.c.b16 %v6710, %v6708
        %v6721 = vpack.c.b16 %v6711, %v6709
        %v6722 = vpack.c.b16 %v6714, %v6712
        %v6723 = vpack.c.b16 %v6715, %v6713
        %v6724 = vpack.c.b16 %v6716, %v6716
        %v6725 = vpack.c.b16 %v6717, %v6717
        %v6732 = vsel %vm2388, %v6663, 0
        %v6734 = vsel %vm2388, %v6665, 0
        %v6736 = vsel %vm2388, %v6667, 0
        %v6738 = vsel %vm2388, %v6669, 0
        %v6740 = vsel %vm2388, %v6671, 0
        %v6742 = vsel %vm2388, %v6673, 0
        %v6744 = vsel %vm2388, %v6675, 0
        %v6746 = vsel %vm2388, %v6677, 0
        %v6749 = vsel %vm2405, %v6724, 0
        %v6752 = vsel %vm2405, %v6725, 0
        %6754 = vmatprep.subr.bf16.mxu0 0
        %6755 = vmatpush1.bf16.msra.mxu0 0
        %6756 = vmatprep.subr.bf16.mxu0 0
        %6757 = vmatpush1.bf16.msra.mxu0 0
        %6758 = vmatprep.subr.bf16.mxu0 0
        %6759 = vmatpush1.bf16.msra.mxu0 0
        %6760 = vmatprep.subr.bf16.mxu0 0
        %6761 = vmatpush1.bf16.msra.mxu0 0
        %6762 = vmatprep.subr.bf16.mxu0 %v6752
        %6763 = vmatpush1.bf16.msra.mxu0 %v6749
        %6764 = vmatprep.subr.bf16.mxu0 %v6723
        %6765 = vmatpush1.bf16.msra.mxu0 %v6722
        %6766 = vmatprep.subr.bf16.mxu0 %v6721
        %6767 = vmatpush1.bf16.msra.mxu0 %v6720
        %6768 = vmatprep.subr.bf16.mxu0 %v6719
        %6769 = vmatpush1.bf16.msra.mxu0 %v6718
        %6770 = vmatprep.subr.bf16.mxu0 0
        %6771 = vmatpush2.bf16.msra.mxu0 0
        %6772 = vmatprep.subr.bf16.mxu0 0
        %6773 = vmatpush2.bf16.msra.mxu0 0
        %6774 = vmatprep.subr.bf16.mxu0 0
        %6775 = vmatpush2.bf16.msra.mxu0 0
        %6776 = vmatprep.subr.bf16.mxu0 0
        %6777 = vmatpush2.bf16.msra.mxu0 0
        %6778 = vmatprep.subr.bf16.mxu0 0
        %6779 = vmatpush2.bf16.msra.mxu0 0
        %6780 = vmatprep.subr.bf16.mxu0 0
        %6781 = vmatpush2.bf16.msra.mxu0 0
        %6782 = vmatprep.subr.bf16.mxu0 0
        %6783 = vmatpush2.bf16.msra.mxu0 0
        %6784 = vmatprep.subr.bf16.mxu0 0
        %6785 = vmatpush2.bf16.msra.mxu0 0
        %6786 = vmatprep.mubr.bf16.mxu0 0
        %6787 = vmatmul.mubr.bf16.gmra.mxu0 %v6732
        %v6788 = vpop.f32.mrf.mxu0
        %v6789 = vadd.f32 %v6690, %v6788
        %v6790 = vpop.f32.mrf.mxu0
        %v6791 = vadd.f32 %v6694, %v6790
        %v6792 = vpop.f32.mrf.mxu0
        %v6793 = vadd.f32 %v6690, %v6792
        %v6794 = vpop.f32.mrf.mxu0
        %v6795 = vadd.f32 %v6694, %v6794
        %6796 = vmatprep.mubr.bf16.mxu0 0
        %6797 = vmatmul.mubr.bf16.gmra.mxu0 %v6734
        %v6798 = vpop.f32.mrf.mxu0
        %v6799 = vadd.f32 %v6690, %v6798
        %v6800 = vpop.f32.mrf.mxu0
        %v6801 = vadd.f32 %v6694, %v6800
        %v6802 = vpop.f32.mrf.mxu0
        %v6803 = vadd.f32 %v6690, %v6802
        %v6804 = vpop.f32.mrf.mxu0
        %v6805 = vadd.f32 %v6694, %v6804
        %6806 = vmatprep.mubr.bf16.mxu0 0
        %6807 = vmatmul.mubr.bf16.gmra.mxu0 %v6736
        %v6808 = vpop.f32.mrf.mxu0
        %v6809 = vadd.f32 %v6690, %v6808
        %v6810 = vpop.f32.mrf.mxu0
        %v6811 = vadd.f32 %v6694, %v6810
        %v6812 = vpop.f32.mrf.mxu0
        %v6813 = vadd.f32 %v6690, %v6812
        %v6814 = vpop.f32.mrf.mxu0
        %v6815 = vadd.f32 %v6694, %v6814
        %6816 = vmatprep.mubr.bf16.mxu0 0
        %6817 = vmatmul.mubr.bf16.gmra.mxu0 %v6738
        %v6818 = vpop.f32.mrf.mxu0
        %v6819 = vadd.f32 %v6690, %v6818
        %v6820 = vpop.f32.mrf.mxu0
        %v6821 = vadd.f32 %v6694, %v6820
        %v6822 = vpop.f32.mrf.mxu0
        %v6823 = vadd.f32 %v6690, %v6822
        %v6824 = vpop.f32.mrf.mxu0
        %v6825 = vadd.f32 %v6694, %v6824
        %6826 = vmatprep.mubr.bf16.mxu0 0
        %6827 = vmatmul.mubr.bf16.gmra.mxu0 %v6740
        %v6828 = vpop.f32.mrf.mxu0
        %v6829 = vadd.f32 %v6690, %v6828
        %v6830 = vpop.f32.mrf.mxu0
        %v6831 = vadd.f32 %v6694, %v6830
        %v6832 = vpop.f32.mrf.mxu0
        %v6833 = vadd.f32 %v6690, %v6832
        %v6834 = vpop.f32.mrf.mxu0
        %v6835 = vadd.f32 %v6694, %v6834
        %6836 = vmatprep.mubr.bf16.mxu0 0
        %6837 = vmatmul.mubr.bf16.gmra.mxu0 %v6742
        %v6838 = vpop.f32.mrf.mxu0
        %v6839 = vadd.f32 %v6690, %v6838
        %v6840 = vpop.f32.mrf.mxu0
        %v6841 = vadd.f32 %v6694, %v6840
        %v6842 = vpop.f32.mrf.mxu0
        %v6843 = vadd.f32 %v6690, %v6842
        %v6844 = vpop.f32.mrf.mxu0
        %v6845 = vadd.f32 %v6694, %v6844
        %6846 = vmatprep.mubr.bf16.mxu0 0
        %6847 = vmatmul.mubr.bf16.gmra.mxu0 %v6744
        %v6848 = vpop.f32.mrf.mxu0
        %v6849 = vadd.f32 %v6690, %v6848
        %v6850 = vpop.f32.mrf.mxu0
        %v6851 = vadd.f32 %v6694, %v6850
        %v6852 = vpop.f32.mrf.mxu0
        %v6853 = vadd.f32 %v6690, %v6852
        %v6854 = vpop.f32.mrf.mxu0
        %v6855 = vadd.f32 %v6694, %v6854
        %6856 = vmatprep.mubr.bf16.mxu0 0
        %6857 = vmatmul.mubr.bf16.gmra.mxu0 %v6746
        %v6858 = vpop.f32.mrf.mxu0
        %v6859 = vadd.f32 %v6690, %v6858
        %v6860 = vpop.f32.mrf.mxu0
        %v6861 = vadd.f32 %v6694, %v6860
        %v6862 = vpop.f32.mrf.mxu0
        %v6863 = vadd.f32 %v6690, %v6862
        %v6864 = vpop.f32.mrf.mxu0
        %v6865 = vadd.f32 %v6694, %v6864
        %6866 = vdwg.mxu0
        %v6867 = vmax.f32 %v6789, 0.0
        %v6868 = vmax.f32 %v6791, 0.0
        %v6869 = vmax.f32 %v6793, 0.0
        %v6870 = vmax.f32 %v6795, 0.0
        %v6871 = vmax.f32 %v6799, 0.0
        %v6872 = vmax.f32 %v6801, 0.0
        %v6873 = vmax.f32 %v6803, 0.0
        %v6874 = vmax.f32 %v6805, 0.0
        %v6875 = vmax.f32 %v6809, 0.0
        %v6876 = vmax.f32 %v6811, 0.0
        %v6877 = vmax.f32 %v6813, 0.0
        %v6878 = vmax.f32 %v6815, 0.0
        %v6879 = vmax.f32 %v6819, 0.0
        %v6880 = vmax.f32 %v6821, 0.0
        %v6881 = vmax.f32 %v6823, 0.0
        %v6882 = vmax.f32 %v6825, 0.0
        %v6883 = vmax.f32 %v6829, 0.0
        %v6884 = vmax.f32 %v6831, 0.0
        %v6885 = vmax.f32 %v6833, 0.0
        %v6886 = vmax.f32 %v6835, 0.0
        %v6887 = vmax.f32 %v6839, 0.0
        %v6888 = vmax.f32 %v6841, 0.0
        %v6889 = vmax.f32 %v6843, 0.0
        %v6890 = vmax.f32 %v6845, 0.0
        %v6891 = vmax.f32 %v6849, 0.0
        %v6892 = vmax.f32 %v6851, 0.0
        %v6893 = vmax.f32 %v6853, 0.0
        %v6894 = vmax.f32 %v6855, 0.0
        %v6895 = vmax.f32 %v6859, 0.0
        %v6896 = vmax.f32 %v6861, 0.0
        %v6897 = vmax.f32 %v6863, 0.0
        %v6898 = vmax.f32 %v6865, 0.0
        %6947 = vrot.lane.b32.xlu0 %v669, 48
        %v6948 = vpop.permute.xlu0 %6947
        %6949 = vrot.lane.b32.xlu0 %v780, 48
        %v6950 = vpop.permute.xlu0 %6949
        %6951 = vrot.lane.b32.xlu0 %v782, 48
        %v6952 = vpop.permute.xlu0 %6951
        %6953 = vrot.lane.b32.xlu0 %v673, 48
        %v6954 = vpop.permute.xlu0 %6953
        %6955 = vrot.lane.b32.xlu0 %v784, 48
        %v6956 = vpop.permute.xlu0 %6955
        %6957 = vrot.lane.b32.xlu0 %v786, 48
        %v6958 = vpop.permute.xlu0 %6957
        %6959 = vrot.lane.b32.xlu0 %v679, 48
        %v6960 = vpop.permute.xlu0 %6959
        %6961 = vrot.lane.b32.xlu0 %v790, 48
        %v6962 = vpop.permute.xlu0 %6961
        %6963 = vrot.lane.b32.xlu0 %v792, 48
        %v6964 = vpop.permute.xlu0 %6963
        %6965 = vrot.lane.b32.xlu0 %v683, 48
        %v6966 = vpop.permute.xlu0 %6965
        %6967 = vrot.lane.b32.xlu0 %v794, 48
        %v6968 = vpop.permute.xlu0 %6967
        %6969 = vrot.lane.b32.xlu0 %v796, 48
        %v6970 = vpop.permute.xlu0 %6969
        %6971 = vrot.lane.b32.xlu0 %v689, 48
        %v6972 = vpop.permute.xlu0 %6971
        %6973 = vrot.lane.b32.xlu0 %v800, 48
        %v6974 = vpop.permute.xlu0 %6973
        %6975 = vrot.lane.b32.xlu0 %v802, 48
        %v6976 = vpop.permute.xlu0 %6975
        %6977 = vrot.lane.b32.xlu0 %v693, 48
        %v6978 = vpop.permute.xlu0 %6977
        %6979 = vrot.lane.b32.xlu0 %v804, 48
        %v6980 = vpop.permute.xlu0 %6979
        %6981 = vrot.lane.b32.xlu0 %v806, 48
        %v6982 = vpop.permute.xlu0 %6981
        %6983 = vrot.lane.b32.xlu0 %v699, 48
        %v6984 = vpop.permute.xlu0 %6983
        %6985 = vrot.lane.b32.xlu0 %v810, 48
        %v6986 = vpop.permute.xlu0 %6985
        %6987 = vrot.lane.b32.xlu0 %v812, 48
        %v6988 = vpop.permute.xlu0 %6987
        %6989 = vrot.lane.b32.xlu0 %v703, 48
        %v6990 = vpop.permute.xlu0 %6989
        %6991 = vrot.lane.b32.xlu0 %v814, 48
        %v6992 = vpop.permute.xlu0 %6991
        %6993 = vrot.lane.b32.xlu0 %v816, 48
        %v6994 = vpop.permute.xlu0 %6993
        %6995 = vrot.lane.b32.xlu0 %v709, 48
        %v6996 = vpop.permute.xlu0 %6995
        %6997 = vrot.lane.b32.xlu0 %v820, 48
        %v6998 = vpop.permute.xlu0 %6997
        %6999 = vrot.lane.b32.xlu0 %v822, 48
        %v7000 = vpop.permute.xlu0 %6999
        %7001 = vrot.lane.b32.xlu0 %v713, 48
        %v7002 = vpop.permute.xlu0 %7001
        %7003 = vrot.lane.b32.xlu0 %v824, 48
        %v7004 = vpop.permute.xlu0 %7003
        %7005 = vrot.lane.b32.xlu0 %v826, 48
        %v7006 = vpop.permute.xlu0 %7005
        %7007 = vrot.lane.b32.xlu0 %v719, 48
        %v7008 = vpop.permute.xlu0 %7007
        %7009 = vrot.lane.b32.xlu0 %v830, 48
        %v7010 = vpop.permute.xlu0 %7009
        %7011 = vrot.lane.b32.xlu0 %v832, 48
        %v7012 = vpop.permute.xlu0 %7011
        %7013 = vrot.lane.b32.xlu0 %v723, 48
        %v7014 = vpop.permute.xlu0 %7013
        %7015 = vrot.lane.b32.xlu0 %v834, 48
        %v7016 = vpop.permute.xlu0 %7015
        %7017 = vrot.lane.b32.xlu0 %v836, 48
        %v7018 = vpop.permute.xlu0 %7017
        %7019 = vrot.lane.b32.xlu0 %v729, 48
        %v7020 = vpop.permute.xlu0 %7019
        %7021 = vrot.lane.b32.xlu0 %v840, 48
        %v7022 = vpop.permute.xlu0 %7021
        %7023 = vrot.lane.b32.xlu0 %v842, 48
        %v7024 = vpop.permute.xlu0 %7023
        %7025 = vrot.lane.b32.xlu0 %v733, 48
        %v7026 = vpop.permute.xlu0 %7025
        %7027 = vrot.lane.b32.xlu0 %v844, 48
        %v7028 = vpop.permute.xlu0 %7027
        %7029 = vrot.lane.b32.xlu0 %v846, 48
        %v7030 = vpop.permute.xlu0 %7029
        %7031 = vrot.lane.b32.xlu0 %v739, 48
        %v7032 = vpop.permute.xlu0 %7031
        %7033 = vrot.lane.b32.xlu0 %v850, 48
        %v7034 = vpop.permute.xlu0 %7033
        %7035 = vrot.lane.b32.xlu0 %v852, 48
        %v7036 = vpop.permute.xlu0 %7035
        %7037 = vrot.lane.b32.xlu0 %v743, 48
        %v7038 = vpop.permute.xlu0 %7037
        %7039 = vrot.lane.b32.xlu0 %v854, 48
        %v7040 = vpop.permute.xlu0 %7039
        %7041 = vrot.lane.b32.xlu0 %v856, 48
        %v7042 = vpop.permute.xlu0 %7041
        %v7043 = vsel %vm2336, %v6948, %v6950
        %v7044 = vsel %vm2336, %v6950, %v6952
        %v7045 = vsel %vm2336, %v6954, %v6956
        %v7046 = vsel %vm2336, %v6956, %v6958
        %v7047 = vsel %vm2336, %v6960, %v6962
        %v7048 = vsel %vm2336, %v6962, %v6964
        %v7049 = vsel %vm2336, %v6966, %v6968
        %v7050 = vsel %vm2336, %v6968, %v6970
        %v7051 = vsel %vm2336, %v6972, %v6974
        %v7052 = vsel %vm2336, %v6974, %v6976
        %v7053 = vsel %vm2336, %v6978, %v6980
        %v7054 = vsel %vm2336, %v6980, %v6982
        %v7055 = vsel %vm2336, %v6984, %v6986
        %v7056 = vsel %vm2336, %v6986, %v6988
        %v7057 = vsel %vm2336, %v6990, %v6992
        %v7058 = vsel %vm2336, %v6992, %v6994
        %v7059 = vsel %vm2336, %v6996, %v6998
        %v7060 = vsel %vm2336, %v6998, %v7000
        %v7061 = vsel %vm2336, %v7002, %v7004
        %v7062 = vsel %vm2336, %v7004, %v7006
        %v7063 = vsel %vm2336, %v7008, %v7010
        %v7064 = vsel %vm2336, %v7010, %v7012
        %v7065 = vsel %vm2336, %v7014, %v7016
        %v7066 = vsel %vm2336, %v7016, %v7018
        %v7067 = vsel %vm2336, %v7020, %v7022
        %v7068 = vsel %vm2336, %v7022, %v7024
        %v7069 = vsel %vm2336, %v7026, %v7028
        %v7070 = vsel %vm2336, %v7028, %v7030
        %v7071 = vsel %vm2336, %v7032, %v7034
        %v7072 = vsel %vm2336, %v7034, %v7036
        %v7073 = vsel %vm2336, %v7038, %v7040
        %v7074 = vsel %vm2336, %v7040, %v7042
        %v7076 = vrot.slane 0.0, 7
        %v7077 = vrot.slane %v7043, 7
        %v7078 = vrot.slane %v7044, 7
        %v7079 = vrot.slane %v7045, 7
        %v7080 = vrot.slane %v7046, 7
        %v7081 = vrot.slane %v7047, 7
        %v7082 = vrot.slane %v7048, 7
        %v7083 = vrot.slane %v7049, 7
        %v7084 = vrot.slane %v7050, 7
        %v7085 = vrot.slane %v7051, 7
        %v7086 = vrot.slane %v7052, 7
        %v7087 = vrot.slane %v7053, 7
        %v7088 = vrot.slane %v7054, 7
        %v7089 = vrot.slane %v7055, 7
        %v7090 = vrot.slane %v7056, 7
        %v7091 = vrot.slane %v7057, 7
        %v7092 = vrot.slane %v7058, 7
        %v7093 = vrot.slane %v7059, 7
        %v7094 = vrot.slane %v7060, 7
        %v7095 = vrot.slane %v7061, 7
        %v7096 = vrot.slane %v7062, 7
        %v7097 = vrot.slane %v7063, 7
        %v7098 = vrot.slane %v7064, 7
        %v7099 = vrot.slane %v7065, 7
        %v7100 = vrot.slane %v7066, 7
        %v7101 = vrot.slane %v7067, 7
        %v7102 = vrot.slane %v7068, 7
        %v7103 = vrot.slane %v7069, 7
        %v7104 = vrot.slane %v7070, 7
        %v7105 = vrot.slane %v7071, 7
        %v7106 = vrot.slane %v7072, 7
        %v7107 = vrot.slane %v7073, 7
        %v7108 = vrot.slane %v7074, 7
        %vm7142 = vcmask 1040384
        %v7143 = vsel %vm7142, 0.0, %v7076
        %v7144 = vsel %vm7142, 0.0, %v7077
        %v7145 = vsel %vm7142, 0.0, %v7078
        %v7146 = vsel %vm7142, 0.0, %v7079
        %v7147 = vsel %vm7142, 0.0, %v7080
        %v7148 = vsel %vm7142, 0.0, %v7081
        %v7149 = vsel %vm7142, 0.0, %v7082
        %v7150 = vsel %vm7142, 0.0, %v7083
        %v7151 = vsel %vm7142, 0.0, %v7084
        %v7152 = vsel %vm7142, 0.0, %v7085
        %v7153 = vsel %vm7142, 0.0, %v7086
        %v7154 = vsel %vm7142, 0.0, %v7087
        %v7155 = vsel %vm7142, 0.0, %v7088
        %v7156 = vsel %vm7142, 0.0, %v7089
        %v7157 = vsel %vm7142, 0.0, %v7090
        %v7158 = vsel %vm7142, 0.0, %v7091
        %v7159 = vsel %vm7142, 0.0, %v7092
        %v7160 = vsel %vm7142, 0.0, %v7093
        %v7161 = vsel %vm7142, 0.0, %v7094
        %v7162 = vsel %vm7142, 0.0, %v7095
        %v7163 = vsel %vm7142, 0.0, %v7096
        %v7164 = vsel %vm7142, 0.0, %v7097
        %v7165 = vsel %vm7142, 0.0, %v7098
        %v7166 = vsel %vm7142, 0.0, %v7099
        %v7167 = vsel %vm7142, 0.0, %v7100
        %v7168 = vsel %vm7142, 0.0, %v7101
        %v7169 = vsel %vm7142, 0.0, %v7102
        %v7170 = vsel %vm7142, 0.0, %v7103
        %v7171 = vsel %vm7142, 0.0, %v7104
        %v7172 = vsel %vm7142, 0.0, %v7105
        %v7173 = vsel %vm7142, 0.0, %v7106
        %v7174 = vsel %vm7142, 0.0, %v7107
        %v7175 = vsel %vm7142, 0.0, %v7108
        %v7176 = vsel %vm7142, %v7076, 0.0
        %v7177 = vsel %vm7142, %v7077, 0.0
        %v7178 = vsel %vm7142, %v7078, 0.0
        %v7179 = vsel %vm7142, %v7079, 0.0
        %v7180 = vsel %vm7142, %v7080, 0.0
        %v7181 = vsel %vm7142, %v7081, 0.0
        %v7182 = vsel %vm7142, %v7082, 0.0
        %v7183 = vsel %vm7142, %v7083, 0.0
        %v7184 = vsel %vm7142, %v7084, 0.0
        %v7185 = vsel %vm7142, %v7085, 0.0
        %v7186 = vsel %vm7142, %v7086, 0.0
        %v7187 = vsel %vm7142, %v7087, 0.0
        %v7188 = vsel %vm7142, %v7088, 0.0
        %v7189 = vsel %vm7142, %v7089, 0.0
        %v7190 = vsel %vm7142, %v7090, 0.0
        %v7191 = vsel %vm7142, %v7091, 0.0
        %v7192 = vsel %vm7142, %v7092, 0.0
        %v7193 = vsel %vm7142, %v7093, 0.0
        %v7194 = vsel %vm7142, %v7094, 0.0
        %v7195 = vsel %vm7142, %v7095, 0.0
        %v7196 = vsel %vm7142, %v7096, 0.0
        %v7197 = vsel %vm7142, %v7097, 0.0
        %v7198 = vsel %vm7142, %v7098, 0.0
        %v7199 = vsel %vm7142, %v7099, 0.0
        %v7200 = vsel %vm7142, %v7100, 0.0
        %v7201 = vsel %vm7142, %v7101, 0.0
        %v7202 = vsel %vm7142, %v7102, 0.0
        %v7203 = vsel %vm7142, %v7103, 0.0
        %v7204 = vsel %vm7142, %v7104, 0.0
        %v7205 = vsel %vm7142, %v7105, 0.0
        %v7206 = vsel %vm7142, %v7106, 0.0
        %v7207 = vsel %vm7142, %v7107, 0.0
        %v7208 = vsel %vm7142, %v7108, 0.0
        %v7209 = vadd.f32 %v7143, 0.0
        %v7210 = vadd.f32 %v7144, 0.0
        %v7211 = vadd.f32 %v7145, 0.0
        %v7212 = vadd.f32 %v7146, 0.0
        %v7213 = vadd.f32 %v7147, 0.0
        %v7214 = vadd.f32 %v7148, 0.0
        %v7215 = vadd.f32 %v7149, 0.0
        %v7216 = vadd.f32 %v7150, 0.0
        %v7217 = vadd.f32 %v7151, 0.0
        %v7218 = vadd.f32 %v7152, 0.0
        %v7219 = vadd.f32 %v7153, 0.0
        %v7220 = vadd.f32 %v7154, 0.0
        %v7221 = vadd.f32 %v7155, 0.0
        %v7222 = vadd.f32 %v7156, 0.0
        %v7223 = vadd.f32 %v7157, 0.0
        %v7224 = vadd.f32 %v7160, 0.0
        %v7225 = vadd.f32 %v7161, 0.0
        %v7226 = vadd.f32 %v7162, 0.0
        %v7227 = vadd.f32 %v7163, 0.0
        %v7228 = vadd.f32 %v7164, 0.0
        %v7229 = vadd.f32 %v7165, 0.0
        %v7230 = vadd.f32 %v7166, 0.0
        %v7231 = vadd.f32 %v7167, 0.0
        %v7232 = vadd.f32 %v7168, 0.0
        %v7233 = vadd.f32 %v7169, 0.0
        %v7234 = vadd.f32 %v7170, 0.0
        %v7235 = vadd.f32 %v7171, 0.0
        %v7236 = vadd.f32 %v7172, 0.0
        %v7237 = vadd.f32 %v7173, 0.0
        %vm7296 = vcmask 1046528
        %v7297 = vrot.slane %v7143, 1
        %v7298 = vrot.slane %v7176, 1
        %v7299 = vsel %vm7296, %v7297, %v7298
        %v7300 = vrot.slane %v7144, 1
        %v7301 = vrot.slane %v7177, 1
        %v7302 = vsel %vm7296, %v7300, %v7301
        %v7303 = vrot.slane %v7145, 1
        %v7304 = vrot.slane %v7178, 1
        %v7305 = vsel %vm7296, %v7303, %v7304
        %v7306 = vrot.slane %v7146, 1
        %v7307 = vrot.slane %v7179, 1
        %v7308 = vsel %vm7296, %v7306, %v7307
        %v7309 = vrot.slane %v7147, 1
        %v7310 = vrot.slane %v7180, 1
        %v7311 = vsel %vm7296, %v7309, %v7310
        %v7312 = vrot.slane %v7148, 1
        %v7313 = vrot.slane %v7181, 1
        %v7314 = vsel %vm7296, %v7312, %v7313
        %v7315 = vrot.slane %v7149, 1
        %v7316 = vrot.slane %v7182, 1
        %v7317 = vsel %vm7296, %v7315, %v7316
        %v7318 = vrot.slane %v7150, 1
        %v7319 = vrot.slane %v7183, 1
        %v7320 = vsel %vm7296, %v7318, %v7319
        %v7321 = vrot.slane %v7151, 1
        %v7322 = vrot.slane %v7184, 1
        %v7323 = vsel %vm7296, %v7321, %v7322
        %v7324 = vrot.slane %v7152, 1
        %v7325 = vrot.slane %v7185, 1
        %v7326 = vsel %vm7296, %v7324, %v7325
        %v7327 = vrot.slane %v7153, 1
        %v7328 = vrot.slane %v7186, 1
        %v7329 = vsel %vm7296, %v7327, %v7328
        %v7330 = vrot.slane %v7154, 1
        %v7331 = vrot.slane %v7187, 1
        %v7332 = vsel %vm7296, %v7330, %v7331
        %v7333 = vrot.slane %v7155, 1
        %v7334 = vrot.slane %v7188, 1
        %v7335 = vsel %vm7296, %v7333, %v7334
        %v7336 = vrot.slane %v7156, 1
        %v7337 = vrot.slane %v7189, 1
        %v7338 = vsel %vm7296, %v7336, %v7337
        %v7339 = vrot.slane %v7157, 1
        %v7340 = vrot.slane %v7190, 1
        %v7341 = vsel %vm7296, %v7339, %v7340
        %v7342 = vrot.slane %v7160, 1
        %v7343 = vrot.slane %v7193, 1
        %v7344 = vsel %vm7296, %v7342, %v7343
        %v7345 = vrot.slane %v7161, 1
        %v7346 = vrot.slane %v7194, 1
        %v7347 = vsel %vm7296, %v7345, %v7346
        %v7348 = vrot.slane %v7162, 1
        %v7349 = vrot.slane %v7195, 1
        %v7350 = vsel %vm7296, %v7348, %v7349
        %v7351 = vrot.slane %v7163, 1
        %v7352 = vrot.slane %v7196, 1
        %v7353 = vsel %vm7296, %v7351, %v7352
        %v7354 = vrot.slane %v7164, 1
        %v7355 = vrot.slane %v7197, 1
        %v7356 = vsel %vm7296, %v7354, %v7355
        %v7357 = vrot.slane %v7165, 1
        %v7358 = vrot.slane %v7198, 1
        %v7359 = vsel %vm7296, %v7357, %v7358
        %v7360 = vrot.slane %v7166, 1
        %v7361 = vrot.slane %v7199, 1
        %v7362 = vsel %vm7296, %v7360, %v7361
        %v7363 = vrot.slane %v7167, 1
        %v7364 = vrot.slane %v7200, 1
        %v7365 = vsel %vm7296, %v7363, %v7364
        %v7366 = vrot.slane %v7168, 1
        %v7367 = vrot.slane %v7201, 1
        %v7368 = vsel %vm7296, %v7366, %v7367
        %v7369 = vrot.slane %v7169, 1
        %v7370 = vrot.slane %v7202, 1
        %v7371 = vsel %vm7296, %v7369, %v7370
        %v7372 = vrot.slane %v7170, 1
        %v7373 = vrot.slane %v7203, 1
        %v7374 = vsel %vm7296, %v7372, %v7373
        %v7375 = vrot.slane %v7171, 1
        %v7376 = vrot.slane %v7204, 1
        %v7377 = vsel %vm7296, %v7375, %v7376
        %v7378 = vrot.slane %v7172, 1
        %v7379 = vrot.slane %v7205, 1
        %v7380 = vsel %vm7296, %v7378, %v7379
        %v7381 = vrot.slane %v7173, 1
        %v7382 = vrot.slane %v7206, 1
        %v7383 = vsel %vm7296, %v7381, %v7382
        %v7413 = vadd.f32 %v7209, %v7299
        %v7414 = vadd.f32 %v7210, %v7302
        %v7415 = vadd.f32 %v7211, %v7305
        %v7416 = vadd.f32 %v7212, %v7308
        %v7417 = vadd.f32 %v7213, %v7311
        %v7418 = vadd.f32 %v7214, %v7314
        %v7419 = vadd.f32 %v7215, %v7317
        %v7420 = vadd.f32 %v7216, %v7320
        %v7421 = vadd.f32 %v7217, %v7323
        %v7422 = vadd.f32 %v7218, %v7326
        %v7423 = vadd.f32 %v7219, %v7329
        %v7424 = vadd.f32 %v7220, %v7332
        %v7425 = vadd.f32 %v7221, %v7335
        %v7426 = vadd.f32 %v7222, %v7338
        %v7427 = vadd.f32 %v7223, %v7341
        %v7428 = vadd.f32 %v7224, %v7344
        %v7429 = vadd.f32 %v7225, %v7347
        %v7430 = vadd.f32 %v7226, %v7350
        %v7431 = vadd.f32 %v7227, %v7353
        %v7432 = vadd.f32 %v7228, %v7356
        %v7433 = vadd.f32 %v7229, %v7359
        %v7434 = vadd.f32 %v7230, %v7362
        %v7435 = vadd.f32 %v7231, %v7365
        %v7436 = vadd.f32 %v7232, %v7368
        %v7437 = vadd.f32 %v7233, %v7371
        %v7438 = vadd.f32 %v7234, %v7374
        %v7439 = vadd.f32 %v7235, %v7377
        %v7440 = vadd.f32 %v7236, %v7380
        %v7441 = vadd.f32 %v7237, %v7383
        %vm7442 = vcmask 1045504
        %v7443 = vrot.slane %v7143, 2
        %v7444 = vrot.slane %v7176, 2
        %v7445 = vsel %vm7442, %v7443, %v7444
        %v7446 = vrot.slane %v7144, 2
        %v7447 = vrot.slane %v7177, 2
        %v7448 = vsel %vm7442, %v7446, %v7447
        %v7449 = vrot.slane %v7145, 2
        %v7450 = vrot.slane %v7178, 2
        %v7451 = vsel %vm7442, %v7449, %v7450
        %v7452 = vrot.slane %v7146, 2
        %v7453 = vrot.slane %v7179, 2
        %v7454 = vsel %vm7442, %v7452, %v7453
        %v7455 = vrot.slane %v7147, 2
        %v7456 = vrot.slane %v7180, 2
        %v7457 = vsel %vm7442, %v7455, %v7456
        %v7458 = vrot.slane %v7148, 2
        %v7459 = vrot.slane %v7181, 2
        %v7460 = vsel %vm7442, %v7458, %v7459
        %v7461 = vrot.slane %v7149, 2
        %v7462 = vrot.slane %v7182, 2
        %v7463 = vsel %vm7442, %v7461, %v7462
        %v7464 = vrot.slane %v7150, 2
        %v7465 = vrot.slane %v7183, 2
        %v7466 = vsel %vm7442, %v7464, %v7465
        %v7467 = vrot.slane %v7151, 2
        %v7468 = vrot.slane %v7184, 2
        %v7469 = vsel %vm7442, %v7467, %v7468
        %v7470 = vrot.slane %v7152, 2
        %v7471 = vrot.slane %v7185, 2
        %v7472 = vsel %vm7442, %v7470, %v7471
        %v7473 = vrot.slane %v7153, 2
        %v7474 = vrot.slane %v7186, 2
        %v7475 = vsel %vm7442, %v7473, %v7474
        %v7476 = vrot.slane %v7154, 2
        %v7477 = vrot.slane %v7187, 2
        %v7478 = vsel %vm7442, %v7476, %v7477
        %v7479 = vrot.slane %v7155, 2
        %v7480 = vrot.slane %v7188, 2
        %v7481 = vsel %vm7442, %v7479, %v7480
        %v7482 = vrot.slane %v7156, 2
        %v7483 = vrot.slane %v7189, 2
        %v7484 = vsel %vm7442, %v7482, %v7483
        %v7485 = vrot.slane %v7157, 2
        %v7486 = vrot.slane %v7190, 2
        %v7487 = vsel %vm7442, %v7485, %v7486
        %v7488 = vrot.slane %v7160, 2
        %v7489 = vrot.slane %v7193, 2
        %v7490 = vsel %vm7442, %v7488, %v7489
        %v7491 = vrot.slane %v7161, 2
        %v7492 = vrot.slane %v7194, 2
        %v7493 = vsel %vm7442, %v7491, %v7492
        %v7494 = vrot.slane %v7162, 2
        %v7495 = vrot.slane %v7195, 2
        %v7496 = vsel %vm7442, %v7494, %v7495
        %v7497 = vrot.slane %v7163, 2
        %v7498 = vrot.slane %v7196, 2
        %v7499 = vsel %vm7442, %v7497, %v7498
        %v7500 = vrot.slane %v7164, 2
        %v7501 = vrot.slane %v7197, 2
        %v7502 = vsel %vm7442, %v7500, %v7501
        %v7503 = vrot.slane %v7165, 2
        %v7504 = vrot.slane %v7198, 2
        %v7505 = vsel %vm7442, %v7503, %v7504
        %v7506 = vrot.slane %v7166, 2
        %v7507 = vrot.slane %v7199, 2
        %v7508 = vsel %vm7442, %v7506, %v7507
        %v7509 = vrot.slane %v7167, 2
        %v7510 = vrot.slane %v7200, 2
        %v7511 = vsel %vm7442, %v7509, %v7510
        %v7512 = vrot.slane %v7168, 2
        %v7513 = vrot.slane %v7201, 2
        %v7514 = vsel %vm7442, %v7512, %v7513
        %v7515 = vrot.slane %v7169, 2
        %v7516 = vrot.slane %v7202, 2
        %v7517 = vsel %vm7442, %v7515, %v7516
        %v7518 = vrot.slane %v7170, 2
        %v7519 = vrot.slane %v7203, 2
        %v7520 = vsel %vm7442, %v7518, %v7519
        %v7521 = vrot.slane %v7171, 2
        %v7522 = vrot.slane %v7204, 2
        %v7523 = vsel %vm7442, %v7521, %v7522
        %v7524 = vrot.slane %v7172, 2
        %v7525 = vrot.slane %v7205, 2
        %v7526 = vsel %vm7442, %v7524, %v7525
        %v7527 = vrot.slane %v7173, 2
        %v7528 = vrot.slane %v7206, 2
        %v7529 = vsel %vm7442, %v7527, %v7528
        %v7559 = vadd.f32 %v7413, %v7445
        %v7560 = vadd.f32 %v7414, %v7448
        %v7561 = vadd.f32 %v7415, %v7451
        %v7562 = vadd.f32 %v7416, %v7454
        %v7563 = vadd.f32 %v7417, %v7457
        %v7564 = vadd.f32 %v7418, %v7460
        %v7565 = vadd.f32 %v7419, %v7463
        %v7566 = vadd.f32 %v7420, %v7466
        %v7567 = vadd.f32 %v7421, %v7469
        %v7568 = vadd.f32 %v7422, %v7472
        %v7569 = vadd.f32 %v7423, %v7475
        %v7570 = vadd.f32 %v7424, %v7478
        %v7571 = vadd.f32 %v7425, %v7481
        %v7572 = vadd.f32 %v7426, %v7484
        %v7573 = vadd.f32 %v7427, %v7487
        %v7574 = vadd.f32 %v7428, %v7490
        %v7575 = vadd.f32 %v7429, %v7493
        %v7576 = vadd.f32 %v7430, %v7496
        %v7577 = vadd.f32 %v7431, %v7499
        %v7578 = vadd.f32 %v7432, %v7502
        %v7579 = vadd.f32 %v7433, %v7505
        %v7580 = vadd.f32 %v7434, %v7508
        %v7581 = vadd.f32 %v7435, %v7511
        %v7582 = vadd.f32 %v7436, %v7514
        %v7583 = vadd.f32 %v7437, %v7517
        %v7584 = vadd.f32 %v7438, %v7520
        %v7585 = vadd.f32 %v7439, %v7523
        %v7586 = vadd.f32 %v7440, %v7526
        %v7587 = vadd.f32 %v7441, %v7529
        %v7588 = vadd.f32 %v7559, %v7144
        %v7589 = vadd.f32 %v7559, %v7145
        %v7590 = vadd.f32 %v7560, %v7146
        %v7591 = vadd.f32 %v7561, %v7147
        %v7592 = vadd.f32 %v7562, %v7148
        %v7593 = vadd.f32 %v7563, %v7149
        %v7594 = vadd.f32 %v7564, %v7150
        %v7595 = vadd.f32 %v7565, %v7151
        %v7596 = vadd.f32 %v7566, %v7152
        %v7597 = vadd.f32 %v7567, %v7153
        %v7598 = vadd.f32 %v7568, %v7154
        %v7599 = vadd.f32 %v7569, %v7155
        %v7600 = vadd.f32 %v7570, %v7156
        %v7601 = vadd.f32 %v7571, %v7157
        %v7602 = vadd.f32 %v7572, %v7158
        %v7603 = vadd.f32 %v7573, %v7159
        %v7604 = vadd.f32 %v7559, %v7160
        %v7605 = vadd.f32 %v7559, %v7161
        %v7606 = vadd.f32 %v7574, %v7162
        %v7607 = vadd.f32 %v7575, %v7163
        %v7608 = vadd.f32 %v7576, %v7164
        %v7609 = vadd.f32 %v7577, %v7165
        %v7610 = vadd.f32 %v7578, %v7166
        %v7611 = vadd.f32 %v7579, %v7167
        %v7612 = vadd.f32 %v7580, %v7168
        %v7613 = vadd.f32 %v7581, %v7169
        %v7614 = vadd.f32 %v7582, %v7170
        %v7615 = vadd.f32 %v7583, %v7171
        %v7616 = vadd.f32 %v7584, %v7172
        %v7617 = vadd.f32 %v7585, %v7173
        %v7618 = vadd.f32 %v7586, %v7174
        %v7619 = vadd.f32 %v7587, %v7175
        %v7628 = vrot.slane %v7158, 1
        %v7629 = vrot.slane %v7191, 1
        %v7630 = vsel %vm7296, %v7628, %v7629
        %v7631 = vrot.slane %v7159, 1
        %v7632 = vrot.slane %v7192, 1
        %v7633 = vsel %vm7296, %v7631, %v7632
        %v7634 = vrot.slane %v7174, 1
        %v7635 = vrot.slane %v7207, 1
        %v7636 = vsel %vm7296, %v7634, %v7635
        %v7637 = vrot.slane %v7175, 1
        %v7638 = vrot.slane %v7208, 1
        %v7639 = vsel %vm7296, %v7637, %v7638
        %v7644 = vadd.f32 %v7588, %v7302
        %v7645 = vadd.f32 %v7589, %v7305
        %v7646 = vadd.f32 %v7590, %v7308
        %v7647 = vadd.f32 %v7591, %v7311
        %v7648 = vadd.f32 %v7592, %v7314
        %v7649 = vadd.f32 %v7593, %v7317
        %v7650 = vadd.f32 %v7594, %v7320
        %v7651 = vadd.f32 %v7595, %v7323
        %v7652 = vadd.f32 %v7596, %v7326
        %v7653 = vadd.f32 %v7597, %v7329
        %v7654 = vadd.f32 %v7598, %v7332
        %v7655 = vadd.f32 %v7599, %v7335
        %v7656 = vadd.f32 %v7600, %v7338
        %v7657 = vadd.f32 %v7601, %v7341
        %v7658 = vadd.f32 %v7602, %v7630
        %v7659 = vadd.f32 %v7603, %v7633
        %v7660 = vadd.f32 %v7604, %v7344
        %v7661 = vadd.f32 %v7605, %v7347
        %v7662 = vadd.f32 %v7606, %v7350
        %v7663 = vadd.f32 %v7607, %v7353
        %v7664 = vadd.f32 %v7608, %v7356
        %v7665 = vadd.f32 %v7609, %v7359
        %v7666 = vadd.f32 %v7610, %v7362
        %v7667 = vadd.f32 %v7611, %v7365
        %v7668 = vadd.f32 %v7612, %v7368
        %v7669 = vadd.f32 %v7613, %v7371
        %v7670 = vadd.f32 %v7614, %v7374
        %v7671 = vadd.f32 %v7615, %v7377
        %v7672 = vadd.f32 %v7616, %v7380
        %v7673 = vadd.f32 %v7617, %v7383
        %v7674 = vadd.f32 %v7618, %v7636
        %v7675 = vadd.f32 %v7619, %v7639
        %v7676 = vrot.slane %v7158, 2
        %v7677 = vrot.slane %v7191, 2
        %v7678 = vsel %vm7442, %v7676, %v7677
        %v7679 = vrot.slane %v7159, 2
        %v7680 = vrot.slane %v7192, 2
        %v7681 = vsel %vm7442, %v7679, %v7680
        %v7682 = vrot.slane %v7174, 2
        %v7683 = vrot.slane %v7207, 2
        %v7684 = vsel %vm7442, %v7682, %v7683
        %v7685 = vrot.slane %v7175, 2
        %v7686 = vrot.slane %v7208, 2
        %v7687 = vsel %vm7442, %v7685, %v7686
        %v7692 = vadd.f32 %v7644, %v7448
        %v7693 = vadd.f32 %v7645, %v7451
        %v7694 = vadd.f32 %v7646, %v7454
        %v7695 = vadd.f32 %v7647, %v7457
        %v7696 = vadd.f32 %v7648, %v7460
        %v7697 = vadd.f32 %v7649, %v7463
        %v7698 = vadd.f32 %v7650, %v7466
        %v7699 = vadd.f32 %v7651, %v7469
        %v7700 = vadd.f32 %v7652, %v7472
        %v7701 = vadd.f32 %v7653, %v7475
        %v7702 = vadd.f32 %v7654, %v7478
        %v7703 = vadd.f32 %v7655, %v7481
        %v7704 = vadd.f32 %v7656, %v7484
        %v7705 = vadd.f32 %v7657, %v7487
        %v7706 = vadd.f32 %v7658, %v7678
        %v7707 = vadd.f32 %v7659, %v7681
        %v7708 = vadd.f32 %v7660, %v7490
        %v7709 = vadd.f32 %v7661, %v7493
        %v7710 = vadd.f32 %v7662, %v7496
        %v7711 = vadd.f32 %v7663, %v7499
        %v7712 = vadd.f32 %v7664, %v7502
        %v7713 = vadd.f32 %v7665, %v7505
        %v7714 = vadd.f32 %v7666, %v7508
        %v7715 = vadd.f32 %v7667, %v7511
        %v7716 = vadd.f32 %v7668, %v7514
        %v7717 = vadd.f32 %v7669, %v7517
        %v7718 = vadd.f32 %v7670, %v7520
        %v7719 = vadd.f32 %v7671, %v7523
        %v7720 = vadd.f32 %v7672, %v7526
        %v7721 = vadd.f32 %v7673, %v7529
        %v7722 = vadd.f32 %v7674, %v7684
        %v7723 = vadd.f32 %v7675, %v7687
        %v7724 = vadd.f32 %v7692, %v7146
        %v7725 = vadd.f32 %v7693, %v7147
        %v7726 = vadd.f32 %v7694, %v7148
        %v7727 = vadd.f32 %v7695, %v7149
        %v7728 = vadd.f32 %v7696, %v7150
        %v7729 = vadd.f32 %v7697, %v7151
        %v7730 = vadd.f32 %v7698, %v7152
        %v7731 = vadd.f32 %v7699, %v7153
        %v7732 = vadd.f32 %v7700, %v7154
        %v7733 = vadd.f32 %v7701, %v7155
        %v7734 = vadd.f32 %v7702, %v7156
        %v7735 = vadd.f32 %v7703, %v7157
        %v7736 = vadd.f32 %v7704, %v7158
        %v7737 = vadd.f32 %v7705, %v7159
        %v7738 = vadd.f32 %v7706, %v7143
        %v7739 = vadd.f32 %v7707, %v7143
        %v7740 = vadd.f32 %v7708, %v7162
        %v7741 = vadd.f32 %v7709, %v7163
        %v7742 = vadd.f32 %v7710, %v7164
        %v7743 = vadd.f32 %v7711, %v7165
        %v7744 = vadd.f32 %v7712, %v7166
        %v7745 = vadd.f32 %v7713, %v7167
        %v7746 = vadd.f32 %v7714, %v7168
        %v7747 = vadd.f32 %v7715, %v7169
        %v7748 = vadd.f32 %v7716, %v7170
        %v7749 = vadd.f32 %v7717, %v7171
        %v7750 = vadd.f32 %v7718, %v7172
        %v7751 = vadd.f32 %v7719, %v7173
        %v7752 = vadd.f32 %v7720, %v7174
        %v7753 = vadd.f32 %v7721, %v7175
        %v7754 = vadd.f32 %v7722, %v7143
        %v7755 = vadd.f32 %v7723, %v7143
        %v7756 = vadd.f32 %v7724, %v7308
        %v7757 = vadd.f32 %v7725, %v7311
        %v7758 = vadd.f32 %v7726, %v7314
        %v7759 = vadd.f32 %v7727, %v7317
        %v7760 = vadd.f32 %v7728, %v7320
        %v7761 = vadd.f32 %v7729, %v7323
        %v7762 = vadd.f32 %v7730, %v7326
        %v7763 = vadd.f32 %v7731, %v7329
        %v7764 = vadd.f32 %v7732, %v7332
        %v7765 = vadd.f32 %v7733, %v7335
        %v7766 = vadd.f32 %v7734, %v7338
        %v7767 = vadd.f32 %v7735, %v7341
        %v7768 = vadd.f32 %v7736, %v7630
        %v7769 = vadd.f32 %v7737, %v7633
        %v7770 = vadd.f32 %v7738, %v7299
        %v7771 = vadd.f32 %v7739, %v7299
        %v7772 = vadd.f32 %v7740, %v7350
        %v7773 = vadd.f32 %v7741, %v7353
        %v7774 = vadd.f32 %v7742, %v7356
        %v7775 = vadd.f32 %v7743, %v7359
        %v7776 = vadd.f32 %v7744, %v7362
        %v7777 = vadd.f32 %v7745, %v7365
        %v7778 = vadd.f32 %v7746, %v7368
        %v7779 = vadd.f32 %v7747, %v7371
        %v7780 = vadd.f32 %v7748, %v7374
        %v7781 = vadd.f32 %v7749, %v7377
        %v7782 = vadd.f32 %v7750, %v7380
        %v7783 = vadd.f32 %v7751, %v7383
        %v7784 = vadd.f32 %v7752, %v7636
        %v7785 = vadd.f32 %v7753, %v7639
        %v7786 = vadd.f32 %v7754, %v7299
        %v7787 = vadd.f32 %v7755, %v7299
        %v7788 = vadd.f32 %v7756, %v7454
        %v7789 = vadd.f32 %v7757, %v7457
        %v7790 = vadd.f32 %v7758, %v7460
        %v7791 = vadd.f32 %v7759, %v7463
        %v7792 = vadd.f32 %v7760, %v7466
        %v7793 = vadd.f32 %v7761, %v7469
        %v7794 = vadd.f32 %v7762, %v7472
        %v7795 = vadd.f32 %v7763, %v7475
        %v7796 = vadd.f32 %v7764, %v7478
        %v7797 = vadd.f32 %v7765, %v7481
        %v7798 = vadd.f32 %v7766, %v7484
        %v7799 = vadd.f32 %v7767, %v7487
        %v7800 = vadd.f32 %v7768, %v7678
        %v7801 = vadd.f32 %v7769, %v7681
        %v7802 = vadd.f32 %v7770, %v7445
        %v7803 = vadd.f32 %v7771, %v7445
        %v7804 = vadd.f32 %v7772, %v7496
        %v7805 = vadd.f32 %v7773, %v7499
        %v7806 = vadd.f32 %v7774, %v7502
        %v7807 = vadd.f32 %v7775, %v7505
        %v7808 = vadd.f32 %v7776, %v7508
        %v7809 = vadd.f32 %v7777, %v7511
        %v7810 = vadd.f32 %v7778, %v7514
        %v7811 = vadd.f32 %v7779, %v7517
        %v7812 = vadd.f32 %v7780, %v7520
        %v7813 = vadd.f32 %v7781, %v7523
        %v7814 = vadd.f32 %v7782, %v7526
        %v7815 = vadd.f32 %v7783, %v7529
        %v7816 = vadd.f32 %v7784, %v7684
        %v7817 = vadd.f32 %v7785, %v7687
        %v7818 = vadd.f32 %v7786, %v7445
        %v7819 = vadd.f32 %v7787, %v7445
        %v7820 = vmul.f32 %v7788, 0.11111111
        %v7821 = vmul.f32 %v7789, 0.11111111
        %v7822 = vmul.f32 %v7790, 0.11111111
        %v7823 = vmul.f32 %v7791, 0.11111111
        %v7824 = vmul.f32 %v7792, 0.11111111
        %v7825 = vmul.f32 %v7793, 0.11111111
        %v7826 = vmul.f32 %v7794, 0.11111111
        %v7827 = vmul.f32 %v7795, 0.11111111
        %v7828 = vmul.f32 %v7796, 0.11111111
        %v7829 = vmul.f32 %v7797, 0.11111111
        %v7830 = vmul.f32 %v7798, 0.11111111
        %v7831 = vmul.f32 %v7799, 0.11111111
        %v7832 = vmul.f32 %v7800, 0.11111111
        %v7833 = vmul.f32 %v7801, 0.11111111
        %v7834 = vmul.f32 %v7802, 0.11111111
        %v7835 = vmul.f32 %v7803, 0.11111111
        %v7836 = vmul.f32 %v7804, 0.11111111
        %v7837 = vmul.f32 %v7805, 0.11111111
        %v7838 = vmul.f32 %v7806, 0.11111111
        %v7839 = vmul.f32 %v7807, 0.11111111
        %v7840 = vmul.f32 %v7808, 0.11111111
        %v7841 = vmul.f32 %v7809, 0.11111111
        %v7842 = vmul.f32 %v7810, 0.11111111
        %v7843 = vmul.f32 %v7811, 0.11111111
        %v7844 = vmul.f32 %v7812, 0.11111111
        %v7845 = vmul.f32 %v7813, 0.11111111
        %v7846 = vmul.f32 %v7814, 0.11111111
        %v7847 = vmul.f32 %v7815, 0.11111111
        %v7848 = vmul.f32 %v7816, 0.11111111
        %v7849 = vmul.f32 %v7817, 0.11111111
        %v7850 = vmul.f32 %v7818, 0.11111111
        %v7851 = vmul.f32 %v7819, 0.11111111
        %v7852 = vld [vmem:[%s3] sm:$0x3]
        %v7854 = vlaneseq
        %v7855 = vshrl.u32 %v7854, 7
        %v7856 = vsub.s32 0, %v7855
        %v7857 = vrot.slane %v7852, %v7856
        %v7858 = vlaneseq
        %v7859 = vshrl.u32 %v7858, 7
        %v7860 = vsub.s32 1, %v7859
        %v7861 = vrot.slane %v7852, %v7860
        %v7864 = vadd.f32 %v7820, %v7857
        %v7865 = vadd.f32 %v7821, %v7861
        %v7866 = vadd.f32 %v7822, %v7857
        %v7867 = vadd.f32 %v7823, %v7861
        %v7868 = vadd.f32 %v7824, %v7857
        %v7869 = vadd.f32 %v7825, %v7861
        %v7870 = vadd.f32 %v7826, %v7857
        %v7871 = vadd.f32 %v7827, %v7861
        %v7872 = vadd.f32 %v7828, %v7857
        %v7873 = vadd.f32 %v7829, %v7861
        %v7874 = vadd.f32 %v7830, %v7857
        %v7875 = vadd.f32 %v7831, %v7861
        %v7876 = vadd.f32 %v7832, %v7857
        %v7877 = vadd.f32 %v7833, %v7861
        %v7878 = vadd.f32 %v7834, %v7857
        %v7879 = vadd.f32 %v7835, %v7861
        %v7880 = vadd.f32 %v7836, %v7857
        %v7881 = vadd.f32 %v7837, %v7861
        %v7882 = vadd.f32 %v7838, %v7857
        %v7883 = vadd.f32 %v7839, %v7861
        %v7884 = vadd.f32 %v7840, %v7857
        %v7885 = vadd.f32 %v7841, %v7861
        %v7886 = vadd.f32 %v7842, %v7857
        %v7887 = vadd.f32 %v7843, %v7861
        %v7888 = vadd.f32 %v7844, %v7857
        %v7889 = vadd.f32 %v7845, %v7861
        %v7890 = vadd.f32 %v7846, %v7857
        %v7891 = vadd.f32 %v7847, %v7861
        %v7892 = vadd.f32 %v7848, %v7857
        %v7893 = vadd.f32 %v7849, %v7861
        %v7894 = vadd.f32 %v7850, %v7857
        %v7895 = vadd.f32 %v7851, %v7861
        %v7896 = vmax.f32 %v7864, 0.0
        %v7897 = vmax.f32 %v7865, 0.0
        %v7898 = vmax.f32 %v7866, 0.0
        %v7899 = vmax.f32 %v7867, 0.0
        %v7900 = vmax.f32 %v7868, 0.0
        %v7901 = vmax.f32 %v7869, 0.0
        %v7902 = vmax.f32 %v7870, 0.0
        %v7903 = vmax.f32 %v7871, 0.0
        %v7904 = vmax.f32 %v7872, 0.0
        %v7905 = vmax.f32 %v7873, 0.0
        %v7906 = vmax.f32 %v7874, 0.0
        %v7907 = vmax.f32 %v7875, 0.0
        %v7908 = vmax.f32 %v7876, 0.0
        %v7909 = vmax.f32 %v7877, 0.0
        %v7910 = vmax.f32 %v7878, 0.0
        %v7911 = vmax.f32 %v7879, 0.0
        %v7912 = vmax.f32 %v7880, 0.0
        %v7913 = vmax.f32 %v7881, 0.0
        %v7914 = vmax.f32 %v7882, 0.0
        %v7915 = vmax.f32 %v7883, 0.0
        %v7916 = vmax.f32 %v7884, 0.0
        %v7917 = vmax.f32 %v7885, 0.0
        %v7918 = vmax.f32 %v7886, 0.0
        %v7919 = vmax.f32 %v7887, 0.0
        %v7920 = vmax.f32 %v7888, 0.0
        %v7921 = vmax.f32 %v7889, 0.0
        %v7922 = vmax.f32 %v7890, 0.0
        %v7923 = vmax.f32 %v7891, 0.0
        %v7924 = vmax.f32 %v7892, 0.0
        %v7925 = vmax.f32 %v7893, 0.0
        %v7926 = vmax.f32 %v7894, 0.0
        %v7927 = vmax.f32 %v7895, 0.0
        %7960 = vrot.lane.b32.xlu0 %v2953, 64
        %v7961 = vpop.permute.xlu0 %7960
        %7962 = vrot.lane.b32.xlu0 %v2954, 64
        %v7963 = vpop.permute.xlu0 %7962
        %7964 = vrot.lane.b32.xlu0 %v2955, 64
        %v7965 = vpop.permute.xlu0 %7964
        %7966 = vrot.lane.b32.xlu0 %v2956, 64
        %v7967 = vpop.permute.xlu0 %7966
        %7968 = vrot.lane.b32.xlu0 %v2957, 64
        %v7969 = vpop.permute.xlu0 %7968
        %7970 = vrot.lane.b32.xlu0 %v2958, 64
        %v7971 = vpop.permute.xlu0 %7970
        %7972 = vrot.lane.b32.xlu0 %v2959, 64
        %v7973 = vpop.permute.xlu0 %7972
        %7974 = vrot.lane.b32.xlu0 %v2960, 64
        %v7975 = vpop.permute.xlu0 %7974
        %7976 = vrot.lane.b32.xlu0 %v2961, 64
        %v7977 = vpop.permute.xlu0 %7976
        %7978 = vrot.lane.b32.xlu0 %v2962, 64
        %v7979 = vpop.permute.xlu0 %7978
        %7980 = vrot.lane.b32.xlu0 %v2963, 64
        %v7981 = vpop.permute.xlu0 %7980
        %7982 = vrot.lane.b32.xlu0 %v2964, 64
        %v7983 = vpop.permute.xlu0 %7982
        %7984 = vrot.lane.b32.xlu0 %v2965, 64
        %v7985 = vpop.permute.xlu0 %7984
        %7986 = vrot.lane.b32.xlu0 %v2966, 64
        %v7987 = vpop.permute.xlu0 %7986
        %7988 = vrot.lane.b32.xlu0 %v2967, 64
        %v7989 = vpop.permute.xlu0 %7988
        %7990 = vrot.lane.b32.xlu0 %v2968, 64
        %v7991 = vpop.permute.xlu0 %7990
        %7992 = vrot.lane.b32.xlu0 %v2969, 64
        %v7993 = vpop.permute.xlu0 %7992
        %7994 = vrot.lane.b32.xlu0 %v2970, 64
        %v7995 = vpop.permute.xlu0 %7994
        %7996 = vrot.lane.b32.xlu0 %v2971, 64
        %v7997 = vpop.permute.xlu0 %7996
        %7998 = vrot.lane.b32.xlu0 %v2972, 64
        %v7999 = vpop.permute.xlu0 %7998
        %8000 = vrot.lane.b32.xlu0 %v2973, 64
        %v8001 = vpop.permute.xlu0 %8000
        %8002 = vrot.lane.b32.xlu0 %v2974, 64
        %v8003 = vpop.permute.xlu0 %8002
        %8004 = vrot.lane.b32.xlu0 %v2975, 64
        %v8005 = vpop.permute.xlu0 %8004
        %8006 = vrot.lane.b32.xlu0 %v2976, 64
        %v8007 = vpop.permute.xlu0 %8006
        %8008 = vrot.lane.b32.xlu0 %v2977, 64
        %v8009 = vpop.permute.xlu0 %8008
        %8010 = vrot.lane.b32.xlu0 %v2978, 64
        %v8011 = vpop.permute.xlu0 %8010
        %8012 = vrot.lane.b32.xlu0 %v2979, 64
        %v8013 = vpop.permute.xlu0 %8012
        %8014 = vrot.lane.b32.xlu0 %v2980, 64
        %v8015 = vpop.permute.xlu0 %8014
        %8016 = vrot.lane.b32.xlu0 %v2981, 64
        %v8017 = vpop.permute.xlu0 %8016
        %8018 = vrot.lane.b32.xlu0 %v2982, 64
        %v8019 = vpop.permute.xlu0 %8018
        %8020 = vrot.lane.b32.xlu0 %v2983, 64
        %v8021 = vpop.permute.xlu0 %8020
        %8022 = vrot.lane.b32.xlu0 %v2984, 64
        %v8023 = vpop.permute.xlu0 %8022
        %vm8024 = vcmask 523264
        %v8025 = vsel %vm8024, %v7961, %v7963
        %v8026 = vsel %vm8024, %v7965, %v7967
        %v8027 = vsel %vm8024, %v7969, %v7971
        %v8028 = vsel %vm8024, %v7973, %v7975
        %v8029 = vsel %vm8024, %v7977, %v7979
        %v8030 = vsel %vm8024, %v7981, %v7983
        %v8031 = vsel %vm8024, %v7985, %v7987
        %v8032 = vsel %vm8024, %v7989, %v7991
        %v8033 = vsel %vm8024, %v7993, %v7995
        %v8034 = vsel %vm8024, %v7997, %v7999
        %v8035 = vsel %vm8024, %v8001, %v8003
        %v8036 = vsel %vm8024, %v8005, %v8007
        %v8037 = vsel %vm8024, %v8009, %v8011
        %v8038 = vsel %vm8024, %v8013, %v8015
        %v8039 = vsel %vm8024, %v8017, %v8019
        %v8040 = vsel %vm8024, %v8021, %v8023
        %8105 = vrot.lane.b32.xlu0 %v7896, 64
        %v8106 = vpop.permute.xlu0 %8105
        %8107 = vrot.lane.b32.xlu0 %v7897, 64
        %v8108 = vpop.permute.xlu0 %8107
        %8109 = vrot.lane.b32.xlu0 %v7898, 64
        %v8110 = vpop.permute.xlu0 %8109
        %8111 = vrot.lane.b32.xlu0 %v7899, 64
        %v8112 = vpop.permute.xlu0 %8111
        %8113 = vrot.lane.b32.xlu0 %v7900, 64
        %v8114 = vpop.permute.xlu0 %8113
        %8115 = vrot.lane.b32.xlu0 %v7901, 64
        %v8116 = vpop.permute.xlu0 %8115
        %8117 = vrot.lane.b32.xlu0 %v7902, 64
        %v8118 = vpop.permute.xlu0 %8117
        %8119 = vrot.lane.b32.xlu0 %v7903, 64
        %v8120 = vpop.permute.xlu0 %8119
        %8121 = vrot.lane.b32.xlu0 %v7904, 64
        %v8122 = vpop.permute.xlu0 %8121
        %8123 = vrot.lane.b32.xlu0 %v7905, 64
        %v8124 = vpop.permute.xlu0 %8123
        %8125 = vrot.lane.b32.xlu0 %v7906, 64
        %v8126 = vpop.permute.xlu0 %8125
        %8127 = vrot.lane.b32.xlu0 %v7907, 64
        %v8128 = vpop.permute.xlu0 %8127
        %8129 = vrot.lane.b32.xlu0 %v7908, 64
        %v8130 = vpop.permute.xlu0 %8129
        %8131 = vrot.lane.b32.xlu0 %v7909, 64
        %v8132 = vpop.permute.xlu0 %8131
        %8133 = vrot.lane.b32.xlu0 %v7910, 64
        %v8134 = vpop.permute.xlu0 %8133
        %8135 = vrot.lane.b32.xlu0 %v7911, 64
        %v8136 = vpop.permute.xlu0 %8135
        %8137 = vrot.lane.b32.xlu0 %v7912, 64
        %v8138 = vpop.permute.xlu0 %8137
        %8139 = vrot.lane.b32.xlu0 %v7913, 64
        %v8140 = vpop.permute.xlu0 %8139
        %8141 = vrot.lane.b32.xlu0 %v7914, 64
        %v8142 = vpop.permute.xlu0 %8141
        %8143 = vrot.lane.b32.xlu0 %v7915, 64
        %v8144 = vpop.permute.xlu0 %8143
        %8145 = vrot.lane.b32.xlu0 %v7916, 64
        %v8146 = vpop.permute.xlu0 %8145
        %8147 = vrot.lane.b32.xlu0 %v7917, 64
        %v8148 = vpop.permute.xlu0 %8147
        %8149 = vrot.lane.b32.xlu0 %v7918, 64
        %v8150 = vpop.permute.xlu0 %8149
        %8151 = vrot.lane.b32.xlu0 %v7919, 64
        %v8152 = vpop.permute.xlu0 %8151
        %8153 = vrot.lane.b32.xlu0 %v7920, 64
        %v8154 = vpop.permute.xlu0 %8153
        %8155 = vrot.lane.b32.xlu0 %v7921, 64
        %v8156 = vpop.permute.xlu0 %8155
        %8157 = vrot.lane.b32.xlu0 %v7922, 64
        %v8158 = vpop.permute.xlu0 %8157
        %8159 = vrot.lane.b32.xlu0 %v7923, 64
        %v8160 = vpop.permute.xlu0 %8159
        %8161 = vrot.lane.b32.xlu0 %v7924, 64
        %v8162 = vpop.permute.xlu0 %8161
        %8163 = vrot.lane.b32.xlu0 %v7925, 64
        %v8164 = vpop.permute.xlu0 %8163
        %8165 = vrot.lane.b32.xlu0 %v7926, 64
        %v8166 = vpop.permute.xlu0 %8165
        %8167 = vrot.lane.b32.xlu0 %v7927, 64
        %v8168 = vpop.permute.xlu0 %8167
        %v8169 = vsel %vm8024, %v8106, %v8108
        %v8170 = vsel %vm8024, %v8110, %v8112
        %v8171 = vsel %vm8024, %v8114, %v8116
        %v8172 = vsel %vm8024, %v8118, %v8120
        %v8173 = vsel %vm8024, %v8122, %v8124
        %v8174 = vsel %vm8024, %v8126, %v8128
        %v8175 = vsel %vm8024, %v8130, %v8132
        %v8176 = vsel %vm8024, %v8134, %v8136
        %v8177 = vsel %vm8024, %v8138, %v8140
        %v8178 = vsel %vm8024, %v8142, %v8144
        %v8179 = vsel %vm8024, %v8146, %v8148
        %v8180 = vsel %vm8024, %v8150, %v8152
        %v8181 = vsel %vm8024, %v8154, %v8156
        %v8182 = vsel %vm8024, %v8158, %v8160
        %v8183 = vsel %vm8024, %v8162, %v8164
        %v8184 = vsel %vm8024, %v8166, %v8168
        %v8217 = vsel %vm8024, %v903, %v7961
        %v8218 = vsel %vm8024, %v905, %v7965
        %v8219 = vsel %vm8024, %v907, %v7969
        %v8220 = vsel %vm8024, %v909, %v7973
        %v8221 = vsel %vm8024, %v911, %v7977
        %v8222 = vsel %vm8024, %v913, %v7981
        %v8223 = vsel %vm8024, %v915, %v7985
        %v8224 = vsel %vm8024, %v917, %v7989
        %v8225 = vsel %vm8024, %v919, %v7993
        %v8226 = vsel %vm8024, %v921, %v7997
        %v8227 = vsel %vm8024, %v923, %v8001
        %v8228 = vsel %vm8024, %v925, %v8005
        %v8229 = vsel %vm8024, %v927, %v8009
        %v8230 = vsel %vm8024, %v929, %v8013
        %v8231 = vsel %vm8024, %v931, %v8017
        %v8232 = vsel %vm8024, %v933, %v8021
        %v8233 = vsel %vm8024, %v6868, %v8106
        %v8234 = vsel %vm8024, %v6870, %v8110
        %v8235 = vsel %vm8024, %v6872, %v8114
        %v8236 = vsel %vm8024, %v6874, %v8118
        %v8237 = vsel %vm8024, %v6876, %v8122
        %v8238 = vsel %vm8024, %v6878, %v8126
        %v8239 = vsel %vm8024, %v6880, %v8130
        %v8240 = vsel %vm8024, %v6882, %v8134
        %v8241 = vsel %vm8024, %v6884, %v8138
        %v8242 = vsel %vm8024, %v6886, %v8142
        %v8243 = vsel %vm8024, %v6888, %v8146
        %v8244 = vsel %vm8024, %v6890, %v8150
        %v8245 = vsel %vm8024, %v6892, %v8154
        %v8246 = vsel %vm8024, %v6894, %v8158
        %v8247 = vsel %vm8024, %v6896, %v8162
        %v8248 = vsel %vm8024, %v6898, %v8166
        %8249 = vst [vmem:[%s517] sm:$0xff] %v902
        %8250 = vst [vmem:[%s517 + $0x8] sm:$0xff] %v8217
        %8251 = vst [vmem:[%s517 + $0x10] sm:$0xff] %v8025
        %8252 = vst [vmem:[%s517 + $0x18] sm:$0xff] %v6867
        %8253 = vst [vmem:[%s517 + $0x20] sm:$0xff] %v8233
        %8254 = vst [vmem:[%s517 + $0x28] sm:$0xff] %v8169
        %8255 = vst [vmem:[%s517 + $0x30] sm:$0xff] %v904
        %8256 = vst [vmem:[%s517 + $0x38] sm:$0xff] %v8218
        %8257 = vst [vmem:[%s517 + $0x40] sm:$0xff] %v8026
        %8258 = vst [vmem:[%s517 + $0x48] sm:$0xff] %v6869
        %8259 = vst [vmem:[%s517 + $0x50] sm:$0xff] %v8234
        %8260 = vst [vmem:[%s517 + $0x58] sm:$0xff] %v8170
        %8261 = vst [vmem:[%s517 + $0x60] sm:$0xff] %v906
        %8262 = vst [vmem:[%s517 + $0x68] sm:$0xff] %v8219
        %8263 = vst [vmem:[%s517 + $0x70] sm:$0xff] %v8027
        %8264 = vst [vmem:[%s517 + $0x78] sm:$0xff] %v6871
        %8265 = vst [vmem:[%s517 + $0x80] sm:$0xff] %v8235
        %8266 = vst [vmem:[%s517 + $0x88] sm:$0xff] %v8171
        %8267 = vst [vmem:[%s517 + $0x90] sm:$0xff] %v908
        %8268 = vst [vmem:[%s517 + $0x98] sm:$0xff] %v8220
        %8269 = vst [vmem:[%s517 + $0xa0] sm:$0xff] %v8028
        %8270 = vst [vmem:[%s517 + $0xa8] sm:$0xff] %v6873
        %8271 = vst [vmem:[%s517 + $0xb0] sm:$0xff] %v8236
        %8272 = vst [vmem:[%s517 + $0xb8] sm:$0xff] %v8172
        %8273 = vst [vmem:[%s517 + $0xc0] sm:$0xff] %v910
        %8274 = vst [vmem:[%s517 + $0xc8] sm:$0xff] %v8221
        %8275 = vst [vmem:[%s517 + $0xd0] sm:$0xff] %v8029
        %8276 = vst [vmem:[%s517 + $0xd8] sm:$0xff] %v6875
        %8277 = vst [vmem:[%s517 + $0xe0] sm:$0xff] %v8237
        %8278 = vst [vmem:[%s517 + $0xe8] sm:$0xff] %v8173
        %8279 = vst [vmem:[%s517 + $0xf0] sm:$0xff] %v912
        %8280 = vst [vmem:[%s517 + $0xf8] sm:$0xff] %v8222
        %8281 = vst [vmem:[%s517 + $0x100] sm:$0xff] %v8030
        %8282 = vst [vmem:[%s517 + $0x108] sm:$0xff] %v6877
        %8283 = vst [vmem:[%s517 + $0x110] sm:$0xff] %v8238
        %8284 = vst [vmem:[%s517 + $0x118] sm:$0xff] %v8174
        %8285 = vst [vmem:[%s517 + $0x120] sm:$0xff] %v914
        %8286 = vst [vmem:[%s517 + $0x128] sm:$0xff] %v8223
        %8287 = vst [vmem:[%s517 + $0x130] sm:$0xff] %v8031
        %8288 = vst [vmem:[%s517 + $0x138] sm:$0xff] %v6879
        %8289 = vst [vmem:[%s517 + $0x140] sm:$0xff] %v8239
        %8290 = vst [vmem:[%s517 + $0x148] sm:$0xff] %v8175
        %8291 = vst [vmem:[%s517 + $0x150] sm:$0xff] %v916
        %8292 = vst [vmem:[%s517 + $0x158] sm:$0xff] %v8224
        %8293 = vst [vmem:[%s517 + $0x160] sm:$0xff] %v8032
        %8294 = vst [vmem:[%s517 + $0x168] sm:$0xff] %v6881
        %8295 = vst [vmem:[%s517 + $0x170] sm:$0xff] %v8240
        %8296 = vst [vmem:[%s517 + $0x178] sm:$0xff] %v8176
        %8297 = vst [vmem:[%s517 + $0x180] sm:$0xff] %v918
        %8298 = vst [vmem:[%s517 + $0x188] sm:$0xff] %v8225
        %8299 = vst [vmem:[%s517 + $0x190] sm:$0xff] %v8033
        %8300 = vst [vmem:[%s517 + $0x198] sm:$0xff] %v6883
        %8301 = vst [vmem:[%s517 + $0x1a0] sm:$0xff] %v8241
        %8302 = vst [vmem:[%s517 + $0x1a8] sm:$0xff] %v8177
        %8303 = vst [vmem:[%s517 + $0x1b0] sm:$0xff] %v920
        %8304 = vst [vmem:[%s517 + $0x1b8] sm:$0xff] %v8226
        %8305 = vst [vmem:[%s517 + $0x1c0] sm:$0xff] %v8034
        %8306 = vst [vmem:[%s517 + $0x1c8] sm:$0xff] %v6885
        %8307 = vst [vmem:[%s517 + $0x1d0] sm:$0xff] %v8242
        %8308 = vst [vmem:[%s517 + $0x1d8] sm:$0xff] %v8178
        %8309 = vst [vmem:[%s517 + $0x1e0] sm:$0xff] %v922
        %8310 = vst [vmem:[%s517 + $0x1e8] sm:$0xff] %v8227
        %8311 = vst [vmem:[%s517 + $0x1f0] sm:$0xff] %v8035
        %8312 = vst [vmem:[%s517 + $0x1f8] sm:$0xff] %v6887
        %8313 = vst [vmem:[%s517 + $0x200] sm:$0xff] %v8243
        %8314 = vst [vmem:[%s517 + $0x208] sm:$0xff] %v8179
        %8315 = vst [vmem:[%s517 + $0x210] sm:$0xff] %v924
        %8316 = vst [vmem:[%s517 + $0x218] sm:$0xff] %v8228
        %8317 = vst [vmem:[%s517 + $0x220] sm:$0xff] %v8036
        %8318 = vst [vmem:[%s517 + $0x228] sm:$0xff] %v6889
        %8319 = vst [vmem:[%s517 + $0x230] sm:$0xff] %v8244
        %8320 = vst [vmem:[%s517 + $0x238] sm:$0xff] %v8180
        %8321 = vst [vmem:[%s517 + $0x240] sm:$0xff] %v926
        %8322 = vst [vmem:[%s517 + $0x248] sm:$0xff] %v8229
        %8323 = vst [vmem:[%s517 + $0x250] sm:$0xff] %v8037
        %8324 = vst [vmem:[%s517 + $0x258] sm:$0xff] %v6891
        %8325 = vst [vmem:[%s517 + $0x260] sm:$0xff] %v8245
        %8326 = vst [vmem:[%s517 + $0x268] sm:$0xff] %v8181
        %8327 = vst [vmem:[%s517 + $0x270] sm:$0xff] %v928
        %8328 = vst [vmem:[%s517 + $0x278] sm:$0xff] %v8230
        %8329 = vst [vmem:[%s517 + $0x280] sm:$0xff] %v8038
        %8330 = vst [vmem:[%s517 + $0x288] sm:$0xff] %v6893
        %8331 = vst [vmem:[%s517 + $0x290] sm:$0xff] %v8246
        %8332 = vst [vmem:[%s517 + $0x298] sm:$0xff] %v8182
        %8333 = vst [vmem:[%s517 + $0x2a0] sm:$0xff] %v930
        %8334 = vst [vmem:[%s517 + $0x2a8] sm:$0xff] %v8231
        %8335 = vst [vmem:[%s517 + $0x2b0] sm:$0xff] %v8039
        %8336 = vst [vmem:[%s517 + $0x2b8] sm:$0xff] %v6895
        %8337 = vst [vmem:[%s517 + $0x2c0] sm:$0xff] %v8247
        %8338 = vst [vmem:[%s517 + $0x2c8] sm:$0xff] %v8183
        %8339 = vst [vmem:[%s517 + $0x2d0] sm:$0xff] %v932
        %8340 = vst [vmem:[%s517 + $0x2d8] sm:$0xff] %v8232
        %8341 = vst [vmem:[%s517 + $0x2e0] sm:$0xff] %v8040
        %8342 = vst [vmem:[%s517 + $0x2e8] sm:$0xff] %v6897
        %8343 = vst [vmem:[%s517 + $0x2f0] sm:$0xff] %v8248
        %8344 = vst [vmem:[%s517 + $0x2f8] sm:$0xff] %v8184
        %s8345 = sand.u32 %s379, 1
        %s8346 = scalar_lea.sflag [#allocation3], %s8345
        %s8347 = sand.u32 %s379, 1
        %s8348 = smul.addr %s8347, 768
        %s8349 = scalar_lea.vmem [#allocation2], %s8348
        // Predicated region
        $region85: #{inception_c_forward.1} parent=83 // pred_check
          %p8350 = pneg %p389
        $region86: #{inception_c_forward.1} parent=83 // pred_check_branch
          %8352 = sbr.rel (%p8350) target = $region88
        $region87: #{inception_c_forward.1} parent=83 // pred_region
          %s8353 = smul.u32 2, %s30
          %s8355 = ssub.s32 12288, 12288
          %8356 = vsyncadd %s8346, %s8355
          %s8357 = smul.addr %s8353, 48
          %s8358 = smul.addr %s8357, 128
          %s8359 = scalar_lea.hbm %s16, %s8358
          %s8360 = sshll.u32 %s8349, 4
          %s8361 = int_to_ptr.vmem [resolvable:$true] %s8360
          %8366 = dma.vmem_to_hbm [thread:$0]  %s8361, 12288, %s8359, %s8346, 768, 768, 48
        $region88: #{inception_c_forward.1} parent=83 // pred_fallthru
          _
      $region84: #{inception_c_forward.1} parent=5 // pred_fallthru
        _
      %p8367 = scmp.le.s32.totalorder 2, %s25
      // Predicated region
      $region89: #{inception_c_forward.1} parent=5 // pred_check
        %p8368 = pneg %p8367
      $region90: #{inception_c_forward.1} parent=5 // pred_check_branch
        %8370 = sbr.rel (%p8368) target = $region92
      $region91: #{inception_c_forward.1} parent=5 // pred_region
        %s8371 = ssub.s32 %s25, 2
        // Predicated region
        $region93: #{inception_c_forward.1} parent=91 // pred_check
          %p8372 = pneg %p395
        $region94: #{inception_c_forward.1} parent=91 // pred_check_branch
          %8374 = sbr.rel (%p8372) target = $region96
        $region95: #{inception_c_forward.1} parent=91 // pred_region
          %s8375 = sand.u32 %s380, 1
          %s8376 = scalar_lea.sflag [#allocation3], %s8375
          %s8377 = sand.u32 %s380, 1
          %s8378 = smul.addr %s8377, 768
          %s8379 = scalar_lea.vmem [#allocation2], %s8378
          %8380 = dma.done %s8376, 12288
        $region96: #{inception_c_forward.1} parent=91 // pred_fallthru
          _
      $region92: #{inception_c_forward.1} parent=5 // pred_fallthru
        _
    $region6: #{inception_c_forward.1} parent=1 // loop_footer
      %s29 = sadd.s32 1, %s25
    $region7: #{inception_c_forward.1} parent=1 // loop_footer_branch
      %24 = sbr.rel target = $region3
    $region8: #{inception_c_forward.1} parent=1 // loop_exit
      _
    %8381 = vsyncpa [#allocation3], 1
    %s8382 = scalar_lea.sflag [#allocation3], 1
    %8383 = vsyncpa %s8382, 1

</llo_original>
